<compile_context>
chip_gen: v5e
topology: v5e:2x2
jax: 0.10.0
libtpu: 0.0.40
codegen_flags: <defaults>
</compile_context>

<pallas_src>
import functools

import numpy as np

import jax
import jax.numpy as jnp
from jax.experimental import pallas as pl
from jax.experimental.pallas import tpu as pltpu


# ----------------------------------------------------------------------------
# Fused kernel: point sampling + radiance-field MLP + volume integral
# ----------------------------------------------------------------------------
def _make_render_kernel(z_vals, dists):
    """z_vals / dists are tuples of Python floats (static depth samples)."""

    def kernel(ro_ref, rd_ref, w1_ref, b1_ref, w2_ref, b2_ref,
               rgb_ref, depth_ref, accum_ref):
        # ro/rd:  (3, Rt)      rays on lanes
        # w1^T:   (H, 3)       b1: (H, 1)
        # w2^T:   (1+C, H)     b2: (1+C, 1)
        # outputs rgb (C, Rt), depth (1, Rt), accum (1, Rt)
        ro = ro_ref[...]
        rd = rd_ref[...]
        w1t = w1_ref[...]
        b1 = b1_ref[...]
        w2t = w2_ref[...]
        b2 = b2_ref[...]

        n_ch = w2_ref.shape[0] - 1
        n_rays = ro_ref.shape[1]

        trans = jnp.ones((1, n_rays), jnp.float32)   # exclusive-cumprod carry
        rgb = jnp.zeros((n_ch, n_rays), jnp.float32)
        depth = jnp.zeros((1, n_rays), jnp.float32)
        accum = jnp.zeros((1, n_rays), jnp.float32)

        # Static unroll over depth samples: pts, MLP activations, alpha and the
        # per-sample weights all stay in vregs/VMEM; only per-ray results are
        # ever stored to HBM.
        for zv, dz in zip(z_vals, dists):
            pts = ro + rd * zv                                         # (3, Rt)
            h = jnp.dot(w1t, pts, preferred_element_type=jnp.float32) + b1
            h = jnp.maximum(h, 0.0)                                    # (H, Rt)
            y = jnp.dot(w2t, h, preferred_element_type=jnp.float32) + b2
            sigma = jnp.maximum(y[0:1, :], 0.0)                        # (1, Rt)
            feats = y[1:, :]                                           # (C, Rt)
            alpha = 1.0 - jnp.exp(-sigma * dz)                         # (1, Rt)
            w = alpha * trans                                          # weights_z
            rgb = rgb + w * feats
            depth = depth + w * zv
            accum = accum + w
            trans = trans * (1.0 - alpha + 1e-10)      # exact torch.cumprod step

        rgb_ref[...] = rgb
        depth_ref[...] = depth
        accum_ref[...] = accum

    return kernel


def _choose_ray_tile(n_rays, max_tile=512):
    """Largest lane-aligned tile <= max_tile that divides n_rays, preferring
    >= 2 grid steps so both v7x TensorCores get work."""
    cands = [t for t in range(128, min(max_tile, n_rays) + 1, 128)
             if n_rays % t == 0]
    if not cands:
        return n_rays                       # tiny / unaligned: one full block
    multi = [t for t in cands if n_rays // t >= 2]
    return max(multi) if multi else max(cands)


@functools.lru_cache(maxsize=None)
def _build_ray_renderer(z_vals, dists, n_rays, tile, hidden, out_dim):
    n_ch = out_dim - 1
    kernel = _make_render_kernel(z_vals, dists)
    return pl.pallas_call(
        kernel,
        out_shape=(
            jax.ShapeDtypeStruct((n_ch, n_rays), jnp.float32),
            jax.ShapeDtypeStruct((1, n_rays), jnp.float32),
            jax.ShapeDtypeStruct((1, n_rays), jnp.float32),
        ),
        grid_spec=pltpu.PrefetchScalarGridSpec(
            num_scalar_prefetch=0,
            grid=(n_rays // tile,),
            in_specs=[
                pl.BlockSpec((3, tile), lambda i: (0, i)),           # origins^T
                pl.BlockSpec((3, tile), lambda i: (0, i)),           # dirs^T
                pl.BlockSpec((hidden, 3), lambda i: (0, 0)),         # w1^T
                pl.BlockSpec((hidden, 1), lambda i: (0, 0)),         # b1
                pl.BlockSpec((out_dim, hidden), lambda i: (0, 0)),   # w2^T
                pl.BlockSpec((out_dim, 1), lambda i: (0, 0)),        # b2
            ],
            out_specs=[
                pl.BlockSpec((n_ch, tile), lambda i: (0, i)),        # rgb
                pl.BlockSpec((1, tile), lambda i: (0, i)),           # depth
                pl.BlockSpec((1, tile), lambda i: (0, i)),           # accum
            ],
        ),
        compiler_params=pltpu.CompilerParams(dimension_semantics=("parallel",)),
    )


def _zvals_np(near, far, num_samples):
    return np.linspace(near, far, num_samples).astype(np.float32)


def render_rays_fused(ray_origins, ray_dirs, near, far, num_samples,
                      w1, b1, w2, b2, *, max_tile_rays=512):
    """Fused sampling + MLP + volume integral.

    ray_origins / ray_dirs: (B, R, 3).  Returns rgb (B, R, C), depth (B, R, 1)
    and accum = sum_z weights (B, R, 1) (all forward() needs from `weights`).
    """
    b, r, _ = ray_origins.shape
    n = b * r
    hidden = w1.shape[1]
    out_dim = w2.shape[1]
    n_ch = out_dim - 1

    z_np = _zvals_np(near, far, num_samples)
    d_np = np.concatenate([z_np[1:] - z_np[:-1], z_np[-1:] - z_np[-2:-1]])

    tile = _choose_ray_tile(n, max_tile_rays)
    assert n % tile == 0
    renderer = _build_ray_renderer(tuple(float(v) for v in z_np),
                                   tuple(float(v) for v in d_np),
                                   n, tile, hidden, out_dim)

    # Rays on the 128-lane axis everywhere; only the tiny (N, 3) per-ray arrays
    # and the MLP weights are transposed outside the kernel.
    ro_t = ray_origins.reshape(n, 3).T                    # (3, N)
    rd_t = ray_dirs.reshape(n, 3).T                       # (3, N)
    rgb_t, depth_t, accum_t = renderer(
        ro_t, rd_t, w1.T, b1.reshape(hidden, 1), w2.T, b2.reshape(out_dim, 1))

    rgb = rgb_t.T.reshape(b, r, n_ch)
    depth = depth_t.reshape(b, r, 1)
    accum = accum_t.reshape(b, r, 1)
    return rgb, depth, accum


# ----------------------------------------------------------------------------
# Plain-JAX glue (ray generation, point sampling, parameter containers)
# ----------------------------------------------------------------------------
def get_world_rays(x_pix, intrinsics, cam2world):
    # x_pix: (B,R,2) pixel coords; intrinsics: (B,3,3); cam2world: (B,4,4)
    fx = intrinsics[:, 0, 0][:, None]
    fy = intrinsics[:, 1, 1][:, None]
    cx = intrinsics[:, 0, 2][:, None]
    cy = intrinsics[:, 1, 2][:, None]
    x_cam = (x_pix[..., 0] - cx) / fx
    y_cam = (x_pix[..., 1] - cy) / fy
    dirs_cam = jnp.stack([x_cam, y_cam, jnp.ones_like(x_cam)], axis=-1)
    dirs_cam = dirs_cam / jnp.linalg.norm(dirs_cam, axis=-1, keepdims=True)
    rot = cam2world[:, :3, :3]
    rds = jnp.einsum("bij,brj->bri", rot, dirs_cam)
    ros = jnp.broadcast_to(cam2world[:, None, :3, 3], rds.shape)
    return ros, rds


def sample_points_along_rays(near, far, num_samples, ray_origins, ray_directions):
    # TODO(synk): logspace / perturb sampling variants not implemented (defaults only).
    z_vals = jnp.asarray(_zvals_np(near, far, num_samples))
    pts = ray_origins[..., None, :] + ray_directions[..., None, :] * z_vals[:, None]
    return pts, z_vals


class MLPRadianceField:
    """Synthetic radiance field: pts(3) -> hidden -> [sigma(1), feats(C)]."""

    def __init__(self, key, hidden=32, n_feats=3):
        k1, k2, k3, k4 = jax.random.split(key, 4)
        self.w1 = jax.random.normal(k1, (3, hidden), jnp.float32) * 0.5
        self.b1 = jax.random.normal(k2, (1, hidden), jnp.float32) * 0.1
        self.w2 = jax.random.normal(k3, (hidden, 1 + n_feats), jnp.float32) * 0.5
        self.b2 = jax.random.normal(k4, (1, 1 + n_feats), jnp.float32) * 0.1
        self.n_feats = n_feats

    def __call__(self, pts):
        # Plain-JAX path (used by the reference check); the fused Pallas
        # renderer reads .w1/.b1/.w2/.b2 directly instead of calling this.
        b, p, _ = pts.shape
        h = jnp.maximum(pts.reshape(b * p, 3) @ self.w1 + self.b1, 0.0)
        y = (h @ self.w2 + self.b2).reshape(b, p, -1)
        return y[..., :1], y[..., 1:], None


class VolumeRenderer:
    def __init__(self, near, far, n_samples=32, backgrd_color=None):
        self.near = float(near)
        self.far = float(far)
        self.n_samples = int(n_samples)
        self.backgrd_color = backgrd_color

    def __call__(self, cam2world, intrinsics, x_pix, radiance_field):
        # TODO(synk): the fused kernel is specialized to the 2-layer MLP field
        # (reads .w1/.b1/.w2/.b2); arbitrary radiance_field modules would need
        # an unfused path.
        batch_size, num_rays = x_pix.shape[0], x_pix.shape[1]
        ros, rds = get_world_rays(x_pix, intrinsics, cam2world)
        rendering, depth_map, accum = render_rays_fused(
            ros, rds, self.near, self.far, self.n_samples,
            radiance_field.w1, radiance_field.b1,
            radiance_field.w2, radiance_field.b2)
        misc = None
        if self.backgrd_color is not None:
            backgrd = jnp.broadcast_to(self.backgrd_color, rendering.shape)
            rendering = rendering + (backgrd - accum)   # matches the PyTorch module
        return rendering, depth_map, misc


# ----------------------------------------------------------------------------
# Pure-JAX reference (mirrors the PyTorch code) for the correctness check
# ----------------------------------------------------------------------------
def _volume_integral_ref(z_vals, sigmas, radiances):
    d = z_vals[1:] - z_vals[:-1]
    dists = jnp.concatenate([d, d[-1:]], -1)
    alpha = 1.0 - jnp.exp(-jnp.maximum(sigmas, 0.0) * dists[None, None, :, None])
    alpha_shifted = jnp.concatenate(
        [jnp.ones_like(alpha[:, :, :1]), 1.0 - alpha + 1e-10], -2)
    Ts = jnp.cumprod(alpha_shifted, -2)
    weights = alpha * Ts[..., :-1, :]
    rgb = jnp.sum(weights * radiances, axis=-2)                       # (B,R,C)
    depth = jnp.sum(weights * z_vals[None, None, :, None], axis=-2)   # (B,R,1)
    return rgb, depth, weights


def _close(x, ref, tol=2e-3):
    return bool(jnp.allclose(x, ref, atol=tol, rtol=tol))


# ----------------------------------------------------------------------------
if __name__ == "__main__":
    key = jax.random.PRNGKey(0)
    B, H_img, W_img = 2, 16, 16
    R = H_img * W_img            # 256 rays per batch element
    Z = 32                       # n_samples (module default)
    C = 3
    near, far = 1.0, 4.0

    # pixel-center grid (u, v), same for both batch items
    u, v = jnp.meshgrid(jnp.arange(W_img, dtype=jnp.float32) + 0.5,
                        jnp.arange(H_img, dtype=jnp.float32) + 0.5, indexing="xy")
    x_pix = jnp.broadcast_to(
        jnp.stack([u.ravel(), v.ravel()], axis=-1), (B, R, 2))

    focal = 20.0
    intrinsics = jnp.broadcast_to(
        jnp.array([[focal, 0.0, W_img / 2.0],
                   [0.0, focal, H_img / 2.0],
                   [0.0, 0.0, 1.0]], jnp.float32), (B, 3, 3))

    cam2world = jnp.broadcast_to(jnp.eye(4, dtype=jnp.float32), (B, 4, 4))
    trans = jnp.array([[0.1, -0.2, 0.0], [-0.3, 0.1, 0.2]], jnp.float32)
    cam2world = cam2world.at[:, :3, 3].set(trans)

    rf_key, _ = jax.random.split(key)
    radiance_field = MLPRadianceField(rf_key, hidden=32, n_feats=C)

    renderer = VolumeRenderer(near, far, n_samples=Z)
    rgb, depth, misc = renderer(cam2world, intrinsics, x_pix, radiance_field)
    jax.block_until_ready((rgb, depth))
    assert rgb.shape == (B, R, C) and depth.shape == (B, R, 1)

    # --- reference pipeline (run at two explicit MLP matmul precisions so the
    #     check is robust to whatever the MXU default maps to) ---------------
    ros, rds = get_world_rays(x_pix, intrinsics, cam2world)
    pts, z_vals = sample_points_along_rays(near, far, Z, ros, rds)
    pts = pts.reshape(B, -1, 3)

    def reference(mlp_precision):
        with jax.default_matmul_precision(mlp_precision):
            sigma_ref, feats_ref, _ = radiance_field(pts)
        sigma_ref = sigma_ref.reshape(B, R, Z, 1)
        feats_ref = feats_ref.reshape(B, R, Z, C)
        return _volume_integral_ref(z_vals, sigma_ref, feats_ref)

    refs = [reference("float32"), reference("bfloat16")]

    assert any(_close(rgb, rr[0]) for rr in refs), \
        [float(jnp.max(jnp.abs(rgb - rr[0]))) for rr in refs]
    assert any(_close(depth, rr[1]) for rr in refs), \
        [float(jnp.max(jnp.abs(depth - rr[1]))) for rr in refs]

    # --- background-compositing path (exercises the accum output) -----------
    bg = jnp.array([1.0, 1.0, 1.0], jnp.float32)
    renderer_bg = VolumeRenderer(near, far, n_samples=Z, backgrd_color=bg)
    rgb_bg, depth_bg, _ = renderer_bg(cam2world, intrinsics, x_pix, radiance_field)
    jax.block_until_ready(rgb_bg)

    def bg_ref(rr):
        rgb_r, _, weights_r = rr
        accum_r = weights_r.sum(axis=-2)
        return rgb_r + (jnp.broadcast_to(bg, rgb_r.shape) - accum_r)

    assert any(_close(rgb_bg, bg_ref(rr)) for rr in refs), \
        [float(jnp.max(jnp.abs(rgb_bg - bg_ref(rr)))) for rr in refs]

    print("KERNEL_OK")
</pallas_src>

<mosaic_0001>
module attributes {stable_mosaic.version = 11 : i64} {
  func.func @kernel(%arg0: i32, %arg1: memref<3x256xf32, #tpu.memory_space<vmem>>, %arg2: memref<3x256xf32, #tpu.memory_space<vmem>>, %arg3: memref<32x3xf32, #tpu.memory_space<vmem>>, %arg4: memref<32x1xf32, #tpu.memory_space<vmem>>, %arg5: memref<4x32xf32, #tpu.memory_space<vmem>>, %arg6: memref<4x1xf32, #tpu.memory_space<vmem>>, %arg7: memref<3x256xf32, #tpu.memory_space<vmem>>, %arg8: memref<1x256xf32, #tpu.memory_space<vmem>>, %arg9: memref<1x256xf32, #tpu.memory_space<vmem>>) attributes {dimension_semantics = [#tpu.dimension_semantics<parallel>], iteration_bounds = array<i64: 2>, scalar_prefetch = 0 : i64, scratch_operands = 0 : i64, tpu.core_type = #tpu.core_type<tc>, window_params = [{transform_indices = @transform_0, window_bounds = array<i64: 3, 256>}, {transform_indices = @transform_1, window_bounds = array<i64: 3, 256>}, {pipeline_mode = #tpu.pipeline_mode<synchronous>, transform_indices = @transform_2, window_bounds = array<i64: 32, 3>}, {pipeline_mode = #tpu.pipeline_mode<synchronous>, transform_indices = @transform_3, window_bounds = array<i64: 32, 1>}, {pipeline_mode = #tpu.pipeline_mode<synchronous>, transform_indices = @transform_4, window_bounds = array<i64: 4, 32>}, {pipeline_mode = #tpu.pipeline_mode<synchronous>, transform_indices = @transform_5, window_bounds = array<i64: 4, 1>}, {transform_indices = @transform_6, window_bounds = array<i64: 3, 256>}, {transform_indices = @transform_7, window_bounds = array<i64: 1, 256>}, {transform_indices = @transform_8, window_bounds = array<i64: 1, 256>}]} {
    %c0 = arith.constant 0 : index
    %c0_0 = arith.constant 0 : index
    %0 = vector.load %arg1[%c0, %c0_0] : memref<3x256xf32, #tpu.memory_space<vmem>>, vector<3x256xf32>
    %c0_1 = arith.constant 0 : index
    %c0_2 = arith.constant 0 : index
    %1 = vector.load %arg2[%c0_1, %c0_2] : memref<3x256xf32, #tpu.memory_space<vmem>>, vector<3x256xf32>
    %c0_3 = arith.constant 0 : index
    %c0_4 = arith.constant 0 : index
    %2 = vector.load %arg3[%c0_3, %c0_4] : memref<32x3xf32, #tpu.memory_space<vmem>>, vector<32x3xf32>
    %c0_5 = arith.constant 0 : index
    %c0_6 = arith.constant 0 : index
    %3 = vector.load %arg4[%c0_5, %c0_6] : memref<32x1xf32, #tpu.memory_space<vmem>>, vector<32x1xf32>
    %c0_7 = arith.constant 0 : index
    %c0_8 = arith.constant 0 : index
    %4 = vector.load %arg5[%c0_7, %c0_8] : memref<4x32xf32, #tpu.memory_space<vmem>>, vector<4x32xf32>
    %c0_9 = arith.constant 0 : index
    %c0_10 = arith.constant 0 : index
    %5 = vector.load %arg6[%c0_9, %c0_10] : memref<4x1xf32, #tpu.memory_space<vmem>>, vector<4x1xf32>
    %cst = arith.constant 1.000000e+00 : f32
    %6 = vector.broadcast %cst : f32 to vector<1x256xf32>
    %cst_11 = arith.constant 0.000000e+00 : f32
    %7 = vector.broadcast %cst_11 : f32 to vector<3x256xf32>
    %cst_12 = arith.constant 0.000000e+00 : f32
    %8 = vector.broadcast %cst_12 : f32 to vector<1x256xf32>
    %cst_13 = arith.constant 0.000000e+00 : f32
    %9 = vector.broadcast %cst_13 : f32 to vector<1x256xf32>
    %cst_14 = arith.constant 1.000000e+00 : f32
    %10 = vector.broadcast %cst_14 : f32 to vector<3x256xf32>
    %11 = arith.mulf %1, %10 : vector<3x256xf32>
    %12 = arith.addf %0, %11 : vector<3x256xf32>
    %cst_15 = arith.constant dense<0.000000e+00> : vector<32x256xf32>
    %13 = tpu.matmul %2, %12, %cst_15 {dimension_numbers = #tpu.dot_dimension_numbers<[1], [0], [0], [1], [0, 0, 1, 1], [], []>} : vector<32x3xf32>, vector<3x256xf32>, vector<32x256xf32> -> vector<32x256xf32>
    %14 = vector.broadcast %3 : vector<32x1xf32> to vector<32x256xf32>
    %15 = arith.addf %13, %14 : vector<32x256xf32>
    %cst_16 = arith.constant 0.000000e+00 : f32
    %16 = vector.broadcast %cst_16 : f32 to vector<32x256xf32>
    %17 = arith.maximumf %15, %16 : vector<32x256xf32>
    %cst_17 = arith.constant dense<0.000000e+00> : vector<4x256xf32>
    %18 = tpu.matmul %4, %17, %cst_17 {dimension_numbers = #tpu.dot_dimension_numbers<[1], [0], [0], [1], [0, 0, 1, 1], [], []>} : vector<4x32xf32>, vector<32x256xf32>, vector<4x256xf32> -> vector<4x256xf32>
    %19 = vector.broadcast %5 : vector<4x1xf32> to vector<4x256xf32>
    %20 = arith.addf %18, %19 : vector<4x256xf32>
    %21 = vector.extract_strided_slice %20 {offsets = [0, 0], sizes = [1, 256], strides = [1, 1]} : vector<4x256xf32> to vector<1x256xf32>
    %cst_18 = arith.constant 0.000000e+00 : f32
    %22 = vector.broadcast %cst_18 : f32 to vector<1x256xf32>
    %23 = arith.maximumf %21, %22 : vector<1x256xf32>
    %24 = vector.extract_strided_slice %20 {offsets = [1, 0], sizes = [3, 256], strides = [1, 1]} : vector<4x256xf32> to vector<3x256xf32>
    %cst_19 = arith.constant 0.000000e+00 : f32
    %25 = vector.broadcast %cst_19 : f32 to vector<1x256xf32>
    %26 = arith.subf %25, %23 : vector<1x256xf32>
    %cst_20 = arith.constant 0.0967742204 : f32
    %27 = vector.broadcast %cst_20 : f32 to vector<1x256xf32>
    %28 = arith.mulf %26, %27 : vector<1x256xf32>
    %29 = math.exp %28 : vector<1x256xf32>
    %cst_21 = arith.constant 1.000000e+00 : f32
    %30 = vector.broadcast %cst_21 : f32 to vector<1x256xf32>
    %31 = arith.subf %30, %29 : vector<1x256xf32>
    %32 = arith.mulf %31, %6 : vector<1x256xf32>
    %33 = vector.broadcast %32 : vector<1x256xf32> to vector<3x256xf32>
    %34 = arith.mulf %33, %24 : vector<3x256xf32>
    %35 = arith.addf %7, %34 : vector<3x256xf32>
    %cst_22 = arith.constant 1.000000e+00 : f32
    %36 = vector.broadcast %cst_22 : f32 to vector<1x256xf32>
    %37 = arith.mulf %32, %36 : vector<1x256xf32>
    %38 = arith.addf %8, %37 : vector<1x256xf32>
    %39 = arith.addf %9, %32 : vector<1x256xf32>
    %cst_23 = arith.constant 1.000000e+00 : f32
    %40 = vector.broadcast %cst_23 : f32 to vector<1x256xf32>
    %41 = arith.subf %40, %31 : vector<1x256xf32>
    %cst_24 = arith.constant 1.000000e-10 : f32
    %42 = vector.broadcast %cst_24 : f32 to vector<1x256xf32>
    %43 = arith.addf %41, %42 : vector<1x256xf32>
    %44 = arith.mulf %6, %43 : vector<1x256xf32>
    %cst_25 = arith.constant 1.09677422 : f32
    %45 = vector.broadcast %cst_25 : f32 to vector<3x256xf32>
    %46 = arith.mulf %1, %45 : vector<3x256xf32>
    %47 = arith.addf %0, %46 : vector<3x256xf32>
    %cst_26 = arith.constant dense<0.000000e+00> : vector<32x256xf32>
    %48 = tpu.matmul %2, %47, %cst_26 {dimension_numbers = #tpu.dot_dimension_numbers<[1], [0], [0], [1], [0, 0, 1, 1], [], []>} : vector<32x3xf32>, vector<3x256xf32>, vector<32x256xf32> -> vector<32x256xf32>
    %49 = vector.broadcast %3 : vector<32x1xf32> to vector<32x256xf32>
    %50 = arith.addf %48, %49 : vector<32x256xf32>
    %cst_27 = arith.constant 0.000000e+00 : f32
    %51 = vector.broadcast %cst_27 : f32 to vector<32x256xf32>
    %52 = arith.maximumf %50, %51 : vector<32x256xf32>
    %cst_28 = arith.constant dense<0.000000e+00> : vector<4x256xf32>
    %53 = tpu.matmul %4, %52, %cst_28 {dimension_numbers = #tpu.dot_dimension_numbers<[1], [0], [0], [1], [0, 0, 1, 1], [], []>} : vector<4x32xf32>, vector<32x256xf32>, vector<4x256xf32> -> vector<4x256xf32>
    %54 = vector.broadcast %5 : vector<4x1xf32> to vector<4x256xf32>
    %55 = arith.addf %53, %54 : vector<4x256xf32>
    %56 = vector.extract_strided_slice %55 {offsets = [0, 0], sizes = [1, 256], strides = [1, 1]} : vector<4x256xf32> to vector<1x256xf32>
    %cst_29 = arith.constant 0.000000e+00 : f32
    %57 = vector.broadcast %cst_29 : f32 to vector<1x256xf32>
    %58 = arith.maximumf %56, %57 : vector<1x256xf32>
    %59 = vector.extract_strided_slice %55 {offsets = [1, 0], sizes = [3, 256], strides = [1, 1]} : vector<4x256xf32> to vector<3x256xf32>
    %cst_30 = arith.constant 0.000000e+00 : f32
    %60 = vector.broadcast %cst_30 : f32 to vector<1x256xf32>
    %61 = arith.subf %60, %58 : vector<1x256xf32>
    %cst_31 = arith.constant 0.0967742204 : f32
    %62 = vector.broadcast %cst_31 : f32 to vector<1x256xf32>
    %63 = arith.mulf %61, %62 : vector<1x256xf32>
    %64 = math.exp %63 : vector<1x256xf32>
    %cst_32 = arith.constant 1.000000e+00 : f32
    %65 = vector.broadcast %cst_32 : f32 to vector<1x256xf32>
    %66 = arith.subf %65, %64 : vector<1x256xf32>
    %67 = arith.mulf %66, %44 : vector<1x256xf32>
    %68 = vector.broadcast %67 : vector<1x256xf32> to vector<3x256xf32>
    %69 = arith.mulf %68, %59 : vector<3x256xf32>
    %70 = arith.addf %35, %69 : vector<3x256xf32>
    %cst_33 = arith.constant 1.09677422 : f32
    %71 = vector.broadcast %cst_33 : f32 to vector<1x256xf32>
    %72 = arith.mulf %67, %71 : vector<1x256xf32>
    %73 = arith.addf %38, %72 : vector<1x256xf32>
    %74 = arith.addf %39, %67 : vector<1x256xf32>
    %cst_34 = arith.constant 1.000000e+00 : f32
    %75 = vector.broadcast %cst_34 : f32 to vector<1x256xf32>
    %76 = arith.subf %75, %66 : vector<1x256xf32>
    %cst_35 = arith.constant 1.000000e-10 : f32
    %77 = vector.broadcast %cst_35 : f32 to vector<1x256xf32>
    %78 = arith.addf %76, %77 : vector<1x256xf32>
    %79 = arith.mulf %44, %78 : vector<1x256xf32>
    %cst_36 = arith.constant 1.19354844 : f32
    %80 = vector.broadcast %cst_36 : f32 to vector<3x256xf32>
    %81 = arith.mulf %1, %80 : vector<3x256xf32>
    %82 = arith.addf %0, %81 : vector<3x256xf32>
    %cst_37 = arith.constant dense<0.000000e+00> : vector<32x256xf32>
    %83 = tpu.matmul %2, %82, %cst_37 {dimension_numbers = #tpu.dot_dimension_numbers<[1], [0], [0], [1], [0, 0, 1, 1], [], []>} : vector<32x3xf32>, vector<3x256xf32>, vector<32x256xf32> -> vector<32x256xf32>
    %84 = vector.broadcast %3 : vector<32x1xf32> to vector<32x256xf32>
    %85 = arith.addf %83, %84 : vector<32x256xf32>
    %cst_38 = arith.constant 0.000000e+00 : f32
    %86 = vector.broadcast %cst_38 : f32 to vector<32x256xf32>
    %87 = arith.maximumf %85, %86 : vector<32x256xf32>
    %cst_39 = arith.constant dense<0.000000e+00> : vector<4x256xf32>
    %88 = tpu.matmul %4, %87, %cst_39 {dimension_numbers = #tpu.dot_dimension_numbers<[1], [0], [0], [1], [0, 0, 1, 1], [], []>} : vector<4x32xf32>, vector<32x256xf32>, vector<4x256xf32> -> vector<4x256xf32>
    %89 = vector.broadcast %5 : vector<4x1xf32> to vector<4x256xf32>
    %90 = arith.addf %88, %89 : vector<4x256xf32>
    %91 = vector.extract_strided_slice %90 {offsets = [0, 0], sizes = [1, 256], strides = [1, 1]} : vector<4x256xf32> to vector<1x256xf32>
    %cst_40 = arith.constant 0.000000e+00 : f32
    %92 = vector.broadcast %cst_40 : f32 to vector<1x256xf32>
    %93 = arith.maximumf %91, %92 : vector<1x256xf32>
    %94 = vector.extract_strided_slice %90 {offsets = [1, 0], sizes = [3, 256], strides = [1, 1]} : vector<4x256xf32> to vector<3x256xf32>
    %cst_41 = arith.constant 0.000000e+00 : f32
    %95 = vector.broadcast %cst_41 : f32 to vector<1x256xf32>
    %96 = arith.subf %95, %93 : vector<1x256xf32>
    %cst_42 = arith.constant 9.677410e-02 : f32
    %97 = vector.broadcast %cst_42 : f32 to vector<1x256xf32>
    %98 = arith.mulf %96, %97 : vector<1x256xf32>
    %99 = math.exp %98 : vector<1x256xf32>
    %cst_43 = arith.constant 1.000000e+00 : f32
    %100 = vector.broadcast %cst_43 : f32 to vector<1x256xf32>
    %101 = arith.subf %100, %99 : vector<1x256xf32>
    %102 = arith.mulf %101, %79 : vector<1x256xf32>
    %103 = vector.broadcast %102 : vector<1x256xf32> to vector<3x256xf32>
    %104 = arith.mulf %103, %94 : vector<3x256xf32>
    %105 = arith.addf %70, %104 : vector<3x256xf32>
    %cst_44 = arith.constant 1.19354844 : f32
    %106 = vector.broadcast %cst_44 : f32 to vector<1x256xf32>
    %107 = arith.mulf %102, %106 : vector<1x256xf32>
    %108 = arith.addf %73, %107 : vector<1x256xf32>
    %109 = arith.addf %74, %102 : vector<1x256xf32>
    %cst_45 = arith.constant 1.000000e+00 : f32
    %110 = vector.broadcast %cst_45 : f32 to vector<1x256xf32>
    %111 = arith.subf %110, %101 : vector<1x256xf32>
    %cst_46 = arith.constant 1.000000e-10 : f32
    %112 = vector.broadcast %cst_46 : f32 to vector<1x256xf32>
    %113 = arith.addf %111, %112 : vector<1x256xf32>
    %114 = arith.mulf %79, %113 : vector<1x256xf32>
    %cst_47 = arith.constant 1.29032254 : f32
    %115 = vector.broadcast %cst_47 : f32 to vector<3x256xf32>
    %116 = arith.mulf %1, %115 : vector<3x256xf32>
    %117 = arith.addf %0, %116 : vector<3x256xf32>
    %cst_48 = arith.constant dense<0.000000e+00> : vector<32x256xf32>
    %118 = tpu.matmul %2, %117, %cst_48 {dimension_numbers = #tpu.dot_dimension_numbers<[1], [0], [0], [1], [0, 0, 1, 1], [], []>} : vector<32x3xf32>, vector<3x256xf32>, vector<32x256xf32> -> vector<32x256xf32>
    %119 = vector.broadcast %3 : vector<32x1xf32> to vector<32x256xf32>
    %120 = arith.addf %118, %119 : vector<32x256xf32>
    %cst_49 = arith.constant 0.000000e+00 : f32
    %121 = vector.broadcast %cst_49 : f32 to vector<32x256xf32>
    %122 = arith.maximumf %120, %121 : vector<32x256xf32>
    %cst_50 = arith.constant dense<0.000000e+00> : vector<4x256xf32>
    %123 = tpu.matmul %4, %122, %cst_50 {dimension_numbers = #tpu.dot_dimension_numbers<[1], [0], [0], [1], [0, 0, 1, 1], [], []>} : vector<4x32xf32>, vector<32x256xf32>, vector<4x256xf32> -> vector<4x256xf32>
    %124 = vector.broadcast %5 : vector<4x1xf32> to vector<4x256xf32>
    %125 = arith.addf %123, %124 : vector<4x256xf32>
    %126 = vector.extract_strided_slice %125 {offsets = [0, 0], sizes = [1, 256], strides = [1, 1]} : vector<4x256xf32> to vector<1x256xf32>
    %cst_51 = arith.constant 0.000000e+00 : f32
    %127 = vector.broadcast %cst_51 : f32 to vector<1x256xf32>
    %128 = arith.maximumf %126, %127 : vector<1x256xf32>
    %129 = vector.extract_strided_slice %125 {offsets = [1, 0], sizes = [3, 256], strides = [1, 1]} : vector<4x256xf32> to vector<3x256xf32>
    %cst_52 = arith.constant 0.000000e+00 : f32
    %130 = vector.broadcast %cst_52 : f32 to vector<1x256xf32>
    %131 = arith.subf %130, %128 : vector<1x256xf32>
    %cst_53 = arith.constant 0.0967742204 : f32
    %132 = vector.broadcast %cst_53 : f32 to vector<1x256xf32>
    %133 = arith.mulf %131, %132 : vector<1x256xf32>
    %134 = math.exp %133 : vector<1x256xf32>
    %cst_54 = arith.constant 1.000000e+00 : f32
    %135 = vector.broadcast %cst_54 : f32 to vector<1x256xf32>
    %136 = arith.subf %135, %134 : vector<1x256xf32>
    %137 = arith.mulf %136, %114 : vector<1x256xf32>
    %138 = vector.broadcast %137 : vector<1x256xf32> to vector<3x256xf32>
    %139 = arith.mulf %138, %129 : vector<3x256xf32>
    %140 = arith.addf %105, %139 : vector<3x256xf32>
    %cst_55 = arith.constant 1.29032254 : f32
    %141 = vector.broadcast %cst_55 : f32 to vector<1x256xf32>
    %142 = arith.mulf %137, %141 : vector<1x256xf32>
    %143 = arith.addf %108, %142 : vector<1x256xf32>
    %144 = arith.addf %109, %137 : vector<1x256xf32>
    %cst_56 = arith.constant 1.000000e+00 : f32
    %145 = vector.broadcast %cst_56 : f32 to vector<1x256xf32>
    %146 = arith.subf %145, %136 : vector<1x256xf32>
    %cst_57 = arith.constant 1.000000e-10 : f32
    %147 = vector.broadcast %cst_57 : f32 to vector<1x256xf32>
    %148 = arith.addf %146, %147 : vector<1x256xf32>
    %149 = arith.mulf %114, %148 : vector<1x256xf32>
    %cst_58 = arith.constant 1.38709676 : f32
    %150 = vector.broadcast %cst_58 : f32 to vector<3x256xf32>
    %151 = arith.mulf %1, %150 : vector<3x256xf32>
    %152 = arith.addf %0, %151 : vector<3x256xf32>
    %cst_59 = arith.constant dense<0.000000e+00> : vector<32x256xf32>
    %153 = tpu.matmul %2, %152, %cst_59 {dimension_numbers = #tpu.dot_dimension_numbers<[1], [0], [0], [1], [0, 0, 1, 1], [], []>} : vector<32x3xf32>, vector<3x256xf32>, vector<32x256xf32> -> vector<32x256xf32>
    %154 = vector.broadcast %3 : vector<32x1xf32> to vector<32x256xf32>
    %155 = arith.addf %153, %154 : vector<32x256xf32>
    %cst_60 = arith.constant 0.000000e+00 : f32
    %156 = vector.broadcast %cst_60 : f32 to vector<32x256xf32>
    %157 = arith.maximumf %155, %156 : vector<32x256xf32>
    %cst_61 = arith.constant dense<0.000000e+00> : vector<4x256xf32>
    %158 = tpu.matmul %4, %157, %cst_61 {dimension_numbers = #tpu.dot_dimension_numbers<[1], [0], [0], [1], [0, 0, 1, 1], [], []>} : vector<4x32xf32>, vector<32x256xf32>, vector<4x256xf32> -> vector<4x256xf32>
    %159 = vector.broadcast %5 : vector<4x1xf32> to vector<4x256xf32>
    %160 = arith.addf %158, %159 : vector<4x256xf32>
    %161 = vector.extract_strided_slice %160 {offsets = [0, 0], sizes = [1, 256], strides = [1, 1]} : vector<4x256xf32> to vector<1x256xf32>
    %cst_62 = arith.constant 0.000000e+00 : f32
    %162 = vector.broadcast %cst_62 : f32 to vector<1x256xf32>
    %163 = arith.maximumf %161, %162 : vector<1x256xf32>
    %164 = vector.extract_strided_slice %160 {offsets = [1, 0], sizes = [3, 256], strides = [1, 1]} : vector<4x256xf32> to vector<3x256xf32>
    %cst_63 = arith.constant 0.000000e+00 : f32
    %165 = vector.broadcast %cst_63 : f32 to vector<1x256xf32>
    %166 = arith.subf %165, %163 : vector<1x256xf32>
    %cst_64 = arith.constant 0.0967742204 : f32
    %167 = vector.broadcast %cst_64 : f32 to vector<1x256xf32>
    %168 = arith.mulf %166, %167 : vector<1x256xf32>
    %169 = math.exp %168 : vector<1x256xf32>
    %cst_65 = arith.constant 1.000000e+00 : f32
    %170 = vector.broadcast %cst_65 : f32 to vector<1x256xf32>
    %171 = arith.subf %170, %169 : vector<1x256xf32>
    %172 = arith.mulf %171, %149 : vector<1x256xf32>
    %173 = vector.broadcast %172 : vector<1x256xf32> to vector<3x256xf32>
    %174 = arith.mulf %173, %164 : vector<3x256xf32>
    %175 = arith.addf %140, %174 : vector<3x256xf32>
    %cst_66 = arith.constant 1.38709676 : f32
    %176 = vector.broadcast %cst_66 : f32 to vector<1x256xf32>
    %177 = arith.mulf %172, %176 : vector<1x256xf32>
    %178 = arith.addf %143, %177 : vector<1x256xf32>
    %179 = arith.addf %144, %172 : vector<1x256xf32>
    %cst_67 = arith.constant 1.000000e+00 : f32
    %180 = vector.broadcast %cst_67 : f32 to vector<1x256xf32>
    %181 = arith.subf %180, %171 : vector<1x256xf32>
    %cst_68 = arith.constant 1.000000e-10 : f32
    %182 = vector.broadcast %cst_68 : f32 to vector<1x256xf32>
    %183 = arith.addf %181, %182 : vector<1x256xf32>
    %184 = arith.mulf %149, %183 : vector<1x256xf32>
    %cst_69 = arith.constant 1.48387098 : f32
    %185 = vector.broadcast %cst_69 : f32 to vector<3x256xf32>
    %186 = arith.mulf %1, %185 : vector<3x256xf32>
    %187 = arith.addf %0, %186 : vector<3x256xf32>
    %cst_70 = arith.constant dense<0.000000e+00> : vector<32x256xf32>
    %188 = tpu.matmul %2, %187, %cst_70 {dimension_numbers = #tpu.dot_dimension_numbers<[1], [0], [0], [1], [0, 0, 1, 1], [], []>} : vector<32x3xf32>, vector<3x256xf32>, vector<32x256xf32> -> vector<32x256xf32>
    %189 = vector.broadcast %3 : vector<32x1xf32> to vector<32x256xf32>
    %190 = arith.addf %188, %189 : vector<32x256xf32>
    %cst_71 = arith.constant 0.000000e+00 : f32
    %191 = vector.broadcast %cst_71 : f32 to vector<32x256xf32>
    %192 = arith.maximumf %190, %191 : vector<32x256xf32>
    %cst_72 = arith.constant dense<0.000000e+00> : vector<4x256xf32>
    %193 = tpu.matmul %4, %192, %cst_72 {dimension_numbers = #tpu.dot_dimension_numbers<[1], [0], [0], [1], [0, 0, 1, 1], [], []>} : vector<4x32xf32>, vector<32x256xf32>, vector<4x256xf32> -> vector<4x256xf32>
    %194 = vector.broadcast %5 : vector<4x1xf32> to vector<4x256xf32>
    %195 = arith.addf %193, %194 : vector<4x256xf32>
    %196 = vector.extract_strided_slice %195 {offsets = [0, 0], sizes = [1, 256], strides = [1, 1]} : vector<4x256xf32> to vector<1x256xf32>
    %cst_73 = arith.constant 0.000000e+00 : f32
    %197 = vector.broadcast %cst_73 : f32 to vector<1x256xf32>
    %198 = arith.maximumf %196, %197 : vector<1x256xf32>
    %199 = vector.extract_strided_slice %195 {offsets = [1, 0], sizes = [3, 256], strides = [1, 1]} : vector<4x256xf32> to vector<3x256xf32>
    %cst_74 = arith.constant 0.000000e+00 : f32
    %200 = vector.broadcast %cst_74 : f32 to vector<1x256xf32>
    %201 = arith.subf %200, %198 : vector<1x256xf32>
    %cst_75 = arith.constant 0.0967742204 : f32
    %202 = vector.broadcast %cst_75 : f32 to vector<1x256xf32>
    %203 = arith.mulf %201, %202 : vector<1x256xf32>
    %204 = math.exp %203 : vector<1x256xf32>
    %cst_76 = arith.constant 1.000000e+00 : f32
    %205 = vector.broadcast %cst_76 : f32 to vector<1x256xf32>
    %206 = arith.subf %205, %204 : vector<1x256xf32>
    %207 = arith.mulf %206, %184 : vector<1x256xf32>
    %208 = vector.broadcast %207 : vector<1x256xf32> to vector<3x256xf32>
    %209 = arith.mulf %208, %199 : vector<3x256xf32>
    %210 = arith.addf %175, %209 : vector<3x256xf32>
    %cst_77 = arith.constant 1.48387098 : f32
    %211 = vector.broadcast %cst_77 : f32 to vector<1x256xf32>
    %212 = arith.mulf %207, %211 : vector<1x256xf32>
    %213 = arith.addf %178, %212 : vector<1x256xf32>
    %214 = arith.addf %179, %207 : vector<1x256xf32>
    %cst_78 = arith.constant 1.000000e+00 : f32
    %215 = vector.broadcast %cst_78 : f32 to vector<1x256xf32>
    %216 = arith.subf %215, %206 : vector<1x256xf32>
    %cst_79 = arith.constant 1.000000e-10 : f32
    %217 = vector.broadcast %cst_79 : f32 to vector<1x256xf32>
    %218 = arith.addf %216, %217 : vector<1x256xf32>
    %219 = arith.mulf %184, %218 : vector<1x256xf32>
    %cst_80 = arith.constant 1.5806452 : f32
    %220 = vector.broadcast %cst_80 : f32 to vector<3x256xf32>
    %221 = arith.mulf %1, %220 : vector<3x256xf32>
    %222 = arith.addf %0, %221 : vector<3x256xf32>
    %cst_81 = arith.constant dense<0.000000e+00> : vector<32x256xf32>
    %223 = tpu.matmul %2, %222, %cst_81 {dimension_numbers = #tpu.dot_dimension_numbers<[1], [0], [0], [1], [0, 0, 1, 1], [], []>} : vector<32x3xf32>, vector<3x256xf32>, vector<32x256xf32> -> vector<32x256xf32>
    %224 = vector.broadcast %3 : vector<32x1xf32> to vector<32x256xf32>
    %225 = arith.addf %223, %224 : vector<32x256xf32>
    %cst_82 = arith.constant 0.000000e+00 : f32
    %226 = vector.broadcast %cst_82 : f32 to vector<32x256xf32>
    %227 = arith.maximumf %225, %226 : vector<32x256xf32>
    %cst_83 = arith.constant dense<0.000000e+00> : vector<4x256xf32>
    %228 = tpu.matmul %4, %227, %cst_83 {dimension_numbers = #tpu.dot_dimension_numbers<[1], [0], [0], [1], [0, 0, 1, 1], [], []>} : vector<4x32xf32>, vector<32x256xf32>, vector<4x256xf32> -> vector<4x256xf32>
    %229 = vector.broadcast %5 : vector<4x1xf32> to vector<4x256xf32>
    %230 = arith.addf %228, %229 : vector<4x256xf32>
    %231 = vector.extract_strided_slice %230 {offsets = [0, 0], sizes = [1, 256], strides = [1, 1]} : vector<4x256xf32> to vector<1x256xf32>
    %cst_84 = arith.constant 0.000000e+00 : f32
    %232 = vector.broadcast %cst_84 : f32 to vector<1x256xf32>
    %233 = arith.maximumf %231, %232 : vector<1x256xf32>
    %234 = vector.extract_strided_slice %230 {offsets = [1, 0], sizes = [3, 256], strides = [1, 1]} : vector<4x256xf32> to vector<3x256xf32>
    %cst_85 = arith.constant 0.000000e+00 : f32
    %235 = vector.broadcast %cst_85 : f32 to vector<1x256xf32>
    %236 = arith.subf %235, %233 : vector<1x256xf32>
    %cst_86 = arith.constant 9.677410e-02 : f32
    %237 = vector.broadcast %cst_86 : f32 to vector<1x256xf32>
    %238 = arith.mulf %236, %237 : vector<1x256xf32>
    %239 = math.exp %238 : vector<1x256xf32>
    %cst_87 = arith.constant 1.000000e+00 : f32
    %240 = vector.broadcast %cst_87 : f32 to vector<1x256xf32>
    %241 = arith.subf %240, %239 : vector<1x256xf32>
    %242 = arith.mulf %241, %219 : vector<1x256xf32>
    %243 = vector.broadcast %242 : vector<1x256xf32> to vector<3x256xf32>
    %244 = arith.mulf %243, %234 : vector<3x256xf32>
    %245 = arith.addf %210, %244 : vector<3x256xf32>
    %cst_88 = arith.constant 1.5806452 : f32
    %246 = vector.broadcast %cst_88 : f32 to vector<1x256xf32>
    %247 = arith.mulf %242, %246 : vector<1x256xf32>
    %248 = arith.addf %213, %247 : vector<1x256xf32>
    %249 = arith.addf %214, %242 : vector<1x256xf32>
    %cst_89 = arith.constant 1.000000e+00 : f32
    %250 = vector.broadcast %cst_89 : f32 to vector<1x256xf32>
    %251 = arith.subf %250, %241 : vector<1x256xf32>
    %cst_90 = arith.constant 1.000000e-10 : f32
    %252 = vector.broadcast %cst_90 : f32 to vector<1x256xf32>
    %253 = arith.addf %251, %252 : vector<1x256xf32>
    %254 = arith.mulf %219, %253 : vector<1x256xf32>
    %cst_91 = arith.constant 1.6774193 : f32
    %255 = vector.broadcast %cst_91 : f32 to vector<3x256xf32>
    %256 = arith.mulf %1, %255 : vector<3x256xf32>
    %257 = arith.addf %0, %256 : vector<3x256xf32>
    %cst_92 = arith.constant dense<0.000000e+00> : vector<32x256xf32>
    %258 = tpu.matmul %2, %257, %cst_92 {dimension_numbers = #tpu.dot_dimension_numbers<[1], [0], [0], [1], [0, 0, 1, 1], [], []>} : vector<32x3xf32>, vector<3x256xf32>, vector<32x256xf32> -> vector<32x256xf32>
    %259 = vector.broadcast %3 : vector<32x1xf32> to vector<32x256xf32>
    %260 = arith.addf %258, %259 : vector<32x256xf32>
    %cst_93 = arith.constant 0.000000e+00 : f32
    %261 = vector.broadcast %cst_93 : f32 to vector<32x256xf32>
    %262 = arith.maximumf %260, %261 : vector<32x256xf32>
    %cst_94 = arith.constant dense<0.000000e+00> : vector<4x256xf32>
    %263 = tpu.matmul %4, %262, %cst_94 {dimension_numbers = #tpu.dot_dimension_numbers<[1], [0], [0], [1], [0, 0, 1, 1], [], []>} : vector<4x32xf32>, vector<32x256xf32>, vector<4x256xf32> -> vector<4x256xf32>
    %264 = vector.broadcast %5 : vector<4x1xf32> to vector<4x256xf32>
    %265 = arith.addf %263, %264 : vector<4x256xf32>
    %266 = vector.extract_strided_slice %265 {offsets = [0, 0], sizes = [1, 256], strides = [1, 1]} : vector<4x256xf32> to vector<1x256xf32>
    %cst_95 = arith.constant 0.000000e+00 : f32
    %267 = vector.broadcast %cst_95 : f32 to vector<1x256xf32>
    %268 = arith.maximumf %266, %267 : vector<1x256xf32>
    %269 = vector.extract_strided_slice %265 {offsets = [1, 0], sizes = [3, 256], strides = [1, 1]} : vector<4x256xf32> to vector<3x256xf32>
    %cst_96 = arith.constant 0.000000e+00 : f32
    %270 = vector.broadcast %cst_96 : f32 to vector<1x256xf32>
    %271 = arith.subf %270, %268 : vector<1x256xf32>
    %cst_97 = arith.constant 0.0967742204 : f32
    %272 = vector.broadcast %cst_97 : f32 to vector<1x256xf32>
    %273 = arith.mulf %271, %272 : vector<1x256xf32>
    %274 = math.exp %273 : vector<1x256xf32>
    %cst_98 = arith.constant 1.000000e+00 : f32
    %275 = vector.broadcast %cst_98 : f32 to vector<1x256xf32>
    %276 = arith.subf %275, %274 : vector<1x256xf32>
    %277 = arith.mulf %276, %254 : vector<1x256xf32>
    %278 = vector.broadcast %277 : vector<1x256xf32> to vector<3x256xf32>
    %279 = arith.mulf %278, %269 : vector<3x256xf32>
    %280 = arith.addf %245, %279 : vector<3x256xf32>
    %cst_99 = arith.constant 1.6774193 : f32
    %281 = vector.broadcast %cst_99 : f32 to vector<1x256xf32>
    %282 = arith.mulf %277, %281 : vector<1x256xf32>
    %283 = arith.addf %248, %282 : vector<1x256xf32>
    %284 = arith.addf %249, %277 : vector<1x256xf32>
    %cst_100 = arith.constant 1.000000e+00 : f32
    %285 = vector.broadcast %cst_100 : f32 to vector<1x256xf32>
    %286 = arith.subf %285, %276 : vector<1x256xf32>
    %cst_101 = arith.constant 1.000000e-10 : f32
    %287 = vector.broadcast %cst_101 : f32 to vector<1x256xf32>
    %288 = arith.addf %286, %287 : vector<1x256xf32>
    %289 = arith.mulf %254, %288 : vector<1x256xf32>
    %cst_102 = arith.constant 1.77419353 : f32
    %290 = vector.broadcast %cst_102 : f32 to vector<3x256xf32>
    %291 = arith.mulf %1, %290 : vector<3x256xf32>
    %292 = arith.addf %0, %291 : vector<3x256xf32>
    %cst_103 = arith.constant dense<0.000000e+00> : vector<32x256xf32>
    %293 = tpu.matmul %2, %292, %cst_103 {dimension_numbers = #tpu.dot_dimension_numbers<[1], [0], [0], [1], [0, 0, 1, 1], [], []>} : vector<32x3xf32>, vector<3x256xf32>, vector<32x256xf32> -> vector<32x256xf32>
    %294 = vector.broadcast %3 : vector<32x1xf32> to vector<32x256xf32>
    %295 = arith.addf %293, %294 : vector<32x256xf32>
    %cst_104 = arith.constant 0.000000e+00 : f32
    %296 = vector.broadcast %cst_104 : f32 to vector<32x256xf32>
    %297 = arith.maximumf %295, %296 : vector<32x256xf32>
    %cst_105 = arith.constant dense<0.000000e+00> : vector<4x256xf32>
    %298 = tpu.matmul %4, %297, %cst_105 {dimension_numbers = #tpu.dot_dimension_numbers<[1], [0], [0], [1], [0, 0, 1, 1], [], []>} : vector<4x32xf32>, vector<32x256xf32>, vector<4x256xf32> -> vector<4x256xf32>
    %299 = vector.broadcast %5 : vector<4x1xf32> to vector<4x256xf32>
    %300 = arith.addf %298, %299 : vector<4x256xf32>
    %301 = vector.extract_strided_slice %300 {offsets = [0, 0], sizes = [1, 256], strides = [1, 1]} : vector<4x256xf32> to vector<1x256xf32>
    %cst_106 = arith.constant 0.000000e+00 : f32
    %302 = vector.broadcast %cst_106 : f32 to vector<1x256xf32>
    %303 = arith.maximumf %301, %302 : vector<1x256xf32>
    %304 = vector.extract_strided_slice %300 {offsets = [1, 0], sizes = [3, 256], strides = [1, 1]} : vector<4x256xf32> to vector<3x256xf32>
    %cst_107 = arith.constant 0.000000e+00 : f32
    %305 = vector.broadcast %cst_107 : f32 to vector<1x256xf32>
    %306 = arith.subf %305, %303 : vector<1x256xf32>
    %cst_108 = arith.constant 0.0967742204 : f32
    %307 = vector.broadcast %cst_108 : f32 to vector<1x256xf32>
    %308 = arith.mulf %306, %307 : vector<1x256xf32>
    %309 = math.exp %308 : vector<1x256xf32>
    %cst_109 = arith.constant 1.000000e+00 : f32
    %310 = vector.broadcast %cst_109 : f32 to vector<1x256xf32>
    %311 = arith.subf %310, %309 : vector<1x256xf32>
    %312 = arith.mulf %311, %289 : vector<1x256xf32>
    %313 = vector.broadcast %312 : vector<1x256xf32> to vector<3x256xf32>
    %314 = arith.mulf %313, %304 : vector<3x256xf32>
    %315 = arith.addf %280, %314 : vector<3x256xf32>
    %cst_110 = arith.constant 1.77419353 : f32
    %316 = vector.broadcast %cst_110 : f32 to vector<1x256xf32>
    %317 = arith.mulf %312, %316 : vector<1x256xf32>
    %318 = arith.addf %283, %317 : vector<1x256xf32>
    %319 = arith.addf %284, %312 : vector<1x256xf32>
    %cst_111 = arith.constant 1.000000e+00 : f32
    %320 = vector.broadcast %cst_111 : f32 to vector<1x256xf32>
    %321 = arith.subf %320, %311 : vector<1x256xf32>
    %cst_112 = arith.constant 1.000000e-10 : f32
    %322 = vector.broadcast %cst_112 : f32 to vector<1x256xf32>
    %323 = arith.addf %321, %322 : vector<1x256xf32>
    %324 = arith.mulf %289, %323 : vector<1x256xf32>
    %cst_113 = arith.constant 1.87096775 : f32
    %325 = vector.broadcast %cst_113 : f32 to vector<3x256xf32>
    %326 = arith.mulf %1, %325 : vector<3x256xf32>
    %327 = arith.addf %0, %326 : vector<3x256xf32>
    %cst_114 = arith.constant dense<0.000000e+00> : vector<32x256xf32>
    %328 = tpu.matmul %2, %327, %cst_114 {dimension_numbers = #tpu.dot_dimension_numbers<[1], [0], [0], [1], [0, 0, 1, 1], [], []>} : vector<32x3xf32>, vector<3x256xf32>, vector<32x256xf32> -> vector<32x256xf32>
    %329 = vector.broadcast %3 : vector<32x1xf32> to vector<32x256xf32>
    %330 = arith.addf %328, %329 : vector<32x256xf32>
    %cst_115 = arith.constant 0.000000e+00 : f32
    %331 = vector.broadcast %cst_115 : f32 to vector<32x256xf32>
    %332 = arith.maximumf %330, %331 : vector<32x256xf32>
    %cst_116 = arith.constant dense<0.000000e+00> : vector<4x256xf32>
    %333 = tpu.matmul %4, %332, %cst_116 {dimension_numbers = #tpu.dot_dimension_numbers<[1], [0], [0], [1], [0, 0, 1, 1], [], []>} : vector<4x32xf32>, vector<32x256xf32>, vector<4x256xf32> -> vector<4x256xf32>
    %334 = vector.broadcast %5 : vector<4x1xf32> to vector<4x256xf32>
    %335 = arith.addf %333, %334 : vector<4x256xf32>
    %336 = vector.extract_strided_slice %335 {offsets = [0, 0], sizes = [1, 256], strides = [1, 1]} : vector<4x256xf32> to vector<1x256xf32>
    %cst_117 = arith.constant 0.000000e+00 : f32
    %337 = vector.broadcast %cst_117 : f32 to vector<1x256xf32>
    %338 = arith.maximumf %336, %337 : vector<1x256xf32>
    %339 = vector.extract_strided_slice %335 {offsets = [1, 0], sizes = [3, 256], strides = [1, 1]} : vector<4x256xf32> to vector<3x256xf32>
    %cst_118 = arith.constant 0.000000e+00 : f32
    %340 = vector.broadcast %cst_118 : f32 to vector<1x256xf32>
    %341 = arith.subf %340, %338 : vector<1x256xf32>
    %cst_119 = arith.constant 0.0967742204 : f32
    %342 = vector.broadcast %cst_119 : f32 to vector<1x256xf32>
    %343 = arith.mulf %341, %342 : vector<1x256xf32>
    %344 = math.exp %343 : vector<1x256xf32>
    %cst_120 = arith.constant 1.000000e+00 : f32
    %345 = vector.broadcast %cst_120 : f32 to vector<1x256xf32>
    %346 = arith.subf %345, %344 : vector<1x256xf32>
    %347 = arith.mulf %346, %324 : vector<1x256xf32>
    %348 = vector.broadcast %347 : vector<1x256xf32> to vector<3x256xf32>
    %349 = arith.mulf %348, %339 : vector<3x256xf32>
    %350 = arith.addf %315, %349 : vector<3x256xf32>
    %cst_121 = arith.constant 1.87096775 : f32
    %351 = vector.broadcast %cst_121 : f32 to vector<1x256xf32>
    %352 = arith.mulf %347, %351 : vector<1x256xf32>
    %353 = arith.addf %318, %352 : vector<1x256xf32>
    %354 = arith.addf %319, %347 : vector<1x256xf32>
    %cst_122 = arith.constant 1.000000e+00 : f32
    %355 = vector.broadcast %cst_122 : f32 to vector<1x256xf32>
    %356 = arith.subf %355, %346 : vector<1x256xf32>
    %cst_123 = arith.constant 1.000000e-10 : f32
    %357 = vector.broadcast %cst_123 : f32 to vector<1x256xf32>
    %358 = arith.addf %356, %357 : vector<1x256xf32>
    %359 = arith.mulf %324, %358 : vector<1x256xf32>
    %cst_124 = arith.constant 1.96774197 : f32
    %360 = vector.broadcast %cst_124 : f32 to vector<3x256xf32>
    %361 = arith.mulf %1, %360 : vector<3x256xf32>
    %362 = arith.addf %0, %361 : vector<3x256xf32>
    %cst_125 = arith.constant dense<0.000000e+00> : vector<32x256xf32>
    %363 = tpu.matmul %2, %362, %cst_125 {dimension_numbers = #tpu.dot_dimension_numbers<[1], [0], [0], [1], [0, 0, 1, 1], [], []>} : vector<32x3xf32>, vector<3x256xf32>, vector<32x256xf32> -> vector<32x256xf32>
    %364 = vector.broadcast %3 : vector<32x1xf32> to vector<32x256xf32>
    %365 = arith.addf %363, %364 : vector<32x256xf32>
    %cst_126 = arith.constant 0.000000e+00 : f32
    %366 = vector.broadcast %cst_126 : f32 to vector<32x256xf32>
    %367 = arith.maximumf %365, %366 : vector<32x256xf32>
    %cst_127 = arith.constant dense<0.000000e+00> : vector<4x256xf32>
    %368 = tpu.matmul %4, %367, %cst_127 {dimension_numbers = #tpu.dot_dimension_numbers<[1], [0], [0], [1], [0, 0, 1, 1], [], []>} : vector<4x32xf32>, vector<32x256xf32>, vector<4x256xf32> -> vector<4x256xf32>
    %369 = vector.broadcast %5 : vector<4x1xf32> to vector<4x256xf32>
    %370 = arith.addf %368, %369 : vector<4x256xf32>
    %371 = vector.extract_strided_slice %370 {offsets = [0, 0], sizes = [1, 256], strides = [1, 1]} : vector<4x256xf32> to vector<1x256xf32>
    %cst_128 = arith.constant 0.000000e+00 : f32
    %372 = vector.broadcast %cst_128 : f32 to vector<1x256xf32>
    %373 = arith.maximumf %371, %372 : vector<1x256xf32>
    %374 = vector.extract_strided_slice %370 {offsets = [1, 0], sizes = [3, 256], strides = [1, 1]} : vector<4x256xf32> to vector<3x256xf32>
    %cst_129 = arith.constant 0.000000e+00 : f32
    %375 = vector.broadcast %cst_129 : f32 to vector<1x256xf32>
    %376 = arith.subf %375, %373 : vector<1x256xf32>
    %cst_130 = arith.constant 9.677410e-02 : f32
    %377 = vector.broadcast %cst_130 : f32 to vector<1x256xf32>
    %378 = arith.mulf %376, %377 : vector<1x256xf32>
    %379 = math.exp %378 : vector<1x256xf32>
    %cst_131 = arith.constant 1.000000e+00 : f32
    %380 = vector.broadcast %cst_131 : f32 to vector<1x256xf32>
    %381 = arith.subf %380, %379 : vector<1x256xf32>
    %382 = arith.mulf %381, %359 : vector<1x256xf32>
    %383 = vector.broadcast %382 : vector<1x256xf32> to vector<3x256xf32>
    %384 = arith.mulf %383, %374 : vector<3x256xf32>
    %385 = arith.addf %350, %384 : vector<3x256xf32>
    %cst_132 = arith.constant 1.96774197 : f32
    %386 = vector.broadcast %cst_132 : f32 to vector<1x256xf32>
    %387 = arith.mulf %382, %386 : vector<1x256xf32>
    %388 = arith.addf %353, %387 : vector<1x256xf32>
    %389 = arith.addf %354, %382 : vector<1x256xf32>
    %cst_133 = arith.constant 1.000000e+00 : f32
    %390 = vector.broadcast %cst_133 : f32 to vector<1x256xf32>
    %391 = arith.subf %390, %381 : vector<1x256xf32>
    %cst_134 = arith.constant 1.000000e-10 : f32
    %392 = vector.broadcast %cst_134 : f32 to vector<1x256xf32>
    %393 = arith.addf %391, %392 : vector<1x256xf32>
    %394 = arith.mulf %359, %393 : vector<1x256xf32>
    %cst_135 = arith.constant 2.06451607 : f32
    %395 = vector.broadcast %cst_135 : f32 to vector<3x256xf32>
    %396 = arith.mulf %1, %395 : vector<3x256xf32>
    %397 = arith.addf %0, %396 : vector<3x256xf32>
    %cst_136 = arith.constant dense<0.000000e+00> : vector<32x256xf32>
    %398 = tpu.matmul %2, %397, %cst_136 {dimension_numbers = #tpu.dot_dimension_numbers<[1], [0], [0], [1], [0, 0, 1, 1], [], []>} : vector<32x3xf32>, vector<3x256xf32>, vector<32x256xf32> -> vector<32x256xf32>
    %399 = vector.broadcast %3 : vector<32x1xf32> to vector<32x256xf32>
    %400 = arith.addf %398, %399 : vector<32x256xf32>
    %cst_137 = arith.constant 0.000000e+00 : f32
    %401 = vector.broadcast %cst_137 : f32 to vector<32x256xf32>
    %402 = arith.maximumf %400, %401 : vector<32x256xf32>
    %cst_138 = arith.constant dense<0.000000e+00> : vector<4x256xf32>
    %403 = tpu.matmul %4, %402, %cst_138 {dimension_numbers = #tpu.dot_dimension_numbers<[1], [0], [0], [1], [0, 0, 1, 1], [], []>} : vector<4x32xf32>, vector<32x256xf32>, vector<4x256xf32> -> vector<4x256xf32>
    %404 = vector.broadcast %5 : vector<4x1xf32> to vector<4x256xf32>
    %405 = arith.addf %403, %404 : vector<4x256xf32>
    %406 = vector.extract_strided_slice %405 {offsets = [0, 0], sizes = [1, 256], strides = [1, 1]} : vector<4x256xf32> to vector<1x256xf32>
    %cst_139 = arith.constant 0.000000e+00 : f32
    %407 = vector.broadcast %cst_139 : f32 to vector<1x256xf32>
    %408 = arith.maximumf %406, %407 : vector<1x256xf32>
    %409 = vector.extract_strided_slice %405 {offsets = [1, 0], sizes = [3, 256], strides = [1, 1]} : vector<4x256xf32> to vector<3x256xf32>
    %cst_140 = arith.constant 0.000000e+00 : f32
    %410 = vector.broadcast %cst_140 : f32 to vector<1x256xf32>
    %411 = arith.subf %410, %408 : vector<1x256xf32>
    %cst_141 = arith.constant 0.0967743396 : f32
    %412 = vector.broadcast %cst_141 : f32 to vector<1x256xf32>
    %413 = arith.mulf %411, %412 : vector<1x256xf32>
    %414 = math.exp %413 : vector<1x256xf32>
    %cst_142 = arith.constant 1.000000e+00 : f32
    %415 = vector.broadcast %cst_142 : f32 to vector<1x256xf32>
    %416 = arith.subf %415, %414 : vector<1x256xf32>
    %417 = arith.mulf %416, %394 : vector<1x256xf32>
    %418 = vector.broadcast %417 : vector<1x256xf32> to vector<3x256xf32>
    %419 = arith.mulf %418, %409 : vector<3x256xf32>
    %420 = arith.addf %385, %419 : vector<3x256xf32>
    %cst_143 = arith.constant 2.06451607 : f32
    %421 = vector.broadcast %cst_143 : f32 to vector<1x256xf32>
    %422 = arith.mulf %417, %421 : vector<1x256xf32>
    %423 = arith.addf %388, %422 : vector<1x256xf32>
    %424 = arith.addf %389, %417 : vector<1x256xf32>
    %cst_144 = arith.constant 1.000000e+00 : f32
    %425 = vector.broadcast %cst_144 : f32 to vector<1x256xf32>
    %426 = arith.subf %425, %416 : vector<1x256xf32>
    %cst_145 = arith.constant 1.000000e-10 : f32
    %427 = vector.broadcast %cst_145 : f32 to vector<1x256xf32>
    %428 = arith.addf %426, %427 : vector<1x256xf32>
    %429 = arith.mulf %394, %428 : vector<1x256xf32>
    %cst_146 = arith.constant 2.16129041 : f32
    %430 = vector.broadcast %cst_146 : f32 to vector<3x256xf32>
    %431 = arith.mulf %1, %430 : vector<3x256xf32>
    %432 = arith.addf %0, %431 : vector<3x256xf32>
    %cst_147 = arith.constant dense<0.000000e+00> : vector<32x256xf32>
    %433 = tpu.matmul %2, %432, %cst_147 {dimension_numbers = #tpu.dot_dimension_numbers<[1], [0], [0], [1], [0, 0, 1, 1], [], []>} : vector<32x3xf32>, vector<3x256xf32>, vector<32x256xf32> -> vector<32x256xf32>
    %434 = vector.broadcast %3 : vector<32x1xf32> to vector<32x256xf32>
    %435 = arith.addf %433, %434 : vector<32x256xf32>
    %cst_148 = arith.constant 0.000000e+00 : f32
    %436 = vector.broadcast %cst_148 : f32 to vector<32x256xf32>
    %437 = arith.maximumf %435, %436 : vector<32x256xf32>
    %cst_149 = arith.constant dense<0.000000e+00> : vector<4x256xf32>
    %438 = tpu.matmul %4, %437, %cst_149 {dimension_numbers = #tpu.dot_dimension_numbers<[1], [0], [0], [1], [0, 0, 1, 1], [], []>} : vector<4x32xf32>, vector<32x256xf32>, vector<4x256xf32> -> vector<4x256xf32>
    %439 = vector.broadcast %5 : vector<4x1xf32> to vector<4x256xf32>
    %440 = arith.addf %438, %439 : vector<4x256xf32>
    %441 = vector.extract_strided_slice %440 {offsets = [0, 0], sizes = [1, 256], strides = [1, 1]} : vector<4x256xf32> to vector<1x256xf32>
    %cst_150 = arith.constant 0.000000e+00 : f32
    %442 = vector.broadcast %cst_150 : f32 to vector<1x256xf32>
    %443 = arith.maximumf %441, %442 : vector<1x256xf32>
    %444 = vector.extract_strided_slice %440 {offsets = [1, 0], sizes = [3, 256], strides = [1, 1]} : vector<4x256xf32> to vector<3x256xf32>
    %cst_151 = arith.constant 0.000000e+00 : f32
    %445 = vector.broadcast %cst_151 : f32 to vector<1x256xf32>
    %446 = arith.subf %445, %443 : vector<1x256xf32>
    %cst_152 = arith.constant 9.677410e-02 : f32
    %447 = vector.broadcast %cst_152 : f32 to vector<1x256xf32>
    %448 = arith.mulf %446, %447 : vector<1x256xf32>
    %449 = math.exp %448 : vector<1x256xf32>
    %cst_153 = arith.constant 1.000000e+00 : f32
    %450 = vector.broadcast %cst_153 : f32 to vector<1x256xf32>
    %451 = arith.subf %450, %449 : vector<1x256xf32>
    %452 = arith.mulf %451, %429 : vector<1x256xf32>
    %453 = vector.broadcast %452 : vector<1x256xf32> to vector<3x256xf32>
    %454 = arith.mulf %453, %444 : vector<3x256xf32>
    %455 = arith.addf %420, %454 : vector<3x256xf32>
    %cst_154 = arith.constant 2.16129041 : f32
    %456 = vector.broadcast %cst_154 : f32 to vector<1x256xf32>
    %457 = arith.mulf %452, %456 : vector<1x256xf32>
    %458 = arith.addf %423, %457 : vector<1x256xf32>
    %459 = arith.addf %424, %452 : vector<1x256xf32>
    %cst_155 = arith.constant 1.000000e+00 : f32
    %460 = vector.broadcast %cst_155 : f32 to vector<1x256xf32>
    %461 = arith.subf %460, %451 : vector<1x256xf32>
    %cst_156 = arith.constant 1.000000e-10 : f32
    %462 = vector.broadcast %cst_156 : f32 to vector<1x256xf32>
    %463 = arith.addf %461, %462 : vector<1x256xf32>
    %464 = arith.mulf %429, %463 : vector<1x256xf32>
    %cst_157 = arith.constant 2.25806451 : f32
    %465 = vector.broadcast %cst_157 : f32 to vector<3x256xf32>
    %466 = arith.mulf %1, %465 : vector<3x256xf32>
    %467 = arith.addf %0, %466 : vector<3x256xf32>
    %cst_158 = arith.constant dense<0.000000e+00> : vector<32x256xf32>
    %468 = tpu.matmul %2, %467, %cst_158 {dimension_numbers = #tpu.dot_dimension_numbers<[1], [0], [0], [1], [0, 0, 1, 1], [], []>} : vector<32x3xf32>, vector<3x256xf32>, vector<32x256xf32> -> vector<32x256xf32>
    %469 = vector.broadcast %3 : vector<32x1xf32> to vector<32x256xf32>
    %470 = arith.addf %468, %469 : vector<32x256xf32>
    %cst_159 = arith.constant 0.000000e+00 : f32
    %471 = vector.broadcast %cst_159 : f32 to vector<32x256xf32>
    %472 = arith.maximumf %470, %471 : vector<32x256xf32>
    %cst_160 = arith.constant dense<0.000000e+00> : vector<4x256xf32>
    %473 = tpu.matmul %4, %472, %cst_160 {dimension_numbers = #tpu.dot_dimension_numbers<[1], [0], [0], [1], [0, 0, 1, 1], [], []>} : vector<4x32xf32>, vector<32x256xf32>, vector<4x256xf32> -> vector<4x256xf32>
    %474 = vector.broadcast %5 : vector<4x1xf32> to vector<4x256xf32>
    %475 = arith.addf %473, %474 : vector<4x256xf32>
    %476 = vector.extract_strided_slice %475 {offsets = [0, 0], sizes = [1, 256], strides = [1, 1]} : vector<4x256xf32> to vector<1x256xf32>
    %cst_161 = arith.constant 0.000000e+00 : f32
    %477 = vector.broadcast %cst_161 : f32 to vector<1x256xf32>
    %478 = arith.maximumf %476, %477 : vector<1x256xf32>
    %479 = vector.extract_strided_slice %475 {offsets = [1, 0], sizes = [3, 256], strides = [1, 1]} : vector<4x256xf32> to vector<3x256xf32>
    %cst_162 = arith.constant 0.000000e+00 : f32
    %480 = vector.broadcast %cst_162 : f32 to vector<1x256xf32>
    %481 = arith.subf %480, %478 : vector<1x256xf32>
    %cst_163 = arith.constant 9.677410e-02 : f32
    %482 = vector.broadcast %cst_163 : f32 to vector<1x256xf32>
    %483 = arith.mulf %481, %482 : vector<1x256xf32>
    %484 = math.exp %483 : vector<1x256xf32>
    %cst_164 = arith.constant 1.000000e+00 : f32
    %485 = vector.broadcast %cst_164 : f32 to vector<1x256xf32>
    %486 = arith.subf %485, %484 : vector<1x256xf32>
    %487 = arith.mulf %486, %464 : vector<1x256xf32>
    %488 = vector.broadcast %487 : vector<1x256xf32> to vector<3x256xf32>
    %489 = arith.mulf %488, %479 : vector<3x256xf32>
    %490 = arith.addf %455, %489 : vector<3x256xf32>
    %cst_165 = arith.constant 2.25806451 : f32
    %491 = vector.broadcast %cst_165 : f32 to vector<1x256xf32>
    %492 = arith.mulf %487, %491 : vector<1x256xf32>
    %493 = arith.addf %458, %492 : vector<1x256xf32>
    %494 = arith.addf %459, %487 : vector<1x256xf32>
    %cst_166 = arith.constant 1.000000e+00 : f32
    %495 = vector.broadcast %cst_166 : f32 to vector<1x256xf32>
    %496 = arith.subf %495, %486 : vector<1x256xf32>
    %cst_167 = arith.constant 1.000000e-10 : f32
    %497 = vector.broadcast %cst_167 : f32 to vector<1x256xf32>
    %498 = arith.addf %496, %497 : vector<1x256xf32>
    %499 = arith.mulf %464, %498 : vector<1x256xf32>
    %cst_168 = arith.constant 2.35483861 : f32
    %500 = vector.broadcast %cst_168 : f32 to vector<3x256xf32>
    %501 = arith.mulf %1, %500 : vector<3x256xf32>
    %502 = arith.addf %0, %501 : vector<3x256xf32>
    %cst_169 = arith.constant dense<0.000000e+00> : vector<32x256xf32>
    %503 = tpu.matmul %2, %502, %cst_169 {dimension_numbers = #tpu.dot_dimension_numbers<[1], [0], [0], [1], [0, 0, 1, 1], [], []>} : vector<32x3xf32>, vector<3x256xf32>, vector<32x256xf32> -> vector<32x256xf32>
    %504 = vector.broadcast %3 : vector<32x1xf32> to vector<32x256xf32>
    %505 = arith.addf %503, %504 : vector<32x256xf32>
    %cst_170 = arith.constant 0.000000e+00 : f32
    %506 = vector.broadcast %cst_170 : f32 to vector<32x256xf32>
    %507 = arith.maximumf %505, %506 : vector<32x256xf32>
    %cst_171 = arith.constant dense<0.000000e+00> : vector<4x256xf32>
    %508 = tpu.matmul %4, %507, %cst_171 {dimension_numbers = #tpu.dot_dimension_numbers<[1], [0], [0], [1], [0, 0, 1, 1], [], []>} : vector<4x32xf32>, vector<32x256xf32>, vector<4x256xf32> -> vector<4x256xf32>
    %509 = vector.broadcast %5 : vector<4x1xf32> to vector<4x256xf32>
    %510 = arith.addf %508, %509 : vector<4x256xf32>
    %511 = vector.extract_strided_slice %510 {offsets = [0, 0], sizes = [1, 256], strides = [1, 1]} : vector<4x256xf32> to vector<1x256xf32>
    %cst_172 = arith.constant 0.000000e+00 : f32
    %512 = vector.broadcast %cst_172 : f32 to vector<1x256xf32>
    %513 = arith.maximumf %511, %512 : vector<1x256xf32>
    %514 = vector.extract_strided_slice %510 {offsets = [1, 0], sizes = [3, 256], strides = [1, 1]} : vector<4x256xf32> to vector<3x256xf32>
    %cst_173 = arith.constant 0.000000e+00 : f32
    %515 = vector.broadcast %cst_173 : f32 to vector<1x256xf32>
    %516 = arith.subf %515, %513 : vector<1x256xf32>
    %cst_174 = arith.constant 0.0967743396 : f32
    %517 = vector.broadcast %cst_174 : f32 to vector<1x256xf32>
    %518 = arith.mulf %516, %517 : vector<1x256xf32>
    %519 = math.exp %518 : vector<1x256xf32>
    %cst_175 = arith.constant 1.000000e+00 : f32
    %520 = vector.broadcast %cst_175 : f32 to vector<1x256xf32>
    %521 = arith.subf %520, %519 : vector<1x256xf32>
    %522 = arith.mulf %521, %499 : vector<1x256xf32>
    %523 = vector.broadcast %522 : vector<1x256xf32> to vector<3x256xf32>
    %524 = arith.mulf %523, %514 : vector<3x256xf32>
    %525 = arith.addf %490, %524 : vector<3x256xf32>
    %cst_176 = arith.constant 2.35483861 : f32
    %526 = vector.broadcast %cst_176 : f32 to vector<1x256xf32>
    %527 = arith.mulf %522, %526 : vector<1x256xf32>
    %528 = arith.addf %493, %527 : vector<1x256xf32>
    %529 = arith.addf %494, %522 : vector<1x256xf32>
    %cst_177 = arith.constant 1.000000e+00 : f32
    %530 = vector.broadcast %cst_177 : f32 to vector<1x256xf32>
    %531 = arith.subf %530, %521 : vector<1x256xf32>
    %cst_178 = arith.constant 1.000000e-10 : f32
    %532 = vector.broadcast %cst_178 : f32 to vector<1x256xf32>
    %533 = arith.addf %531, %532 : vector<1x256xf32>
    %534 = arith.mulf %499, %533 : vector<1x256xf32>
    %cst_179 = arith.constant 2.45161295 : f32
    %535 = vector.broadcast %cst_179 : f32 to vector<3x256xf32>
    %536 = arith.mulf %1, %535 : vector<3x256xf32>
    %537 = arith.addf %0, %536 : vector<3x256xf32>
    %cst_180 = arith.constant dense<0.000000e+00> : vector<32x256xf32>
    %538 = tpu.matmul %2, %537, %cst_180 {dimension_numbers = #tpu.dot_dimension_numbers<[1], [0], [0], [1], [0, 0, 1, 1], [], []>} : vector<32x3xf32>, vector<3x256xf32>, vector<32x256xf32> -> vector<32x256xf32>
    %539 = vector.broadcast %3 : vector<32x1xf32> to vector<32x256xf32>
    %540 = arith.addf %538, %539 : vector<32x256xf32>
    %cst_181 = arith.constant 0.000000e+00 : f32
    %541 = vector.broadcast %cst_181 : f32 to vector<32x256xf32>
    %542 = arith.maximumf %540, %541 : vector<32x256xf32>
    %cst_182 = arith.constant dense<0.000000e+00> : vector<4x256xf32>
    %543 = tpu.matmul %4, %542, %cst_182 {dimension_numbers = #tpu.dot_dimension_numbers<[1], [0], [0], [1], [0, 0, 1, 1], [], []>} : vector<4x32xf32>, vector<32x256xf32>, vector<4x256xf32> -> vector<4x256xf32>
    %544 = vector.broadcast %5 : vector<4x1xf32> to vector<4x256xf32>
    %545 = arith.addf %543, %544 : vector<4x256xf32>
    %546 = vector.extract_strided_slice %545 {offsets = [0, 0], sizes = [1, 256], strides = [1, 1]} : vector<4x256xf32> to vector<1x256xf32>
    %cst_183 = arith.constant 0.000000e+00 : f32
    %547 = vector.broadcast %cst_183 : f32 to vector<1x256xf32>
    %548 = arith.maximumf %546, %547 : vector<1x256xf32>
    %549 = vector.extract_strided_slice %545 {offsets = [1, 0], sizes = [3, 256], strides = [1, 1]} : vector<4x256xf32> to vector<3x256xf32>
    %cst_184 = arith.constant 0.000000e+00 : f32
    %550 = vector.broadcast %cst_184 : f32 to vector<1x256xf32>
    %551 = arith.subf %550, %548 : vector<1x256xf32>
    %cst_185 = arith.constant 9.677410e-02 : f32
    %552 = vector.broadcast %cst_185 : f32 to vector<1x256xf32>
    %553 = arith.mulf %551, %552 : vector<1x256xf32>
    %554 = math.exp %553 : vector<1x256xf32>
    %cst_186 = arith.constant 1.000000e+00 : f32
    %555 = vector.broadcast %cst_186 : f32 to vector<1x256xf32>
    %556 = arith.subf %555, %554 : vector<1x256xf32>
    %557 = arith.mulf %556, %534 : vector<1x256xf32>
    %558 = vector.broadcast %557 : vector<1x256xf32> to vector<3x256xf32>
    %559 = arith.mulf %558, %549 : vector<3x256xf32>
    %560 = arith.addf %525, %559 : vector<3x256xf32>
    %cst_187 = arith.constant 2.45161295 : f32
    %561 = vector.broadcast %cst_187 : f32 to vector<1x256xf32>
    %562 = arith.mulf %557, %561 : vector<1x256xf32>
    %563 = arith.addf %528, %562 : vector<1x256xf32>
    %564 = arith.addf %529, %557 : vector<1x256xf32>
    %cst_188 = arith.constant 1.000000e+00 : f32
    %565 = vector.broadcast %cst_188 : f32 to vector<1x256xf32>
    %566 = arith.subf %565, %556 : vector<1x256xf32>
    %cst_189 = arith.constant 1.000000e-10 : f32
    %567 = vector.broadcast %cst_189 : f32 to vector<1x256xf32>
    %568 = arith.addf %566, %567 : vector<1x256xf32>
    %569 = arith.mulf %534, %568 : vector<1x256xf32>
    %cst_190 = arith.constant 2.54838705 : f32
    %570 = vector.broadcast %cst_190 : f32 to vector<3x256xf32>
    %571 = arith.mulf %1, %570 : vector<3x256xf32>
    %572 = arith.addf %0, %571 : vector<3x256xf32>
    %cst_191 = arith.constant dense<0.000000e+00> : vector<32x256xf32>
    %573 = tpu.matmul %2, %572, %cst_191 {dimension_numbers = #tpu.dot_dimension_numbers<[1], [0], [0], [1], [0, 0, 1, 1], [], []>} : vector<32x3xf32>, vector<3x256xf32>, vector<32x256xf32> -> vector<32x256xf32>
    %574 = vector.broadcast %3 : vector<32x1xf32> to vector<32x256xf32>
    %575 = arith.addf %573, %574 : vector<32x256xf32>
    %cst_192 = arith.constant 0.000000e+00 : f32
    %576 = vector.broadcast %cst_192 : f32 to vector<32x256xf32>
    %577 = arith.maximumf %575, %576 : vector<32x256xf32>
    %cst_193 = arith.constant dense<0.000000e+00> : vector<4x256xf32>
    %578 = tpu.matmul %4, %577, %cst_193 {dimension_numbers = #tpu.dot_dimension_numbers<[1], [0], [0], [1], [0, 0, 1, 1], [], []>} : vector<4x32xf32>, vector<32x256xf32>, vector<4x256xf32> -> vector<4x256xf32>
    %579 = vector.broadcast %5 : vector<4x1xf32> to vector<4x256xf32>
    %580 = arith.addf %578, %579 : vector<4x256xf32>
    %581 = vector.extract_strided_slice %580 {offsets = [0, 0], sizes = [1, 256], strides = [1, 1]} : vector<4x256xf32> to vector<1x256xf32>
    %cst_194 = arith.constant 0.000000e+00 : f32
    %582 = vector.broadcast %cst_194 : f32 to vector<1x256xf32>
    %583 = arith.maximumf %581, %582 : vector<1x256xf32>
    %584 = vector.extract_strided_slice %580 {offsets = [1, 0], sizes = [3, 256], strides = [1, 1]} : vector<4x256xf32> to vector<3x256xf32>
    %cst_195 = arith.constant 0.000000e+00 : f32
    %585 = vector.broadcast %cst_195 : f32 to vector<1x256xf32>
    %586 = arith.subf %585, %583 : vector<1x256xf32>
    %cst_196 = arith.constant 0.0967743396 : f32
    %587 = vector.broadcast %cst_196 : f32 to vector<1x256xf32>
    %588 = arith.mulf %586, %587 : vector<1x256xf32>
    %589 = math.exp %588 : vector<1x256xf32>
    %cst_197 = arith.constant 1.000000e+00 : f32
    %590 = vector.broadcast %cst_197 : f32 to vector<1x256xf32>
    %591 = arith.subf %590, %589 : vector<1x256xf32>
    %592 = arith.mulf %591, %569 : vector<1x256xf32>
    %593 = vector.broadcast %592 : vector<1x256xf32> to vector<3x256xf32>
    %594 = arith.mulf %593, %584 : vector<3x256xf32>
    %595 = arith.addf %560, %594 : vector<3x256xf32>
    %cst_198 = arith.constant 2.54838705 : f32
    %596 = vector.broadcast %cst_198 : f32 to vector<1x256xf32>
    %597 = arith.mulf %592, %596 : vector<1x256xf32>
    %598 = arith.addf %563, %597 : vector<1x256xf32>
    %599 = arith.addf %564, %592 : vector<1x256xf32>
    %cst_199 = arith.constant 1.000000e+00 : f32
    %600 = vector.broadcast %cst_199 : f32 to vector<1x256xf32>
    %601 = arith.subf %600, %591 : vector<1x256xf32>
    %cst_200 = arith.constant 1.000000e-10 : f32
    %602 = vector.broadcast %cst_200 : f32 to vector<1x256xf32>
    %603 = arith.addf %601, %602 : vector<1x256xf32>
    %604 = arith.mulf %569, %603 : vector<1x256xf32>
    %cst_201 = arith.constant 2.64516139 : f32
    %605 = vector.broadcast %cst_201 : f32 to vector<3x256xf32>
    %606 = arith.mulf %1, %605 : vector<3x256xf32>
    %607 = arith.addf %0, %606 : vector<3x256xf32>
    %cst_202 = arith.constant dense<0.000000e+00> : vector<32x256xf32>
    %608 = tpu.matmul %2, %607, %cst_202 {dimension_numbers = #tpu.dot_dimension_numbers<[1], [0], [0], [1], [0, 0, 1, 1], [], []>} : vector<32x3xf32>, vector<3x256xf32>, vector<32x256xf32> -> vector<32x256xf32>
    %609 = vector.broadcast %3 : vector<32x1xf32> to vector<32x256xf32>
    %610 = arith.addf %608, %609 : vector<32x256xf32>
    %cst_203 = arith.constant 0.000000e+00 : f32
    %611 = vector.broadcast %cst_203 : f32 to vector<32x256xf32>
    %612 = arith.maximumf %610, %611 : vector<32x256xf32>
    %cst_204 = arith.constant dense<0.000000e+00> : vector<4x256xf32>
    %613 = tpu.matmul %4, %612, %cst_204 {dimension_numbers = #tpu.dot_dimension_numbers<[1], [0], [0], [1], [0, 0, 1, 1], [], []>} : vector<4x32xf32>, vector<32x256xf32>, vector<4x256xf32> -> vector<4x256xf32>
    %614 = vector.broadcast %5 : vector<4x1xf32> to vector<4x256xf32>
    %615 = arith.addf %613, %614 : vector<4x256xf32>
    %616 = vector.extract_strided_slice %615 {offsets = [0, 0], sizes = [1, 256], strides = [1, 1]} : vector<4x256xf32> to vector<1x256xf32>
    %cst_205 = arith.constant 0.000000e+00 : f32
    %617 = vector.broadcast %cst_205 : f32 to vector<1x256xf32>
    %618 = arith.maximumf %616, %617 : vector<1x256xf32>
    %619 = vector.extract_strided_slice %615 {offsets = [1, 0], sizes = [3, 256], strides = [1, 1]} : vector<4x256xf32> to vector<3x256xf32>
    %cst_206 = arith.constant 0.000000e+00 : f32
    %620 = vector.broadcast %cst_206 : f32 to vector<1x256xf32>
    %621 = arith.subf %620, %618 : vector<1x256xf32>
    %cst_207 = arith.constant 9.677410e-02 : f32
    %622 = vector.broadcast %cst_207 : f32 to vector<1x256xf32>
    %623 = arith.mulf %621, %622 : vector<1x256xf32>
    %624 = math.exp %623 : vector<1x256xf32>
    %cst_208 = arith.constant 1.000000e+00 : f32
    %625 = vector.broadcast %cst_208 : f32 to vector<1x256xf32>
    %626 = arith.subf %625, %624 : vector<1x256xf32>
    %627 = arith.mulf %626, %604 : vector<1x256xf32>
    %628 = vector.broadcast %627 : vector<1x256xf32> to vector<3x256xf32>
    %629 = arith.mulf %628, %619 : vector<3x256xf32>
    %630 = arith.addf %595, %629 : vector<3x256xf32>
    %cst_209 = arith.constant 2.64516139 : f32
    %631 = vector.broadcast %cst_209 : f32 to vector<1x256xf32>
    %632 = arith.mulf %627, %631 : vector<1x256xf32>
    %633 = arith.addf %598, %632 : vector<1x256xf32>
    %634 = arith.addf %599, %627 : vector<1x256xf32>
    %cst_210 = arith.constant 1.000000e+00 : f32
    %635 = vector.broadcast %cst_210 : f32 to vector<1x256xf32>
    %636 = arith.subf %635, %626 : vector<1x256xf32>
    %cst_211 = arith.constant 1.000000e-10 : f32
    %637 = vector.broadcast %cst_211 : f32 to vector<1x256xf32>
    %638 = arith.addf %636, %637 : vector<1x256xf32>
    %639 = arith.mulf %604, %638 : vector<1x256xf32>
    %cst_212 = arith.constant 2.74193549 : f32
    %640 = vector.broadcast %cst_212 : f32 to vector<3x256xf32>
    %641 = arith.mulf %1, %640 : vector<3x256xf32>
    %642 = arith.addf %0, %641 : vector<3x256xf32>
    %cst_213 = arith.constant dense<0.000000e+00> : vector<32x256xf32>
    %643 = tpu.matmul %2, %642, %cst_213 {dimension_numbers = #tpu.dot_dimension_numbers<[1], [0], [0], [1], [0, 0, 1, 1], [], []>} : vector<32x3xf32>, vector<3x256xf32>, vector<32x256xf32> -> vector<32x256xf32>
    %644 = vector.broadcast %3 : vector<32x1xf32> to vector<32x256xf32>
    %645 = arith.addf %643, %644 : vector<32x256xf32>
    %cst_214 = arith.constant 0.000000e+00 : f32
    %646 = vector.broadcast %cst_214 : f32 to vector<32x256xf32>
    %647 = arith.maximumf %645, %646 : vector<32x256xf32>
    %cst_215 = arith.constant dense<0.000000e+00> : vector<4x256xf32>
    %648 = tpu.matmul %4, %647, %cst_215 {dimension_numbers = #tpu.dot_dimension_numbers<[1], [0], [0], [1], [0, 0, 1, 1], [], []>} : vector<4x32xf32>, vector<32x256xf32>, vector<4x256xf32> -> vector<4x256xf32>
    %649 = vector.broadcast %5 : vector<4x1xf32> to vector<4x256xf32>
    %650 = arith.addf %648, %649 : vector<4x256xf32>
    %651 = vector.extract_strided_slice %650 {offsets = [0, 0], sizes = [1, 256], strides = [1, 1]} : vector<4x256xf32> to vector<1x256xf32>
    %cst_216 = arith.constant 0.000000e+00 : f32
    %652 = vector.broadcast %cst_216 : f32 to vector<1x256xf32>
    %653 = arith.maximumf %651, %652 : vector<1x256xf32>
    %654 = vector.extract_strided_slice %650 {offsets = [1, 0], sizes = [3, 256], strides = [1, 1]} : vector<4x256xf32> to vector<3x256xf32>
    %cst_217 = arith.constant 0.000000e+00 : f32
    %655 = vector.broadcast %cst_217 : f32 to vector<1x256xf32>
    %656 = arith.subf %655, %653 : vector<1x256xf32>
    %cst_218 = arith.constant 9.677410e-02 : f32
    %657 = vector.broadcast %cst_218 : f32 to vector<1x256xf32>
    %658 = arith.mulf %656, %657 : vector<1x256xf32>
    %659 = math.exp %658 : vector<1x256xf32>
    %cst_219 = arith.constant 1.000000e+00 : f32
    %660 = vector.broadcast %cst_219 : f32 to vector<1x256xf32>
    %661 = arith.subf %660, %659 : vector<1x256xf32>
    %662 = arith.mulf %661, %639 : vector<1x256xf32>
    %663 = vector.broadcast %662 : vector<1x256xf32> to vector<3x256xf32>
    %664 = arith.mulf %663, %654 : vector<3x256xf32>
    %665 = arith.addf %630, %664 : vector<3x256xf32>
    %cst_220 = arith.constant 2.74193549 : f32
    %666 = vector.broadcast %cst_220 : f32 to vector<1x256xf32>
    %667 = arith.mulf %662, %666 : vector<1x256xf32>
    %668 = arith.addf %633, %667 : vector<1x256xf32>
    %669 = arith.addf %634, %662 : vector<1x256xf32>
    %cst_221 = arith.constant 1.000000e+00 : f32
    %670 = vector.broadcast %cst_221 : f32 to vector<1x256xf32>
    %671 = arith.subf %670, %661 : vector<1x256xf32>
    %cst_222 = arith.constant 1.000000e-10 : f32
    %672 = vector.broadcast %cst_222 : f32 to vector<1x256xf32>
    %673 = arith.addf %671, %672 : vector<1x256xf32>
    %674 = arith.mulf %639, %673 : vector<1x256xf32>
    %cst_223 = arith.constant 2.83870959 : f32
    %675 = vector.broadcast %cst_223 : f32 to vector<3x256xf32>
    %676 = arith.mulf %1, %675 : vector<3x256xf32>
    %677 = arith.addf %0, %676 : vector<3x256xf32>
    %cst_224 = arith.constant dense<0.000000e+00> : vector<32x256xf32>
    %678 = tpu.matmul %2, %677, %cst_224 {dimension_numbers = #tpu.dot_dimension_numbers<[1], [0], [0], [1], [0, 0, 1, 1], [], []>} : vector<32x3xf32>, vector<3x256xf32>, vector<32x256xf32> -> vector<32x256xf32>
    %679 = vector.broadcast %3 : vector<32x1xf32> to vector<32x256xf32>
    %680 = arith.addf %678, %679 : vector<32x256xf32>
    %cst_225 = arith.constant 0.000000e+00 : f32
    %681 = vector.broadcast %cst_225 : f32 to vector<32x256xf32>
    %682 = arith.maximumf %680, %681 : vector<32x256xf32>
    %cst_226 = arith.constant dense<0.000000e+00> : vector<4x256xf32>
    %683 = tpu.matmul %4, %682, %cst_226 {dimension_numbers = #tpu.dot_dimension_numbers<[1], [0], [0], [1], [0, 0, 1, 1], [], []>} : vector<4x32xf32>, vector<32x256xf32>, vector<4x256xf32> -> vector<4x256xf32>
    %684 = vector.broadcast %5 : vector<4x1xf32> to vector<4x256xf32>
    %685 = arith.addf %683, %684 : vector<4x256xf32>
    %686 = vector.extract_strided_slice %685 {offsets = [0, 0], sizes = [1, 256], strides = [1, 1]} : vector<4x256xf32> to vector<1x256xf32>
    %cst_227 = arith.constant 0.000000e+00 : f32
    %687 = vector.broadcast %cst_227 : f32 to vector<1x256xf32>
    %688 = arith.maximumf %686, %687 : vector<1x256xf32>
    %689 = vector.extract_strided_slice %685 {offsets = [1, 0], sizes = [3, 256], strides = [1, 1]} : vector<4x256xf32> to vector<3x256xf32>
    %cst_228 = arith.constant 0.000000e+00 : f32
    %690 = vector.broadcast %cst_228 : f32 to vector<1x256xf32>
    %691 = arith.subf %690, %688 : vector<1x256xf32>
    %cst_229 = arith.constant 0.0967743396 : f32
    %692 = vector.broadcast %cst_229 : f32 to vector<1x256xf32>
    %693 = arith.mulf %691, %692 : vector<1x256xf32>
    %694 = math.exp %693 : vector<1x256xf32>
    %cst_230 = arith.constant 1.000000e+00 : f32
    %695 = vector.broadcast %cst_230 : f32 to vector<1x256xf32>
    %696 = arith.subf %695, %694 : vector<1x256xf32>
    %697 = arith.mulf %696, %674 : vector<1x256xf32>
    %698 = vector.broadcast %697 : vector<1x256xf32> to vector<3x256xf32>
    %699 = arith.mulf %698, %689 : vector<3x256xf32>
    %700 = arith.addf %665, %699 : vector<3x256xf32>
    %cst_231 = arith.constant 2.83870959 : f32
    %701 = vector.broadcast %cst_231 : f32 to vector<1x256xf32>
    %702 = arith.mulf %697, %701 : vector<1x256xf32>
    %703 = arith.addf %668, %702 : vector<1x256xf32>
    %704 = arith.addf %669, %697 : vector<1x256xf32>
    %cst_232 = arith.constant 1.000000e+00 : f32
    %705 = vector.broadcast %cst_232 : f32 to vector<1x256xf32>
    %706 = arith.subf %705, %696 : vector<1x256xf32>
    %cst_233 = arith.constant 1.000000e-10 : f32
    %707 = vector.broadcast %cst_233 : f32 to vector<1x256xf32>
    %708 = arith.addf %706, %707 : vector<1x256xf32>
    %709 = arith.mulf %674, %708 : vector<1x256xf32>
    %cst_234 = arith.constant 2.93548393 : f32
    %710 = vector.broadcast %cst_234 : f32 to vector<3x256xf32>
    %711 = arith.mulf %1, %710 : vector<3x256xf32>
    %712 = arith.addf %0, %711 : vector<3x256xf32>
    %cst_235 = arith.constant dense<0.000000e+00> : vector<32x256xf32>
    %713 = tpu.matmul %2, %712, %cst_235 {dimension_numbers = #tpu.dot_dimension_numbers<[1], [0], [0], [1], [0, 0, 1, 1], [], []>} : vector<32x3xf32>, vector<3x256xf32>, vector<32x256xf32> -> vector<32x256xf32>
    %714 = vector.broadcast %3 : vector<32x1xf32> to vector<32x256xf32>
    %715 = arith.addf %713, %714 : vector<32x256xf32>
    %cst_236 = arith.constant 0.000000e+00 : f32
    %716 = vector.broadcast %cst_236 : f32 to vector<32x256xf32>
    %717 = arith.maximumf %715, %716 : vector<32x256xf32>
    %cst_237 = arith.constant dense<0.000000e+00> : vector<4x256xf32>
    %718 = tpu.matmul %4, %717, %cst_237 {dimension_numbers = #tpu.dot_dimension_numbers<[1], [0], [0], [1], [0, 0, 1, 1], [], []>} : vector<4x32xf32>, vector<32x256xf32>, vector<4x256xf32> -> vector<4x256xf32>
    %719 = vector.broadcast %5 : vector<4x1xf32> to vector<4x256xf32>
    %720 = arith.addf %718, %719 : vector<4x256xf32>
    %721 = vector.extract_strided_slice %720 {offsets = [0, 0], sizes = [1, 256], strides = [1, 1]} : vector<4x256xf32> to vector<1x256xf32>
    %cst_238 = arith.constant 0.000000e+00 : f32
    %722 = vector.broadcast %cst_238 : f32 to vector<1x256xf32>
    %723 = arith.maximumf %721, %722 : vector<1x256xf32>
    %724 = vector.extract_strided_slice %720 {offsets = [1, 0], sizes = [3, 256], strides = [1, 1]} : vector<4x256xf32> to vector<3x256xf32>
    %cst_239 = arith.constant 0.000000e+00 : f32
    %725 = vector.broadcast %cst_239 : f32 to vector<1x256xf32>
    %726 = arith.subf %725, %723 : vector<1x256xf32>
    %cst_240 = arith.constant 9.677410e-02 : f32
    %727 = vector.broadcast %cst_240 : f32 to vector<1x256xf32>
    %728 = arith.mulf %726, %727 : vector<1x256xf32>
    %729 = math.exp %728 : vector<1x256xf32>
    %cst_241 = arith.constant 1.000000e+00 : f32
    %730 = vector.broadcast %cst_241 : f32 to vector<1x256xf32>
    %731 = arith.subf %730, %729 : vector<1x256xf32>
    %732 = arith.mulf %731, %709 : vector<1x256xf32>
    %733 = vector.broadcast %732 : vector<1x256xf32> to vector<3x256xf32>
    %734 = arith.mulf %733, %724 : vector<3x256xf32>
    %735 = arith.addf %700, %734 : vector<3x256xf32>
    %cst_242 = arith.constant 2.93548393 : f32
    %736 = vector.broadcast %cst_242 : f32 to vector<1x256xf32>
    %737 = arith.mulf %732, %736 : vector<1x256xf32>
    %738 = arith.addf %703, %737 : vector<1x256xf32>
    %739 = arith.addf %704, %732 : vector<1x256xf32>
    %cst_243 = arith.constant 1.000000e+00 : f32
    %740 = vector.broadcast %cst_243 : f32 to vector<1x256xf32>
    %741 = arith.subf %740, %731 : vector<1x256xf32>
    %cst_244 = arith.constant 1.000000e-10 : f32
    %742 = vector.broadcast %cst_244 : f32 to vector<1x256xf32>
    %743 = arith.addf %741, %742 : vector<1x256xf32>
    %744 = arith.mulf %709, %743 : vector<1x256xf32>
    %cst_245 = arith.constant 3.03225803 : f32
    %745 = vector.broadcast %cst_245 : f32 to vector<3x256xf32>
    %746 = arith.mulf %1, %745 : vector<3x256xf32>
    %747 = arith.addf %0, %746 : vector<3x256xf32>
    %cst_246 = arith.constant dense<0.000000e+00> : vector<32x256xf32>
    %748 = tpu.matmul %2, %747, %cst_246 {dimension_numbers = #tpu.dot_dimension_numbers<[1], [0], [0], [1], [0, 0, 1, 1], [], []>} : vector<32x3xf32>, vector<3x256xf32>, vector<32x256xf32> -> vector<32x256xf32>
    %749 = vector.broadcast %3 : vector<32x1xf32> to vector<32x256xf32>
    %750 = arith.addf %748, %749 : vector<32x256xf32>
    %cst_247 = arith.constant 0.000000e+00 : f32
    %751 = vector.broadcast %cst_247 : f32 to vector<32x256xf32>
    %752 = arith.maximumf %750, %751 : vector<32x256xf32>
    %cst_248 = arith.constant dense<0.000000e+00> : vector<4x256xf32>
    %753 = tpu.matmul %4, %752, %cst_248 {dimension_numbers = #tpu.dot_dimension_numbers<[1], [0], [0], [1], [0, 0, 1, 1], [], []>} : vector<4x32xf32>, vector<32x256xf32>, vector<4x256xf32> -> vector<4x256xf32>
    %754 = vector.broadcast %5 : vector<4x1xf32> to vector<4x256xf32>
    %755 = arith.addf %753, %754 : vector<4x256xf32>
    %756 = vector.extract_strided_slice %755 {offsets = [0, 0], sizes = [1, 256], strides = [1, 1]} : vector<4x256xf32> to vector<1x256xf32>
    %cst_249 = arith.constant 0.000000e+00 : f32
    %757 = vector.broadcast %cst_249 : f32 to vector<1x256xf32>
    %758 = arith.maximumf %756, %757 : vector<1x256xf32>
    %759 = vector.extract_strided_slice %755 {offsets = [1, 0], sizes = [3, 256], strides = [1, 1]} : vector<4x256xf32> to vector<3x256xf32>
    %cst_250 = arith.constant 0.000000e+00 : f32
    %760 = vector.broadcast %cst_250 : f32 to vector<1x256xf32>
    %761 = arith.subf %760, %758 : vector<1x256xf32>
    %cst_251 = arith.constant 0.0967743396 : f32
    %762 = vector.broadcast %cst_251 : f32 to vector<1x256xf32>
    %763 = arith.mulf %761, %762 : vector<1x256xf32>
    %764 = math.exp %763 : vector<1x256xf32>
    %cst_252 = arith.constant 1.000000e+00 : f32
    %765 = vector.broadcast %cst_252 : f32 to vector<1x256xf32>
    %766 = arith.subf %765, %764 : vector<1x256xf32>
    %767 = arith.mulf %766, %744 : vector<1x256xf32>
    %768 = vector.broadcast %767 : vector<1x256xf32> to vector<3x256xf32>
    %769 = arith.mulf %768, %759 : vector<3x256xf32>
    %770 = arith.addf %735, %769 : vector<3x256xf32>
    %cst_253 = arith.constant 3.03225803 : f32
    %771 = vector.broadcast %cst_253 : f32 to vector<1x256xf32>
    %772 = arith.mulf %767, %771 : vector<1x256xf32>
    %773 = arith.addf %738, %772 : vector<1x256xf32>
    %774 = arith.addf %739, %767 : vector<1x256xf32>
    %cst_254 = arith.constant 1.000000e+00 : f32
    %775 = vector.broadcast %cst_254 : f32 to vector<1x256xf32>
    %776 = arith.subf %775, %766 : vector<1x256xf32>
    %cst_255 = arith.constant 1.000000e-10 : f32
    %777 = vector.broadcast %cst_255 : f32 to vector<1x256xf32>
    %778 = arith.addf %776, %777 : vector<1x256xf32>
    %779 = arith.mulf %744, %778 : vector<1x256xf32>
    %cst_256 = arith.constant 3.12903237 : f32
    %780 = vector.broadcast %cst_256 : f32 to vector<3x256xf32>
    %781 = arith.mulf %1, %780 : vector<3x256xf32>
    %782 = arith.addf %0, %781 : vector<3x256xf32>
    %cst_257 = arith.constant dense<0.000000e+00> : vector<32x256xf32>
    %783 = tpu.matmul %2, %782, %cst_257 {dimension_numbers = #tpu.dot_dimension_numbers<[1], [0], [0], [1], [0, 0, 1, 1], [], []>} : vector<32x3xf32>, vector<3x256xf32>, vector<32x256xf32> -> vector<32x256xf32>
    %784 = vector.broadcast %3 : vector<32x1xf32> to vector<32x256xf32>
    %785 = arith.addf %783, %784 : vector<32x256xf32>
    %cst_258 = arith.constant 0.000000e+00 : f32
    %786 = vector.broadcast %cst_258 : f32 to vector<32x256xf32>
    %787 = arith.maximumf %785, %786 : vector<32x256xf32>
    %cst_259 = arith.constant dense<0.000000e+00> : vector<4x256xf32>
    %788 = tpu.matmul %4, %787, %cst_259 {dimension_numbers = #tpu.dot_dimension_numbers<[1], [0], [0], [1], [0, 0, 1, 1], [], []>} : vector<4x32xf32>, vector<32x256xf32>, vector<4x256xf32> -> vector<4x256xf32>
    %789 = vector.broadcast %5 : vector<4x1xf32> to vector<4x256xf32>
    %790 = arith.addf %788, %789 : vector<4x256xf32>
    %791 = vector.extract_strided_slice %790 {offsets = [0, 0], sizes = [1, 256], strides = [1, 1]} : vector<4x256xf32> to vector<1x256xf32>
    %cst_260 = arith.constant 0.000000e+00 : f32
    %792 = vector.broadcast %cst_260 : f32 to vector<1x256xf32>
    %793 = arith.maximumf %791, %792 : vector<1x256xf32>
    %794 = vector.extract_strided_slice %790 {offsets = [1, 0], sizes = [3, 256], strides = [1, 1]} : vector<4x256xf32> to vector<3x256xf32>
    %cst_261 = arith.constant 0.000000e+00 : f32
    %795 = vector.broadcast %cst_261 : f32 to vector<1x256xf32>
    %796 = arith.subf %795, %793 : vector<1x256xf32>
    %cst_262 = arith.constant 9.677410e-02 : f32
    %797 = vector.broadcast %cst_262 : f32 to vector<1x256xf32>
    %798 = arith.mulf %796, %797 : vector<1x256xf32>
    %799 = math.exp %798 : vector<1x256xf32>
    %cst_263 = arith.constant 1.000000e+00 : f32
    %800 = vector.broadcast %cst_263 : f32 to vector<1x256xf32>
    %801 = arith.subf %800, %799 : vector<1x256xf32>
    %802 = arith.mulf %801, %779 : vector<1x256xf32>
    %803 = vector.broadcast %802 : vector<1x256xf32> to vector<3x256xf32>
    %804 = arith.mulf %803, %794 : vector<3x256xf32>
    %805 = arith.addf %770, %804 : vector<3x256xf32>
    %cst_264 = arith.constant 3.12903237 : f32
    %806 = vector.broadcast %cst_264 : f32 to vector<1x256xf32>
    %807 = arith.mulf %802, %806 : vector<1x256xf32>
    %808 = arith.addf %773, %807 : vector<1x256xf32>
    %809 = arith.addf %774, %802 : vector<1x256xf32>
    %cst_265 = arith.constant 1.000000e+00 : f32
    %810 = vector.broadcast %cst_265 : f32 to vector<1x256xf32>
    %811 = arith.subf %810, %801 : vector<1x256xf32>
    %cst_266 = arith.constant 1.000000e-10 : f32
    %812 = vector.broadcast %cst_266 : f32 to vector<1x256xf32>
    %813 = arith.addf %811, %812 : vector<1x256xf32>
    %814 = arith.mulf %779, %813 : vector<1x256xf32>
    %cst_267 = arith.constant 3.22580647 : f32
    %815 = vector.broadcast %cst_267 : f32 to vector<3x256xf32>
    %816 = arith.mulf %1, %815 : vector<3x256xf32>
    %817 = arith.addf %0, %816 : vector<3x256xf32>
    %cst_268 = arith.constant dense<0.000000e+00> : vector<32x256xf32>
    %818 = tpu.matmul %2, %817, %cst_268 {dimension_numbers = #tpu.dot_dimension_numbers<[1], [0], [0], [1], [0, 0, 1, 1], [], []>} : vector<32x3xf32>, vector<3x256xf32>, vector<32x256xf32> -> vector<32x256xf32>
    %819 = vector.broadcast %3 : vector<32x1xf32> to vector<32x256xf32>
    %820 = arith.addf %818, %819 : vector<32x256xf32>
    %cst_269 = arith.constant 0.000000e+00 : f32
    %821 = vector.broadcast %cst_269 : f32 to vector<32x256xf32>
    %822 = arith.maximumf %820, %821 : vector<32x256xf32>
    %cst_270 = arith.constant dense<0.000000e+00> : vector<4x256xf32>
    %823 = tpu.matmul %4, %822, %cst_270 {dimension_numbers = #tpu.dot_dimension_numbers<[1], [0], [0], [1], [0, 0, 1, 1], [], []>} : vector<4x32xf32>, vector<32x256xf32>, vector<4x256xf32> -> vector<4x256xf32>
    %824 = vector.broadcast %5 : vector<4x1xf32> to vector<4x256xf32>
    %825 = arith.addf %823, %824 : vector<4x256xf32>
    %826 = vector.extract_strided_slice %825 {offsets = [0, 0], sizes = [1, 256], strides = [1, 1]} : vector<4x256xf32> to vector<1x256xf32>
    %cst_271 = arith.constant 0.000000e+00 : f32
    %827 = vector.broadcast %cst_271 : f32 to vector<1x256xf32>
    %828 = arith.maximumf %826, %827 : vector<1x256xf32>
    %829 = vector.extract_strided_slice %825 {offsets = [1, 0], sizes = [3, 256], strides = [1, 1]} : vector<4x256xf32> to vector<3x256xf32>
    %cst_272 = arith.constant 0.000000e+00 : f32
    %830 = vector.broadcast %cst_272 : f32 to vector<1x256xf32>
    %831 = arith.subf %830, %828 : vector<1x256xf32>
    %cst_273 = arith.constant 9.677410e-02 : f32
    %832 = vector.broadcast %cst_273 : f32 to vector<1x256xf32>
    %833 = arith.mulf %831, %832 : vector<1x256xf32>
    %834 = math.exp %833 : vector<1x256xf32>
    %cst_274 = arith.constant 1.000000e+00 : f32
    %835 = vector.broadcast %cst_274 : f32 to vector<1x256xf32>
    %836 = arith.subf %835, %834 : vector<1x256xf32>
    %837 = arith.mulf %836, %814 : vector<1x256xf32>
    %838 = vector.broadcast %837 : vector<1x256xf32> to vector<3x256xf32>
    %839 = arith.mulf %838, %829 : vector<3x256xf32>
    %840 = arith.addf %805, %839 : vector<3x256xf32>
    %cst_275 = arith.constant 3.22580647 : f32
    %841 = vector.broadcast %cst_275 : f32 to vector<1x256xf32>
    %842 = arith.mulf %837, %841 : vector<1x256xf32>
    %843 = arith.addf %808, %842 : vector<1x256xf32>
    %844 = arith.addf %809, %837 : vector<1x256xf32>
    %cst_276 = arith.constant 1.000000e+00 : f32
    %845 = vector.broadcast %cst_276 : f32 to vector<1x256xf32>
    %846 = arith.subf %845, %836 : vector<1x256xf32>
    %cst_277 = arith.constant 1.000000e-10 : f32
    %847 = vector.broadcast %cst_277 : f32 to vector<1x256xf32>
    %848 = arith.addf %846, %847 : vector<1x256xf32>
    %849 = arith.mulf %814, %848 : vector<1x256xf32>
    %cst_278 = arith.constant 3.32258058 : f32
    %850 = vector.broadcast %cst_278 : f32 to vector<3x256xf32>
    %851 = arith.mulf %1, %850 : vector<3x256xf32>
    %852 = arith.addf %0, %851 : vector<3x256xf32>
    %cst_279 = arith.constant dense<0.000000e+00> : vector<32x256xf32>
    %853 = tpu.matmul %2, %852, %cst_279 {dimension_numbers = #tpu.dot_dimension_numbers<[1], [0], [0], [1], [0, 0, 1, 1], [], []>} : vector<32x3xf32>, vector<3x256xf32>, vector<32x256xf32> -> vector<32x256xf32>
    %854 = vector.broadcast %3 : vector<32x1xf32> to vector<32x256xf32>
    %855 = arith.addf %853, %854 : vector<32x256xf32>
    %cst_280 = arith.constant 0.000000e+00 : f32
    %856 = vector.broadcast %cst_280 : f32 to vector<32x256xf32>
    %857 = arith.maximumf %855, %856 : vector<32x256xf32>
    %cst_281 = arith.constant dense<0.000000e+00> : vector<4x256xf32>
    %858 = tpu.matmul %4, %857, %cst_281 {dimension_numbers = #tpu.dot_dimension_numbers<[1], [0], [0], [1], [0, 0, 1, 1], [], []>} : vector<4x32xf32>, vector<32x256xf32>, vector<4x256xf32> -> vector<4x256xf32>
    %859 = vector.broadcast %5 : vector<4x1xf32> to vector<4x256xf32>
    %860 = arith.addf %858, %859 : vector<4x256xf32>
    %861 = vector.extract_strided_slice %860 {offsets = [0, 0], sizes = [1, 256], strides = [1, 1]} : vector<4x256xf32> to vector<1x256xf32>
    %cst_282 = arith.constant 0.000000e+00 : f32
    %862 = vector.broadcast %cst_282 : f32 to vector<1x256xf32>
    %863 = arith.maximumf %861, %862 : vector<1x256xf32>
    %864 = vector.extract_strided_slice %860 {offsets = [1, 0], sizes = [3, 256], strides = [1, 1]} : vector<4x256xf32> to vector<3x256xf32>
    %cst_283 = arith.constant 0.000000e+00 : f32
    %865 = vector.broadcast %cst_283 : f32 to vector<1x256xf32>
    %866 = arith.subf %865, %863 : vector<1x256xf32>
    %cst_284 = arith.constant 0.0967743396 : f32
    %867 = vector.broadcast %cst_284 : f32 to vector<1x256xf32>
    %868 = arith.mulf %866, %867 : vector<1x256xf32>
    %869 = math.exp %868 : vector<1x256xf32>
    %cst_285 = arith.constant 1.000000e+00 : f32
    %870 = vector.broadcast %cst_285 : f32 to vector<1x256xf32>
    %871 = arith.subf %870, %869 : vector<1x256xf32>
    %872 = arith.mulf %871, %849 : vector<1x256xf32>
    %873 = vector.broadcast %872 : vector<1x256xf32> to vector<3x256xf32>
    %874 = arith.mulf %873, %864 : vector<3x256xf32>
    %875 = arith.addf %840, %874 : vector<3x256xf32>
    %cst_286 = arith.constant 3.32258058 : f32
    %876 = vector.broadcast %cst_286 : f32 to vector<1x256xf32>
    %877 = arith.mulf %872, %876 : vector<1x256xf32>
    %878 = arith.addf %843, %877 : vector<1x256xf32>
    %879 = arith.addf %844, %872 : vector<1x256xf32>
    %cst_287 = arith.constant 1.000000e+00 : f32
    %880 = vector.broadcast %cst_287 : f32 to vector<1x256xf32>
    %881 = arith.subf %880, %871 : vector<1x256xf32>
    %cst_288 = arith.constant 1.000000e-10 : f32
    %882 = vector.broadcast %cst_288 : f32 to vector<1x256xf32>
    %883 = arith.addf %881, %882 : vector<1x256xf32>
    %884 = arith.mulf %849, %883 : vector<1x256xf32>
    %cst_289 = arith.constant 3.41935492 : f32
    %885 = vector.broadcast %cst_289 : f32 to vector<3x256xf32>
    %886 = arith.mulf %1, %885 : vector<3x256xf32>
    %887 = arith.addf %0, %886 : vector<3x256xf32>
    %cst_290 = arith.constant dense<0.000000e+00> : vector<32x256xf32>
    %888 = tpu.matmul %2, %887, %cst_290 {dimension_numbers = #tpu.dot_dimension_numbers<[1], [0], [0], [1], [0, 0, 1, 1], [], []>} : vector<32x3xf32>, vector<3x256xf32>, vector<32x256xf32> -> vector<32x256xf32>
    %889 = vector.broadcast %3 : vector<32x1xf32> to vector<32x256xf32>
    %890 = arith.addf %888, %889 : vector<32x256xf32>
    %cst_291 = arith.constant 0.000000e+00 : f32
    %891 = vector.broadcast %cst_291 : f32 to vector<32x256xf32>
    %892 = arith.maximumf %890, %891 : vector<32x256xf32>
    %cst_292 = arith.constant dense<0.000000e+00> : vector<4x256xf32>
    %893 = tpu.matmul %4, %892, %cst_292 {dimension_numbers = #tpu.dot_dimension_numbers<[1], [0], [0], [1], [0, 0, 1, 1], [], []>} : vector<4x32xf32>, vector<32x256xf32>, vector<4x256xf32> -> vector<4x256xf32>
    %894 = vector.broadcast %5 : vector<4x1xf32> to vector<4x256xf32>
    %895 = arith.addf %893, %894 : vector<4x256xf32>
    %896 = vector.extract_strided_slice %895 {offsets = [0, 0], sizes = [1, 256], strides = [1, 1]} : vector<4x256xf32> to vector<1x256xf32>
    %cst_293 = arith.constant 0.000000e+00 : f32
    %897 = vector.broadcast %cst_293 : f32 to vector<1x256xf32>
    %898 = arith.maximumf %896, %897 : vector<1x256xf32>
    %899 = vector.extract_strided_slice %895 {offsets = [1, 0], sizes = [3, 256], strides = [1, 1]} : vector<4x256xf32> to vector<3x256xf32>
    %cst_294 = arith.constant 0.000000e+00 : f32
    %900 = vector.broadcast %cst_294 : f32 to vector<1x256xf32>
    %901 = arith.subf %900, %898 : vector<1x256xf32>
    %cst_295 = arith.constant 9.677410e-02 : f32
    %902 = vector.broadcast %cst_295 : f32 to vector<1x256xf32>
    %903 = arith.mulf %901, %902 : vector<1x256xf32>
    %904 = math.exp %903 : vector<1x256xf32>
    %cst_296 = arith.constant 1.000000e+00 : f32
    %905 = vector.broadcast %cst_296 : f32 to vector<1x256xf32>
    %906 = arith.subf %905, %904 : vector<1x256xf32>
    %907 = arith.mulf %906, %884 : vector<1x256xf32>
    %908 = vector.broadcast %907 : vector<1x256xf32> to vector<3x256xf32>
    %909 = arith.mulf %908, %899 : vector<3x256xf32>
    %910 = arith.addf %875, %909 : vector<3x256xf32>
    %cst_297 = arith.constant 3.41935492 : f32
    %911 = vector.broadcast %cst_297 : f32 to vector<1x256xf32>
    %912 = arith.mulf %907, %911 : vector<1x256xf32>
    %913 = arith.addf %878, %912 : vector<1x256xf32>
    %914 = arith.addf %879, %907 : vector<1x256xf32>
    %cst_298 = arith.constant 1.000000e+00 : f32
    %915 = vector.broadcast %cst_298 : f32 to vector<1x256xf32>
    %916 = arith.subf %915, %906 : vector<1x256xf32>
    %cst_299 = arith.constant 1.000000e-10 : f32
    %917 = vector.broadcast %cst_299 : f32 to vector<1x256xf32>
    %918 = arith.addf %916, %917 : vector<1x256xf32>
    %919 = arith.mulf %884, %918 : vector<1x256xf32>
    %cst_300 = arith.constant 3.51612902 : f32
    %920 = vector.broadcast %cst_300 : f32 to vector<3x256xf32>
    %921 = arith.mulf %1, %920 : vector<3x256xf32>
    %922 = arith.addf %0, %921 : vector<3x256xf32>
    %cst_301 = arith.constant dense<0.000000e+00> : vector<32x256xf32>
    %923 = tpu.matmul %2, %922, %cst_301 {dimension_numbers = #tpu.dot_dimension_numbers<[1], [0], [0], [1], [0, 0, 1, 1], [], []>} : vector<32x3xf32>, vector<3x256xf32>, vector<32x256xf32> -> vector<32x256xf32>
    %924 = vector.broadcast %3 : vector<32x1xf32> to vector<32x256xf32>
    %925 = arith.addf %923, %924 : vector<32x256xf32>
    %cst_302 = arith.constant 0.000000e+00 : f32
    %926 = vector.broadcast %cst_302 : f32 to vector<32x256xf32>
    %927 = arith.maximumf %925, %926 : vector<32x256xf32>
    %cst_303 = arith.constant dense<0.000000e+00> : vector<4x256xf32>
    %928 = tpu.matmul %4, %927, %cst_303 {dimension_numbers = #tpu.dot_dimension_numbers<[1], [0], [0], [1], [0, 0, 1, 1], [], []>} : vector<4x32xf32>, vector<32x256xf32>, vector<4x256xf32> -> vector<4x256xf32>
    %929 = vector.broadcast %5 : vector<4x1xf32> to vector<4x256xf32>
    %930 = arith.addf %928, %929 : vector<4x256xf32>
    %931 = vector.extract_strided_slice %930 {offsets = [0, 0], sizes = [1, 256], strides = [1, 1]} : vector<4x256xf32> to vector<1x256xf32>
    %cst_304 = arith.constant 0.000000e+00 : f32
    %932 = vector.broadcast %cst_304 : f32 to vector<1x256xf32>
    %933 = arith.maximumf %931, %932 : vector<1x256xf32>
    %934 = vector.extract_strided_slice %930 {offsets = [1, 0], sizes = [3, 256], strides = [1, 1]} : vector<4x256xf32> to vector<3x256xf32>
    %cst_305 = arith.constant 0.000000e+00 : f32
    %935 = vector.broadcast %cst_305 : f32 to vector<1x256xf32>
    %936 = arith.subf %935, %933 : vector<1x256xf32>
    %cst_306 = arith.constant 9.677410e-02 : f32
    %937 = vector.broadcast %cst_306 : f32 to vector<1x256xf32>
    %938 = arith.mulf %936, %937 : vector<1x256xf32>
    %939 = math.exp %938 : vector<1x256xf32>
    %cst_307 = arith.constant 1.000000e+00 : f32
    %940 = vector.broadcast %cst_307 : f32 to vector<1x256xf32>
    %941 = arith.subf %940, %939 : vector<1x256xf32>
    %942 = arith.mulf %941, %919 : vector<1x256xf32>
    %943 = vector.broadcast %942 : vector<1x256xf32> to vector<3x256xf32>
    %944 = arith.mulf %943, %934 : vector<3x256xf32>
    %945 = arith.addf %910, %944 : vector<3x256xf32>
    %cst_308 = arith.constant 3.51612902 : f32
    %946 = vector.broadcast %cst_308 : f32 to vector<1x256xf32>
    %947 = arith.mulf %942, %946 : vector<1x256xf32>
    %948 = arith.addf %913, %947 : vector<1x256xf32>
    %949 = arith.addf %914, %942 : vector<1x256xf32>
    %cst_309 = arith.constant 1.000000e+00 : f32
    %950 = vector.broadcast %cst_309 : f32 to vector<1x256xf32>
    %951 = arith.subf %950, %941 : vector<1x256xf32>
    %cst_310 = arith.constant 1.000000e-10 : f32
    %952 = vector.broadcast %cst_310 : f32 to vector<1x256xf32>
    %953 = arith.addf %951, %952 : vector<1x256xf32>
    %954 = arith.mulf %919, %953 : vector<1x256xf32>
    %cst_311 = arith.constant 3.61290312 : f32
    %955 = vector.broadcast %cst_311 : f32 to vector<3x256xf32>
    %956 = arith.mulf %1, %955 : vector<3x256xf32>
    %957 = arith.addf %0, %956 : vector<3x256xf32>
    %cst_312 = arith.constant dense<0.000000e+00> : vector<32x256xf32>
    %958 = tpu.matmul %2, %957, %cst_312 {dimension_numbers = #tpu.dot_dimension_numbers<[1], [0], [0], [1], [0, 0, 1, 1], [], []>} : vector<32x3xf32>, vector<3x256xf32>, vector<32x256xf32> -> vector<32x256xf32>
    %959 = vector.broadcast %3 : vector<32x1xf32> to vector<32x256xf32>
    %960 = arith.addf %958, %959 : vector<32x256xf32>
    %cst_313 = arith.constant 0.000000e+00 : f32
    %961 = vector.broadcast %cst_313 : f32 to vector<32x256xf32>
    %962 = arith.maximumf %960, %961 : vector<32x256xf32>
    %cst_314 = arith.constant dense<0.000000e+00> : vector<4x256xf32>
    %963 = tpu.matmul %4, %962, %cst_314 {dimension_numbers = #tpu.dot_dimension_numbers<[1], [0], [0], [1], [0, 0, 1, 1], [], []>} : vector<4x32xf32>, vector<32x256xf32>, vector<4x256xf32> -> vector<4x256xf32>
    %964 = vector.broadcast %5 : vector<4x1xf32> to vector<4x256xf32>
    %965 = arith.addf %963, %964 : vector<4x256xf32>
    %966 = vector.extract_strided_slice %965 {offsets = [0, 0], sizes = [1, 256], strides = [1, 1]} : vector<4x256xf32> to vector<1x256xf32>
    %cst_315 = arith.constant 0.000000e+00 : f32
    %967 = vector.broadcast %cst_315 : f32 to vector<1x256xf32>
    %968 = arith.maximumf %966, %967 : vector<1x256xf32>
    %969 = vector.extract_strided_slice %965 {offsets = [1, 0], sizes = [3, 256], strides = [1, 1]} : vector<4x256xf32> to vector<3x256xf32>
    %cst_316 = arith.constant 0.000000e+00 : f32
    %970 = vector.broadcast %cst_316 : f32 to vector<1x256xf32>
    %971 = arith.subf %970, %968 : vector<1x256xf32>
    %cst_317 = arith.constant 0.0967743396 : f32
    %972 = vector.broadcast %cst_317 : f32 to vector<1x256xf32>
    %973 = arith.mulf %971, %972 : vector<1x256xf32>
    %974 = math.exp %973 : vector<1x256xf32>
    %cst_318 = arith.constant 1.000000e+00 : f32
    %975 = vector.broadcast %cst_318 : f32 to vector<1x256xf32>
    %976 = arith.subf %975, %974 : vector<1x256xf32>
    %977 = arith.mulf %976, %954 : vector<1x256xf32>
    %978 = vector.broadcast %977 : vector<1x256xf32> to vector<3x256xf32>
    %979 = arith.mulf %978, %969 : vector<3x256xf32>
    %980 = arith.addf %945, %979 : vector<3x256xf32>
    %cst_319 = arith.constant 3.61290312 : f32
    %981 = vector.broadcast %cst_319 : f32 to vector<1x256xf32>
    %982 = arith.mulf %977, %981 : vector<1x256xf32>
    %983 = arith.addf %948, %982 : vector<1x256xf32>
    %984 = arith.addf %949, %977 : vector<1x256xf32>
    %cst_320 = arith.constant 1.000000e+00 : f32
    %985 = vector.broadcast %cst_320 : f32 to vector<1x256xf32>
    %986 = arith.subf %985, %976 : vector<1x256xf32>
    %cst_321 = arith.constant 1.000000e-10 : f32
    %987 = vector.broadcast %cst_321 : f32 to vector<1x256xf32>
    %988 = arith.addf %986, %987 : vector<1x256xf32>
    %989 = arith.mulf %954, %988 : vector<1x256xf32>
    %cst_322 = arith.constant 3.70967746 : f32
    %990 = vector.broadcast %cst_322 : f32 to vector<3x256xf32>
    %991 = arith.mulf %1, %990 : vector<3x256xf32>
    %992 = arith.addf %0, %991 : vector<3x256xf32>
    %cst_323 = arith.constant dense<0.000000e+00> : vector<32x256xf32>
    %993 = tpu.matmul %2, %992, %cst_323 {dimension_numbers = #tpu.dot_dimension_numbers<[1], [0], [0], [1], [0, 0, 1, 1], [], []>} : vector<32x3xf32>, vector<3x256xf32>, vector<32x256xf32> -> vector<32x256xf32>
    %994 = vector.broadcast %3 : vector<32x1xf32> to vector<32x256xf32>
    %995 = arith.addf %993, %994 : vector<32x256xf32>
    %cst_324 = arith.constant 0.000000e+00 : f32
    %996 = vector.broadcast %cst_324 : f32 to vector<32x256xf32>
    %997 = arith.maximumf %995, %996 : vector<32x256xf32>
    %cst_325 = arith.constant dense<0.000000e+00> : vector<4x256xf32>
    %998 = tpu.matmul %4, %997, %cst_325 {dimension_numbers = #tpu.dot_dimension_numbers<[1], [0], [0], [1], [0, 0, 1, 1], [], []>} : vector<4x32xf32>, vector<32x256xf32>, vector<4x256xf32> -> vector<4x256xf32>
    %999 = vector.broadcast %5 : vector<4x1xf32> to vector<4x256xf32>
    %1000 = arith.addf %998, %999 : vector<4x256xf32>
    %1001 = vector.extract_strided_slice %1000 {offsets = [0, 0], sizes = [1, 256], strides = [1, 1]} : vector<4x256xf32> to vector<1x256xf32>
    %cst_326 = arith.constant 0.000000e+00 : f32
    %1002 = vector.broadcast %cst_326 : f32 to vector<1x256xf32>
    %1003 = arith.maximumf %1001, %1002 : vector<1x256xf32>
    %1004 = vector.extract_strided_slice %1000 {offsets = [1, 0], sizes = [3, 256], strides = [1, 1]} : vector<4x256xf32> to vector<3x256xf32>
    %cst_327 = arith.constant 0.000000e+00 : f32
    %1005 = vector.broadcast %cst_327 : f32 to vector<1x256xf32>
    %1006 = arith.subf %1005, %1003 : vector<1x256xf32>
    %cst_328 = arith.constant 9.677410e-02 : f32
    %1007 = vector.broadcast %cst_328 : f32 to vector<1x256xf32>
    %1008 = arith.mulf %1006, %1007 : vector<1x256xf32>
    %1009 = math.exp %1008 : vector<1x256xf32>
    %cst_329 = arith.constant 1.000000e+00 : f32
    %1010 = vector.broadcast %cst_329 : f32 to vector<1x256xf32>
    %1011 = arith.subf %1010, %1009 : vector<1x256xf32>
    %1012 = arith.mulf %1011, %989 : vector<1x256xf32>
    %1013 = vector.broadcast %1012 : vector<1x256xf32> to vector<3x256xf32>
    %1014 = arith.mulf %1013, %1004 : vector<3x256xf32>
    %1015 = arith.addf %980, %1014 : vector<3x256xf32>
    %cst_330 = arith.constant 3.70967746 : f32
    %1016 = vector.broadcast %cst_330 : f32 to vector<1x256xf32>
    %1017 = arith.mulf %1012, %1016 : vector<1x256xf32>
    %1018 = arith.addf %983, %1017 : vector<1x256xf32>
    %1019 = arith.addf %984, %1012 : vector<1x256xf32>
    %cst_331 = arith.constant 1.000000e+00 : f32
    %1020 = vector.broadcast %cst_331 : f32 to vector<1x256xf32>
    %1021 = arith.subf %1020, %1011 : vector<1x256xf32>
    %cst_332 = arith.constant 1.000000e-10 : f32
    %1022 = vector.broadcast %cst_332 : f32 to vector<1x256xf32>
    %1023 = arith.addf %1021, %1022 : vector<1x256xf32>
    %1024 = arith.mulf %989, %1023 : vector<1x256xf32>
    %cst_333 = arith.constant 3.80645156 : f32
    %1025 = vector.broadcast %cst_333 : f32 to vector<3x256xf32>
    %1026 = arith.mulf %1, %1025 : vector<3x256xf32>
    %1027 = arith.addf %0, %1026 : vector<3x256xf32>
    %cst_334 = arith.constant dense<0.000000e+00> : vector<32x256xf32>
    %1028 = tpu.matmul %2, %1027, %cst_334 {dimension_numbers = #tpu.dot_dimension_numbers<[1], [0], [0], [1], [0, 0, 1, 1], [], []>} : vector<32x3xf32>, vector<3x256xf32>, vector<32x256xf32> -> vector<32x256xf32>
    %1029 = vector.broadcast %3 : vector<32x1xf32> to vector<32x256xf32>
    %1030 = arith.addf %1028, %1029 : vector<32x256xf32>
    %cst_335 = arith.constant 0.000000e+00 : f32
    %1031 = vector.broadcast %cst_335 : f32 to vector<32x256xf32>
    %1032 = arith.maximumf %1030, %1031 : vector<32x256xf32>
    %cst_336 = arith.constant dense<0.000000e+00> : vector<4x256xf32>
    %1033 = tpu.matmul %4, %1032, %cst_336 {dimension_numbers = #tpu.dot_dimension_numbers<[1], [0], [0], [1], [0, 0, 1, 1], [], []>} : vector<4x32xf32>, vector<32x256xf32>, vector<4x256xf32> -> vector<4x256xf32>
    %1034 = vector.broadcast %5 : vector<4x1xf32> to vector<4x256xf32>
    %1035 = arith.addf %1033, %1034 : vector<4x256xf32>
    %1036 = vector.extract_strided_slice %1035 {offsets = [0, 0], sizes = [1, 256], strides = [1, 1]} : vector<4x256xf32> to vector<1x256xf32>
    %cst_337 = arith.constant 0.000000e+00 : f32
    %1037 = vector.broadcast %cst_337 : f32 to vector<1x256xf32>
    %1038 = arith.maximumf %1036, %1037 : vector<1x256xf32>
    %1039 = vector.extract_strided_slice %1035 {offsets = [1, 0], sizes = [3, 256], strides = [1, 1]} : vector<4x256xf32> to vector<3x256xf32>
    %cst_338 = arith.constant 0.000000e+00 : f32
    %1040 = vector.broadcast %cst_338 : f32 to vector<1x256xf32>
    %1041 = arith.subf %1040, %1038 : vector<1x256xf32>
    %cst_339 = arith.constant 0.0967743396 : f32
    %1042 = vector.broadcast %cst_339 : f32 to vector<1x256xf32>
    %1043 = arith.mulf %1041, %1042 : vector<1x256xf32>
    %1044 = math.exp %1043 : vector<1x256xf32>
    %cst_340 = arith.constant 1.000000e+00 : f32
    %1045 = vector.broadcast %cst_340 : f32 to vector<1x256xf32>
    %1046 = arith.subf %1045, %1044 : vector<1x256xf32>
    %1047 = arith.mulf %1046, %1024 : vector<1x256xf32>
    %1048 = vector.broadcast %1047 : vector<1x256xf32> to vector<3x256xf32>
    %1049 = arith.mulf %1048, %1039 : vector<3x256xf32>
    %1050 = arith.addf %1015, %1049 : vector<3x256xf32>
    %cst_341 = arith.constant 3.80645156 : f32
    %1051 = vector.broadcast %cst_341 : f32 to vector<1x256xf32>
    %1052 = arith.mulf %1047, %1051 : vector<1x256xf32>
    %1053 = arith.addf %1018, %1052 : vector<1x256xf32>
    %1054 = arith.addf %1019, %1047 : vector<1x256xf32>
    %cst_342 = arith.constant 1.000000e+00 : f32
    %1055 = vector.broadcast %cst_342 : f32 to vector<1x256xf32>
    %1056 = arith.subf %1055, %1046 : vector<1x256xf32>
    %cst_343 = arith.constant 1.000000e-10 : f32
    %1057 = vector.broadcast %cst_343 : f32 to vector<1x256xf32>
    %1058 = arith.addf %1056, %1057 : vector<1x256xf32>
    %1059 = arith.mulf %1024, %1058 : vector<1x256xf32>
    %cst_344 = arith.constant 3.9032259 : f32
    %1060 = vector.broadcast %cst_344 : f32 to vector<3x256xf32>
    %1061 = arith.mulf %1, %1060 : vector<3x256xf32>
    %1062 = arith.addf %0, %1061 : vector<3x256xf32>
    %cst_345 = arith.constant dense<0.000000e+00> : vector<32x256xf32>
    %1063 = tpu.matmul %2, %1062, %cst_345 {dimension_numbers = #tpu.dot_dimension_numbers<[1], [0], [0], [1], [0, 0, 1, 1], [], []>} : vector<32x3xf32>, vector<3x256xf32>, vector<32x256xf32> -> vector<32x256xf32>
    %1064 = vector.broadcast %3 : vector<32x1xf32> to vector<32x256xf32>
    %1065 = arith.addf %1063, %1064 : vector<32x256xf32>
    %cst_346 = arith.constant 0.000000e+00 : f32
    %1066 = vector.broadcast %cst_346 : f32 to vector<32x256xf32>
    %1067 = arith.maximumf %1065, %1066 : vector<32x256xf32>
    %cst_347 = arith.constant dense<0.000000e+00> : vector<4x256xf32>
    %1068 = tpu.matmul %4, %1067, %cst_347 {dimension_numbers = #tpu.dot_dimension_numbers<[1], [0], [0], [1], [0, 0, 1, 1], [], []>} : vector<4x32xf32>, vector<32x256xf32>, vector<4x256xf32> -> vector<4x256xf32>
    %1069 = vector.broadcast %5 : vector<4x1xf32> to vector<4x256xf32>
    %1070 = arith.addf %1068, %1069 : vector<4x256xf32>
    %1071 = vector.extract_strided_slice %1070 {offsets = [0, 0], sizes = [1, 256], strides = [1, 1]} : vector<4x256xf32> to vector<1x256xf32>
    %cst_348 = arith.constant 0.000000e+00 : f32
    %1072 = vector.broadcast %cst_348 : f32 to vector<1x256xf32>
    %1073 = arith.maximumf %1071, %1072 : vector<1x256xf32>
    %1074 = vector.extract_strided_slice %1070 {offsets = [1, 0], sizes = [3, 256], strides = [1, 1]} : vector<4x256xf32> to vector<3x256xf32>
    %cst_349 = arith.constant 0.000000e+00 : f32
    %1075 = vector.broadcast %cst_349 : f32 to vector<1x256xf32>
    %1076 = arith.subf %1075, %1073 : vector<1x256xf32>
    %cst_350 = arith.constant 9.677410e-02 : f32
    %1077 = vector.broadcast %cst_350 : f32 to vector<1x256xf32>
    %1078 = arith.mulf %1076, %1077 : vector<1x256xf32>
    %1079 = math.exp %1078 : vector<1x256xf32>
    %cst_351 = arith.constant 1.000000e+00 : f32
    %1080 = vector.broadcast %cst_351 : f32 to vector<1x256xf32>
    %1081 = arith.subf %1080, %1079 : vector<1x256xf32>
    %1082 = arith.mulf %1081, %1059 : vector<1x256xf32>
    %1083 = vector.broadcast %1082 : vector<1x256xf32> to vector<3x256xf32>
    %1084 = arith.mulf %1083, %1074 : vector<3x256xf32>
    %1085 = arith.addf %1050, %1084 : vector<3x256xf32>
    %cst_352 = arith.constant 3.9032259 : f32
    %1086 = vector.broadcast %cst_352 : f32 to vector<1x256xf32>
    %1087 = arith.mulf %1082, %1086 : vector<1x256xf32>
    %1088 = arith.addf %1053, %1087 : vector<1x256xf32>
    %1089 = arith.addf %1054, %1082 : vector<1x256xf32>
    %cst_353 = arith.constant 1.000000e+00 : f32
    %1090 = vector.broadcast %cst_353 : f32 to vector<1x256xf32>
    %1091 = arith.subf %1090, %1081 : vector<1x256xf32>
    %cst_354 = arith.constant 1.000000e-10 : f32
    %1092 = vector.broadcast %cst_354 : f32 to vector<1x256xf32>
    %1093 = arith.addf %1091, %1092 : vector<1x256xf32>
    %1094 = arith.mulf %1059, %1093 : vector<1x256xf32>
    %cst_355 = arith.constant 4.000000e+00 : f32
    %1095 = vector.broadcast %cst_355 : f32 to vector<3x256xf32>
    %1096 = arith.mulf %1, %1095 : vector<3x256xf32>
    %1097 = arith.addf %0, %1096 : vector<3x256xf32>
    %cst_356 = arith.constant dense<0.000000e+00> : vector<32x256xf32>
    %1098 = tpu.matmul %2, %1097, %cst_356 {dimension_numbers = #tpu.dot_dimension_numbers<[1], [0], [0], [1], [0, 0, 1, 1], [], []>} : vector<32x3xf32>, vector<3x256xf32>, vector<32x256xf32> -> vector<32x256xf32>
    %1099 = vector.broadcast %3 : vector<32x1xf32> to vector<32x256xf32>
    %1100 = arith.addf %1098, %1099 : vector<32x256xf32>
    %cst_357 = arith.constant 0.000000e+00 : f32
    %1101 = vector.broadcast %cst_357 : f32 to vector<32x256xf32>
    %1102 = arith.maximumf %1100, %1101 : vector<32x256xf32>
    %cst_358 = arith.constant dense<0.000000e+00> : vector<4x256xf32>
    %1103 = tpu.matmul %4, %1102, %cst_358 {dimension_numbers = #tpu.dot_dimension_numbers<[1], [0], [0], [1], [0, 0, 1, 1], [], []>} : vector<4x32xf32>, vector<32x256xf32>, vector<4x256xf32> -> vector<4x256xf32>
    %1104 = vector.broadcast %5 : vector<4x1xf32> to vector<4x256xf32>
    %1105 = arith.addf %1103, %1104 : vector<4x256xf32>
    %1106 = vector.extract_strided_slice %1105 {offsets = [0, 0], sizes = [1, 256], strides = [1, 1]} : vector<4x256xf32> to vector<1x256xf32>
    %cst_359 = arith.constant 0.000000e+00 : f32
    %1107 = vector.broadcast %cst_359 : f32 to vector<1x256xf32>
    %1108 = arith.maximumf %1106, %1107 : vector<1x256xf32>
    %1109 = vector.extract_strided_slice %1105 {offsets = [1, 0], sizes = [3, 256], strides = [1, 1]} : vector<4x256xf32> to vector<3x256xf32>
    %cst_360 = arith.constant 0.000000e+00 : f32
    %1110 = vector.broadcast %cst_360 : f32 to vector<1x256xf32>
    %1111 = arith.subf %1110, %1108 : vector<1x256xf32>
    %cst_361 = arith.constant 9.677410e-02 : f32
    %1112 = vector.broadcast %cst_361 : f32 to vector<1x256xf32>
    %1113 = arith.mulf %1111, %1112 : vector<1x256xf32>
    %1114 = math.exp %1113 : vector<1x256xf32>
    %cst_362 = arith.constant 1.000000e+00 : f32
    %1115 = vector.broadcast %cst_362 : f32 to vector<1x256xf32>
    %1116 = arith.subf %1115, %1114 : vector<1x256xf32>
    %1117 = arith.mulf %1116, %1094 : vector<1x256xf32>
    %1118 = vector.broadcast %1117 : vector<1x256xf32> to vector<3x256xf32>
    %1119 = arith.mulf %1118, %1109 : vector<3x256xf32>
    %1120 = arith.addf %1085, %1119 : vector<3x256xf32>
    %cst_363 = arith.constant 4.000000e+00 : f32
    %1121 = vector.broadcast %cst_363 : f32 to vector<1x256xf32>
    %1122 = arith.mulf %1117, %1121 : vector<1x256xf32>
    %1123 = arith.addf %1088, %1122 : vector<1x256xf32>
    %1124 = arith.addf %1089, %1117 : vector<1x256xf32>
    %c0_364 = arith.constant 0 : index
    %c0_365 = arith.constant 0 : index
    %1125 = vector.load %arg7[%c0_364, %c0_365] : memref<3x256xf32, #tpu.memory_space<vmem>>, vector<3x256xf32>
    tpu.vector_store %arg7[%c0_364, %c0_365], %1120 {strides = array<i32>} : memref<3x256xf32, #tpu.memory_space<vmem>>, vector<3x256xf32>,
    %c0_366 = arith.constant 0 : index
    %c0_367 = arith.constant 0 : index
    %1126 = vector.load %arg8[%c0_366, %c0_367] : memref<1x256xf32, #tpu.memory_space<vmem>>, vector<1x256xf32>
    tpu.vector_store %arg8[%c0_366, %c0_367], %1123 {strides = array<i32>} : memref<1x256xf32, #tpu.memory_space<vmem>>, vector<1x256xf32>,
    %c0_368 = arith.constant 0 : index
    %c0_369 = arith.constant 0 : index
    %1127 = vector.load %arg9[%c0_368, %c0_369] : memref<1x256xf32, #tpu.memory_space<vmem>>, vector<1x256xf32>
    tpu.vector_store %arg9[%c0_368, %c0_369], %1124 {strides = array<i32>} : memref<1x256xf32, #tpu.memory_space<vmem>>, vector<1x256xf32>,
    return
  }
  func.func @transform_0(%arg0: i32) -> (i32, i32) {
    %c0_i32 = arith.constant 0 : i32
    %c0_i32_0 = arith.constant 0 : i32
    return %c0_i32, %arg0 : i32, i32
  }
  func.func @transform_1(%arg0: i32) -> (i32, i32) {
    %c0_i32 = arith.constant 0 : i32
    %c0_i32_0 = arith.constant 0 : i32
    return %c0_i32, %arg0 : i32, i32
  }
  func.func @transform_2(%arg0: i32) -> (i32, i32) {
    %c0_i32 = arith.constant 0 : i32
    %c0_i32_0 = arith.constant 0 : i32
    %c0_i32_1 = arith.constant 0 : i32
    return %c0_i32, %c0_i32_0 : i32, i32
  }
  func.func @transform_3(%arg0: i32) -> (i32, i32) {
    %c0_i32 = arith.constant 0 : i32
    %c0_i32_0 = arith.constant 0 : i32
    %c0_i32_1 = arith.constant 0 : i32
    return %c0_i32, %c0_i32_0 : i32, i32
  }
  func.func @transform_4(%arg0: i32) -> (i32, i32) {
    %c0_i32 = arith.constant 0 : i32
    %c0_i32_0 = arith.constant 0 : i32
    %c0_i32_1 = arith.constant 0 : i32
    return %c0_i32, %c0_i32_0 : i32, i32
  }
  func.func @transform_5(%arg0: i32) -> (i32, i32) {
    %c0_i32 = arith.constant 0 : i32
    %c0_i32_0 = arith.constant 0 : i32
    %c0_i32_1 = arith.constant 0 : i32
    return %c0_i32, %c0_i32_0 : i32, i32
  }
  func.func @transform_6(%arg0: i32) -> (i32, i32) {
    %c0_i32 = arith.constant 0 : i32
    %c0_i32_0 = arith.constant 0 : i32
    return %c0_i32, %arg0 : i32, i32
  }
  func.func @transform_7(%arg0: i32) -> (i32, i32) {
    %c0_i32 = arith.constant 0 : i32
    %c0_i32_0 = arith.constant 0 : i32
    return %c0_i32, %arg0 : i32, i32
  }
  func.func @transform_8(%arg0: i32) -> (i32, i32) {
    %c0_i32 = arith.constant 0 : i32
    %c0_i32_0 = arith.constant 0 : i32
    return %c0_i32, %arg0 : i32, i32
  }
}

</mosaic_0001>

<llo_original>
// kernel: tpu_custom_call.1
$region0: #{tpu_custom_call.1}
  #allocation0 [shape = 'u32[]', space=smem, size = 0x4, offset = 0x4, fixed_abs, tag = 'smem constant byte address 0x4 - core index']
  #allocation1 [shape = 'u32[72,128]{1,0:T(1,128)}', space=vmem, size = 0x9000, scoped, tag = 'internal scratch']
  %s0 = inlined_call_operand.vmem [shape: f32[3,512], index: 0, kind: input, shape index: {}]
  %s1 = inlined_call_operand.vmem [shape: f32[3,512], index: 1, kind: input, shape index: {}]
  %s2 = inlined_call_operand.vmem [shape: f32[32,3], index: 2, kind: input, shape index: {}]
  %s3 = inlined_call_operand.vmem [shape: f32[32,1], index: 3, kind: input, shape index: {}]
  %s4 = inlined_call_operand.vmem [shape: f32[4,32], index: 4, kind: input, shape index: {}]
  %s5 = inlined_call_operand.vmem [shape: f32[4,1], index: 5, kind: input, shape index: {}]
  %s6 = inlined_call_operand.hbm [shape: f32[3,512], index: 6, kind: output, shape index: {0}]
  %s7 = inlined_call_operand.hbm [shape: f32[1,512], index: 7, kind: output, shape index: {1}]
  %s8 = inlined_call_operand.hbm [shape: f32[1,512], index: 8, kind: output, shape index: {2}]
  %9 = xla_tuple %s6, %s7, %s8
  %s10 = sld [smem:[#allocation0]]
  $region73: #{tpu_custom_call.1} parent=0
    _
  %s12 = ssub.s32 1, %s10
  %s13 = scalar_select 0, %s12, %s10
  $region1: #{tpu_custom_call.1} parent=0
    #allocation2 [shape = 'u8[8192]{0}', space=vmem, size = 0x2000, scoped, tag = 'output window, operand 0']
    #allocation3 [shape = 's32[2]{0}', space=sflag, size = 0x8, scoped, tag = 'scoped memory for tpu_custom_call.1']
    #allocation4 [shape = 'u8[2048]{0}', space=vmem, size = 0x800, scoped, tag = 'output window, operand 1']
    #allocation5 [shape = 's32[2]{0}', space=sflag, size = 0x8, scoped, tag = 'scoped memory for tpu_custom_call.1']
    #allocation6 [shape = 'u8[2048]{0}', space=vmem, size = 0x800, scoped, tag = 'output window, operand 2']
    %14 = vsyncpa [#allocation3], 0
    %s15 = scalar_lea.sflag [#allocation3], 1
    %16 = vsyncpa %s15, 0
    %17 = vsyncpa [#allocation5], 0
    %s18 = scalar_lea.sflag [#allocation5], 1
    %19 = vsyncpa %s18, 0
    loop: start=0, step=1, limit=4
    $region2: #{tpu_custom_call.1} parent=1 // loop_pre_header
      _
    $region3: #{tpu_custom_call.1} parent=1 // loop_header
      %s21 = sphi 0, %s25
      %p22 = scmp.ge.s32.totalorder %s21, 4
      %s31 = sphi 0, %s33
      %s34 = sphi 0, %s31
      %s35 = sphi 0, %s34
      %s51 = sphi 0, %s35
      %s57 = sphi 0, %s59
      %s60 = sphi 0, %s57
      %s61 = sphi 0, %s60
      %s77 = sphi 0, %s61
      %s81 = sphi 0, %s81
      %s83 = sphi 0, %s81
      %s84 = sphi 0, %s83
      %s98 = sphi 0, %s84
      %s102 = sphi 0, %s102
      %s104 = sphi 0, %s102
      %s105 = sphi 0, %s104
      %s119 = sphi 0, %s105
      %s123 = sphi 0, %s123
      %s125 = sphi 0, %s123
      %s126 = sphi 0, %s125
      %s140 = sphi 0, %s126
      %s144 = sphi 0, %s144
      %s146 = sphi 0, %s144
      %s147 = sphi 0, %s146
      %s161 = sphi 0, %s147
      %s167 = sphi 0, %s169
      %s170 = sphi 0, %s167
      %s171 = sphi 0, %s170
      %s187 = sphi 0, %s171
      %s193 = sphi 0, %s195
      %s196 = sphi 0, %s193
      %s197 = sphi 0, %s196
      %s213 = sphi 0, %s197
      %s219 = sphi 0, %s221
      %s222 = sphi 0, %s219
      %s223 = sphi 0, %s222
      %s239 = sphi 0, %s223
    $region4: #{tpu_custom_call.1} parent=1 // loop_header_branch
      %24 = sbr.rel (%p22) target = $region8
    $region5: #{tpu_custom_call.1} parent=1 // loop_body
      %s26 = ssub.s32 %s21, 1
      %s27 = ssub.s32 %s21, 2
      %s28 = sadd.s32 %s21, 1
      %s29 = ssub.s32 %s21, %s28
      %p30 = scmp.eq.s32.totalorder %s29, 0
      %s32 = sadd.s32 %s31, 1
      %s33 = scalar_select %p30, %s31, %s32
      %p36 = pneg %p30
      %p37 = scmp.eq.s32.totalorder %s21, 1
      %p38 = por %p36, %p37
      %p39 = scmp.ne.s32.totalorder %s31, %s34
      %p40 = scmp.eq.s32.totalorder %s21, 0
      %p41 = por %p39, %p40
      %p42 = scmp.ne.s32.totalorder %s31, %s34
      %p43 = scmp.eq.s32.totalorder %s26, 1
      %p44 = por %p42, %p43
      %p45 = scmp.ne.s32.totalorder %s34, %s35
      %p46 = scmp.eq.s32.totalorder %s26, 0
      %p47 = por %p45, %p46
      %p48 = scmp.ne.s32.totalorder %s34, %s35
      %p49 = scmp.eq.s32.totalorder %s27, 1
      %p50 = por %p48, %p49
      %p52 = scmp.ne.s32.totalorder %s35, %s51
      %p53 = scmp.eq.s32.totalorder %s27, 0
      %p54 = por %p52, %p53
      %s55 = ssub.s32 %s21, %s28
      %p56 = scmp.eq.s32.totalorder %s55, 0
      %s58 = sadd.s32 %s57, 1
      %s59 = scalar_select %p56, %s57, %s58
      %p62 = pneg %p56
      %p63 = scmp.eq.s32.totalorder %s21, 1
      %p64 = por %p62, %p63
      %p65 = scmp.ne.s32.totalorder %s57, %s60
      %p66 = scmp.eq.s32.totalorder %s21, 0
      %p67 = por %p65, %p66
      %p68 = scmp.ne.s32.totalorder %s57, %s60
      %p69 = scmp.eq.s32.totalorder %s26, 1
      %p70 = por %p68, %p69
      %p71 = scmp.ne.s32.totalorder %s60, %s61
      %p72 = scmp.eq.s32.totalorder %s26, 0
      %p73 = por %p71, %p72
      %p74 = scmp.ne.s32.totalorder %s60, %s61
      %p75 = scmp.eq.s32.totalorder %s27, 1
      %p76 = por %p74, %p75
      %p78 = scmp.ne.s32.totalorder %s61, %s77
      %p79 = scmp.eq.s32.totalorder %s27, 0
      %p80 = por %p78, %p79
      %s82 = sadd.s32 %s81, 1
      %p85 = scmp.eq.s32.totalorder %s21, 1
      %p86 = scmp.ne.s32.totalorder %s81, %s83
      %p87 = scmp.eq.s32.totalorder %s21, 0
      %p88 = por %p86, %p87
      %p89 = scmp.ne.s32.totalorder %s81, %s83
      %p90 = scmp.eq.s32.totalorder %s26, 1
      %p91 = por %p89, %p90
      %p92 = scmp.ne.s32.totalorder %s83, %s84
      %p93 = scmp.eq.s32.totalorder %s26, 0
      %p94 = por %p92, %p93
      %p95 = scmp.ne.s32.totalorder %s83, %s84
      %p96 = scmp.eq.s32.totalorder %s27, 1
      %p97 = por %p95, %p96
      %p99 = scmp.ne.s32.totalorder %s84, %s98
      %p100 = scmp.eq.s32.totalorder %s27, 0
      %p101 = por %p99, %p100
      %s103 = sadd.s32 %s102, 1
      %p106 = scmp.eq.s32.totalorder %s21, 1
      %p107 = scmp.ne.s32.totalorder %s102, %s104
      %p108 = scmp.eq.s32.totalorder %s21, 0
      %p109 = por %p107, %p108
      %p110 = scmp.ne.s32.totalorder %s102, %s104
      %p111 = scmp.eq.s32.totalorder %s26, 1
      %p112 = por %p110, %p111
      %p113 = scmp.ne.s32.totalorder %s104, %s105
      %p114 = scmp.eq.s32.totalorder %s26, 0
      %p115 = por %p113, %p114
      %p116 = scmp.ne.s32.totalorder %s104, %s105
      %p117 = scmp.eq.s32.totalorder %s27, 1
      %p118 = por %p116, %p117
      %p120 = scmp.ne.s32.totalorder %s105, %s119
      %p121 = scmp.eq.s32.totalorder %s27, 0
      %p122 = por %p120, %p121
      %s124 = sadd.s32 %s123, 1
      %p127 = scmp.eq.s32.totalorder %s21, 1
      %p128 = scmp.ne.s32.totalorder %s123, %s125
      %p129 = scmp.eq.s32.totalorder %s21, 0
      %p130 = por %p128, %p129
      %p131 = scmp.ne.s32.totalorder %s123, %s125
      %p132 = scmp.eq.s32.totalorder %s26, 1
      %p133 = por %p131, %p132
      %p134 = scmp.ne.s32.totalorder %s125, %s126
      %p135 = scmp.eq.s32.totalorder %s26, 0
      %p136 = por %p134, %p135
      %p137 = scmp.ne.s32.totalorder %s125, %s126
      %p138 = scmp.eq.s32.totalorder %s27, 1
      %p139 = por %p137, %p138
      %p141 = scmp.ne.s32.totalorder %s126, %s140
      %p142 = scmp.eq.s32.totalorder %s27, 0
      %p143 = por %p141, %p142
      %s145 = sadd.s32 %s144, 1
      %p148 = scmp.eq.s32.totalorder %s21, 1
      %p149 = scmp.ne.s32.totalorder %s144, %s146
      %p150 = scmp.eq.s32.totalorder %s21, 0
      %p151 = por %p149, %p150
      %p152 = scmp.ne.s32.totalorder %s144, %s146
      %p153 = scmp.eq.s32.totalorder %s26, 1
      %p154 = por %p152, %p153
      %p155 = scmp.ne.s32.totalorder %s146, %s147
      %p156 = scmp.eq.s32.totalorder %s26, 0
      %p157 = por %p155, %p156
      %p158 = scmp.ne.s32.totalorder %s146, %s147
      %p159 = scmp.eq.s32.totalorder %s27, 1
      %p160 = por %p158, %p159
      %p162 = scmp.ne.s32.totalorder %s147, %s161
      %p163 = scmp.eq.s32.totalorder %s27, 0
      %p164 = por %p162, %p163
      %s165 = ssub.s32 %s21, %s28
      %p166 = scmp.eq.s32.totalorder %s165, 0
      %s168 = sadd.s32 %s167, 1
      %s169 = scalar_select %p166, %s167, %s168
      %p172 = pneg %p166
      %p173 = scmp.eq.s32.totalorder %s21, 1
      %p174 = por %p172, %p173
      %p175 = scmp.ne.s32.totalorder %s167, %s170
      %p176 = scmp.eq.s32.totalorder %s21, 0
      %p177 = por %p175, %p176
      %p178 = scmp.ne.s32.totalorder %s167, %s170
      %p179 = scmp.eq.s32.totalorder %s26, 1
      %p180 = por %p178, %p179
      %p181 = scmp.ne.s32.totalorder %s170, %s171
      %p182 = scmp.eq.s32.totalorder %s26, 0
      %p183 = por %p181, %p182
      %p184 = scmp.ne.s32.totalorder %s170, %s171
      %p185 = scmp.eq.s32.totalorder %s27, 1
      %p186 = por %p184, %p185
      %p188 = scmp.ne.s32.totalorder %s171, %s187
      %p189 = scmp.eq.s32.totalorder %s27, 0
      %p190 = por %p188, %p189
      %s191 = ssub.s32 %s21, %s28
      %p192 = scmp.eq.s32.totalorder %s191, 0
      %s194 = sadd.s32 %s193, 1
      %s195 = scalar_select %p192, %s193, %s194
      %p198 = pneg %p192
      %p199 = scmp.eq.s32.totalorder %s21, 1
      %p200 = por %p198, %p199
      %p201 = scmp.ne.s32.totalorder %s193, %s196
      %p202 = scmp.eq.s32.totalorder %s21, 0
      %p203 = por %p201, %p202
      %p204 = scmp.ne.s32.totalorder %s193, %s196
      %p205 = scmp.eq.s32.totalorder %s26, 1
      %p206 = por %p204, %p205
      %p207 = scmp.ne.s32.totalorder %s196, %s197
      %p208 = scmp.eq.s32.totalorder %s26, 0
      %p209 = por %p207, %p208
      %p210 = scmp.ne.s32.totalorder %s196, %s197
      %p211 = scmp.eq.s32.totalorder %s27, 1
      %p212 = por %p210, %p211
      %p214 = scmp.ne.s32.totalorder %s197, %s213
      %p215 = scmp.eq.s32.totalorder %s27, 0
      %p216 = por %p214, %p215
      %s217 = ssub.s32 %s21, %s28
      %p218 = scmp.eq.s32.totalorder %s217, 0
      %s220 = sadd.s32 %s219, 1
      %s221 = scalar_select %p218, %s219, %s220
      %p224 = pneg %p218
      %p225 = scmp.eq.s32.totalorder %s21, 1
      %p226 = por %p224, %p225
      %p227 = scmp.ne.s32.totalorder %s219, %s222
      %p228 = scmp.eq.s32.totalorder %s21, 0
      %p229 = por %p227, %p228
      %p230 = scmp.ne.s32.totalorder %s219, %s222
      %p231 = scmp.eq.s32.totalorder %s26, 1
      %p232 = por %p230, %p231
      %p233 = scmp.ne.s32.totalorder %s222, %s223
      %p234 = scmp.eq.s32.totalorder %s26, 0
      %p235 = por %p233, %p234
      %p236 = scmp.ne.s32.totalorder %s222, %s223
      %p237 = scmp.eq.s32.totalorder %s27, 1
      %p238 = por %p236, %p237
      %p240 = scmp.ne.s32.totalorder %s223, %s239
      %p241 = scmp.eq.s32.totalorder %s27, 0
      %p242 = por %p240, %p241
      %p243 = scmp.le.s32.totalorder 1, %s21
      %p244 = scmp.lt.s32.totalorder %s21, 3
      %p245 = pnand %p243, %p244
      %p246 = pneg %p245
      // Predicated region
      $region9: #{tpu_custom_call.1} parent=5 // pred_check
        _
      $region10: #{tpu_custom_call.1} parent=5 // pred_check_branch
        %248 = sbr.rel (%p245) target = $region12
      $region11: #{tpu_custom_call.1} parent=5 // pred_region
        %s249 = ssub.s32 %s21, 1
        // Predicated region
        $region13: #{tpu_custom_call.1} parent=11 // pred_check
          %p250 = pneg %p94
        $region14: #{tpu_custom_call.1} parent=11 // pred_check_branch
          %252 = sbr.rel (%p250) target = $region16
        $region15: #{tpu_custom_call.1} parent=11 // pred_region
          _
        $region16: #{tpu_custom_call.1} parent=11 // pred_fallthru
          _
        // Predicated region
        $region17: #{tpu_custom_call.1} parent=11 // pred_check
          %p253 = pneg %p115
        $region18: #{tpu_custom_call.1} parent=11 // pred_check_branch
          %255 = sbr.rel (%p253) target = $region20
        $region19: #{tpu_custom_call.1} parent=11 // pred_region
          _
        $region20: #{tpu_custom_call.1} parent=11 // pred_fallthru
          _
        // Predicated region
        $region21: #{tpu_custom_call.1} parent=11 // pred_check
          %p256 = pneg %p136
        $region22: #{tpu_custom_call.1} parent=11 // pred_check_branch
          %258 = sbr.rel (%p256) target = $region24
        $region23: #{tpu_custom_call.1} parent=11 // pred_region
          _
        $region24: #{tpu_custom_call.1} parent=11 // pred_fallthru
          _
        // Predicated region
        $region25: #{tpu_custom_call.1} parent=11 // pred_check
          %p259 = pneg %p157
        $region26: #{tpu_custom_call.1} parent=11 // pred_check_branch
          %261 = sbr.rel (%p259) target = $region28
        $region27: #{tpu_custom_call.1} parent=11 // pred_region
          _
        $region28: #{tpu_custom_call.1} parent=11 // pred_fallthru
          _
      $region12: #{tpu_custom_call.1} parent=5 // pred_fallthru
        _
      %p262 = scmp.lt.s32.totalorder %s21, 2
      // Predicated region
      $region29: #{tpu_custom_call.1} parent=5 // pred_check
        %p263 = pneg %p262
      $region30: #{tpu_custom_call.1} parent=5 // pred_check_branch
        %265 = sbr.rel (%p263) target = $region32
      $region31: #{tpu_custom_call.1} parent=5 // pred_region
        // Predicated region
        $region33: #{tpu_custom_call.1} parent=31 // pred_check
          %p266 = pneg %p41
        $region34: #{tpu_custom_call.1} parent=31 // pred_check_branch
          %268 = sbr.rel (%p266) target = $region36
        $region35: #{tpu_custom_call.1} parent=31 // pred_region
          %s269 = smul.u32 2, %s21
          %p270 = scmp.lt.s32.totalorder %s269, 3
          %s271 = scalar_select %p270, %s269, 3
          %s272 = smul.addr %s271, 4
          %s273 = scalar_lea.vmem %s0, %s272
          %s274 = smul.u32 2, %s21
        $region36: #{tpu_custom_call.1} parent=31 // pred_fallthru
          _
        // Predicated region
        $region37: #{tpu_custom_call.1} parent=31 // pred_check
          %p275 = pneg %p67
        $region38: #{tpu_custom_call.1} parent=31 // pred_check_branch
          %277 = sbr.rel (%p275) target = $region40
        $region39: #{tpu_custom_call.1} parent=31 // pred_region
          %s278 = smul.u32 2, %s21
          %p279 = scmp.lt.s32.totalorder %s278, 3
          %s280 = scalar_select %p279, %s278, 3
          %s281 = smul.addr %s280, 4
          %s282 = scalar_lea.vmem %s1, %s281
          %s283 = smul.u32 2, %s21
        $region40: #{tpu_custom_call.1} parent=31 // pred_fallthru
          _
      $region32: #{tpu_custom_call.1} parent=5 // pred_fallthru
        _
      %p284 = scmp.le.s32.totalorder 1, %s21
      %p285 = scmp.lt.s32.totalorder %s21, 3
      %p286 = pnand %p284, %p285
      %p287 = pneg %p286
      // Predicated region
      $region41: #{tpu_custom_call.1} parent=5 // pred_check
        _
      $region42: #{tpu_custom_call.1} parent=5 // pred_check_branch
        %289 = sbr.rel (%p286) target = $region44
      $region43: #{tpu_custom_call.1} parent=5 // pred_region
        %s290 = ssub.s32 %s21, 1
        %s291 = smul.u32 2, %s26
        %p292 = scmp.lt.s32.totalorder %s291, 3
        %s293 = scalar_select %p292, %s291, 3
        %s294 = smul.addr %s293, 4
        %s295 = scalar_lea.vmem %s0, %s294
        %p296 = pneg %p47
        %p297 = pneg %p44
        %s298 = smul.u32 2, %s26
        %p299 = scmp.lt.s32.totalorder %s298, 3
        %s300 = scalar_select %p299, %s298, 3
        %s301 = smul.addr %s300, 4
        %s302 = scalar_lea.vmem %s1, %s301
        %p303 = pneg %p73
        %p304 = pneg %p70
        %p305 = pneg %p94
        %p306 = pneg %p91
        %p307 = pneg %p115
        %p308 = pneg %p112
        %p309 = pneg %p136
        %p310 = pneg %p133
        %p311 = pneg %p157
        %p312 = pneg %p154
        %p313 = pneg %p183
        %p314 = pneg %p180
        %s315 = sand.u32 %s170, 1
        %s316 = scalar_lea.sflag [#allocation3], %s315
        %s317 = sand.u32 %s170, 1
        %s318 = smul.addr %s317, 8
        %s319 = scalar_lea.vmem [#allocation2], %s318
        %p320 = pneg %p209
        %p321 = pneg %p206
        %s322 = sand.u32 %s26, 1
        %s323 = scalar_lea.sflag [#allocation5], %s322
        %s324 = sand.u32 %s196, 1
        %s325 = smul.addr %s324, 2
        %s326 = scalar_lea.vmem [#allocation4], %s325
        %p327 = pneg %p235
        %p328 = pneg %p232
        %s329 = sand.u32 %s26, 1
        %s330 = scalar_lea.sflag [#allocation5], %s329
        %s331 = sand.u32 %s222, 1
        %s332 = smul.addr %s331, 2
        %s333 = scalar_lea.vmem [#allocation6], %s332
        %s334 = smul.u32 2, %s26
        %p335 = scmp.lt.s32.totalorder %s334, 3
        %s336 = scalar_select %p335, %s334, 3
        %s337 = smul.addr %s336, 4
        %s338 = scalar_lea.vmem %s0, %s337
        %s339 = smul.u32 2, %s26
        %s340 = smul.u32 2, %s26
        %p341 = scmp.lt.s32.totalorder %s340, 3
        %s342 = scalar_select %p341, %s340, 3
        %s343 = smul.addr %s342, 4
        %s344 = scalar_lea.vmem %s1, %s343
        %s345 = smul.u32 2, %s26
        %s346 = smul.u32 2, %s26
        %s347 = smul.u32 2, %s26
        %s348 = smul.u32 2, %s26
        %v349 = vld [vmem:[%s338] sm:$0x77]
        %v350 = vld [vmem:[%s344] sm:$0x77]
        %v351 = vld [vmem:[%s2] sm:$0xff]
        %v352 = vld [vmem:[%s2 + $0x8] sm:$0xff]
        %v353 = vld [vmem:[%s2 + $0x10] sm:$0xff]
        %v354 = vld [vmem:[%s2 + $0x18] sm:$0xff]
        %v355 = vld [vmem:[%s3] sm:$0xff]
        %v356 = vld [vmem:[%s3 + $0x8] sm:$0xff]
        %v357 = vld [vmem:[%s3 + $0x10] sm:$0xff]
        %v358 = vld [vmem:[%s3 + $0x18] sm:$0xff]
        %v359 = vld [vmem:[%s4] sm:$0xf]
        %v360 = vld [vmem:[%s5] sm:$0xf]
        %v361 = vadd.f32 %v349, %v350
        %363 = vset.pattern.permute.xlu0 0
        %364 = vperm.xlu0 %363, %v355
        %v365 = vpop.permute.xlu0 %364
        %368 = vset.pattern.permute.xlu0 0
        %369 = vperm.xlu0 %368, %v356
        %v370 = vpop.permute.xlu0 %369
        %373 = vset.pattern.permute.xlu0 0
        %374 = vperm.xlu0 %373, %v357
        %v375 = vpop.permute.xlu0 %374
        %378 = vset.pattern.permute.xlu0 0
        %379 = vperm.xlu0 %378, %v358
        %v380 = vpop.permute.xlu0 %379
        %383 = vst [vmem:[#allocation1] ss:$2 sm:$0xff] %v361
        %v384 = vld.sshfl [vmem:[#allocation1] sm:$0xff pattern:$0x75316420]
        %v385 = vld.sshfl [vmem:[#allocation1 + $0x8] sm:$0xff pattern:$0x75316420]
        %vm386 = vcmask 23552
        %v388 = vsel %vm386, %v351, 0
        %v391 = vsel %vm386, %v352, 0
        %v394 = vsel %vm386, %v353, 0
        %v397 = vsel %vm386, %v354, 0
        %vm399 = vcmask 1042432
        %v400 = vsel %vm399, %v384, 0
        %v402 = vsel %vm399, %v385, 0
        %404 = vmatpush.msra.mxu0 0.0
        %405 = vmatpush.msra.mxu0 0.0
        %406 = vmatpush.msra.mxu0 0.0
        %407 = vmatpush.msra.mxu0 0.0
        %408 = vmatpush.msra.mxu0 0.0
        %409 = vmatpush.msra.mxu0 0.0
        %410 = vmatpush.msra.mxu0 0.0
        %411 = vmatpush.msra.mxu0 0.0
        %412 = vmatpush.msra.mxu0 0.0
        %413 = vmatpush.msra.mxu0 0.0
        %414 = vmatpush.msra.mxu0 0.0
        %415 = vmatpush.msra.mxu0 0.0
        %416 = vmatpush.msra.mxu0 0.0
        %417 = vmatpush.msra.mxu0 0.0
        %418 = vmatpush.msra.mxu0 0.0
        %419 = vmatpush.msra.mxu0 %v400
        %420 = vmatmul.f32.gmra.mxu0 %v388
        %v421 = vpop.f32.mrf.mxu0
        %v422 = vadd.f32 %v365, %v421
        %423 = vmatmul.f32.gmra.mxu0 %v391
        %v424 = vpop.f32.mrf.mxu0
        %v425 = vadd.f32 %v370, %v424
        %426 = vmatmul.f32.gmra.mxu0 %v394
        %v427 = vpop.f32.mrf.mxu0
        %v428 = vadd.f32 %v375, %v427
        %429 = vmatmul.f32.gmra.mxu0 %v397
        %v430 = vpop.f32.mrf.mxu0
        %v431 = vadd.f32 %v380, %v430
        %432 = vdwg.mxu0
        %433 = vmatpush.msra.mxu0 0.0
        %434 = vmatpush.msra.mxu0 0.0
        %435 = vmatpush.msra.mxu0 0.0
        %436 = vmatpush.msra.mxu0 0.0
        %437 = vmatpush.msra.mxu0 0.0
        %438 = vmatpush.msra.mxu0 0.0
        %439 = vmatpush.msra.mxu0 0.0
        %440 = vmatpush.msra.mxu0 0.0
        %441 = vmatpush.msra.mxu0 0.0
        %442 = vmatpush.msra.mxu0 0.0
        %443 = vmatpush.msra.mxu0 0.0
        %444 = vmatpush.msra.mxu0 0.0
        %445 = vmatpush.msra.mxu0 0.0
        %446 = vmatpush.msra.mxu0 0.0
        %447 = vmatpush.msra.mxu0 0.0
        %448 = vmatpush.msra.mxu0 %v402
        %449 = vmatmul.f32.gmra.mxu0 %v388
        %v450 = vpop.f32.mrf.mxu0
        %v451 = vadd.f32 %v365, %v450
        %452 = vmatmul.f32.gmra.mxu0 %v391
        %v453 = vpop.f32.mrf.mxu0
        %v454 = vadd.f32 %v370, %v453
        %455 = vmatmul.f32.gmra.mxu0 %v394
        %v456 = vpop.f32.mrf.mxu0
        %v457 = vadd.f32 %v375, %v456
        %458 = vmatmul.f32.gmra.mxu0 %v397
        %v459 = vpop.f32.mrf.mxu0
        %v460 = vadd.f32 %v380, %v459
        %461 = vdwg.mxu0
        %v462 = vmax.f32 %v422, 0.0
        %v463 = vmax.f32 %v451, 0.0
        %v464 = vmax.f32 %v425, 0.0
        %v465 = vmax.f32 %v454, 0.0
        %v466 = vmax.f32 %v428, 0.0
        %v467 = vmax.f32 %v457, 0.0
        %v468 = vmax.f32 %v431, 0.0
        %v469 = vmax.f32 %v460, 0.0
        %471 = vset.pattern.permute.xlu0 0
        %472 = vperm.xlu0 %471, %v360
        %v473 = vpop.permute.xlu0 %472
        %vm475 = vcmask 261120
        %v477 = vsel %vm475, %v359, 0
        %479 = vmatpush.msra.mxu0 0.0
        %480 = vmatpush.msra.mxu0 0.0
        %481 = vmatpush.msra.mxu0 0.0
        %482 = vmatpush.msra.mxu0 0.0
        %483 = vmatpush.msra.mxu0 0.0
        %484 = vmatpush.msra.mxu0 0.0
        %485 = vmatpush.msra.mxu0 0.0
        %486 = vmatpush.msra.mxu0 0.0
        %487 = vmatpush.msra.mxu0 0.0
        %488 = vmatpush.msra.mxu0 0.0
        %489 = vmatpush.msra.mxu0 0.0
        %490 = vmatpush.msra.mxu0 0.0
        %491 = vmatpush.msra.mxu0 %v468
        %492 = vmatpush.msra.mxu0 %v466
        %493 = vmatpush.msra.mxu0 %v464
        %494 = vmatpush.msra.mxu0 %v462
        %495 = vmatmul.f32.gmra.mxu0 %v477
        %v496 = vpop.f32.mrf.mxu0
        %v497 = vadd.f32 %v473, %v496
        %498 = vdwg.mxu0
        %499 = vmatpush.msra.mxu0 0.0
        %500 = vmatpush.msra.mxu0 0.0
        %501 = vmatpush.msra.mxu0 0.0
        %502 = vmatpush.msra.mxu0 0.0
        %503 = vmatpush.msra.mxu0 0.0
        %504 = vmatpush.msra.mxu0 0.0
        %505 = vmatpush.msra.mxu0 0.0
        %506 = vmatpush.msra.mxu0 0.0
        %507 = vmatpush.msra.mxu0 0.0
        %508 = vmatpush.msra.mxu0 0.0
        %509 = vmatpush.msra.mxu0 0.0
        %510 = vmatpush.msra.mxu0 0.0
        %511 = vmatpush.msra.mxu0 %v469
        %512 = vmatpush.msra.mxu0 %v467
        %513 = vmatpush.msra.mxu0 %v465
        %514 = vmatpush.msra.mxu0 %v463
        %515 = vmatmul.f32.gmra.mxu0 %v477
        %v516 = vpop.f32.mrf.mxu0
        %v517 = vadd.f32 %v473, %v516
        %518 = vdwg.mxu0
        %v519 = vmax.f32 %v497, 0.0
        %v520 = vmax.f32 %v517, 0.0
        %v521 = vsub.f32 0.0, %v519
        %v522 = vsub.f32 0.0, %v520
        %v523 = vmul.f32 %v521, 0.09677422
        %v524 = vmul.f32 %v522, 0.09677422
        %v525 = vmul.f32 %v523, 1.442695
        %v526 = vpow.pop %v525
        %v527 = vmul.f32 %v524, 1.442695
        %v528 = vpow.pop %v527
        %v529 = vsub.f32 1.0, %v526
        %v530 = vsub.f32 1.0, %v528
        %v531 = vperm.slane %v529, 0
        %v532 = vperm.slane %v530, 0
        %v533 = vmul.f32 %v531, %v497
        %v534 = vmul.f32 %v532, %v517
        %v535 = vadd.f32 %v533, 0.0
        %v536 = vadd.f32 %v534, 0.0
        %v537 = vadd.f32 %v529, 0.0
        %v538 = vadd.f32 %v530, 0.0
        %v539 = vsub.f32 1.0, %v529
        %v540 = vsub.f32 1.0, %v530
        %v541 = vadd.f32 %v539, 1e-10
        %v542 = vadd.f32 %v540, 1e-10
        %v543 = vmul.f32 %v350, 1.0967742
        %v544 = vadd.f32 %v349, %v543
        %546 = vst [vmem:[#allocation1] ss:$2 sm:$0xff] %v544
        %v547 = vld.sshfl [vmem:[#allocation1] sm:$0xff pattern:$0x75316420]
        %v548 = vld.sshfl [vmem:[#allocation1 + $0x8] sm:$0xff pattern:$0x75316420]
        %v549 = vsel %vm399, %v547, 0
        %v551 = vsel %vm399, %v548, 0
        %553 = vmatpush.msra.mxu0 0.0
        %554 = vmatpush.msra.mxu0 0.0
        %555 = vmatpush.msra.mxu0 0.0
        %556 = vmatpush.msra.mxu0 0.0
        %557 = vmatpush.msra.mxu0 0.0
        %558 = vmatpush.msra.mxu0 0.0
        %559 = vmatpush.msra.mxu0 0.0
        %560 = vmatpush.msra.mxu0 0.0
        %561 = vmatpush.msra.mxu0 0.0
        %562 = vmatpush.msra.mxu0 0.0
        %563 = vmatpush.msra.mxu0 0.0
        %564 = vmatpush.msra.mxu0 0.0
        %565 = vmatpush.msra.mxu0 0.0
        %566 = vmatpush.msra.mxu0 0.0
        %567 = vmatpush.msra.mxu0 0.0
        %568 = vmatpush.msra.mxu0 %v549
        %569 = vmatmul.f32.gmra.mxu0 %v388
        %v570 = vpop.f32.mrf.mxu0
        %v571 = vadd.f32 %v365, %v570
        %572 = vmatmul.f32.gmra.mxu0 %v391
        %v573 = vpop.f32.mrf.mxu0
        %v574 = vadd.f32 %v370, %v573
        %575 = vmatmul.f32.gmra.mxu0 %v394
        %v576 = vpop.f32.mrf.mxu0
        %v577 = vadd.f32 %v375, %v576
        %578 = vmatmul.f32.gmra.mxu0 %v397
        %v579 = vpop.f32.mrf.mxu0
        %v580 = vadd.f32 %v380, %v579
        %581 = vdwg.mxu0
        %582 = vmatpush.msra.mxu0 0.0
        %583 = vmatpush.msra.mxu0 0.0
        %584 = vmatpush.msra.mxu0 0.0
        %585 = vmatpush.msra.mxu0 0.0
        %586 = vmatpush.msra.mxu0 0.0
        %587 = vmatpush.msra.mxu0 0.0
        %588 = vmatpush.msra.mxu0 0.0
        %589 = vmatpush.msra.mxu0 0.0
        %590 = vmatpush.msra.mxu0 0.0
        %591 = vmatpush.msra.mxu0 0.0
        %592 = vmatpush.msra.mxu0 0.0
        %593 = vmatpush.msra.mxu0 0.0
        %594 = vmatpush.msra.mxu0 0.0
        %595 = vmatpush.msra.mxu0 0.0
        %596 = vmatpush.msra.mxu0 0.0
        %597 = vmatpush.msra.mxu0 %v551
        %598 = vmatmul.f32.gmra.mxu0 %v388
        %v599 = vpop.f32.mrf.mxu0
        %v600 = vadd.f32 %v365, %v599
        %601 = vmatmul.f32.gmra.mxu0 %v391
        %v602 = vpop.f32.mrf.mxu0
        %v603 = vadd.f32 %v370, %v602
        %604 = vmatmul.f32.gmra.mxu0 %v394
        %v605 = vpop.f32.mrf.mxu0
        %v606 = vadd.f32 %v375, %v605
        %607 = vmatmul.f32.gmra.mxu0 %v397
        %v608 = vpop.f32.mrf.mxu0
        %v609 = vadd.f32 %v380, %v608
        %610 = vdwg.mxu0
        %v611 = vmax.f32 %v571, 0.0
        %v612 = vmax.f32 %v600, 0.0
        %v613 = vmax.f32 %v574, 0.0
        %v614 = vmax.f32 %v603, 0.0
        %v615 = vmax.f32 %v577, 0.0
        %v616 = vmax.f32 %v606, 0.0
        %v617 = vmax.f32 %v580, 0.0
        %v618 = vmax.f32 %v609, 0.0
        %619 = vmatpush.msra.mxu0 0.0
        %620 = vmatpush.msra.mxu0 0.0
        %621 = vmatpush.msra.mxu0 0.0
        %622 = vmatpush.msra.mxu0 0.0
        %623 = vmatpush.msra.mxu0 0.0
        %624 = vmatpush.msra.mxu0 0.0
        %625 = vmatpush.msra.mxu0 0.0
        %626 = vmatpush.msra.mxu0 0.0
        %627 = vmatpush.msra.mxu0 0.0
        %628 = vmatpush.msra.mxu0 0.0
        %629 = vmatpush.msra.mxu0 0.0
        %630 = vmatpush.msra.mxu0 0.0
        %631 = vmatpush.msra.mxu0 %v617
        %632 = vmatpush.msra.mxu0 %v615
        %633 = vmatpush.msra.mxu0 %v613
        %634 = vmatpush.msra.mxu0 %v611
        %635 = vmatmul.f32.gmra.mxu0 %v477
        %v636 = vpop.f32.mrf.mxu0
        %v637 = vadd.f32 %v473, %v636
        %638 = vdwg.mxu0
        %639 = vmatpush.msra.mxu0 0.0
        %640 = vmatpush.msra.mxu0 0.0
        %641 = vmatpush.msra.mxu0 0.0
        %642 = vmatpush.msra.mxu0 0.0
        %643 = vmatpush.msra.mxu0 0.0
        %644 = vmatpush.msra.mxu0 0.0
        %645 = vmatpush.msra.mxu0 0.0
        %646 = vmatpush.msra.mxu0 0.0
        %647 = vmatpush.msra.mxu0 0.0
        %648 = vmatpush.msra.mxu0 0.0
        %649 = vmatpush.msra.mxu0 0.0
        %650 = vmatpush.msra.mxu0 0.0
        %651 = vmatpush.msra.mxu0 %v618
        %652 = vmatpush.msra.mxu0 %v616
        %653 = vmatpush.msra.mxu0 %v614
        %654 = vmatpush.msra.mxu0 %v612
        %655 = vmatmul.f32.gmra.mxu0 %v477
        %v656 = vpop.f32.mrf.mxu0
        %v657 = vadd.f32 %v473, %v656
        %658 = vdwg.mxu0
        %v659 = vmax.f32 %v637, 0.0
        %v660 = vmax.f32 %v657, 0.0
        %v661 = vsub.f32 0.0, %v659
        %v662 = vsub.f32 0.0, %v660
        %v663 = vmul.f32 %v661, 0.09677422
        %v664 = vmul.f32 %v662, 0.09677422
        %v665 = vmul.f32 %v663, 1.442695
        %v666 = vpow.pop %v665
        %v667 = vmul.f32 %v664, 1.442695
        %v668 = vpow.pop %v667
        %v669 = vsub.f32 1.0, %v666
        %v670 = vsub.f32 1.0, %v668
        %v671 = vmul.f32 %v669, %v541
        %v672 = vmul.f32 %v670, %v542
        %v673 = vperm.slane %v671, 0
        %v674 = vperm.slane %v672, 0
        %v675 = vmul.f32 %v673, %v637
        %v676 = vmul.f32 %v674, %v657
        %v677 = vadd.f32 %v535, %v675
        %v678 = vadd.f32 %v536, %v676
        %v679 = vmul.f32 %v671, 1.0967742
        %v680 = vmul.f32 %v672, 1.0967742
        %v681 = vadd.f32 %v537, %v679
        %v682 = vadd.f32 %v538, %v680
        %v683 = vadd.f32 %v537, %v671
        %v684 = vadd.f32 %v538, %v672
        %v685 = vsub.f32 1.0, %v669
        %v686 = vsub.f32 1.0, %v670
        %v687 = vadd.f32 %v685, 1e-10
        %v688 = vadd.f32 %v686, 1e-10
        %v689 = vmul.f32 %v541, %v687
        %v690 = vmul.f32 %v542, %v688
        %v691 = vmul.f32 %v350, 1.1935484
        %v692 = vadd.f32 %v349, %v691
        %694 = vst [vmem:[#allocation1] ss:$2 sm:$0xff] %v692
        %v695 = vld.sshfl [vmem:[#allocation1] sm:$0xff pattern:$0x75316420]
        %v696 = vld.sshfl [vmem:[#allocation1 + $0x8] sm:$0xff pattern:$0x75316420]
        %v697 = vsel %vm399, %v695, 0
        %v699 = vsel %vm399, %v696, 0
        %701 = vmatpush.msra.mxu0 0.0
        %702 = vmatpush.msra.mxu0 0.0
        %703 = vmatpush.msra.mxu0 0.0
        %704 = vmatpush.msra.mxu0 0.0
        %705 = vmatpush.msra.mxu0 0.0
        %706 = vmatpush.msra.mxu0 0.0
        %707 = vmatpush.msra.mxu0 0.0
        %708 = vmatpush.msra.mxu0 0.0
        %709 = vmatpush.msra.mxu0 0.0
        %710 = vmatpush.msra.mxu0 0.0
        %711 = vmatpush.msra.mxu0 0.0
        %712 = vmatpush.msra.mxu0 0.0
        %713 = vmatpush.msra.mxu0 0.0
        %714 = vmatpush.msra.mxu0 0.0
        %715 = vmatpush.msra.mxu0 0.0
        %716 = vmatpush.msra.mxu0 %v697
        %717 = vmatmul.f32.gmra.mxu0 %v388
        %v718 = vpop.f32.mrf.mxu0
        %v719 = vadd.f32 %v365, %v718
        %720 = vmatmul.f32.gmra.mxu0 %v391
        %v721 = vpop.f32.mrf.mxu0
        %v722 = vadd.f32 %v370, %v721
        %723 = vmatmul.f32.gmra.mxu0 %v394
        %v724 = vpop.f32.mrf.mxu0
        %v725 = vadd.f32 %v375, %v724
        %726 = vmatmul.f32.gmra.mxu0 %v397
        %v727 = vpop.f32.mrf.mxu0
        %v728 = vadd.f32 %v380, %v727
        %729 = vdwg.mxu0
        %730 = vmatpush.msra.mxu0 0.0
        %731 = vmatpush.msra.mxu0 0.0
        %732 = vmatpush.msra.mxu0 0.0
        %733 = vmatpush.msra.mxu0 0.0
        %734 = vmatpush.msra.mxu0 0.0
        %735 = vmatpush.msra.mxu0 0.0
        %736 = vmatpush.msra.mxu0 0.0
        %737 = vmatpush.msra.mxu0 0.0
        %738 = vmatpush.msra.mxu0 0.0
        %739 = vmatpush.msra.mxu0 0.0
        %740 = vmatpush.msra.mxu0 0.0
        %741 = vmatpush.msra.mxu0 0.0
        %742 = vmatpush.msra.mxu0 0.0
        %743 = vmatpush.msra.mxu0 0.0
        %744 = vmatpush.msra.mxu0 0.0
        %745 = vmatpush.msra.mxu0 %v699
        %746 = vmatmul.f32.gmra.mxu0 %v388
        %v747 = vpop.f32.mrf.mxu0
        %v748 = vadd.f32 %v365, %v747
        %749 = vmatmul.f32.gmra.mxu0 %v391
        %v750 = vpop.f32.mrf.mxu0
        %v751 = vadd.f32 %v370, %v750
        %752 = vmatmul.f32.gmra.mxu0 %v394
        %v753 = vpop.f32.mrf.mxu0
        %v754 = vadd.f32 %v375, %v753
        %755 = vmatmul.f32.gmra.mxu0 %v397
        %v756 = vpop.f32.mrf.mxu0
        %v757 = vadd.f32 %v380, %v756
        %758 = vdwg.mxu0
        %v759 = vmax.f32 %v719, 0.0
        %v760 = vmax.f32 %v748, 0.0
        %v761 = vmax.f32 %v722, 0.0
        %v762 = vmax.f32 %v751, 0.0
        %v763 = vmax.f32 %v725, 0.0
        %v764 = vmax.f32 %v754, 0.0
        %v765 = vmax.f32 %v728, 0.0
        %v766 = vmax.f32 %v757, 0.0
        %767 = vmatpush.msra.mxu0 0.0
        %768 = vmatpush.msra.mxu0 0.0
        %769 = vmatpush.msra.mxu0 0.0
        %770 = vmatpush.msra.mxu0 0.0
        %771 = vmatpush.msra.mxu0 0.0
        %772 = vmatpush.msra.mxu0 0.0
        %773 = vmatpush.msra.mxu0 0.0
        %774 = vmatpush.msra.mxu0 0.0
        %775 = vmatpush.msra.mxu0 0.0
        %776 = vmatpush.msra.mxu0 0.0
        %777 = vmatpush.msra.mxu0 0.0
        %778 = vmatpush.msra.mxu0 0.0
        %779 = vmatpush.msra.mxu0 %v765
        %780 = vmatpush.msra.mxu0 %v763
        %781 = vmatpush.msra.mxu0 %v761
        %782 = vmatpush.msra.mxu0 %v759
        %783 = vmatmul.f32.gmra.mxu0 %v477
        %v784 = vpop.f32.mrf.mxu0
        %v785 = vadd.f32 %v473, %v784
        %786 = vdwg.mxu0
        %787 = vmatpush.msra.mxu0 0.0
        %788 = vmatpush.msra.mxu0 0.0
        %789 = vmatpush.msra.mxu0 0.0
        %790 = vmatpush.msra.mxu0 0.0
        %791 = vmatpush.msra.mxu0 0.0
        %792 = vmatpush.msra.mxu0 0.0
        %793 = vmatpush.msra.mxu0 0.0
        %794 = vmatpush.msra.mxu0 0.0
        %795 = vmatpush.msra.mxu0 0.0
        %796 = vmatpush.msra.mxu0 0.0
        %797 = vmatpush.msra.mxu0 0.0
        %798 = vmatpush.msra.mxu0 0.0
        %799 = vmatpush.msra.mxu0 %v766
        %800 = vmatpush.msra.mxu0 %v764
        %801 = vmatpush.msra.mxu0 %v762
        %802 = vmatpush.msra.mxu0 %v760
        %803 = vmatmul.f32.gmra.mxu0 %v477
        %v804 = vpop.f32.mrf.mxu0
        %v805 = vadd.f32 %v473, %v804
        %806 = vdwg.mxu0
        %v807 = vmax.f32 %v785, 0.0
        %v808 = vmax.f32 %v805, 0.0
        %v809 = vsub.f32 0.0, %v807
        %v810 = vsub.f32 0.0, %v808
        %v811 = vmul.f32 %v809, 0.0967741
        %v812 = vmul.f32 %v810, 0.0967741
        %v813 = vmul.f32 %v811, 1.442695
        %v814 = vpow.pop %v813
        %v815 = vmul.f32 %v812, 1.442695
        %v816 = vpow.pop %v815
        %v817 = vsub.f32 1.0, %v814
        %v818 = vsub.f32 1.0, %v816
        %v819 = vmul.f32 %v817, %v689
        %v820 = vmul.f32 %v818, %v690
        %v821 = vperm.slane %v819, 0
        %v822 = vperm.slane %v820, 0
        %v823 = vmul.f32 %v821, %v785
        %v824 = vmul.f32 %v822, %v805
        %v825 = vadd.f32 %v677, %v823
        %v826 = vadd.f32 %v678, %v824
        %v827 = vmul.f32 %v819, 1.1935484
        %v828 = vmul.f32 %v820, 1.1935484
        %v829 = vadd.f32 %v681, %v827
        %v830 = vadd.f32 %v682, %v828
        %v831 = vadd.f32 %v683, %v819
        %v832 = vadd.f32 %v684, %v820
        %v833 = vsub.f32 1.0, %v817
        %v834 = vsub.f32 1.0, %v818
        %v835 = vadd.f32 %v833, 1e-10
        %v836 = vadd.f32 %v834, 1e-10
        %v837 = vmul.f32 %v689, %v835
        %v838 = vmul.f32 %v690, %v836
        %v839 = vmul.f32 %v350, 1.2903225
        %v840 = vadd.f32 %v349, %v839
        %842 = vst [vmem:[#allocation1] ss:$2 sm:$0xff] %v840
        %v843 = vld.sshfl [vmem:[#allocation1] sm:$0xff pattern:$0x75316420]
        %v844 = vld.sshfl [vmem:[#allocation1 + $0x8] sm:$0xff pattern:$0x75316420]
        %v845 = vsel %vm399, %v843, 0
        %v847 = vsel %vm399, %v844, 0
        %849 = vmatpush.msra.mxu0 0.0
        %850 = vmatpush.msra.mxu0 0.0
        %851 = vmatpush.msra.mxu0 0.0
        %852 = vmatpush.msra.mxu0 0.0
        %853 = vmatpush.msra.mxu0 0.0
        %854 = vmatpush.msra.mxu0 0.0
        %855 = vmatpush.msra.mxu0 0.0
        %856 = vmatpush.msra.mxu0 0.0
        %857 = vmatpush.msra.mxu0 0.0
        %858 = vmatpush.msra.mxu0 0.0
        %859 = vmatpush.msra.mxu0 0.0
        %860 = vmatpush.msra.mxu0 0.0
        %861 = vmatpush.msra.mxu0 0.0
        %862 = vmatpush.msra.mxu0 0.0
        %863 = vmatpush.msra.mxu0 0.0
        %864 = vmatpush.msra.mxu0 %v845
        %865 = vmatmul.f32.gmra.mxu0 %v388
        %v866 = vpop.f32.mrf.mxu0
        %v867 = vadd.f32 %v365, %v866
        %868 = vmatmul.f32.gmra.mxu0 %v391
        %v869 = vpop.f32.mrf.mxu0
        %v870 = vadd.f32 %v370, %v869
        %871 = vmatmul.f32.gmra.mxu0 %v394
        %v872 = vpop.f32.mrf.mxu0
        %v873 = vadd.f32 %v375, %v872
        %874 = vmatmul.f32.gmra.mxu0 %v397
        %v875 = vpop.f32.mrf.mxu0
        %v876 = vadd.f32 %v380, %v875
        %877 = vdwg.mxu0
        %878 = vmatpush.msra.mxu0 0.0
        %879 = vmatpush.msra.mxu0 0.0
        %880 = vmatpush.msra.mxu0 0.0
        %881 = vmatpush.msra.mxu0 0.0
        %882 = vmatpush.msra.mxu0 0.0
        %883 = vmatpush.msra.mxu0 0.0
        %884 = vmatpush.msra.mxu0 0.0
        %885 = vmatpush.msra.mxu0 0.0
        %886 = vmatpush.msra.mxu0 0.0
        %887 = vmatpush.msra.mxu0 0.0
        %888 = vmatpush.msra.mxu0 0.0
        %889 = vmatpush.msra.mxu0 0.0
        %890 = vmatpush.msra.mxu0 0.0
        %891 = vmatpush.msra.mxu0 0.0
        %892 = vmatpush.msra.mxu0 0.0
        %893 = vmatpush.msra.mxu0 %v847
        %894 = vmatmul.f32.gmra.mxu0 %v388
        %v895 = vpop.f32.mrf.mxu0
        %v896 = vadd.f32 %v365, %v895
        %897 = vmatmul.f32.gmra.mxu0 %v391
        %v898 = vpop.f32.mrf.mxu0
        %v899 = vadd.f32 %v370, %v898
        %900 = vmatmul.f32.gmra.mxu0 %v394
        %v901 = vpop.f32.mrf.mxu0
        %v902 = vadd.f32 %v375, %v901
        %903 = vmatmul.f32.gmra.mxu0 %v397
        %v904 = vpop.f32.mrf.mxu0
        %v905 = vadd.f32 %v380, %v904
        %906 = vdwg.mxu0
        %v907 = vmax.f32 %v867, 0.0
        %v908 = vmax.f32 %v896, 0.0
        %v909 = vmax.f32 %v870, 0.0
        %v910 = vmax.f32 %v899, 0.0
        %v911 = vmax.f32 %v873, 0.0
        %v912 = vmax.f32 %v902, 0.0
        %v913 = vmax.f32 %v876, 0.0
        %v914 = vmax.f32 %v905, 0.0
        %915 = vmatpush.msra.mxu0 0.0
        %916 = vmatpush.msra.mxu0 0.0
        %917 = vmatpush.msra.mxu0 0.0
        %918 = vmatpush.msra.mxu0 0.0
        %919 = vmatpush.msra.mxu0 0.0
        %920 = vmatpush.msra.mxu0 0.0
        %921 = vmatpush.msra.mxu0 0.0
        %922 = vmatpush.msra.mxu0 0.0
        %923 = vmatpush.msra.mxu0 0.0
        %924 = vmatpush.msra.mxu0 0.0
        %925 = vmatpush.msra.mxu0 0.0
        %926 = vmatpush.msra.mxu0 0.0
        %927 = vmatpush.msra.mxu0 %v913
        %928 = vmatpush.msra.mxu0 %v911
        %929 = vmatpush.msra.mxu0 %v909
        %930 = vmatpush.msra.mxu0 %v907
        %931 = vmatmul.f32.gmra.mxu0 %v477
        %v932 = vpop.f32.mrf.mxu0
        %v933 = vadd.f32 %v473, %v932
        %934 = vdwg.mxu0
        %935 = vmatpush.msra.mxu0 0.0
        %936 = vmatpush.msra.mxu0 0.0
        %937 = vmatpush.msra.mxu0 0.0
        %938 = vmatpush.msra.mxu0 0.0
        %939 = vmatpush.msra.mxu0 0.0
        %940 = vmatpush.msra.mxu0 0.0
        %941 = vmatpush.msra.mxu0 0.0
        %942 = vmatpush.msra.mxu0 0.0
        %943 = vmatpush.msra.mxu0 0.0
        %944 = vmatpush.msra.mxu0 0.0
        %945 = vmatpush.msra.mxu0 0.0
        %946 = vmatpush.msra.mxu0 0.0
        %947 = vmatpush.msra.mxu0 %v914
        %948 = vmatpush.msra.mxu0 %v912
        %949 = vmatpush.msra.mxu0 %v910
        %950 = vmatpush.msra.mxu0 %v908
        %951 = vmatmul.f32.gmra.mxu0 %v477
        %v952 = vpop.f32.mrf.mxu0
        %v953 = vadd.f32 %v473, %v952
        %954 = vdwg.mxu0
        %v955 = vmax.f32 %v933, 0.0
        %v956 = vmax.f32 %v953, 0.0
        %v957 = vsub.f32 0.0, %v955
        %v958 = vsub.f32 0.0, %v956
        %v959 = vmul.f32 %v957, 0.09677422
        %v960 = vmul.f32 %v958, 0.09677422
        %v961 = vmul.f32 %v959, 1.442695
        %v962 = vpow.pop %v961
        %v963 = vmul.f32 %v960, 1.442695
        %v964 = vpow.pop %v963
        %v965 = vsub.f32 1.0, %v962
        %v966 = vsub.f32 1.0, %v964
        %v967 = vmul.f32 %v965, %v837
        %v968 = vmul.f32 %v966, %v838
        %v969 = vperm.slane %v967, 0
        %v970 = vperm.slane %v968, 0
        %v971 = vmul.f32 %v969, %v933
        %v972 = vmul.f32 %v970, %v953
        %v973 = vadd.f32 %v825, %v971
        %v974 = vadd.f32 %v826, %v972
        %v975 = vmul.f32 %v967, 1.2903225
        %v976 = vmul.f32 %v968, 1.2903225
        %v977 = vadd.f32 %v829, %v975
        %v978 = vadd.f32 %v830, %v976
        %v979 = vadd.f32 %v831, %v967
        %v980 = vadd.f32 %v832, %v968
        %v981 = vsub.f32 1.0, %v965
        %v982 = vsub.f32 1.0, %v966
        %v983 = vadd.f32 %v981, 1e-10
        %v984 = vadd.f32 %v982, 1e-10
        %v985 = vmul.f32 %v837, %v983
        %v986 = vmul.f32 %v838, %v984
        %v987 = vmul.f32 %v350, 1.3870968
        %v988 = vadd.f32 %v349, %v987
        %990 = vst [vmem:[#allocation1] ss:$2 sm:$0xff] %v988
        %v991 = vld.sshfl [vmem:[#allocation1] sm:$0xff pattern:$0x75316420]
        %v992 = vld.sshfl [vmem:[#allocation1 + $0x8] sm:$0xff pattern:$0x75316420]
        %v993 = vsel %vm399, %v991, 0
        %v995 = vsel %vm399, %v992, 0
        %997 = vmatpush.msra.mxu0 0.0
        %998 = vmatpush.msra.mxu0 0.0
        %999 = vmatpush.msra.mxu0 0.0
        %1000 = vmatpush.msra.mxu0 0.0
        %1001 = vmatpush.msra.mxu0 0.0
        %1002 = vmatpush.msra.mxu0 0.0
        %1003 = vmatpush.msra.mxu0 0.0
        %1004 = vmatpush.msra.mxu0 0.0
        %1005 = vmatpush.msra.mxu0 0.0
        %1006 = vmatpush.msra.mxu0 0.0
        %1007 = vmatpush.msra.mxu0 0.0
        %1008 = vmatpush.msra.mxu0 0.0
        %1009 = vmatpush.msra.mxu0 0.0
        %1010 = vmatpush.msra.mxu0 0.0
        %1011 = vmatpush.msra.mxu0 0.0
        %1012 = vmatpush.msra.mxu0 %v993
        %1013 = vmatmul.f32.gmra.mxu0 %v388
        %v1014 = vpop.f32.mrf.mxu0
        %v1015 = vadd.f32 %v365, %v1014
        %1016 = vmatmul.f32.gmra.mxu0 %v391
        %v1017 = vpop.f32.mrf.mxu0
        %v1018 = vadd.f32 %v370, %v1017
        %1019 = vmatmul.f32.gmra.mxu0 %v394
        %v1020 = vpop.f32.mrf.mxu0
        %v1021 = vadd.f32 %v375, %v1020
        %1022 = vmatmul.f32.gmra.mxu0 %v397
        %v1023 = vpop.f32.mrf.mxu0
        %v1024 = vadd.f32 %v380, %v1023
        %1025 = vdwg.mxu0
        %1026 = vmatpush.msra.mxu0 0.0
        %1027 = vmatpush.msra.mxu0 0.0
        %1028 = vmatpush.msra.mxu0 0.0
        %1029 = vmatpush.msra.mxu0 0.0
        %1030 = vmatpush.msra.mxu0 0.0
        %1031 = vmatpush.msra.mxu0 0.0
        %1032 = vmatpush.msra.mxu0 0.0
        %1033 = vmatpush.msra.mxu0 0.0
        %1034 = vmatpush.msra.mxu0 0.0
        %1035 = vmatpush.msra.mxu0 0.0
        %1036 = vmatpush.msra.mxu0 0.0
        %1037 = vmatpush.msra.mxu0 0.0
        %1038 = vmatpush.msra.mxu0 0.0
        %1039 = vmatpush.msra.mxu0 0.0
        %1040 = vmatpush.msra.mxu0 0.0
        %1041 = vmatpush.msra.mxu0 %v995
        %1042 = vmatmul.f32.gmra.mxu0 %v388
        %v1043 = vpop.f32.mrf.mxu0
        %v1044 = vadd.f32 %v365, %v1043
        %1045 = vmatmul.f32.gmra.mxu0 %v391
        %v1046 = vpop.f32.mrf.mxu0
        %v1047 = vadd.f32 %v370, %v1046
        %1048 = vmatmul.f32.gmra.mxu0 %v394
        %v1049 = vpop.f32.mrf.mxu0
        %v1050 = vadd.f32 %v375, %v1049
        %1051 = vmatmul.f32.gmra.mxu0 %v397
        %v1052 = vpop.f32.mrf.mxu0
        %v1053 = vadd.f32 %v380, %v1052
        %1054 = vdwg.mxu0
        %v1055 = vmax.f32 %v1015, 0.0
        %v1056 = vmax.f32 %v1044, 0.0
        %v1057 = vmax.f32 %v1018, 0.0
        %v1058 = vmax.f32 %v1047, 0.0
        %v1059 = vmax.f32 %v1021, 0.0
        %v1060 = vmax.f32 %v1050, 0.0
        %v1061 = vmax.f32 %v1024, 0.0
        %v1062 = vmax.f32 %v1053, 0.0
        %1063 = vmatpush.msra.mxu0 0.0
        %1064 = vmatpush.msra.mxu0 0.0
        %1065 = vmatpush.msra.mxu0 0.0
        %1066 = vmatpush.msra.mxu0 0.0
        %1067 = vmatpush.msra.mxu0 0.0
        %1068 = vmatpush.msra.mxu0 0.0
        %1069 = vmatpush.msra.mxu0 0.0
        %1070 = vmatpush.msra.mxu0 0.0
        %1071 = vmatpush.msra.mxu0 0.0
        %1072 = vmatpush.msra.mxu0 0.0
        %1073 = vmatpush.msra.mxu0 0.0
        %1074 = vmatpush.msra.mxu0 0.0
        %1075 = vmatpush.msra.mxu0 %v1061
        %1076 = vmatpush.msra.mxu0 %v1059
        %1077 = vmatpush.msra.mxu0 %v1057
        %1078 = vmatpush.msra.mxu0 %v1055
        %1079 = vmatmul.f32.gmra.mxu0 %v477
        %v1080 = vpop.f32.mrf.mxu0
        %v1081 = vadd.f32 %v473, %v1080
        %1082 = vdwg.mxu0
        %1083 = vmatpush.msra.mxu0 0.0
        %1084 = vmatpush.msra.mxu0 0.0
        %1085 = vmatpush.msra.mxu0 0.0
        %1086 = vmatpush.msra.mxu0 0.0
        %1087 = vmatpush.msra.mxu0 0.0
        %1088 = vmatpush.msra.mxu0 0.0
        %1089 = vmatpush.msra.mxu0 0.0
        %1090 = vmatpush.msra.mxu0 0.0
        %1091 = vmatpush.msra.mxu0 0.0
        %1092 = vmatpush.msra.mxu0 0.0
        %1093 = vmatpush.msra.mxu0 0.0
        %1094 = vmatpush.msra.mxu0 0.0
        %1095 = vmatpush.msra.mxu0 %v1062
        %1096 = vmatpush.msra.mxu0 %v1060
        %1097 = vmatpush.msra.mxu0 %v1058
        %1098 = vmatpush.msra.mxu0 %v1056
        %1099 = vmatmul.f32.gmra.mxu0 %v477
        %v1100 = vpop.f32.mrf.mxu0
        %v1101 = vadd.f32 %v473, %v1100
        %1102 = vdwg.mxu0
        %v1103 = vmax.f32 %v1081, 0.0
        %v1104 = vmax.f32 %v1101, 0.0
        %v1105 = vsub.f32 0.0, %v1103
        %v1106 = vsub.f32 0.0, %v1104
        %v1107 = vmul.f32 %v1105, 0.09677422
        %v1108 = vmul.f32 %v1106, 0.09677422
        %v1109 = vmul.f32 %v1107, 1.442695
        %v1110 = vpow.pop %v1109
        %v1111 = vmul.f32 %v1108, 1.442695
        %v1112 = vpow.pop %v1111
        %v1113 = vsub.f32 1.0, %v1110
        %v1114 = vsub.f32 1.0, %v1112
        %v1115 = vmul.f32 %v1113, %v985
        %v1116 = vmul.f32 %v1114, %v986
        %v1117 = vperm.slane %v1115, 0
        %v1118 = vperm.slane %v1116, 0
        %v1119 = vmul.f32 %v1117, %v1081
        %v1120 = vmul.f32 %v1118, %v1101
        %v1121 = vadd.f32 %v973, %v1119
        %v1122 = vadd.f32 %v974, %v1120
        %v1123 = vmul.f32 %v1115, 1.3870968
        %v1124 = vmul.f32 %v1116, 1.3870968
        %v1125 = vadd.f32 %v977, %v1123
        %v1126 = vadd.f32 %v978, %v1124
        %v1127 = vadd.f32 %v979, %v1115
        %v1128 = vadd.f32 %v980, %v1116
        %v1129 = vsub.f32 1.0, %v1113
        %v1130 = vsub.f32 1.0, %v1114
        %v1131 = vadd.f32 %v1129, 1e-10
        %v1132 = vadd.f32 %v1130, 1e-10
        %v1133 = vmul.f32 %v985, %v1131
        %v1134 = vmul.f32 %v986, %v1132
        %v1135 = vmul.f32 %v350, 1.483871
        %v1136 = vadd.f32 %v349, %v1135
        %1138 = vst [vmem:[#allocation1] ss:$2 sm:$0xff] %v1136
        %v1139 = vld.sshfl [vmem:[#allocation1] sm:$0xff pattern:$0x75316420]
        %v1140 = vld.sshfl [vmem:[#allocation1 + $0x8] sm:$0xff pattern:$0x75316420]
        %v1141 = vsel %vm399, %v1139, 0
        %v1143 = vsel %vm399, %v1140, 0
        %1145 = vmatpush.msra.mxu0 0.0
        %1146 = vmatpush.msra.mxu0 0.0
        %1147 = vmatpush.msra.mxu0 0.0
        %1148 = vmatpush.msra.mxu0 0.0
        %1149 = vmatpush.msra.mxu0 0.0
        %1150 = vmatpush.msra.mxu0 0.0
        %1151 = vmatpush.msra.mxu0 0.0
        %1152 = vmatpush.msra.mxu0 0.0
        %1153 = vmatpush.msra.mxu0 0.0
        %1154 = vmatpush.msra.mxu0 0.0
        %1155 = vmatpush.msra.mxu0 0.0
        %1156 = vmatpush.msra.mxu0 0.0
        %1157 = vmatpush.msra.mxu0 0.0
        %1158 = vmatpush.msra.mxu0 0.0
        %1159 = vmatpush.msra.mxu0 0.0
        %1160 = vmatpush.msra.mxu0 %v1141
        %1161 = vmatmul.f32.gmra.mxu0 %v388
        %v1162 = vpop.f32.mrf.mxu0
        %v1163 = vadd.f32 %v365, %v1162
        %1164 = vmatmul.f32.gmra.mxu0 %v391
        %v1165 = vpop.f32.mrf.mxu0
        %v1166 = vadd.f32 %v370, %v1165
        %1167 = vmatmul.f32.gmra.mxu0 %v394
        %v1168 = vpop.f32.mrf.mxu0
        %v1169 = vadd.f32 %v375, %v1168
        %1170 = vmatmul.f32.gmra.mxu0 %v397
        %v1171 = vpop.f32.mrf.mxu0
        %v1172 = vadd.f32 %v380, %v1171
        %1173 = vdwg.mxu0
        %1174 = vmatpush.msra.mxu0 0.0
        %1175 = vmatpush.msra.mxu0 0.0
        %1176 = vmatpush.msra.mxu0 0.0
        %1177 = vmatpush.msra.mxu0 0.0
        %1178 = vmatpush.msra.mxu0 0.0
        %1179 = vmatpush.msra.mxu0 0.0
        %1180 = vmatpush.msra.mxu0 0.0
        %1181 = vmatpush.msra.mxu0 0.0
        %1182 = vmatpush.msra.mxu0 0.0
        %1183 = vmatpush.msra.mxu0 0.0
        %1184 = vmatpush.msra.mxu0 0.0
        %1185 = vmatpush.msra.mxu0 0.0
        %1186 = vmatpush.msra.mxu0 0.0
        %1187 = vmatpush.msra.mxu0 0.0
        %1188 = vmatpush.msra.mxu0 0.0
        %1189 = vmatpush.msra.mxu0 %v1143
        %1190 = vmatmul.f32.gmra.mxu0 %v388
        %v1191 = vpop.f32.mrf.mxu0
        %v1192 = vadd.f32 %v365, %v1191
        %1193 = vmatmul.f32.gmra.mxu0 %v391
        %v1194 = vpop.f32.mrf.mxu0
        %v1195 = vadd.f32 %v370, %v1194
        %1196 = vmatmul.f32.gmra.mxu0 %v394
        %v1197 = vpop.f32.mrf.mxu0
        %v1198 = vadd.f32 %v375, %v1197
        %1199 = vmatmul.f32.gmra.mxu0 %v397
        %v1200 = vpop.f32.mrf.mxu0
        %v1201 = vadd.f32 %v380, %v1200
        %1202 = vdwg.mxu0
        %v1203 = vmax.f32 %v1163, 0.0
        %v1204 = vmax.f32 %v1192, 0.0
        %v1205 = vmax.f32 %v1166, 0.0
        %v1206 = vmax.f32 %v1195, 0.0
        %v1207 = vmax.f32 %v1169, 0.0
        %v1208 = vmax.f32 %v1198, 0.0
        %v1209 = vmax.f32 %v1172, 0.0
        %v1210 = vmax.f32 %v1201, 0.0
        %1211 = vmatpush.msra.mxu0 0.0
        %1212 = vmatpush.msra.mxu0 0.0
        %1213 = vmatpush.msra.mxu0 0.0
        %1214 = vmatpush.msra.mxu0 0.0
        %1215 = vmatpush.msra.mxu0 0.0
        %1216 = vmatpush.msra.mxu0 0.0
        %1217 = vmatpush.msra.mxu0 0.0
        %1218 = vmatpush.msra.mxu0 0.0
        %1219 = vmatpush.msra.mxu0 0.0
        %1220 = vmatpush.msra.mxu0 0.0
        %1221 = vmatpush.msra.mxu0 0.0
        %1222 = vmatpush.msra.mxu0 0.0
        %1223 = vmatpush.msra.mxu0 %v1209
        %1224 = vmatpush.msra.mxu0 %v1207
        %1225 = vmatpush.msra.mxu0 %v1205
        %1226 = vmatpush.msra.mxu0 %v1203
        %1227 = vmatmul.f32.gmra.mxu0 %v477
        %v1228 = vpop.f32.mrf.mxu0
        %v1229 = vadd.f32 %v473, %v1228
        %1230 = vdwg.mxu0
        %1231 = vmatpush.msra.mxu0 0.0
        %1232 = vmatpush.msra.mxu0 0.0
        %1233 = vmatpush.msra.mxu0 0.0
        %1234 = vmatpush.msra.mxu0 0.0
        %1235 = vmatpush.msra.mxu0 0.0
        %1236 = vmatpush.msra.mxu0 0.0
        %1237 = vmatpush.msra.mxu0 0.0
        %1238 = vmatpush.msra.mxu0 0.0
        %1239 = vmatpush.msra.mxu0 0.0
        %1240 = vmatpush.msra.mxu0 0.0
        %1241 = vmatpush.msra.mxu0 0.0
        %1242 = vmatpush.msra.mxu0 0.0
        %1243 = vmatpush.msra.mxu0 %v1210
        %1244 = vmatpush.msra.mxu0 %v1208
        %1245 = vmatpush.msra.mxu0 %v1206
        %1246 = vmatpush.msra.mxu0 %v1204
        %1247 = vmatmul.f32.gmra.mxu0 %v477
        %v1248 = vpop.f32.mrf.mxu0
        %v1249 = vadd.f32 %v473, %v1248
        %1250 = vdwg.mxu0
        %v1251 = vmax.f32 %v1229, 0.0
        %v1252 = vmax.f32 %v1249, 0.0
        %v1253 = vsub.f32 0.0, %v1251
        %v1254 = vsub.f32 0.0, %v1252
        %v1255 = vmul.f32 %v1253, 0.09677422
        %v1256 = vmul.f32 %v1254, 0.09677422
        %v1257 = vmul.f32 %v1255, 1.442695
        %v1258 = vpow.pop %v1257
        %v1259 = vmul.f32 %v1256, 1.442695
        %v1260 = vpow.pop %v1259
        %v1261 = vsub.f32 1.0, %v1258
        %v1262 = vsub.f32 1.0, %v1260
        %v1263 = vmul.f32 %v1261, %v1133
        %v1264 = vmul.f32 %v1262, %v1134
        %v1265 = vperm.slane %v1263, 0
        %v1266 = vperm.slane %v1264, 0
        %v1267 = vmul.f32 %v1265, %v1229
        %v1268 = vmul.f32 %v1266, %v1249
        %v1269 = vadd.f32 %v1121, %v1267
        %v1270 = vadd.f32 %v1122, %v1268
        %v1271 = vmul.f32 %v1263, 1.483871
        %v1272 = vmul.f32 %v1264, 1.483871
        %v1273 = vadd.f32 %v1125, %v1271
        %v1274 = vadd.f32 %v1126, %v1272
        %v1275 = vadd.f32 %v1127, %v1263
        %v1276 = vadd.f32 %v1128, %v1264
        %v1277 = vsub.f32 1.0, %v1261
        %v1278 = vsub.f32 1.0, %v1262
        %v1279 = vadd.f32 %v1277, 1e-10
        %v1280 = vadd.f32 %v1278, 1e-10
        %v1281 = vmul.f32 %v1133, %v1279
        %v1282 = vmul.f32 %v1134, %v1280
        %v1283 = vmul.f32 %v350, 1.5806452
        %v1284 = vadd.f32 %v349, %v1283
        %1286 = vst [vmem:[#allocation1] ss:$2 sm:$0xff] %v1284
        %v1287 = vld.sshfl [vmem:[#allocation1] sm:$0xff pattern:$0x75316420]
        %v1288 = vld.sshfl [vmem:[#allocation1 + $0x8] sm:$0xff pattern:$0x75316420]
        %v1289 = vsel %vm399, %v1287, 0
        %v1291 = vsel %vm399, %v1288, 0
        %1293 = vmatpush.msra.mxu0 0.0
        %1294 = vmatpush.msra.mxu0 0.0
        %1295 = vmatpush.msra.mxu0 0.0
        %1296 = vmatpush.msra.mxu0 0.0
        %1297 = vmatpush.msra.mxu0 0.0
        %1298 = vmatpush.msra.mxu0 0.0
        %1299 = vmatpush.msra.mxu0 0.0
        %1300 = vmatpush.msra.mxu0 0.0
        %1301 = vmatpush.msra.mxu0 0.0
        %1302 = vmatpush.msra.mxu0 0.0
        %1303 = vmatpush.msra.mxu0 0.0
        %1304 = vmatpush.msra.mxu0 0.0
        %1305 = vmatpush.msra.mxu0 0.0
        %1306 = vmatpush.msra.mxu0 0.0
        %1307 = vmatpush.msra.mxu0 0.0
        %1308 = vmatpush.msra.mxu0 %v1289
        %1309 = vmatmul.f32.gmra.mxu0 %v388
        %v1310 = vpop.f32.mrf.mxu0
        %v1311 = vadd.f32 %v365, %v1310
        %1312 = vmatmul.f32.gmra.mxu0 %v391
        %v1313 = vpop.f32.mrf.mxu0
        %v1314 = vadd.f32 %v370, %v1313
        %1315 = vmatmul.f32.gmra.mxu0 %v394
        %v1316 = vpop.f32.mrf.mxu0
        %v1317 = vadd.f32 %v375, %v1316
        %1318 = vmatmul.f32.gmra.mxu0 %v397
        %v1319 = vpop.f32.mrf.mxu0
        %v1320 = vadd.f32 %v380, %v1319
        %1321 = vdwg.mxu0
        %1322 = vmatpush.msra.mxu0 0.0
        %1323 = vmatpush.msra.mxu0 0.0
        %1324 = vmatpush.msra.mxu0 0.0
        %1325 = vmatpush.msra.mxu0 0.0
        %1326 = vmatpush.msra.mxu0 0.0
        %1327 = vmatpush.msra.mxu0 0.0
        %1328 = vmatpush.msra.mxu0 0.0
        %1329 = vmatpush.msra.mxu0 0.0
        %1330 = vmatpush.msra.mxu0 0.0
        %1331 = vmatpush.msra.mxu0 0.0
        %1332 = vmatpush.msra.mxu0 0.0
        %1333 = vmatpush.msra.mxu0 0.0
        %1334 = vmatpush.msra.mxu0 0.0
        %1335 = vmatpush.msra.mxu0 0.0
        %1336 = vmatpush.msra.mxu0 0.0
        %1337 = vmatpush.msra.mxu0 %v1291
        %1338 = vmatmul.f32.gmra.mxu0 %v388
        %v1339 = vpop.f32.mrf.mxu0
        %v1340 = vadd.f32 %v365, %v1339
        %1341 = vmatmul.f32.gmra.mxu0 %v391
        %v1342 = vpop.f32.mrf.mxu0
        %v1343 = vadd.f32 %v370, %v1342
        %1344 = vmatmul.f32.gmra.mxu0 %v394
        %v1345 = vpop.f32.mrf.mxu0
        %v1346 = vadd.f32 %v375, %v1345
        %1347 = vmatmul.f32.gmra.mxu0 %v397
        %v1348 = vpop.f32.mrf.mxu0
        %v1349 = vadd.f32 %v380, %v1348
        %1350 = vdwg.mxu0
        %v1351 = vmax.f32 %v1311, 0.0
        %v1352 = vmax.f32 %v1340, 0.0
        %v1353 = vmax.f32 %v1314, 0.0
        %v1354 = vmax.f32 %v1343, 0.0
        %v1355 = vmax.f32 %v1317, 0.0
        %v1356 = vmax.f32 %v1346, 0.0
        %v1357 = vmax.f32 %v1320, 0.0
        %v1358 = vmax.f32 %v1349, 0.0
        %1359 = vmatpush.msra.mxu0 0.0
        %1360 = vmatpush.msra.mxu0 0.0
        %1361 = vmatpush.msra.mxu0 0.0
        %1362 = vmatpush.msra.mxu0 0.0
        %1363 = vmatpush.msra.mxu0 0.0
        %1364 = vmatpush.msra.mxu0 0.0
        %1365 = vmatpush.msra.mxu0 0.0
        %1366 = vmatpush.msra.mxu0 0.0
        %1367 = vmatpush.msra.mxu0 0.0
        %1368 = vmatpush.msra.mxu0 0.0
        %1369 = vmatpush.msra.mxu0 0.0
        %1370 = vmatpush.msra.mxu0 0.0
        %1371 = vmatpush.msra.mxu0 %v1357
        %1372 = vmatpush.msra.mxu0 %v1355
        %1373 = vmatpush.msra.mxu0 %v1353
        %1374 = vmatpush.msra.mxu0 %v1351
        %1375 = vmatmul.f32.gmra.mxu0 %v477
        %v1376 = vpop.f32.mrf.mxu0
        %v1377 = vadd.f32 %v473, %v1376
        %1378 = vdwg.mxu0
        %1379 = vmatpush.msra.mxu0 0.0
        %1380 = vmatpush.msra.mxu0 0.0
        %1381 = vmatpush.msra.mxu0 0.0
        %1382 = vmatpush.msra.mxu0 0.0
        %1383 = vmatpush.msra.mxu0 0.0
        %1384 = vmatpush.msra.mxu0 0.0
        %1385 = vmatpush.msra.mxu0 0.0
        %1386 = vmatpush.msra.mxu0 0.0
        %1387 = vmatpush.msra.mxu0 0.0
        %1388 = vmatpush.msra.mxu0 0.0
        %1389 = vmatpush.msra.mxu0 0.0
        %1390 = vmatpush.msra.mxu0 0.0
        %1391 = vmatpush.msra.mxu0 %v1358
        %1392 = vmatpush.msra.mxu0 %v1356
        %1393 = vmatpush.msra.mxu0 %v1354
        %1394 = vmatpush.msra.mxu0 %v1352
        %1395 = vmatmul.f32.gmra.mxu0 %v477
        %v1396 = vpop.f32.mrf.mxu0
        %v1397 = vadd.f32 %v473, %v1396
        %1398 = vdwg.mxu0
        %v1399 = vmax.f32 %v1377, 0.0
        %v1400 = vmax.f32 %v1397, 0.0
        %v1401 = vsub.f32 0.0, %v1399
        %v1402 = vsub.f32 0.0, %v1400
        %v1403 = vmul.f32 %v1401, 0.0967741
        %v1404 = vmul.f32 %v1402, 0.0967741
        %v1405 = vmul.f32 %v1403, 1.442695
        %v1406 = vpow.pop %v1405
        %v1407 = vmul.f32 %v1404, 1.442695
        %v1408 = vpow.pop %v1407
        %v1409 = vsub.f32 1.0, %v1406
        %v1410 = vsub.f32 1.0, %v1408
        %v1411 = vmul.f32 %v1409, %v1281
        %v1412 = vmul.f32 %v1410, %v1282
        %v1413 = vperm.slane %v1411, 0
        %v1414 = vperm.slane %v1412, 0
        %v1415 = vmul.f32 %v1413, %v1377
        %v1416 = vmul.f32 %v1414, %v1397
        %v1417 = vadd.f32 %v1269, %v1415
        %v1418 = vadd.f32 %v1270, %v1416
        %v1419 = vmul.f32 %v1411, 1.5806452
        %v1420 = vmul.f32 %v1412, 1.5806452
        %v1421 = vadd.f32 %v1273, %v1419
        %v1422 = vadd.f32 %v1274, %v1420
        %v1423 = vadd.f32 %v1275, %v1411
        %v1424 = vadd.f32 %v1276, %v1412
        %v1425 = vsub.f32 1.0, %v1409
        %v1426 = vsub.f32 1.0, %v1410
        %v1427 = vadd.f32 %v1425, 1e-10
        %v1428 = vadd.f32 %v1426, 1e-10
        %v1429 = vmul.f32 %v1281, %v1427
        %v1430 = vmul.f32 %v1282, %v1428
        %v1431 = vmul.f32 %v350, 1.6774193
        %v1432 = vadd.f32 %v349, %v1431
        %1434 = vst [vmem:[#allocation1] ss:$2 sm:$0xff] %v1432
        %v1435 = vld.sshfl [vmem:[#allocation1] sm:$0xff pattern:$0x75316420]
        %v1436 = vld.sshfl [vmem:[#allocation1 + $0x8] sm:$0xff pattern:$0x75316420]
        %v1437 = vsel %vm399, %v1435, 0
        %v1439 = vsel %vm399, %v1436, 0
        %1441 = vmatpush.msra.mxu0 0.0
        %1442 = vmatpush.msra.mxu0 0.0
        %1443 = vmatpush.msra.mxu0 0.0
        %1444 = vmatpush.msra.mxu0 0.0
        %1445 = vmatpush.msra.mxu0 0.0
        %1446 = vmatpush.msra.mxu0 0.0
        %1447 = vmatpush.msra.mxu0 0.0
        %1448 = vmatpush.msra.mxu0 0.0
        %1449 = vmatpush.msra.mxu0 0.0
        %1450 = vmatpush.msra.mxu0 0.0
        %1451 = vmatpush.msra.mxu0 0.0
        %1452 = vmatpush.msra.mxu0 0.0
        %1453 = vmatpush.msra.mxu0 0.0
        %1454 = vmatpush.msra.mxu0 0.0
        %1455 = vmatpush.msra.mxu0 0.0
        %1456 = vmatpush.msra.mxu0 %v1437
        %1457 = vmatmul.f32.gmra.mxu0 %v388
        %v1458 = vpop.f32.mrf.mxu0
        %v1459 = vadd.f32 %v365, %v1458
        %1460 = vmatmul.f32.gmra.mxu0 %v391
        %v1461 = vpop.f32.mrf.mxu0
        %v1462 = vadd.f32 %v370, %v1461
        %1463 = vmatmul.f32.gmra.mxu0 %v394
        %v1464 = vpop.f32.mrf.mxu0
        %v1465 = vadd.f32 %v375, %v1464
        %1466 = vmatmul.f32.gmra.mxu0 %v397
        %v1467 = vpop.f32.mrf.mxu0
        %v1468 = vadd.f32 %v380, %v1467
        %1469 = vdwg.mxu0
        %1470 = vmatpush.msra.mxu0 0.0
        %1471 = vmatpush.msra.mxu0 0.0
        %1472 = vmatpush.msra.mxu0 0.0
        %1473 = vmatpush.msra.mxu0 0.0
        %1474 = vmatpush.msra.mxu0 0.0
        %1475 = vmatpush.msra.mxu0 0.0
        %1476 = vmatpush.msra.mxu0 0.0
        %1477 = vmatpush.msra.mxu0 0.0
        %1478 = vmatpush.msra.mxu0 0.0
        %1479 = vmatpush.msra.mxu0 0.0
        %1480 = vmatpush.msra.mxu0 0.0
        %1481 = vmatpush.msra.mxu0 0.0
        %1482 = vmatpush.msra.mxu0 0.0
        %1483 = vmatpush.msra.mxu0 0.0
        %1484 = vmatpush.msra.mxu0 0.0
        %1485 = vmatpush.msra.mxu0 %v1439
        %1486 = vmatmul.f32.gmra.mxu0 %v388
        %v1487 = vpop.f32.mrf.mxu0
        %v1488 = vadd.f32 %v365, %v1487
        %1489 = vmatmul.f32.gmra.mxu0 %v391
        %v1490 = vpop.f32.mrf.mxu0
        %v1491 = vadd.f32 %v370, %v1490
        %1492 = vmatmul.f32.gmra.mxu0 %v394
        %v1493 = vpop.f32.mrf.mxu0
        %v1494 = vadd.f32 %v375, %v1493
        %1495 = vmatmul.f32.gmra.mxu0 %v397
        %v1496 = vpop.f32.mrf.mxu0
        %v1497 = vadd.f32 %v380, %v1496
        %1498 = vdwg.mxu0
        %v1499 = vmax.f32 %v1459, 0.0
        %v1500 = vmax.f32 %v1488, 0.0
        %v1501 = vmax.f32 %v1462, 0.0
        %v1502 = vmax.f32 %v1491, 0.0
        %v1503 = vmax.f32 %v1465, 0.0
        %v1504 = vmax.f32 %v1494, 0.0
        %v1505 = vmax.f32 %v1468, 0.0
        %v1506 = vmax.f32 %v1497, 0.0
        %1507 = vmatpush.msra.mxu0 0.0
        %1508 = vmatpush.msra.mxu0 0.0
        %1509 = vmatpush.msra.mxu0 0.0
        %1510 = vmatpush.msra.mxu0 0.0
        %1511 = vmatpush.msra.mxu0 0.0
        %1512 = vmatpush.msra.mxu0 0.0
        %1513 = vmatpush.msra.mxu0 0.0
        %1514 = vmatpush.msra.mxu0 0.0
        %1515 = vmatpush.msra.mxu0 0.0
        %1516 = vmatpush.msra.mxu0 0.0
        %1517 = vmatpush.msra.mxu0 0.0
        %1518 = vmatpush.msra.mxu0 0.0
        %1519 = vmatpush.msra.mxu0 %v1505
        %1520 = vmatpush.msra.mxu0 %v1503
        %1521 = vmatpush.msra.mxu0 %v1501
        %1522 = vmatpush.msra.mxu0 %v1499
        %1523 = vmatmul.f32.gmra.mxu0 %v477
        %v1524 = vpop.f32.mrf.mxu0
        %v1525 = vadd.f32 %v473, %v1524
        %1526 = vdwg.mxu0
        %1527 = vmatpush.msra.mxu0 0.0
        %1528 = vmatpush.msra.mxu0 0.0
        %1529 = vmatpush.msra.mxu0 0.0
        %1530 = vmatpush.msra.mxu0 0.0
        %1531 = vmatpush.msra.mxu0 0.0
        %1532 = vmatpush.msra.mxu0 0.0
        %1533 = vmatpush.msra.mxu0 0.0
        %1534 = vmatpush.msra.mxu0 0.0
        %1535 = vmatpush.msra.mxu0 0.0
        %1536 = vmatpush.msra.mxu0 0.0
        %1537 = vmatpush.msra.mxu0 0.0
        %1538 = vmatpush.msra.mxu0 0.0
        %1539 = vmatpush.msra.mxu0 %v1506
        %1540 = vmatpush.msra.mxu0 %v1504
        %1541 = vmatpush.msra.mxu0 %v1502
        %1542 = vmatpush.msra.mxu0 %v1500
        %1543 = vmatmul.f32.gmra.mxu0 %v477
        %v1544 = vpop.f32.mrf.mxu0
        %v1545 = vadd.f32 %v473, %v1544
        %1546 = vdwg.mxu0
        %v1547 = vmax.f32 %v1525, 0.0
        %v1548 = vmax.f32 %v1545, 0.0
        %v1549 = vsub.f32 0.0, %v1547
        %v1550 = vsub.f32 0.0, %v1548
        %v1551 = vmul.f32 %v1549, 0.09677422
        %v1552 = vmul.f32 %v1550, 0.09677422
        %v1553 = vmul.f32 %v1551, 1.442695
        %v1554 = vpow.pop %v1553
        %v1555 = vmul.f32 %v1552, 1.442695
        %v1556 = vpow.pop %v1555
        %v1557 = vsub.f32 1.0, %v1554
        %v1558 = vsub.f32 1.0, %v1556
        %v1559 = vmul.f32 %v1557, %v1429
        %v1560 = vmul.f32 %v1558, %v1430
        %v1561 = vperm.slane %v1559, 0
        %v1562 = vperm.slane %v1560, 0
        %v1563 = vmul.f32 %v1561, %v1525
        %v1564 = vmul.f32 %v1562, %v1545
        %v1565 = vadd.f32 %v1417, %v1563
        %v1566 = vadd.f32 %v1418, %v1564
        %v1567 = vmul.f32 %v1559, 1.6774193
        %v1568 = vmul.f32 %v1560, 1.6774193
        %v1569 = vadd.f32 %v1421, %v1567
        %v1570 = vadd.f32 %v1422, %v1568
        %v1571 = vadd.f32 %v1423, %v1559
        %v1572 = vadd.f32 %v1424, %v1560
        %v1573 = vsub.f32 1.0, %v1557
        %v1574 = vsub.f32 1.0, %v1558
        %v1575 = vadd.f32 %v1573, 1e-10
        %v1576 = vadd.f32 %v1574, 1e-10
        %v1577 = vmul.f32 %v1429, %v1575
        %v1578 = vmul.f32 %v1430, %v1576
        %v1579 = vmul.f32 %v350, 1.7741935
        %v1580 = vadd.f32 %v349, %v1579
        %1582 = vst [vmem:[#allocation1] ss:$2 sm:$0xff] %v1580
        %v1583 = vld.sshfl [vmem:[#allocation1] sm:$0xff pattern:$0x75316420]
        %v1584 = vld.sshfl [vmem:[#allocation1 + $0x8] sm:$0xff pattern:$0x75316420]
        %v1585 = vsel %vm399, %v1583, 0
        %v1587 = vsel %vm399, %v1584, 0
        %1589 = vmatpush.msra.mxu0 0.0
        %1590 = vmatpush.msra.mxu0 0.0
        %1591 = vmatpush.msra.mxu0 0.0
        %1592 = vmatpush.msra.mxu0 0.0
        %1593 = vmatpush.msra.mxu0 0.0
        %1594 = vmatpush.msra.mxu0 0.0
        %1595 = vmatpush.msra.mxu0 0.0
        %1596 = vmatpush.msra.mxu0 0.0
        %1597 = vmatpush.msra.mxu0 0.0
        %1598 = vmatpush.msra.mxu0 0.0
        %1599 = vmatpush.msra.mxu0 0.0
        %1600 = vmatpush.msra.mxu0 0.0
        %1601 = vmatpush.msra.mxu0 0.0
        %1602 = vmatpush.msra.mxu0 0.0
        %1603 = vmatpush.msra.mxu0 0.0
        %1604 = vmatpush.msra.mxu0 %v1585
        %1605 = vmatmul.f32.gmra.mxu0 %v388
        %v1606 = vpop.f32.mrf.mxu0
        %v1607 = vadd.f32 %v365, %v1606
        %1608 = vmatmul.f32.gmra.mxu0 %v391
        %v1609 = vpop.f32.mrf.mxu0
        %v1610 = vadd.f32 %v370, %v1609
        %1611 = vmatmul.f32.gmra.mxu0 %v394
        %v1612 = vpop.f32.mrf.mxu0
        %v1613 = vadd.f32 %v375, %v1612
        %1614 = vmatmul.f32.gmra.mxu0 %v397
        %v1615 = vpop.f32.mrf.mxu0
        %v1616 = vadd.f32 %v380, %v1615
        %1617 = vdwg.mxu0
        %1618 = vmatpush.msra.mxu0 0.0
        %1619 = vmatpush.msra.mxu0 0.0
        %1620 = vmatpush.msra.mxu0 0.0
        %1621 = vmatpush.msra.mxu0 0.0
        %1622 = vmatpush.msra.mxu0 0.0
        %1623 = vmatpush.msra.mxu0 0.0
        %1624 = vmatpush.msra.mxu0 0.0
        %1625 = vmatpush.msra.mxu0 0.0
        %1626 = vmatpush.msra.mxu0 0.0
        %1627 = vmatpush.msra.mxu0 0.0
        %1628 = vmatpush.msra.mxu0 0.0
        %1629 = vmatpush.msra.mxu0 0.0
        %1630 = vmatpush.msra.mxu0 0.0
        %1631 = vmatpush.msra.mxu0 0.0
        %1632 = vmatpush.msra.mxu0 0.0
        %1633 = vmatpush.msra.mxu0 %v1587
        %1634 = vmatmul.f32.gmra.mxu0 %v388
        %v1635 = vpop.f32.mrf.mxu0
        %v1636 = vadd.f32 %v365, %v1635
        %1637 = vmatmul.f32.gmra.mxu0 %v391
        %v1638 = vpop.f32.mrf.mxu0
        %v1639 = vadd.f32 %v370, %v1638
        %1640 = vmatmul.f32.gmra.mxu0 %v394
        %v1641 = vpop.f32.mrf.mxu0
        %v1642 = vadd.f32 %v375, %v1641
        %1643 = vmatmul.f32.gmra.mxu0 %v397
        %v1644 = vpop.f32.mrf.mxu0
        %v1645 = vadd.f32 %v380, %v1644
        %1646 = vdwg.mxu0
        %v1647 = vmax.f32 %v1607, 0.0
        %v1648 = vmax.f32 %v1636, 0.0
        %v1649 = vmax.f32 %v1610, 0.0
        %v1650 = vmax.f32 %v1639, 0.0
        %v1651 = vmax.f32 %v1613, 0.0
        %v1652 = vmax.f32 %v1642, 0.0
        %v1653 = vmax.f32 %v1616, 0.0
        %v1654 = vmax.f32 %v1645, 0.0
        %1655 = vmatpush.msra.mxu0 0.0
        %1656 = vmatpush.msra.mxu0 0.0
        %1657 = vmatpush.msra.mxu0 0.0
        %1658 = vmatpush.msra.mxu0 0.0
        %1659 = vmatpush.msra.mxu0 0.0
        %1660 = vmatpush.msra.mxu0 0.0
        %1661 = vmatpush.msra.mxu0 0.0
        %1662 = vmatpush.msra.mxu0 0.0
        %1663 = vmatpush.msra.mxu0 0.0
        %1664 = vmatpush.msra.mxu0 0.0
        %1665 = vmatpush.msra.mxu0 0.0
        %1666 = vmatpush.msra.mxu0 0.0
        %1667 = vmatpush.msra.mxu0 %v1653
        %1668 = vmatpush.msra.mxu0 %v1651
        %1669 = vmatpush.msra.mxu0 %v1649
        %1670 = vmatpush.msra.mxu0 %v1647
        %1671 = vmatmul.f32.gmra.mxu0 %v477
        %v1672 = vpop.f32.mrf.mxu0
        %v1673 = vadd.f32 %v473, %v1672
        %1674 = vdwg.mxu0
        %1675 = vmatpush.msra.mxu0 0.0
        %1676 = vmatpush.msra.mxu0 0.0
        %1677 = vmatpush.msra.mxu0 0.0
        %1678 = vmatpush.msra.mxu0 0.0
        %1679 = vmatpush.msra.mxu0 0.0
        %1680 = vmatpush.msra.mxu0 0.0
        %1681 = vmatpush.msra.mxu0 0.0
        %1682 = vmatpush.msra.mxu0 0.0
        %1683 = vmatpush.msra.mxu0 0.0
        %1684 = vmatpush.msra.mxu0 0.0
        %1685 = vmatpush.msra.mxu0 0.0
        %1686 = vmatpush.msra.mxu0 0.0
        %1687 = vmatpush.msra.mxu0 %v1654
        %1688 = vmatpush.msra.mxu0 %v1652
        %1689 = vmatpush.msra.mxu0 %v1650
        %1690 = vmatpush.msra.mxu0 %v1648
        %1691 = vmatmul.f32.gmra.mxu0 %v477
        %v1692 = vpop.f32.mrf.mxu0
        %v1693 = vadd.f32 %v473, %v1692
        %1694 = vdwg.mxu0
        %v1695 = vmax.f32 %v1673, 0.0
        %v1696 = vmax.f32 %v1693, 0.0
        %v1697 = vsub.f32 0.0, %v1695
        %v1698 = vsub.f32 0.0, %v1696
        %v1699 = vmul.f32 %v1697, 0.09677422
        %v1700 = vmul.f32 %v1698, 0.09677422
        %v1701 = vmul.f32 %v1699, 1.442695
        %v1702 = vpow.pop %v1701
        %v1703 = vmul.f32 %v1700, 1.442695
        %v1704 = vpow.pop %v1703
        %v1705 = vsub.f32 1.0, %v1702
        %v1706 = vsub.f32 1.0, %v1704
        %v1707 = vmul.f32 %v1705, %v1577
        %v1708 = vmul.f32 %v1706, %v1578
        %v1709 = vperm.slane %v1707, 0
        %v1710 = vperm.slane %v1708, 0
        %v1711 = vmul.f32 %v1709, %v1673
        %v1712 = vmul.f32 %v1710, %v1693
        %v1713 = vadd.f32 %v1565, %v1711
        %v1714 = vadd.f32 %v1566, %v1712
        %v1715 = vmul.f32 %v1707, 1.7741935
        %v1716 = vmul.f32 %v1708, 1.7741935
        %v1717 = vadd.f32 %v1569, %v1715
        %v1718 = vadd.f32 %v1570, %v1716
        %v1719 = vadd.f32 %v1571, %v1707
        %v1720 = vadd.f32 %v1572, %v1708
        %v1721 = vsub.f32 1.0, %v1705
        %v1722 = vsub.f32 1.0, %v1706
        %v1723 = vadd.f32 %v1721, 1e-10
        %v1724 = vadd.f32 %v1722, 1e-10
        %v1725 = vmul.f32 %v1577, %v1723
        %v1726 = vmul.f32 %v1578, %v1724
        %v1727 = vmul.f32 %v350, 1.8709677
        %v1728 = vadd.f32 %v349, %v1727
        %1730 = vst [vmem:[#allocation1] ss:$2 sm:$0xff] %v1728
        %v1731 = vld.sshfl [vmem:[#allocation1] sm:$0xff pattern:$0x75316420]
        %v1732 = vld.sshfl [vmem:[#allocation1 + $0x8] sm:$0xff pattern:$0x75316420]
        %v1733 = vsel %vm399, %v1731, 0
        %v1735 = vsel %vm399, %v1732, 0
        %1737 = vmatpush.msra.mxu0 0.0
        %1738 = vmatpush.msra.mxu0 0.0
        %1739 = vmatpush.msra.mxu0 0.0
        %1740 = vmatpush.msra.mxu0 0.0
        %1741 = vmatpush.msra.mxu0 0.0
        %1742 = vmatpush.msra.mxu0 0.0
        %1743 = vmatpush.msra.mxu0 0.0
        %1744 = vmatpush.msra.mxu0 0.0
        %1745 = vmatpush.msra.mxu0 0.0
        %1746 = vmatpush.msra.mxu0 0.0
        %1747 = vmatpush.msra.mxu0 0.0
        %1748 = vmatpush.msra.mxu0 0.0
        %1749 = vmatpush.msra.mxu0 0.0
        %1750 = vmatpush.msra.mxu0 0.0
        %1751 = vmatpush.msra.mxu0 0.0
        %1752 = vmatpush.msra.mxu0 %v1733
        %1753 = vmatmul.f32.gmra.mxu0 %v388
        %v1754 = vpop.f32.mrf.mxu0
        %v1755 = vadd.f32 %v365, %v1754
        %1756 = vmatmul.f32.gmra.mxu0 %v391
        %v1757 = vpop.f32.mrf.mxu0
        %v1758 = vadd.f32 %v370, %v1757
        %1759 = vmatmul.f32.gmra.mxu0 %v394
        %v1760 = vpop.f32.mrf.mxu0
        %v1761 = vadd.f32 %v375, %v1760
        %1762 = vmatmul.f32.gmra.mxu0 %v397
        %v1763 = vpop.f32.mrf.mxu0
        %v1764 = vadd.f32 %v380, %v1763
        %1765 = vdwg.mxu0
        %1766 = vmatpush.msra.mxu0 0.0
        %1767 = vmatpush.msra.mxu0 0.0
        %1768 = vmatpush.msra.mxu0 0.0
        %1769 = vmatpush.msra.mxu0 0.0
        %1770 = vmatpush.msra.mxu0 0.0
        %1771 = vmatpush.msra.mxu0 0.0
        %1772 = vmatpush.msra.mxu0 0.0
        %1773 = vmatpush.msra.mxu0 0.0
        %1774 = vmatpush.msra.mxu0 0.0
        %1775 = vmatpush.msra.mxu0 0.0
        %1776 = vmatpush.msra.mxu0 0.0
        %1777 = vmatpush.msra.mxu0 0.0
        %1778 = vmatpush.msra.mxu0 0.0
        %1779 = vmatpush.msra.mxu0 0.0
        %1780 = vmatpush.msra.mxu0 0.0
        %1781 = vmatpush.msra.mxu0 %v1735
        %1782 = vmatmul.f32.gmra.mxu0 %v388
        %v1783 = vpop.f32.mrf.mxu0
        %v1784 = vadd.f32 %v365, %v1783
        %1785 = vmatmul.f32.gmra.mxu0 %v391
        %v1786 = vpop.f32.mrf.mxu0
        %v1787 = vadd.f32 %v370, %v1786
        %1788 = vmatmul.f32.gmra.mxu0 %v394
        %v1789 = vpop.f32.mrf.mxu0
        %v1790 = vadd.f32 %v375, %v1789
        %1791 = vmatmul.f32.gmra.mxu0 %v397
        %v1792 = vpop.f32.mrf.mxu0
        %v1793 = vadd.f32 %v380, %v1792
        %1794 = vdwg.mxu0
        %v1795 = vmax.f32 %v1755, 0.0
        %v1796 = vmax.f32 %v1784, 0.0
        %v1797 = vmax.f32 %v1758, 0.0
        %v1798 = vmax.f32 %v1787, 0.0
        %v1799 = vmax.f32 %v1761, 0.0
        %v1800 = vmax.f32 %v1790, 0.0
        %v1801 = vmax.f32 %v1764, 0.0
        %v1802 = vmax.f32 %v1793, 0.0
        %1803 = vmatpush.msra.mxu0 0.0
        %1804 = vmatpush.msra.mxu0 0.0
        %1805 = vmatpush.msra.mxu0 0.0
        %1806 = vmatpush.msra.mxu0 0.0
        %1807 = vmatpush.msra.mxu0 0.0
        %1808 = vmatpush.msra.mxu0 0.0
        %1809 = vmatpush.msra.mxu0 0.0
        %1810 = vmatpush.msra.mxu0 0.0
        %1811 = vmatpush.msra.mxu0 0.0
        %1812 = vmatpush.msra.mxu0 0.0
        %1813 = vmatpush.msra.mxu0 0.0
        %1814 = vmatpush.msra.mxu0 0.0
        %1815 = vmatpush.msra.mxu0 %v1801
        %1816 = vmatpush.msra.mxu0 %v1799
        %1817 = vmatpush.msra.mxu0 %v1797
        %1818 = vmatpush.msra.mxu0 %v1795
        %1819 = vmatmul.f32.gmra.mxu0 %v477
        %v1820 = vpop.f32.mrf.mxu0
        %v1821 = vadd.f32 %v473, %v1820
        %1822 = vdwg.mxu0
        %1823 = vmatpush.msra.mxu0 0.0
        %1824 = vmatpush.msra.mxu0 0.0
        %1825 = vmatpush.msra.mxu0 0.0
        %1826 = vmatpush.msra.mxu0 0.0
        %1827 = vmatpush.msra.mxu0 0.0
        %1828 = vmatpush.msra.mxu0 0.0
        %1829 = vmatpush.msra.mxu0 0.0
        %1830 = vmatpush.msra.mxu0 0.0
        %1831 = vmatpush.msra.mxu0 0.0
        %1832 = vmatpush.msra.mxu0 0.0
        %1833 = vmatpush.msra.mxu0 0.0
        %1834 = vmatpush.msra.mxu0 0.0
        %1835 = vmatpush.msra.mxu0 %v1802
        %1836 = vmatpush.msra.mxu0 %v1800
        %1837 = vmatpush.msra.mxu0 %v1798
        %1838 = vmatpush.msra.mxu0 %v1796
        %1839 = vmatmul.f32.gmra.mxu0 %v477
        %v1840 = vpop.f32.mrf.mxu0
        %v1841 = vadd.f32 %v473, %v1840
        %1842 = vdwg.mxu0
        %v1843 = vmax.f32 %v1821, 0.0
        %v1844 = vmax.f32 %v1841, 0.0
        %v1845 = vsub.f32 0.0, %v1843
        %v1846 = vsub.f32 0.0, %v1844
        %v1847 = vmul.f32 %v1845, 0.09677422
        %v1848 = vmul.f32 %v1846, 0.09677422
        %v1849 = vmul.f32 %v1847, 1.442695
        %v1850 = vpow.pop %v1849
        %v1851 = vmul.f32 %v1848, 1.442695
        %v1852 = vpow.pop %v1851
        %v1853 = vsub.f32 1.0, %v1850
        %v1854 = vsub.f32 1.0, %v1852
        %v1855 = vmul.f32 %v1853, %v1725
        %v1856 = vmul.f32 %v1854, %v1726
        %v1857 = vperm.slane %v1855, 0
        %v1858 = vperm.slane %v1856, 0
        %v1859 = vmul.f32 %v1857, %v1821
        %v1860 = vmul.f32 %v1858, %v1841
        %v1861 = vadd.f32 %v1713, %v1859
        %v1862 = vadd.f32 %v1714, %v1860
        %v1863 = vmul.f32 %v1855, 1.8709677
        %v1864 = vmul.f32 %v1856, 1.8709677
        %v1865 = vadd.f32 %v1717, %v1863
        %v1866 = vadd.f32 %v1718, %v1864
        %v1867 = vadd.f32 %v1719, %v1855
        %v1868 = vadd.f32 %v1720, %v1856
        %v1869 = vsub.f32 1.0, %v1853
        %v1870 = vsub.f32 1.0, %v1854
        %v1871 = vadd.f32 %v1869, 1e-10
        %v1872 = vadd.f32 %v1870, 1e-10
        %v1873 = vmul.f32 %v1725, %v1871
        %v1874 = vmul.f32 %v1726, %v1872
        %v1875 = vmul.f32 %v350, 1.967742
        %v1876 = vadd.f32 %v349, %v1875
        %1878 = vst [vmem:[#allocation1] ss:$2 sm:$0xff] %v1876
        %v1879 = vld.sshfl [vmem:[#allocation1] sm:$0xff pattern:$0x75316420]
        %v1880 = vld.sshfl [vmem:[#allocation1 + $0x8] sm:$0xff pattern:$0x75316420]
        %v1881 = vsel %vm399, %v1879, 0
        %v1883 = vsel %vm399, %v1880, 0
        %1885 = vmatpush.msra.mxu0 0.0
        %1886 = vmatpush.msra.mxu0 0.0
        %1887 = vmatpush.msra.mxu0 0.0
        %1888 = vmatpush.msra.mxu0 0.0
        %1889 = vmatpush.msra.mxu0 0.0
        %1890 = vmatpush.msra.mxu0 0.0
        %1891 = vmatpush.msra.mxu0 0.0
        %1892 = vmatpush.msra.mxu0 0.0
        %1893 = vmatpush.msra.mxu0 0.0
        %1894 = vmatpush.msra.mxu0 0.0
        %1895 = vmatpush.msra.mxu0 0.0
        %1896 = vmatpush.msra.mxu0 0.0
        %1897 = vmatpush.msra.mxu0 0.0
        %1898 = vmatpush.msra.mxu0 0.0
        %1899 = vmatpush.msra.mxu0 0.0
        %1900 = vmatpush.msra.mxu0 %v1881
        %1901 = vmatmul.f32.gmra.mxu0 %v388
        %v1902 = vpop.f32.mrf.mxu0
        %v1903 = vadd.f32 %v365, %v1902
        %1904 = vmatmul.f32.gmra.mxu0 %v391
        %v1905 = vpop.f32.mrf.mxu0
        %v1906 = vadd.f32 %v370, %v1905
        %1907 = vmatmul.f32.gmra.mxu0 %v394
        %v1908 = vpop.f32.mrf.mxu0
        %v1909 = vadd.f32 %v375, %v1908
        %1910 = vmatmul.f32.gmra.mxu0 %v397
        %v1911 = vpop.f32.mrf.mxu0
        %v1912 = vadd.f32 %v380, %v1911
        %1913 = vdwg.mxu0
        %1914 = vmatpush.msra.mxu0 0.0
        %1915 = vmatpush.msra.mxu0 0.0
        %1916 = vmatpush.msra.mxu0 0.0
        %1917 = vmatpush.msra.mxu0 0.0
        %1918 = vmatpush.msra.mxu0 0.0
        %1919 = vmatpush.msra.mxu0 0.0
        %1920 = vmatpush.msra.mxu0 0.0
        %1921 = vmatpush.msra.mxu0 0.0
        %1922 = vmatpush.msra.mxu0 0.0
        %1923 = vmatpush.msra.mxu0 0.0
        %1924 = vmatpush.msra.mxu0 0.0
        %1925 = vmatpush.msra.mxu0 0.0
        %1926 = vmatpush.msra.mxu0 0.0
        %1927 = vmatpush.msra.mxu0 0.0
        %1928 = vmatpush.msra.mxu0 0.0
        %1929 = vmatpush.msra.mxu0 %v1883
        %1930 = vmatmul.f32.gmra.mxu0 %v388
        %v1931 = vpop.f32.mrf.mxu0
        %v1932 = vadd.f32 %v365, %v1931
        %1933 = vmatmul.f32.gmra.mxu0 %v391
        %v1934 = vpop.f32.mrf.mxu0
        %v1935 = vadd.f32 %v370, %v1934
        %1936 = vmatmul.f32.gmra.mxu0 %v394
        %v1937 = vpop.f32.mrf.mxu0
        %v1938 = vadd.f32 %v375, %v1937
        %1939 = vmatmul.f32.gmra.mxu0 %v397
        %v1940 = vpop.f32.mrf.mxu0
        %v1941 = vadd.f32 %v380, %v1940
        %1942 = vdwg.mxu0
        %v1943 = vmax.f32 %v1903, 0.0
        %v1944 = vmax.f32 %v1932, 0.0
        %v1945 = vmax.f32 %v1906, 0.0
        %v1946 = vmax.f32 %v1935, 0.0
        %v1947 = vmax.f32 %v1909, 0.0
        %v1948 = vmax.f32 %v1938, 0.0
        %v1949 = vmax.f32 %v1912, 0.0
        %v1950 = vmax.f32 %v1941, 0.0
        %1951 = vmatpush.msra.mxu0 0.0
        %1952 = vmatpush.msra.mxu0 0.0
        %1953 = vmatpush.msra.mxu0 0.0
        %1954 = vmatpush.msra.mxu0 0.0
        %1955 = vmatpush.msra.mxu0 0.0
        %1956 = vmatpush.msra.mxu0 0.0
        %1957 = vmatpush.msra.mxu0 0.0
        %1958 = vmatpush.msra.mxu0 0.0
        %1959 = vmatpush.msra.mxu0 0.0
        %1960 = vmatpush.msra.mxu0 0.0
        %1961 = vmatpush.msra.mxu0 0.0
        %1962 = vmatpush.msra.mxu0 0.0
        %1963 = vmatpush.msra.mxu0 %v1949
        %1964 = vmatpush.msra.mxu0 %v1947
        %1965 = vmatpush.msra.mxu0 %v1945
        %1966 = vmatpush.msra.mxu0 %v1943
        %1967 = vmatmul.f32.gmra.mxu0 %v477
        %v1968 = vpop.f32.mrf.mxu0
        %v1969 = vadd.f32 %v473, %v1968
        %1970 = vdwg.mxu0
        %1971 = vmatpush.msra.mxu0 0.0
        %1972 = vmatpush.msra.mxu0 0.0
        %1973 = vmatpush.msra.mxu0 0.0
        %1974 = vmatpush.msra.mxu0 0.0
        %1975 = vmatpush.msra.mxu0 0.0
        %1976 = vmatpush.msra.mxu0 0.0
        %1977 = vmatpush.msra.mxu0 0.0
        %1978 = vmatpush.msra.mxu0 0.0
        %1979 = vmatpush.msra.mxu0 0.0
        %1980 = vmatpush.msra.mxu0 0.0
        %1981 = vmatpush.msra.mxu0 0.0
        %1982 = vmatpush.msra.mxu0 0.0
        %1983 = vmatpush.msra.mxu0 %v1950
        %1984 = vmatpush.msra.mxu0 %v1948
        %1985 = vmatpush.msra.mxu0 %v1946
        %1986 = vmatpush.msra.mxu0 %v1944
        %1987 = vmatmul.f32.gmra.mxu0 %v477
        %v1988 = vpop.f32.mrf.mxu0
        %v1989 = vadd.f32 %v473, %v1988
        %1990 = vdwg.mxu0
        %v1991 = vmax.f32 %v1969, 0.0
        %v1992 = vmax.f32 %v1989, 0.0
        %v1993 = vsub.f32 0.0, %v1991
        %v1994 = vsub.f32 0.0, %v1992
        %v1995 = vmul.f32 %v1993, 0.0967741
        %v1996 = vmul.f32 %v1994, 0.0967741
        %v1997 = vmul.f32 %v1995, 1.442695
        %v1998 = vpow.pop %v1997
        %v1999 = vmul.f32 %v1996, 1.442695
        %v2000 = vpow.pop %v1999
        %v2001 = vsub.f32 1.0, %v1998
        %v2002 = vsub.f32 1.0, %v2000
        %v2003 = vmul.f32 %v2001, %v1873
        %v2004 = vmul.f32 %v2002, %v1874
        %v2005 = vperm.slane %v2003, 0
        %v2006 = vperm.slane %v2004, 0
        %v2007 = vmul.f32 %v2005, %v1969
        %v2008 = vmul.f32 %v2006, %v1989
        %v2009 = vadd.f32 %v1861, %v2007
        %v2010 = vadd.f32 %v1862, %v2008
        %v2011 = vmul.f32 %v2003, 1.967742
        %v2012 = vmul.f32 %v2004, 1.967742
        %v2013 = vadd.f32 %v1865, %v2011
        %v2014 = vadd.f32 %v1866, %v2012
        %v2015 = vadd.f32 %v1867, %v2003
        %v2016 = vadd.f32 %v1868, %v2004
        %v2017 = vsub.f32 1.0, %v2001
        %v2018 = vsub.f32 1.0, %v2002
        %v2019 = vadd.f32 %v2017, 1e-10
        %v2020 = vadd.f32 %v2018, 1e-10
        %v2021 = vmul.f32 %v1873, %v2019
        %v2022 = vmul.f32 %v1874, %v2020
        %v2023 = vmul.f32 %v350, 2.064516
        %v2024 = vadd.f32 %v349, %v2023
        %2026 = vst [vmem:[#allocation1] ss:$2 sm:$0xff] %v2024
        %v2027 = vld.sshfl [vmem:[#allocation1] sm:$0xff pattern:$0x75316420]
        %v2028 = vld.sshfl [vmem:[#allocation1 + $0x8] sm:$0xff pattern:$0x75316420]
        %v2029 = vsel %vm399, %v2027, 0
        %v2031 = vsel %vm399, %v2028, 0
        %2033 = vmatpush.msra.mxu0 0.0
        %2034 = vmatpush.msra.mxu0 0.0
        %2035 = vmatpush.msra.mxu0 0.0
        %2036 = vmatpush.msra.mxu0 0.0
        %2037 = vmatpush.msra.mxu0 0.0
        %2038 = vmatpush.msra.mxu0 0.0
        %2039 = vmatpush.msra.mxu0 0.0
        %2040 = vmatpush.msra.mxu0 0.0
        %2041 = vmatpush.msra.mxu0 0.0
        %2042 = vmatpush.msra.mxu0 0.0
        %2043 = vmatpush.msra.mxu0 0.0
        %2044 = vmatpush.msra.mxu0 0.0
        %2045 = vmatpush.msra.mxu0 0.0
        %2046 = vmatpush.msra.mxu0 0.0
        %2047 = vmatpush.msra.mxu0 0.0
        %2048 = vmatpush.msra.mxu0 %v2029
        %2049 = vmatmul.f32.gmra.mxu0 %v388
        %v2050 = vpop.f32.mrf.mxu0
        %v2051 = vadd.f32 %v365, %v2050
        %2052 = vmatmul.f32.gmra.mxu0 %v391
        %v2053 = vpop.f32.mrf.mxu0
        %v2054 = vadd.f32 %v370, %v2053
        %2055 = vmatmul.f32.gmra.mxu0 %v394
        %v2056 = vpop.f32.mrf.mxu0
        %v2057 = vadd.f32 %v375, %v2056
        %2058 = vmatmul.f32.gmra.mxu0 %v397
        %v2059 = vpop.f32.mrf.mxu0
        %v2060 = vadd.f32 %v380, %v2059
        %2061 = vdwg.mxu0
        %2062 = vmatpush.msra.mxu0 0.0
        %2063 = vmatpush.msra.mxu0 0.0
        %2064 = vmatpush.msra.mxu0 0.0
        %2065 = vmatpush.msra.mxu0 0.0
        %2066 = vmatpush.msra.mxu0 0.0
        %2067 = vmatpush.msra.mxu0 0.0
        %2068 = vmatpush.msra.mxu0 0.0
        %2069 = vmatpush.msra.mxu0 0.0
        %2070 = vmatpush.msra.mxu0 0.0
        %2071 = vmatpush.msra.mxu0 0.0
        %2072 = vmatpush.msra.mxu0 0.0
        %2073 = vmatpush.msra.mxu0 0.0
        %2074 = vmatpush.msra.mxu0 0.0
        %2075 = vmatpush.msra.mxu0 0.0
        %2076 = vmatpush.msra.mxu0 0.0
        %2077 = vmatpush.msra.mxu0 %v2031
        %2078 = vmatmul.f32.gmra.mxu0 %v388
        %v2079 = vpop.f32.mrf.mxu0
        %v2080 = vadd.f32 %v365, %v2079
        %2081 = vmatmul.f32.gmra.mxu0 %v391
        %v2082 = vpop.f32.mrf.mxu0
        %v2083 = vadd.f32 %v370, %v2082
        %2084 = vmatmul.f32.gmra.mxu0 %v394
        %v2085 = vpop.f32.mrf.mxu0
        %v2086 = vadd.f32 %v375, %v2085
        %2087 = vmatmul.f32.gmra.mxu0 %v397
        %v2088 = vpop.f32.mrf.mxu0
        %v2089 = vadd.f32 %v380, %v2088
        %2090 = vdwg.mxu0
        %v2091 = vmax.f32 %v2051, 0.0
        %v2092 = vmax.f32 %v2080, 0.0
        %v2093 = vmax.f32 %v2054, 0.0
        %v2094 = vmax.f32 %v2083, 0.0
        %v2095 = vmax.f32 %v2057, 0.0
        %v2096 = vmax.f32 %v2086, 0.0
        %v2097 = vmax.f32 %v2060, 0.0
        %v2098 = vmax.f32 %v2089, 0.0
        %2099 = vmatpush.msra.mxu0 0.0
        %2100 = vmatpush.msra.mxu0 0.0
        %2101 = vmatpush.msra.mxu0 0.0
        %2102 = vmatpush.msra.mxu0 0.0
        %2103 = vmatpush.msra.mxu0 0.0
        %2104 = vmatpush.msra.mxu0 0.0
        %2105 = vmatpush.msra.mxu0 0.0
        %2106 = vmatpush.msra.mxu0 0.0
        %2107 = vmatpush.msra.mxu0 0.0
        %2108 = vmatpush.msra.mxu0 0.0
        %2109 = vmatpush.msra.mxu0 0.0
        %2110 = vmatpush.msra.mxu0 0.0
        %2111 = vmatpush.msra.mxu0 %v2097
        %2112 = vmatpush.msra.mxu0 %v2095
        %2113 = vmatpush.msra.mxu0 %v2093
        %2114 = vmatpush.msra.mxu0 %v2091
        %2115 = vmatmul.f32.gmra.mxu0 %v477
        %v2116 = vpop.f32.mrf.mxu0
        %v2117 = vadd.f32 %v473, %v2116
        %2118 = vdwg.mxu0
        %2119 = vmatpush.msra.mxu0 0.0
        %2120 = vmatpush.msra.mxu0 0.0
        %2121 = vmatpush.msra.mxu0 0.0
        %2122 = vmatpush.msra.mxu0 0.0
        %2123 = vmatpush.msra.mxu0 0.0
        %2124 = vmatpush.msra.mxu0 0.0
        %2125 = vmatpush.msra.mxu0 0.0
        %2126 = vmatpush.msra.mxu0 0.0
        %2127 = vmatpush.msra.mxu0 0.0
        %2128 = vmatpush.msra.mxu0 0.0
        %2129 = vmatpush.msra.mxu0 0.0
        %2130 = vmatpush.msra.mxu0 0.0
        %2131 = vmatpush.msra.mxu0 %v2098
        %2132 = vmatpush.msra.mxu0 %v2096
        %2133 = vmatpush.msra.mxu0 %v2094
        %2134 = vmatpush.msra.mxu0 %v2092
        %2135 = vmatmul.f32.gmra.mxu0 %v477
        %v2136 = vpop.f32.mrf.mxu0
        %v2137 = vadd.f32 %v473, %v2136
        %2138 = vdwg.mxu0
        %v2139 = vmax.f32 %v2117, 0.0
        %v2140 = vmax.f32 %v2137, 0.0
        %v2141 = vsub.f32 0.0, %v2139
        %v2142 = vsub.f32 0.0, %v2140
        %v2143 = vmul.f32 %v2141, 0.09677434
        %v2144 = vmul.f32 %v2142, 0.09677434
        %v2145 = vmul.f32 %v2143, 1.442695
        %v2146 = vpow.pop %v2145
        %v2147 = vmul.f32 %v2144, 1.442695
        %v2148 = vpow.pop %v2147
        %v2149 = vsub.f32 1.0, %v2146
        %v2150 = vsub.f32 1.0, %v2148
        %v2151 = vmul.f32 %v2149, %v2021
        %v2152 = vmul.f32 %v2150, %v2022
        %v2153 = vperm.slane %v2151, 0
        %v2154 = vperm.slane %v2152, 0
        %v2155 = vmul.f32 %v2153, %v2117
        %v2156 = vmul.f32 %v2154, %v2137
        %v2157 = vadd.f32 %v2009, %v2155
        %v2158 = vadd.f32 %v2010, %v2156
        %v2159 = vmul.f32 %v2151, 2.064516
        %v2160 = vmul.f32 %v2152, 2.064516
        %v2161 = vadd.f32 %v2013, %v2159
        %v2162 = vadd.f32 %v2014, %v2160
        %v2163 = vadd.f32 %v2015, %v2151
        %v2164 = vadd.f32 %v2016, %v2152
        %v2165 = vsub.f32 1.0, %v2149
        %v2166 = vsub.f32 1.0, %v2150
        %v2167 = vadd.f32 %v2165, 1e-10
        %v2168 = vadd.f32 %v2166, 1e-10
        %v2169 = vmul.f32 %v2021, %v2167
        %v2170 = vmul.f32 %v2022, %v2168
        %v2171 = vmul.f32 %v350, 2.1612904
        %v2172 = vadd.f32 %v349, %v2171
        %2174 = vst [vmem:[#allocation1] ss:$2 sm:$0xff] %v2172
        %v2175 = vld.sshfl [vmem:[#allocation1] sm:$0xff pattern:$0x75316420]
        %v2176 = vld.sshfl [vmem:[#allocation1 + $0x8] sm:$0xff pattern:$0x75316420]
        %v2177 = vsel %vm399, %v2175, 0
        %v2179 = vsel %vm399, %v2176, 0
        %2181 = vmatpush.msra.mxu0 0.0
        %2182 = vmatpush.msra.mxu0 0.0
        %2183 = vmatpush.msra.mxu0 0.0
        %2184 = vmatpush.msra.mxu0 0.0
        %2185 = vmatpush.msra.mxu0 0.0
        %2186 = vmatpush.msra.mxu0 0.0
        %2187 = vmatpush.msra.mxu0 0.0
        %2188 = vmatpush.msra.mxu0 0.0
        %2189 = vmatpush.msra.mxu0 0.0
        %2190 = vmatpush.msra.mxu0 0.0
        %2191 = vmatpush.msra.mxu0 0.0
        %2192 = vmatpush.msra.mxu0 0.0
        %2193 = vmatpush.msra.mxu0 0.0
        %2194 = vmatpush.msra.mxu0 0.0
        %2195 = vmatpush.msra.mxu0 0.0
        %2196 = vmatpush.msra.mxu0 %v2177
        %2197 = vmatmul.f32.gmra.mxu0 %v388
        %v2198 = vpop.f32.mrf.mxu0
        %v2199 = vadd.f32 %v365, %v2198
        %2200 = vmatmul.f32.gmra.mxu0 %v391
        %v2201 = vpop.f32.mrf.mxu0
        %v2202 = vadd.f32 %v370, %v2201
        %2203 = vmatmul.f32.gmra.mxu0 %v394
        %v2204 = vpop.f32.mrf.mxu0
        %v2205 = vadd.f32 %v375, %v2204
        %2206 = vmatmul.f32.gmra.mxu0 %v397
        %v2207 = vpop.f32.mrf.mxu0
        %v2208 = vadd.f32 %v380, %v2207
        %2209 = vdwg.mxu0
        %2210 = vmatpush.msra.mxu0 0.0
        %2211 = vmatpush.msra.mxu0 0.0
        %2212 = vmatpush.msra.mxu0 0.0
        %2213 = vmatpush.msra.mxu0 0.0
        %2214 = vmatpush.msra.mxu0 0.0
        %2215 = vmatpush.msra.mxu0 0.0
        %2216 = vmatpush.msra.mxu0 0.0
        %2217 = vmatpush.msra.mxu0 0.0
        %2218 = vmatpush.msra.mxu0 0.0
        %2219 = vmatpush.msra.mxu0 0.0
        %2220 = vmatpush.msra.mxu0 0.0
        %2221 = vmatpush.msra.mxu0 0.0
        %2222 = vmatpush.msra.mxu0 0.0
        %2223 = vmatpush.msra.mxu0 0.0
        %2224 = vmatpush.msra.mxu0 0.0
        %2225 = vmatpush.msra.mxu0 %v2179
        %2226 = vmatmul.f32.gmra.mxu0 %v388
        %v2227 = vpop.f32.mrf.mxu0
        %v2228 = vadd.f32 %v365, %v2227
        %2229 = vmatmul.f32.gmra.mxu0 %v391
        %v2230 = vpop.f32.mrf.mxu0
        %v2231 = vadd.f32 %v370, %v2230
        %2232 = vmatmul.f32.gmra.mxu0 %v394
        %v2233 = vpop.f32.mrf.mxu0
        %v2234 = vadd.f32 %v375, %v2233
        %2235 = vmatmul.f32.gmra.mxu0 %v397
        %v2236 = vpop.f32.mrf.mxu0
        %v2237 = vadd.f32 %v380, %v2236
        %2238 = vdwg.mxu0
        %v2239 = vmax.f32 %v2199, 0.0
        %v2240 = vmax.f32 %v2228, 0.0
        %v2241 = vmax.f32 %v2202, 0.0
        %v2242 = vmax.f32 %v2231, 0.0
        %v2243 = vmax.f32 %v2205, 0.0
        %v2244 = vmax.f32 %v2234, 0.0
        %v2245 = vmax.f32 %v2208, 0.0
        %v2246 = vmax.f32 %v2237, 0.0
        %2247 = vmatpush.msra.mxu0 0.0
        %2248 = vmatpush.msra.mxu0 0.0
        %2249 = vmatpush.msra.mxu0 0.0
        %2250 = vmatpush.msra.mxu0 0.0
        %2251 = vmatpush.msra.mxu0 0.0
        %2252 = vmatpush.msra.mxu0 0.0
        %2253 = vmatpush.msra.mxu0 0.0
        %2254 = vmatpush.msra.mxu0 0.0
        %2255 = vmatpush.msra.mxu0 0.0
        %2256 = vmatpush.msra.mxu0 0.0
        %2257 = vmatpush.msra.mxu0 0.0
        %2258 = vmatpush.msra.mxu0 0.0
        %2259 = vmatpush.msra.mxu0 %v2245
        %2260 = vmatpush.msra.mxu0 %v2243
        %2261 = vmatpush.msra.mxu0 %v2241
        %2262 = vmatpush.msra.mxu0 %v2239
        %2263 = vmatmul.f32.gmra.mxu0 %v477
        %v2264 = vpop.f32.mrf.mxu0
        %v2265 = vadd.f32 %v473, %v2264
        %2266 = vdwg.mxu0
        %2267 = vmatpush.msra.mxu0 0.0
        %2268 = vmatpush.msra.mxu0 0.0
        %2269 = vmatpush.msra.mxu0 0.0
        %2270 = vmatpush.msra.mxu0 0.0
        %2271 = vmatpush.msra.mxu0 0.0
        %2272 = vmatpush.msra.mxu0 0.0
        %2273 = vmatpush.msra.mxu0 0.0
        %2274 = vmatpush.msra.mxu0 0.0
        %2275 = vmatpush.msra.mxu0 0.0
        %2276 = vmatpush.msra.mxu0 0.0
        %2277 = vmatpush.msra.mxu0 0.0
        %2278 = vmatpush.msra.mxu0 0.0
        %2279 = vmatpush.msra.mxu0 %v2246
        %2280 = vmatpush.msra.mxu0 %v2244
        %2281 = vmatpush.msra.mxu0 %v2242
        %2282 = vmatpush.msra.mxu0 %v2240
        %2283 = vmatmul.f32.gmra.mxu0 %v477
        %v2284 = vpop.f32.mrf.mxu0
        %v2285 = vadd.f32 %v473, %v2284
        %2286 = vdwg.mxu0
        %v2287 = vmax.f32 %v2265, 0.0
        %v2288 = vmax.f32 %v2285, 0.0
        %v2289 = vsub.f32 0.0, %v2287
        %v2290 = vsub.f32 0.0, %v2288
        %v2291 = vmul.f32 %v2289, 0.0967741
        %v2292 = vmul.f32 %v2290, 0.0967741
        %v2293 = vmul.f32 %v2291, 1.442695
        %v2294 = vpow.pop %v2293
        %v2295 = vmul.f32 %v2292, 1.442695
        %v2296 = vpow.pop %v2295
        %v2297 = vsub.f32 1.0, %v2294
        %v2298 = vsub.f32 1.0, %v2296
        %v2299 = vmul.f32 %v2297, %v2169
        %v2300 = vmul.f32 %v2298, %v2170
        %v2301 = vperm.slane %v2299, 0
        %v2302 = vperm.slane %v2300, 0
        %v2303 = vmul.f32 %v2301, %v2265
        %v2304 = vmul.f32 %v2302, %v2285
        %v2305 = vadd.f32 %v2157, %v2303
        %v2306 = vadd.f32 %v2158, %v2304
        %v2307 = vmul.f32 %v2299, 2.1612904
        %v2308 = vmul.f32 %v2300, 2.1612904
        %v2309 = vadd.f32 %v2161, %v2307
        %v2310 = vadd.f32 %v2162, %v2308
        %v2311 = vadd.f32 %v2163, %v2299
        %v2312 = vadd.f32 %v2164, %v2300
        %v2313 = vsub.f32 1.0, %v2297
        %v2314 = vsub.f32 1.0, %v2298
        %v2315 = vadd.f32 %v2313, 1e-10
        %v2316 = vadd.f32 %v2314, 1e-10
        %v2317 = vmul.f32 %v2169, %v2315
        %v2318 = vmul.f32 %v2170, %v2316
        %v2319 = vmul.f32 %v350, 2.2580645
        %v2320 = vadd.f32 %v349, %v2319
        %2322 = vst [vmem:[#allocation1] ss:$2 sm:$0xff] %v2320
        %v2323 = vld.sshfl [vmem:[#allocation1] sm:$0xff pattern:$0x75316420]
        %v2324 = vld.sshfl [vmem:[#allocation1 + $0x8] sm:$0xff pattern:$0x75316420]
        %v2325 = vsel %vm399, %v2323, 0
        %v2327 = vsel %vm399, %v2324, 0
        %2329 = vmatpush.msra.mxu0 0.0
        %2330 = vmatpush.msra.mxu0 0.0
        %2331 = vmatpush.msra.mxu0 0.0
        %2332 = vmatpush.msra.mxu0 0.0
        %2333 = vmatpush.msra.mxu0 0.0
        %2334 = vmatpush.msra.mxu0 0.0
        %2335 = vmatpush.msra.mxu0 0.0
        %2336 = vmatpush.msra.mxu0 0.0
        %2337 = vmatpush.msra.mxu0 0.0
        %2338 = vmatpush.msra.mxu0 0.0
        %2339 = vmatpush.msra.mxu0 0.0
        %2340 = vmatpush.msra.mxu0 0.0
        %2341 = vmatpush.msra.mxu0 0.0
        %2342 = vmatpush.msra.mxu0 0.0
        %2343 = vmatpush.msra.mxu0 0.0
        %2344 = vmatpush.msra.mxu0 %v2325
        %2345 = vmatmul.f32.gmra.mxu0 %v388
        %v2346 = vpop.f32.mrf.mxu0
        %v2347 = vadd.f32 %v365, %v2346
        %2348 = vmatmul.f32.gmra.mxu0 %v391
        %v2349 = vpop.f32.mrf.mxu0
        %v2350 = vadd.f32 %v370, %v2349
        %2351 = vmatmul.f32.gmra.mxu0 %v394
        %v2352 = vpop.f32.mrf.mxu0
        %v2353 = vadd.f32 %v375, %v2352
        %2354 = vmatmul.f32.gmra.mxu0 %v397
        %v2355 = vpop.f32.mrf.mxu0
        %v2356 = vadd.f32 %v380, %v2355
        %2357 = vdwg.mxu0
        %2358 = vmatpush.msra.mxu0 0.0
        %2359 = vmatpush.msra.mxu0 0.0
        %2360 = vmatpush.msra.mxu0 0.0
        %2361 = vmatpush.msra.mxu0 0.0
        %2362 = vmatpush.msra.mxu0 0.0
        %2363 = vmatpush.msra.mxu0 0.0
        %2364 = vmatpush.msra.mxu0 0.0
        %2365 = vmatpush.msra.mxu0 0.0
        %2366 = vmatpush.msra.mxu0 0.0
        %2367 = vmatpush.msra.mxu0 0.0
        %2368 = vmatpush.msra.mxu0 0.0
        %2369 = vmatpush.msra.mxu0 0.0
        %2370 = vmatpush.msra.mxu0 0.0
        %2371 = vmatpush.msra.mxu0 0.0
        %2372 = vmatpush.msra.mxu0 0.0
        %2373 = vmatpush.msra.mxu0 %v2327
        %2374 = vmatmul.f32.gmra.mxu0 %v388
        %v2375 = vpop.f32.mrf.mxu0
        %v2376 = vadd.f32 %v365, %v2375
        %2377 = vmatmul.f32.gmra.mxu0 %v391
        %v2378 = vpop.f32.mrf.mxu0
        %v2379 = vadd.f32 %v370, %v2378
        %2380 = vmatmul.f32.gmra.mxu0 %v394
        %v2381 = vpop.f32.mrf.mxu0
        %v2382 = vadd.f32 %v375, %v2381
        %2383 = vmatmul.f32.gmra.mxu0 %v397
        %v2384 = vpop.f32.mrf.mxu0
        %v2385 = vadd.f32 %v380, %v2384
        %2386 = vdwg.mxu0
        %v2387 = vmax.f32 %v2347, 0.0
        %v2388 = vmax.f32 %v2376, 0.0
        %v2389 = vmax.f32 %v2350, 0.0
        %v2390 = vmax.f32 %v2379, 0.0
        %v2391 = vmax.f32 %v2353, 0.0
        %v2392 = vmax.f32 %v2382, 0.0
        %v2393 = vmax.f32 %v2356, 0.0
        %v2394 = vmax.f32 %v2385, 0.0
        %2395 = vmatpush.msra.mxu0 0.0
        %2396 = vmatpush.msra.mxu0 0.0
        %2397 = vmatpush.msra.mxu0 0.0
        %2398 = vmatpush.msra.mxu0 0.0
        %2399 = vmatpush.msra.mxu0 0.0
        %2400 = vmatpush.msra.mxu0 0.0
        %2401 = vmatpush.msra.mxu0 0.0
        %2402 = vmatpush.msra.mxu0 0.0
        %2403 = vmatpush.msra.mxu0 0.0
        %2404 = vmatpush.msra.mxu0 0.0
        %2405 = vmatpush.msra.mxu0 0.0
        %2406 = vmatpush.msra.mxu0 0.0
        %2407 = vmatpush.msra.mxu0 %v2393
        %2408 = vmatpush.msra.mxu0 %v2391
        %2409 = vmatpush.msra.mxu0 %v2389
        %2410 = vmatpush.msra.mxu0 %v2387
        %2411 = vmatmul.f32.gmra.mxu0 %v477
        %v2412 = vpop.f32.mrf.mxu0
        %v2413 = vadd.f32 %v473, %v2412
        %2414 = vdwg.mxu0
        %2415 = vmatpush.msra.mxu0 0.0
        %2416 = vmatpush.msra.mxu0 0.0
        %2417 = vmatpush.msra.mxu0 0.0
        %2418 = vmatpush.msra.mxu0 0.0
        %2419 = vmatpush.msra.mxu0 0.0
        %2420 = vmatpush.msra.mxu0 0.0
        %2421 = vmatpush.msra.mxu0 0.0
        %2422 = vmatpush.msra.mxu0 0.0
        %2423 = vmatpush.msra.mxu0 0.0
        %2424 = vmatpush.msra.mxu0 0.0
        %2425 = vmatpush.msra.mxu0 0.0
        %2426 = vmatpush.msra.mxu0 0.0
        %2427 = vmatpush.msra.mxu0 %v2394
        %2428 = vmatpush.msra.mxu0 %v2392
        %2429 = vmatpush.msra.mxu0 %v2390
        %2430 = vmatpush.msra.mxu0 %v2388
        %2431 = vmatmul.f32.gmra.mxu0 %v477
        %v2432 = vpop.f32.mrf.mxu0
        %v2433 = vadd.f32 %v473, %v2432
        %2434 = vdwg.mxu0
        %v2435 = vmax.f32 %v2413, 0.0
        %v2436 = vmax.f32 %v2433, 0.0
        %v2437 = vsub.f32 0.0, %v2435
        %v2438 = vsub.f32 0.0, %v2436
        %v2439 = vmul.f32 %v2437, 0.0967741
        %v2440 = vmul.f32 %v2438, 0.0967741
        %v2441 = vmul.f32 %v2439, 1.442695
        %v2442 = vpow.pop %v2441
        %v2443 = vmul.f32 %v2440, 1.442695
        %v2444 = vpow.pop %v2443
        %v2445 = vsub.f32 1.0, %v2442
        %v2446 = vsub.f32 1.0, %v2444
        %v2447 = vmul.f32 %v2445, %v2317
        %v2448 = vmul.f32 %v2446, %v2318
        %v2449 = vperm.slane %v2447, 0
        %v2450 = vperm.slane %v2448, 0
        %v2451 = vmul.f32 %v2449, %v2413
        %v2452 = vmul.f32 %v2450, %v2433
        %v2453 = vadd.f32 %v2305, %v2451
        %v2454 = vadd.f32 %v2306, %v2452
        %v2455 = vmul.f32 %v2447, 2.2580645
        %v2456 = vmul.f32 %v2448, 2.2580645
        %v2457 = vadd.f32 %v2309, %v2455
        %v2458 = vadd.f32 %v2310, %v2456
        %v2459 = vadd.f32 %v2311, %v2447
        %v2460 = vadd.f32 %v2312, %v2448
        %v2461 = vsub.f32 1.0, %v2445
        %v2462 = vsub.f32 1.0, %v2446
        %v2463 = vadd.f32 %v2461, 1e-10
        %v2464 = vadd.f32 %v2462, 1e-10
        %v2465 = vmul.f32 %v2317, %v2463
        %v2466 = vmul.f32 %v2318, %v2464
        %v2467 = vmul.f32 %v350, 2.3548386
        %v2468 = vadd.f32 %v349, %v2467
        %2470 = vst [vmem:[#allocation1] ss:$2 sm:$0xff] %v2468
        %v2471 = vld.sshfl [vmem:[#allocation1] sm:$0xff pattern:$0x75316420]
        %v2472 = vld.sshfl [vmem:[#allocation1 + $0x8] sm:$0xff pattern:$0x75316420]
        %v2473 = vsel %vm399, %v2471, 0
        %v2475 = vsel %vm399, %v2472, 0
        %2477 = vmatpush.msra.mxu0 0.0
        %2478 = vmatpush.msra.mxu0 0.0
        %2479 = vmatpush.msra.mxu0 0.0
        %2480 = vmatpush.msra.mxu0 0.0
        %2481 = vmatpush.msra.mxu0 0.0
        %2482 = vmatpush.msra.mxu0 0.0
        %2483 = vmatpush.msra.mxu0 0.0
        %2484 = vmatpush.msra.mxu0 0.0
        %2485 = vmatpush.msra.mxu0 0.0
        %2486 = vmatpush.msra.mxu0 0.0
        %2487 = vmatpush.msra.mxu0 0.0
        %2488 = vmatpush.msra.mxu0 0.0
        %2489 = vmatpush.msra.mxu0 0.0
        %2490 = vmatpush.msra.mxu0 0.0
        %2491 = vmatpush.msra.mxu0 0.0
        %2492 = vmatpush.msra.mxu0 %v2473
        %2493 = vmatmul.f32.gmra.mxu0 %v388
        %v2494 = vpop.f32.mrf.mxu0
        %v2495 = vadd.f32 %v365, %v2494
        %2496 = vmatmul.f32.gmra.mxu0 %v391
        %v2497 = vpop.f32.mrf.mxu0
        %v2498 = vadd.f32 %v370, %v2497
        %2499 = vmatmul.f32.gmra.mxu0 %v394
        %v2500 = vpop.f32.mrf.mxu0
        %v2501 = vadd.f32 %v375, %v2500
        %2502 = vmatmul.f32.gmra.mxu0 %v397
        %v2503 = vpop.f32.mrf.mxu0
        %v2504 = vadd.f32 %v380, %v2503
        %2505 = vdwg.mxu0
        %2506 = vmatpush.msra.mxu0 0.0
        %2507 = vmatpush.msra.mxu0 0.0
        %2508 = vmatpush.msra.mxu0 0.0
        %2509 = vmatpush.msra.mxu0 0.0
        %2510 = vmatpush.msra.mxu0 0.0
        %2511 = vmatpush.msra.mxu0 0.0
        %2512 = vmatpush.msra.mxu0 0.0
        %2513 = vmatpush.msra.mxu0 0.0
        %2514 = vmatpush.msra.mxu0 0.0
        %2515 = vmatpush.msra.mxu0 0.0
        %2516 = vmatpush.msra.mxu0 0.0
        %2517 = vmatpush.msra.mxu0 0.0
        %2518 = vmatpush.msra.mxu0 0.0
        %2519 = vmatpush.msra.mxu0 0.0
        %2520 = vmatpush.msra.mxu0 0.0
        %2521 = vmatpush.msra.mxu0 %v2475
        %2522 = vmatmul.f32.gmra.mxu0 %v388
        %v2523 = vpop.f32.mrf.mxu0
        %v2524 = vadd.f32 %v365, %v2523
        %2525 = vmatmul.f32.gmra.mxu0 %v391
        %v2526 = vpop.f32.mrf.mxu0
        %v2527 = vadd.f32 %v370, %v2526
        %2528 = vmatmul.f32.gmra.mxu0 %v394
        %v2529 = vpop.f32.mrf.mxu0
        %v2530 = vadd.f32 %v375, %v2529
        %2531 = vmatmul.f32.gmra.mxu0 %v397
        %v2532 = vpop.f32.mrf.mxu0
        %v2533 = vadd.f32 %v380, %v2532
        %2534 = vdwg.mxu0
        %v2535 = vmax.f32 %v2495, 0.0
        %v2536 = vmax.f32 %v2524, 0.0
        %v2537 = vmax.f32 %v2498, 0.0
        %v2538 = vmax.f32 %v2527, 0.0
        %v2539 = vmax.f32 %v2501, 0.0
        %v2540 = vmax.f32 %v2530, 0.0
        %v2541 = vmax.f32 %v2504, 0.0
        %v2542 = vmax.f32 %v2533, 0.0
        %2543 = vmatpush.msra.mxu0 0.0
        %2544 = vmatpush.msra.mxu0 0.0
        %2545 = vmatpush.msra.mxu0 0.0
        %2546 = vmatpush.msra.mxu0 0.0
        %2547 = vmatpush.msra.mxu0 0.0
        %2548 = vmatpush.msra.mxu0 0.0
        %2549 = vmatpush.msra.mxu0 0.0
        %2550 = vmatpush.msra.mxu0 0.0
        %2551 = vmatpush.msra.mxu0 0.0
        %2552 = vmatpush.msra.mxu0 0.0
        %2553 = vmatpush.msra.mxu0 0.0
        %2554 = vmatpush.msra.mxu0 0.0
        %2555 = vmatpush.msra.mxu0 %v2541
        %2556 = vmatpush.msra.mxu0 %v2539
        %2557 = vmatpush.msra.mxu0 %v2537
        %2558 = vmatpush.msra.mxu0 %v2535
        %2559 = vmatmul.f32.gmra.mxu0 %v477
        %v2560 = vpop.f32.mrf.mxu0
        %v2561 = vadd.f32 %v473, %v2560
        %2562 = vdwg.mxu0
        %2563 = vmatpush.msra.mxu0 0.0
        %2564 = vmatpush.msra.mxu0 0.0
        %2565 = vmatpush.msra.mxu0 0.0
        %2566 = vmatpush.msra.mxu0 0.0
        %2567 = vmatpush.msra.mxu0 0.0
        %2568 = vmatpush.msra.mxu0 0.0
        %2569 = vmatpush.msra.mxu0 0.0
        %2570 = vmatpush.msra.mxu0 0.0
        %2571 = vmatpush.msra.mxu0 0.0
        %2572 = vmatpush.msra.mxu0 0.0
        %2573 = vmatpush.msra.mxu0 0.0
        %2574 = vmatpush.msra.mxu0 0.0
        %2575 = vmatpush.msra.mxu0 %v2542
        %2576 = vmatpush.msra.mxu0 %v2540
        %2577 = vmatpush.msra.mxu0 %v2538
        %2578 = vmatpush.msra.mxu0 %v2536
        %2579 = vmatmul.f32.gmra.mxu0 %v477
        %v2580 = vpop.f32.mrf.mxu0
        %v2581 = vadd.f32 %v473, %v2580
        %2582 = vdwg.mxu0
        %v2583 = vmax.f32 %v2561, 0.0
        %v2584 = vmax.f32 %v2581, 0.0
        %v2585 = vsub.f32 0.0, %v2583
        %v2586 = vsub.f32 0.0, %v2584
        %v2587 = vmul.f32 %v2585, 0.09677434
        %v2588 = vmul.f32 %v2586, 0.09677434
        %v2589 = vmul.f32 %v2587, 1.442695
        %v2590 = vpow.pop %v2589
        %v2591 = vmul.f32 %v2588, 1.442695
        %v2592 = vpow.pop %v2591
        %v2593 = vsub.f32 1.0, %v2590
        %v2594 = vsub.f32 1.0, %v2592
        %v2595 = vmul.f32 %v2593, %v2465
        %v2596 = vmul.f32 %v2594, %v2466
        %v2597 = vperm.slane %v2595, 0
        %v2598 = vperm.slane %v2596, 0
        %v2599 = vmul.f32 %v2597, %v2561
        %v2600 = vmul.f32 %v2598, %v2581
        %v2601 = vadd.f32 %v2453, %v2599
        %v2602 = vadd.f32 %v2454, %v2600
        %v2603 = vmul.f32 %v2595, 2.3548386
        %v2604 = vmul.f32 %v2596, 2.3548386
        %v2605 = vadd.f32 %v2457, %v2603
        %v2606 = vadd.f32 %v2458, %v2604
        %v2607 = vadd.f32 %v2459, %v2595
        %v2608 = vadd.f32 %v2460, %v2596
        %v2609 = vsub.f32 1.0, %v2593
        %v2610 = vsub.f32 1.0, %v2594
        %v2611 = vadd.f32 %v2609, 1e-10
        %v2612 = vadd.f32 %v2610, 1e-10
        %v2613 = vmul.f32 %v2465, %v2611
        %v2614 = vmul.f32 %v2466, %v2612
        %v2615 = vmul.f32 %v350, 2.451613
        %v2616 = vadd.f32 %v349, %v2615
        %2618 = vst [vmem:[#allocation1] ss:$2 sm:$0xff] %v2616
        %v2619 = vld.sshfl [vmem:[#allocation1] sm:$0xff pattern:$0x75316420]
        %v2620 = vld.sshfl [vmem:[#allocation1 + $0x8] sm:$0xff pattern:$0x75316420]
        %v2621 = vsel %vm399, %v2619, 0
        %v2623 = vsel %vm399, %v2620, 0
        %2625 = vmatpush.msra.mxu0 0.0
        %2626 = vmatpush.msra.mxu0 0.0
        %2627 = vmatpush.msra.mxu0 0.0
        %2628 = vmatpush.msra.mxu0 0.0
        %2629 = vmatpush.msra.mxu0 0.0
        %2630 = vmatpush.msra.mxu0 0.0
        %2631 = vmatpush.msra.mxu0 0.0
        %2632 = vmatpush.msra.mxu0 0.0
        %2633 = vmatpush.msra.mxu0 0.0
        %2634 = vmatpush.msra.mxu0 0.0
        %2635 = vmatpush.msra.mxu0 0.0
        %2636 = vmatpush.msra.mxu0 0.0
        %2637 = vmatpush.msra.mxu0 0.0
        %2638 = vmatpush.msra.mxu0 0.0
        %2639 = vmatpush.msra.mxu0 0.0
        %2640 = vmatpush.msra.mxu0 %v2621
        %2641 = vmatmul.f32.gmra.mxu0 %v388
        %v2642 = vpop.f32.mrf.mxu0
        %v2643 = vadd.f32 %v365, %v2642
        %2644 = vmatmul.f32.gmra.mxu0 %v391
        %v2645 = vpop.f32.mrf.mxu0
        %v2646 = vadd.f32 %v370, %v2645
        %2647 = vmatmul.f32.gmra.mxu0 %v394
        %v2648 = vpop.f32.mrf.mxu0
        %v2649 = vadd.f32 %v375, %v2648
        %2650 = vmatmul.f32.gmra.mxu0 %v397
        %v2651 = vpop.f32.mrf.mxu0
        %v2652 = vadd.f32 %v380, %v2651
        %2653 = vdwg.mxu0
        %2654 = vmatpush.msra.mxu0 0.0
        %2655 = vmatpush.msra.mxu0 0.0
        %2656 = vmatpush.msra.mxu0 0.0
        %2657 = vmatpush.msra.mxu0 0.0
        %2658 = vmatpush.msra.mxu0 0.0
        %2659 = vmatpush.msra.mxu0 0.0
        %2660 = vmatpush.msra.mxu0 0.0
        %2661 = vmatpush.msra.mxu0 0.0
        %2662 = vmatpush.msra.mxu0 0.0
        %2663 = vmatpush.msra.mxu0 0.0
        %2664 = vmatpush.msra.mxu0 0.0
        %2665 = vmatpush.msra.mxu0 0.0
        %2666 = vmatpush.msra.mxu0 0.0
        %2667 = vmatpush.msra.mxu0 0.0
        %2668 = vmatpush.msra.mxu0 0.0
        %2669 = vmatpush.msra.mxu0 %v2623
        %2670 = vmatmul.f32.gmra.mxu0 %v388
        %v2671 = vpop.f32.mrf.mxu0
        %v2672 = vadd.f32 %v365, %v2671
        %2673 = vmatmul.f32.gmra.mxu0 %v391
        %v2674 = vpop.f32.mrf.mxu0
        %v2675 = vadd.f32 %v370, %v2674
        %2676 = vmatmul.f32.gmra.mxu0 %v394
        %v2677 = vpop.f32.mrf.mxu0
        %v2678 = vadd.f32 %v375, %v2677
        %2679 = vmatmul.f32.gmra.mxu0 %v397
        %v2680 = vpop.f32.mrf.mxu0
        %v2681 = vadd.f32 %v380, %v2680
        %2682 = vdwg.mxu0
        %v2683 = vmax.f32 %v2643, 0.0
        %v2684 = vmax.f32 %v2672, 0.0
        %v2685 = vmax.f32 %v2646, 0.0
        %v2686 = vmax.f32 %v2675, 0.0
        %v2687 = vmax.f32 %v2649, 0.0
        %v2688 = vmax.f32 %v2678, 0.0
        %v2689 = vmax.f32 %v2652, 0.0
        %v2690 = vmax.f32 %v2681, 0.0
        %2691 = vmatpush.msra.mxu0 0.0
        %2692 = vmatpush.msra.mxu0 0.0
        %2693 = vmatpush.msra.mxu0 0.0
        %2694 = vmatpush.msra.mxu0 0.0
        %2695 = vmatpush.msra.mxu0 0.0
        %2696 = vmatpush.msra.mxu0 0.0
        %2697 = vmatpush.msra.mxu0 0.0
        %2698 = vmatpush.msra.mxu0 0.0
        %2699 = vmatpush.msra.mxu0 0.0
        %2700 = vmatpush.msra.mxu0 0.0
        %2701 = vmatpush.msra.mxu0 0.0
        %2702 = vmatpush.msra.mxu0 0.0
        %2703 = vmatpush.msra.mxu0 %v2689
        %2704 = vmatpush.msra.mxu0 %v2687
        %2705 = vmatpush.msra.mxu0 %v2685
        %2706 = vmatpush.msra.mxu0 %v2683
        %2707 = vmatmul.f32.gmra.mxu0 %v477
        %v2708 = vpop.f32.mrf.mxu0
        %v2709 = vadd.f32 %v473, %v2708
        %2710 = vdwg.mxu0
        %2711 = vmatpush.msra.mxu0 0.0
        %2712 = vmatpush.msra.mxu0 0.0
        %2713 = vmatpush.msra.mxu0 0.0
        %2714 = vmatpush.msra.mxu0 0.0
        %2715 = vmatpush.msra.mxu0 0.0
        %2716 = vmatpush.msra.mxu0 0.0
        %2717 = vmatpush.msra.mxu0 0.0
        %2718 = vmatpush.msra.mxu0 0.0
        %2719 = vmatpush.msra.mxu0 0.0
        %2720 = vmatpush.msra.mxu0 0.0
        %2721 = vmatpush.msra.mxu0 0.0
        %2722 = vmatpush.msra.mxu0 0.0
        %2723 = vmatpush.msra.mxu0 %v2690
        %2724 = vmatpush.msra.mxu0 %v2688
        %2725 = vmatpush.msra.mxu0 %v2686
        %2726 = vmatpush.msra.mxu0 %v2684
        %2727 = vmatmul.f32.gmra.mxu0 %v477
        %v2728 = vpop.f32.mrf.mxu0
        %v2729 = vadd.f32 %v473, %v2728
        %2730 = vdwg.mxu0
        %v2731 = vmax.f32 %v2709, 0.0
        %v2732 = vmax.f32 %v2729, 0.0
        %v2733 = vsub.f32 0.0, %v2731
        %v2734 = vsub.f32 0.0, %v2732
        %v2735 = vmul.f32 %v2733, 0.0967741
        %v2736 = vmul.f32 %v2734, 0.0967741
        %v2737 = vmul.f32 %v2735, 1.442695
        %v2738 = vpow.pop %v2737
        %v2739 = vmul.f32 %v2736, 1.442695
        %v2740 = vpow.pop %v2739
        %v2741 = vsub.f32 1.0, %v2738
        %v2742 = vsub.f32 1.0, %v2740
        %v2743 = vmul.f32 %v2741, %v2613
        %v2744 = vmul.f32 %v2742, %v2614
        %v2745 = vperm.slane %v2743, 0
        %v2746 = vperm.slane %v2744, 0
        %v2747 = vmul.f32 %v2745, %v2709
        %v2748 = vmul.f32 %v2746, %v2729
        %v2749 = vadd.f32 %v2601, %v2747
        %v2750 = vadd.f32 %v2602, %v2748
        %v2751 = vmul.f32 %v2743, 2.451613
        %v2752 = vmul.f32 %v2744, 2.451613
        %v2753 = vadd.f32 %v2605, %v2751
        %v2754 = vadd.f32 %v2606, %v2752
        %v2755 = vadd.f32 %v2607, %v2743
        %v2756 = vadd.f32 %v2608, %v2744
        %v2757 = vsub.f32 1.0, %v2741
        %v2758 = vsub.f32 1.0, %v2742
        %v2759 = vadd.f32 %v2757, 1e-10
        %v2760 = vadd.f32 %v2758, 1e-10
        %v2761 = vmul.f32 %v2613, %v2759
        %v2762 = vmul.f32 %v2614, %v2760
        %v2763 = vmul.f32 %v350, 2.548387
        %v2764 = vadd.f32 %v349, %v2763
        %2766 = vst [vmem:[#allocation1] ss:$2 sm:$0xff] %v2764
        %v2767 = vld.sshfl [vmem:[#allocation1] sm:$0xff pattern:$0x75316420]
        %v2768 = vld.sshfl [vmem:[#allocation1 + $0x8] sm:$0xff pattern:$0x75316420]
        %v2769 = vsel %vm399, %v2767, 0
        %v2771 = vsel %vm399, %v2768, 0
        %2773 = vmatpush.msra.mxu0 0.0
        %2774 = vmatpush.msra.mxu0 0.0
        %2775 = vmatpush.msra.mxu0 0.0
        %2776 = vmatpush.msra.mxu0 0.0
        %2777 = vmatpush.msra.mxu0 0.0
        %2778 = vmatpush.msra.mxu0 0.0
        %2779 = vmatpush.msra.mxu0 0.0
        %2780 = vmatpush.msra.mxu0 0.0
        %2781 = vmatpush.msra.mxu0 0.0
        %2782 = vmatpush.msra.mxu0 0.0
        %2783 = vmatpush.msra.mxu0 0.0
        %2784 = vmatpush.msra.mxu0 0.0
        %2785 = vmatpush.msra.mxu0 0.0
        %2786 = vmatpush.msra.mxu0 0.0
        %2787 = vmatpush.msra.mxu0 0.0
        %2788 = vmatpush.msra.mxu0 %v2769
        %2789 = vmatmul.f32.gmra.mxu0 %v388
        %v2790 = vpop.f32.mrf.mxu0
        %v2791 = vadd.f32 %v365, %v2790
        %2792 = vmatmul.f32.gmra.mxu0 %v391
        %v2793 = vpop.f32.mrf.mxu0
        %v2794 = vadd.f32 %v370, %v2793
        %2795 = vmatmul.f32.gmra.mxu0 %v394
        %v2796 = vpop.f32.mrf.mxu0
        %v2797 = vadd.f32 %v375, %v2796
        %2798 = vmatmul.f32.gmra.mxu0 %v397
        %v2799 = vpop.f32.mrf.mxu0
        %v2800 = vadd.f32 %v380, %v2799
        %2801 = vdwg.mxu0
        %2802 = vmatpush.msra.mxu0 0.0
        %2803 = vmatpush.msra.mxu0 0.0
        %2804 = vmatpush.msra.mxu0 0.0
        %2805 = vmatpush.msra.mxu0 0.0
        %2806 = vmatpush.msra.mxu0 0.0
        %2807 = vmatpush.msra.mxu0 0.0
        %2808 = vmatpush.msra.mxu0 0.0
        %2809 = vmatpush.msra.mxu0 0.0
        %2810 = vmatpush.msra.mxu0 0.0
        %2811 = vmatpush.msra.mxu0 0.0
        %2812 = vmatpush.msra.mxu0 0.0
        %2813 = vmatpush.msra.mxu0 0.0
        %2814 = vmatpush.msra.mxu0 0.0
        %2815 = vmatpush.msra.mxu0 0.0
        %2816 = vmatpush.msra.mxu0 0.0
        %2817 = vmatpush.msra.mxu0 %v2771
        %2818 = vmatmul.f32.gmra.mxu0 %v388
        %v2819 = vpop.f32.mrf.mxu0
        %v2820 = vadd.f32 %v365, %v2819
        %2821 = vmatmul.f32.gmra.mxu0 %v391
        %v2822 = vpop.f32.mrf.mxu0
        %v2823 = vadd.f32 %v370, %v2822
        %2824 = vmatmul.f32.gmra.mxu0 %v394
        %v2825 = vpop.f32.mrf.mxu0
        %v2826 = vadd.f32 %v375, %v2825
        %2827 = vmatmul.f32.gmra.mxu0 %v397
        %v2828 = vpop.f32.mrf.mxu0
        %v2829 = vadd.f32 %v380, %v2828
        %2830 = vdwg.mxu0
        %v2831 = vmax.f32 %v2791, 0.0
        %v2832 = vmax.f32 %v2820, 0.0
        %v2833 = vmax.f32 %v2794, 0.0
        %v2834 = vmax.f32 %v2823, 0.0
        %v2835 = vmax.f32 %v2797, 0.0
        %v2836 = vmax.f32 %v2826, 0.0
        %v2837 = vmax.f32 %v2800, 0.0
        %v2838 = vmax.f32 %v2829, 0.0
        %2839 = vmatpush.msra.mxu0 0.0
        %2840 = vmatpush.msra.mxu0 0.0
        %2841 = vmatpush.msra.mxu0 0.0
        %2842 = vmatpush.msra.mxu0 0.0
        %2843 = vmatpush.msra.mxu0 0.0
        %2844 = vmatpush.msra.mxu0 0.0
        %2845 = vmatpush.msra.mxu0 0.0
        %2846 = vmatpush.msra.mxu0 0.0
        %2847 = vmatpush.msra.mxu0 0.0
        %2848 = vmatpush.msra.mxu0 0.0
        %2849 = vmatpush.msra.mxu0 0.0
        %2850 = vmatpush.msra.mxu0 0.0
        %2851 = vmatpush.msra.mxu0 %v2837
        %2852 = vmatpush.msra.mxu0 %v2835
        %2853 = vmatpush.msra.mxu0 %v2833
        %2854 = vmatpush.msra.mxu0 %v2831
        %2855 = vmatmul.f32.gmra.mxu0 %v477
        %v2856 = vpop.f32.mrf.mxu0
        %v2857 = vadd.f32 %v473, %v2856
        %2858 = vdwg.mxu0
        %2859 = vmatpush.msra.mxu0 0.0
        %2860 = vmatpush.msra.mxu0 0.0
        %2861 = vmatpush.msra.mxu0 0.0
        %2862 = vmatpush.msra.mxu0 0.0
        %2863 = vmatpush.msra.mxu0 0.0
        %2864 = vmatpush.msra.mxu0 0.0
        %2865 = vmatpush.msra.mxu0 0.0
        %2866 = vmatpush.msra.mxu0 0.0
        %2867 = vmatpush.msra.mxu0 0.0
        %2868 = vmatpush.msra.mxu0 0.0
        %2869 = vmatpush.msra.mxu0 0.0
        %2870 = vmatpush.msra.mxu0 0.0
        %2871 = vmatpush.msra.mxu0 %v2838
        %2872 = vmatpush.msra.mxu0 %v2836
        %2873 = vmatpush.msra.mxu0 %v2834
        %2874 = vmatpush.msra.mxu0 %v2832
        %2875 = vmatmul.f32.gmra.mxu0 %v477
        %v2876 = vpop.f32.mrf.mxu0
        %v2877 = vadd.f32 %v473, %v2876
        %2878 = vdwg.mxu0
        %v2879 = vmax.f32 %v2857, 0.0
        %v2880 = vmax.f32 %v2877, 0.0
        %v2881 = vsub.f32 0.0, %v2879
        %v2882 = vsub.f32 0.0, %v2880
        %v2883 = vmul.f32 %v2881, 0.09677434
        %v2884 = vmul.f32 %v2882, 0.09677434
        %v2885 = vmul.f32 %v2883, 1.442695
        %v2886 = vpow.pop %v2885
        %v2887 = vmul.f32 %v2884, 1.442695
        %v2888 = vpow.pop %v2887
        %v2889 = vsub.f32 1.0, %v2886
        %v2890 = vsub.f32 1.0, %v2888
        %v2891 = vmul.f32 %v2889, %v2761
        %v2892 = vmul.f32 %v2890, %v2762
        %v2893 = vperm.slane %v2891, 0
        %v2894 = vperm.slane %v2892, 0
        %v2895 = vmul.f32 %v2893, %v2857
        %v2896 = vmul.f32 %v2894, %v2877
        %v2897 = vadd.f32 %v2749, %v2895
        %v2898 = vadd.f32 %v2750, %v2896
        %v2899 = vmul.f32 %v2891, 2.548387
        %v2900 = vmul.f32 %v2892, 2.548387
        %v2901 = vadd.f32 %v2753, %v2899
        %v2902 = vadd.f32 %v2754, %v2900
        %v2903 = vadd.f32 %v2755, %v2891
        %v2904 = vadd.f32 %v2756, %v2892
        %v2905 = vsub.f32 1.0, %v2889
        %v2906 = vsub.f32 1.0, %v2890
        %v2907 = vadd.f32 %v2905, 1e-10
        %v2908 = vadd.f32 %v2906, 1e-10
        %v2909 = vmul.f32 %v2761, %v2907
        %v2910 = vmul.f32 %v2762, %v2908
        %v2911 = vmul.f32 %v350, 2.6451614
        %v2912 = vadd.f32 %v349, %v2911
        %2914 = vst [vmem:[#allocation1] ss:$2 sm:$0xff] %v2912
        %v2915 = vld.sshfl [vmem:[#allocation1] sm:$0xff pattern:$0x75316420]
        %v2916 = vld.sshfl [vmem:[#allocation1 + $0x8] sm:$0xff pattern:$0x75316420]
        %v2917 = vsel %vm399, %v2915, 0
        %v2919 = vsel %vm399, %v2916, 0
        %2921 = vmatpush.msra.mxu0 0.0
        %2922 = vmatpush.msra.mxu0 0.0
        %2923 = vmatpush.msra.mxu0 0.0
        %2924 = vmatpush.msra.mxu0 0.0
        %2925 = vmatpush.msra.mxu0 0.0
        %2926 = vmatpush.msra.mxu0 0.0
        %2927 = vmatpush.msra.mxu0 0.0
        %2928 = vmatpush.msra.mxu0 0.0
        %2929 = vmatpush.msra.mxu0 0.0
        %2930 = vmatpush.msra.mxu0 0.0
        %2931 = vmatpush.msra.mxu0 0.0
        %2932 = vmatpush.msra.mxu0 0.0
        %2933 = vmatpush.msra.mxu0 0.0
        %2934 = vmatpush.msra.mxu0 0.0
        %2935 = vmatpush.msra.mxu0 0.0
        %2936 = vmatpush.msra.mxu0 %v2917
        %2937 = vmatmul.f32.gmra.mxu0 %v388
        %v2938 = vpop.f32.mrf.mxu0
        %v2939 = vadd.f32 %v365, %v2938
        %2940 = vmatmul.f32.gmra.mxu0 %v391
        %v2941 = vpop.f32.mrf.mxu0
        %v2942 = vadd.f32 %v370, %v2941
        %2943 = vmatmul.f32.gmra.mxu0 %v394
        %v2944 = vpop.f32.mrf.mxu0
        %v2945 = vadd.f32 %v375, %v2944
        %2946 = vmatmul.f32.gmra.mxu0 %v397
        %v2947 = vpop.f32.mrf.mxu0
        %v2948 = vadd.f32 %v380, %v2947
        %2949 = vdwg.mxu0
        %2950 = vmatpush.msra.mxu0 0.0
        %2951 = vmatpush.msra.mxu0 0.0
        %2952 = vmatpush.msra.mxu0 0.0
        %2953 = vmatpush.msra.mxu0 0.0
        %2954 = vmatpush.msra.mxu0 0.0
        %2955 = vmatpush.msra.mxu0 0.0
        %2956 = vmatpush.msra.mxu0 0.0
        %2957 = vmatpush.msra.mxu0 0.0
        %2958 = vmatpush.msra.mxu0 0.0
        %2959 = vmatpush.msra.mxu0 0.0
        %2960 = vmatpush.msra.mxu0 0.0
        %2961 = vmatpush.msra.mxu0 0.0
        %2962 = vmatpush.msra.mxu0 0.0
        %2963 = vmatpush.msra.mxu0 0.0
        %2964 = vmatpush.msra.mxu0 0.0
        %2965 = vmatpush.msra.mxu0 %v2919
        %2966 = vmatmul.f32.gmra.mxu0 %v388
        %v2967 = vpop.f32.mrf.mxu0
        %v2968 = vadd.f32 %v365, %v2967
        %2969 = vmatmul.f32.gmra.mxu0 %v391
        %v2970 = vpop.f32.mrf.mxu0
        %v2971 = vadd.f32 %v370, %v2970
        %2972 = vmatmul.f32.gmra.mxu0 %v394
        %v2973 = vpop.f32.mrf.mxu0
        %v2974 = vadd.f32 %v375, %v2973
        %2975 = vmatmul.f32.gmra.mxu0 %v397
        %v2976 = vpop.f32.mrf.mxu0
        %v2977 = vadd.f32 %v380, %v2976
        %2978 = vdwg.mxu0
        %v2979 = vmax.f32 %v2939, 0.0
        %v2980 = vmax.f32 %v2968, 0.0
        %v2981 = vmax.f32 %v2942, 0.0
        %v2982 = vmax.f32 %v2971, 0.0
        %v2983 = vmax.f32 %v2945, 0.0
        %v2984 = vmax.f32 %v2974, 0.0
        %v2985 = vmax.f32 %v2948, 0.0
        %v2986 = vmax.f32 %v2977, 0.0
        %2987 = vmatpush.msra.mxu0 0.0
        %2988 = vmatpush.msra.mxu0 0.0
        %2989 = vmatpush.msra.mxu0 0.0
        %2990 = vmatpush.msra.mxu0 0.0
        %2991 = vmatpush.msra.mxu0 0.0
        %2992 = vmatpush.msra.mxu0 0.0
        %2993 = vmatpush.msra.mxu0 0.0
        %2994 = vmatpush.msra.mxu0 0.0
        %2995 = vmatpush.msra.mxu0 0.0
        %2996 = vmatpush.msra.mxu0 0.0
        %2997 = vmatpush.msra.mxu0 0.0
        %2998 = vmatpush.msra.mxu0 0.0
        %2999 = vmatpush.msra.mxu0 %v2985
        %3000 = vmatpush.msra.mxu0 %v2983
        %3001 = vmatpush.msra.mxu0 %v2981
        %3002 = vmatpush.msra.mxu0 %v2979
        %3003 = vmatmul.f32.gmra.mxu0 %v477
        %v3004 = vpop.f32.mrf.mxu0
        %v3005 = vadd.f32 %v473, %v3004
        %3006 = vdwg.mxu0
        %3007 = vmatpush.msra.mxu0 0.0
        %3008 = vmatpush.msra.mxu0 0.0
        %3009 = vmatpush.msra.mxu0 0.0
        %3010 = vmatpush.msra.mxu0 0.0
        %3011 = vmatpush.msra.mxu0 0.0
        %3012 = vmatpush.msra.mxu0 0.0
        %3013 = vmatpush.msra.mxu0 0.0
        %3014 = vmatpush.msra.mxu0 0.0
        %3015 = vmatpush.msra.mxu0 0.0
        %3016 = vmatpush.msra.mxu0 0.0
        %3017 = vmatpush.msra.mxu0 0.0
        %3018 = vmatpush.msra.mxu0 0.0
        %3019 = vmatpush.msra.mxu0 %v2986
        %3020 = vmatpush.msra.mxu0 %v2984
        %3021 = vmatpush.msra.mxu0 %v2982
        %3022 = vmatpush.msra.mxu0 %v2980
        %3023 = vmatmul.f32.gmra.mxu0 %v477
        %v3024 = vpop.f32.mrf.mxu0
        %v3025 = vadd.f32 %v473, %v3024
        %3026 = vdwg.mxu0
        %v3027 = vmax.f32 %v3005, 0.0
        %v3028 = vmax.f32 %v3025, 0.0
        %v3029 = vsub.f32 0.0, %v3027
        %v3030 = vsub.f32 0.0, %v3028
        %v3031 = vmul.f32 %v3029, 0.0967741
        %v3032 = vmul.f32 %v3030, 0.0967741
        %v3033 = vmul.f32 %v3031, 1.442695
        %v3034 = vpow.pop %v3033
        %v3035 = vmul.f32 %v3032, 1.442695
        %v3036 = vpow.pop %v3035
        %v3037 = vsub.f32 1.0, %v3034
        %v3038 = vsub.f32 1.0, %v3036
        %v3039 = vmul.f32 %v3037, %v2909
        %v3040 = vmul.f32 %v3038, %v2910
        %v3041 = vperm.slane %v3039, 0
        %v3042 = vperm.slane %v3040, 0
        %v3043 = vmul.f32 %v3041, %v3005
        %v3044 = vmul.f32 %v3042, %v3025
        %v3045 = vadd.f32 %v2897, %v3043
        %v3046 = vadd.f32 %v2898, %v3044
        %v3047 = vmul.f32 %v3039, 2.6451614
        %v3048 = vmul.f32 %v3040, 2.6451614
        %v3049 = vadd.f32 %v2901, %v3047
        %v3050 = vadd.f32 %v2902, %v3048
        %v3051 = vadd.f32 %v2903, %v3039
        %v3052 = vadd.f32 %v2904, %v3040
        %v3053 = vsub.f32 1.0, %v3037
        %v3054 = vsub.f32 1.0, %v3038
        %v3055 = vadd.f32 %v3053, 1e-10
        %v3056 = vadd.f32 %v3054, 1e-10
        %v3057 = vmul.f32 %v2909, %v3055
        %v3058 = vmul.f32 %v2910, %v3056
        %v3059 = vmul.f32 %v350, 2.7419355
        %v3060 = vadd.f32 %v349, %v3059
        %3062 = vst [vmem:[#allocation1] ss:$2 sm:$0xff] %v3060
        %v3063 = vld.sshfl [vmem:[#allocation1] sm:$0xff pattern:$0x75316420]
        %v3064 = vld.sshfl [vmem:[#allocation1 + $0x8] sm:$0xff pattern:$0x75316420]
        %v3065 = vsel %vm399, %v3063, 0
        %v3067 = vsel %vm399, %v3064, 0
        %3069 = vmatpush.msra.mxu0 0.0
        %3070 = vmatpush.msra.mxu0 0.0
        %3071 = vmatpush.msra.mxu0 0.0
        %3072 = vmatpush.msra.mxu0 0.0
        %3073 = vmatpush.msra.mxu0 0.0
        %3074 = vmatpush.msra.mxu0 0.0
        %3075 = vmatpush.msra.mxu0 0.0
        %3076 = vmatpush.msra.mxu0 0.0
        %3077 = vmatpush.msra.mxu0 0.0
        %3078 = vmatpush.msra.mxu0 0.0
        %3079 = vmatpush.msra.mxu0 0.0
        %3080 = vmatpush.msra.mxu0 0.0
        %3081 = vmatpush.msra.mxu0 0.0
        %3082 = vmatpush.msra.mxu0 0.0
        %3083 = vmatpush.msra.mxu0 0.0
        %3084 = vmatpush.msra.mxu0 %v3065
        %3085 = vmatmul.f32.gmra.mxu0 %v388
        %v3086 = vpop.f32.mrf.mxu0
        %v3087 = vadd.f32 %v365, %v3086
        %3088 = vmatmul.f32.gmra.mxu0 %v391
        %v3089 = vpop.f32.mrf.mxu0
        %v3090 = vadd.f32 %v370, %v3089
        %3091 = vmatmul.f32.gmra.mxu0 %v394
        %v3092 = vpop.f32.mrf.mxu0
        %v3093 = vadd.f32 %v375, %v3092
        %3094 = vmatmul.f32.gmra.mxu0 %v397
        %v3095 = vpop.f32.mrf.mxu0
        %v3096 = vadd.f32 %v380, %v3095
        %3097 = vdwg.mxu0
        %3098 = vmatpush.msra.mxu0 0.0
        %3099 = vmatpush.msra.mxu0 0.0
        %3100 = vmatpush.msra.mxu0 0.0
        %3101 = vmatpush.msra.mxu0 0.0
        %3102 = vmatpush.msra.mxu0 0.0
        %3103 = vmatpush.msra.mxu0 0.0
        %3104 = vmatpush.msra.mxu0 0.0
        %3105 = vmatpush.msra.mxu0 0.0
        %3106 = vmatpush.msra.mxu0 0.0
        %3107 = vmatpush.msra.mxu0 0.0
        %3108 = vmatpush.msra.mxu0 0.0
        %3109 = vmatpush.msra.mxu0 0.0
        %3110 = vmatpush.msra.mxu0 0.0
        %3111 = vmatpush.msra.mxu0 0.0
        %3112 = vmatpush.msra.mxu0 0.0
        %3113 = vmatpush.msra.mxu0 %v3067
        %3114 = vmatmul.f32.gmra.mxu0 %v388
        %v3115 = vpop.f32.mrf.mxu0
        %v3116 = vadd.f32 %v365, %v3115
        %3117 = vmatmul.f32.gmra.mxu0 %v391
        %v3118 = vpop.f32.mrf.mxu0
        %v3119 = vadd.f32 %v370, %v3118
        %3120 = vmatmul.f32.gmra.mxu0 %v394
        %v3121 = vpop.f32.mrf.mxu0
        %v3122 = vadd.f32 %v375, %v3121
        %3123 = vmatmul.f32.gmra.mxu0 %v397
        %v3124 = vpop.f32.mrf.mxu0
        %v3125 = vadd.f32 %v380, %v3124
        %3126 = vdwg.mxu0
        %v3127 = vmax.f32 %v3087, 0.0
        %v3128 = vmax.f32 %v3116, 0.0
        %v3129 = vmax.f32 %v3090, 0.0
        %v3130 = vmax.f32 %v3119, 0.0
        %v3131 = vmax.f32 %v3093, 0.0
        %v3132 = vmax.f32 %v3122, 0.0
        %v3133 = vmax.f32 %v3096, 0.0
        %v3134 = vmax.f32 %v3125, 0.0
        %3135 = vmatpush.msra.mxu0 0.0
        %3136 = vmatpush.msra.mxu0 0.0
        %3137 = vmatpush.msra.mxu0 0.0
        %3138 = vmatpush.msra.mxu0 0.0
        %3139 = vmatpush.msra.mxu0 0.0
        %3140 = vmatpush.msra.mxu0 0.0
        %3141 = vmatpush.msra.mxu0 0.0
        %3142 = vmatpush.msra.mxu0 0.0
        %3143 = vmatpush.msra.mxu0 0.0
        %3144 = vmatpush.msra.mxu0 0.0
        %3145 = vmatpush.msra.mxu0 0.0
        %3146 = vmatpush.msra.mxu0 0.0
        %3147 = vmatpush.msra.mxu0 %v3133
        %3148 = vmatpush.msra.mxu0 %v3131
        %3149 = vmatpush.msra.mxu0 %v3129
        %3150 = vmatpush.msra.mxu0 %v3127
        %3151 = vmatmul.f32.gmra.mxu0 %v477
        %v3152 = vpop.f32.mrf.mxu0
        %v3153 = vadd.f32 %v473, %v3152
        %3154 = vdwg.mxu0
        %3155 = vmatpush.msra.mxu0 0.0
        %3156 = vmatpush.msra.mxu0 0.0
        %3157 = vmatpush.msra.mxu0 0.0
        %3158 = vmatpush.msra.mxu0 0.0
        %3159 = vmatpush.msra.mxu0 0.0
        %3160 = vmatpush.msra.mxu0 0.0
        %3161 = vmatpush.msra.mxu0 0.0
        %3162 = vmatpush.msra.mxu0 0.0
        %3163 = vmatpush.msra.mxu0 0.0
        %3164 = vmatpush.msra.mxu0 0.0
        %3165 = vmatpush.msra.mxu0 0.0
        %3166 = vmatpush.msra.mxu0 0.0
        %3167 = vmatpush.msra.mxu0 %v3134
        %3168 = vmatpush.msra.mxu0 %v3132
        %3169 = vmatpush.msra.mxu0 %v3130
        %3170 = vmatpush.msra.mxu0 %v3128
        %3171 = vmatmul.f32.gmra.mxu0 %v477
        %v3172 = vpop.f32.mrf.mxu0
        %v3173 = vadd.f32 %v473, %v3172
        %3174 = vdwg.mxu0
        %v3175 = vmax.f32 %v3153, 0.0
        %v3176 = vmax.f32 %v3173, 0.0
        %v3177 = vsub.f32 0.0, %v3175
        %v3178 = vsub.f32 0.0, %v3176
        %v3179 = vmul.f32 %v3177, 0.0967741
        %v3180 = vmul.f32 %v3178, 0.0967741
        %v3181 = vmul.f32 %v3179, 1.442695
        %v3182 = vpow.pop %v3181
        %v3183 = vmul.f32 %v3180, 1.442695
        %v3184 = vpow.pop %v3183
        %v3185 = vsub.f32 1.0, %v3182
        %v3186 = vsub.f32 1.0, %v3184
        %v3187 = vmul.f32 %v3185, %v3057
        %v3188 = vmul.f32 %v3186, %v3058
        %v3189 = vperm.slane %v3187, 0
        %v3190 = vperm.slane %v3188, 0
        %v3191 = vmul.f32 %v3189, %v3153
        %v3192 = vmul.f32 %v3190, %v3173
        %v3193 = vadd.f32 %v3045, %v3191
        %v3194 = vadd.f32 %v3046, %v3192
        %v3195 = vmul.f32 %v3187, 2.7419355
        %v3196 = vmul.f32 %v3188, 2.7419355
        %v3197 = vadd.f32 %v3049, %v3195
        %v3198 = vadd.f32 %v3050, %v3196
        %v3199 = vadd.f32 %v3051, %v3187
        %v3200 = vadd.f32 %v3052, %v3188
        %v3201 = vsub.f32 1.0, %v3185
        %v3202 = vsub.f32 1.0, %v3186
        %v3203 = vadd.f32 %v3201, 1e-10
        %v3204 = vadd.f32 %v3202, 1e-10
        %v3205 = vmul.f32 %v3057, %v3203
        %v3206 = vmul.f32 %v3058, %v3204
        %v3207 = vmul.f32 %v350, 2.8387096
        %v3208 = vadd.f32 %v349, %v3207
        %3210 = vst [vmem:[#allocation1] ss:$2 sm:$0xff] %v3208
        %v3211 = vld.sshfl [vmem:[#allocation1] sm:$0xff pattern:$0x75316420]
        %v3212 = vld.sshfl [vmem:[#allocation1 + $0x8] sm:$0xff pattern:$0x75316420]
        %v3213 = vsel %vm399, %v3211, 0
        %v3215 = vsel %vm399, %v3212, 0
        %3217 = vmatpush.msra.mxu0 0.0
        %3218 = vmatpush.msra.mxu0 0.0
        %3219 = vmatpush.msra.mxu0 0.0
        %3220 = vmatpush.msra.mxu0 0.0
        %3221 = vmatpush.msra.mxu0 0.0
        %3222 = vmatpush.msra.mxu0 0.0
        %3223 = vmatpush.msra.mxu0 0.0
        %3224 = vmatpush.msra.mxu0 0.0
        %3225 = vmatpush.msra.mxu0 0.0
        %3226 = vmatpush.msra.mxu0 0.0
        %3227 = vmatpush.msra.mxu0 0.0
        %3228 = vmatpush.msra.mxu0 0.0
        %3229 = vmatpush.msra.mxu0 0.0
        %3230 = vmatpush.msra.mxu0 0.0
        %3231 = vmatpush.msra.mxu0 0.0
        %3232 = vmatpush.msra.mxu0 %v3213
        %3233 = vmatmul.f32.gmra.mxu0 %v388
        %v3234 = vpop.f32.mrf.mxu0
        %v3235 = vadd.f32 %v365, %v3234
        %3236 = vmatmul.f32.gmra.mxu0 %v391
        %v3237 = vpop.f32.mrf.mxu0
        %v3238 = vadd.f32 %v370, %v3237
        %3239 = vmatmul.f32.gmra.mxu0 %v394
        %v3240 = vpop.f32.mrf.mxu0
        %v3241 = vadd.f32 %v375, %v3240
        %3242 = vmatmul.f32.gmra.mxu0 %v397
        %v3243 = vpop.f32.mrf.mxu0
        %v3244 = vadd.f32 %v380, %v3243
        %3245 = vdwg.mxu0
        %3246 = vmatpush.msra.mxu0 0.0
        %3247 = vmatpush.msra.mxu0 0.0
        %3248 = vmatpush.msra.mxu0 0.0
        %3249 = vmatpush.msra.mxu0 0.0
        %3250 = vmatpush.msra.mxu0 0.0
        %3251 = vmatpush.msra.mxu0 0.0
        %3252 = vmatpush.msra.mxu0 0.0
        %3253 = vmatpush.msra.mxu0 0.0
        %3254 = vmatpush.msra.mxu0 0.0
        %3255 = vmatpush.msra.mxu0 0.0
        %3256 = vmatpush.msra.mxu0 0.0
        %3257 = vmatpush.msra.mxu0 0.0
        %3258 = vmatpush.msra.mxu0 0.0
        %3259 = vmatpush.msra.mxu0 0.0
        %3260 = vmatpush.msra.mxu0 0.0
        %3261 = vmatpush.msra.mxu0 %v3215
        %3262 = vmatmul.f32.gmra.mxu0 %v388
        %v3263 = vpop.f32.mrf.mxu0
        %v3264 = vadd.f32 %v365, %v3263
        %3265 = vmatmul.f32.gmra.mxu0 %v391
        %v3266 = vpop.f32.mrf.mxu0
        %v3267 = vadd.f32 %v370, %v3266
        %3268 = vmatmul.f32.gmra.mxu0 %v394
        %v3269 = vpop.f32.mrf.mxu0
        %v3270 = vadd.f32 %v375, %v3269
        %3271 = vmatmul.f32.gmra.mxu0 %v397
        %v3272 = vpop.f32.mrf.mxu0
        %v3273 = vadd.f32 %v380, %v3272
        %3274 = vdwg.mxu0
        %v3275 = vmax.f32 %v3235, 0.0
        %v3276 = vmax.f32 %v3264, 0.0
        %v3277 = vmax.f32 %v3238, 0.0
        %v3278 = vmax.f32 %v3267, 0.0
        %v3279 = vmax.f32 %v3241, 0.0
        %v3280 = vmax.f32 %v3270, 0.0
        %v3281 = vmax.f32 %v3244, 0.0
        %v3282 = vmax.f32 %v3273, 0.0
        %3283 = vmatpush.msra.mxu0 0.0
        %3284 = vmatpush.msra.mxu0 0.0
        %3285 = vmatpush.msra.mxu0 0.0
        %3286 = vmatpush.msra.mxu0 0.0
        %3287 = vmatpush.msra.mxu0 0.0
        %3288 = vmatpush.msra.mxu0 0.0
        %3289 = vmatpush.msra.mxu0 0.0
        %3290 = vmatpush.msra.mxu0 0.0
        %3291 = vmatpush.msra.mxu0 0.0
        %3292 = vmatpush.msra.mxu0 0.0
        %3293 = vmatpush.msra.mxu0 0.0
        %3294 = vmatpush.msra.mxu0 0.0
        %3295 = vmatpush.msra.mxu0 %v3281
        %3296 = vmatpush.msra.mxu0 %v3279
        %3297 = vmatpush.msra.mxu0 %v3277
        %3298 = vmatpush.msra.mxu0 %v3275
        %3299 = vmatmul.f32.gmra.mxu0 %v477
        %v3300 = vpop.f32.mrf.mxu0
        %v3301 = vadd.f32 %v473, %v3300
        %3302 = vdwg.mxu0
        %3303 = vmatpush.msra.mxu0 0.0
        %3304 = vmatpush.msra.mxu0 0.0
        %3305 = vmatpush.msra.mxu0 0.0
        %3306 = vmatpush.msra.mxu0 0.0
        %3307 = vmatpush.msra.mxu0 0.0
        %3308 = vmatpush.msra.mxu0 0.0
        %3309 = vmatpush.msra.mxu0 0.0
        %3310 = vmatpush.msra.mxu0 0.0
        %3311 = vmatpush.msra.mxu0 0.0
        %3312 = vmatpush.msra.mxu0 0.0
        %3313 = vmatpush.msra.mxu0 0.0
        %3314 = vmatpush.msra.mxu0 0.0
        %3315 = vmatpush.msra.mxu0 %v3282
        %3316 = vmatpush.msra.mxu0 %v3280
        %3317 = vmatpush.msra.mxu0 %v3278
        %3318 = vmatpush.msra.mxu0 %v3276
        %3319 = vmatmul.f32.gmra.mxu0 %v477
        %v3320 = vpop.f32.mrf.mxu0
        %v3321 = vadd.f32 %v473, %v3320
        %3322 = vdwg.mxu0
        %v3323 = vmax.f32 %v3301, 0.0
        %v3324 = vmax.f32 %v3321, 0.0
        %v3325 = vsub.f32 0.0, %v3323
        %v3326 = vsub.f32 0.0, %v3324
        %v3327 = vmul.f32 %v3325, 0.09677434
        %v3328 = vmul.f32 %v3326, 0.09677434
        %v3329 = vmul.f32 %v3327, 1.442695
        %v3330 = vpow.pop %v3329
        %v3331 = vmul.f32 %v3328, 1.442695
        %v3332 = vpow.pop %v3331
        %v3333 = vsub.f32 1.0, %v3330
        %v3334 = vsub.f32 1.0, %v3332
        %v3335 = vmul.f32 %v3333, %v3205
        %v3336 = vmul.f32 %v3334, %v3206
        %v3337 = vperm.slane %v3335, 0
        %v3338 = vperm.slane %v3336, 0
        %v3339 = vmul.f32 %v3337, %v3301
        %v3340 = vmul.f32 %v3338, %v3321
        %v3341 = vadd.f32 %v3193, %v3339
        %v3342 = vadd.f32 %v3194, %v3340
        %v3343 = vmul.f32 %v3335, 2.8387096
        %v3344 = vmul.f32 %v3336, 2.8387096
        %v3345 = vadd.f32 %v3197, %v3343
        %v3346 = vadd.f32 %v3198, %v3344
        %v3347 = vadd.f32 %v3199, %v3335
        %v3348 = vadd.f32 %v3200, %v3336
        %v3349 = vsub.f32 1.0, %v3333
        %v3350 = vsub.f32 1.0, %v3334
        %v3351 = vadd.f32 %v3349, 1e-10
        %v3352 = vadd.f32 %v3350, 1e-10
        %v3353 = vmul.f32 %v3205, %v3351
        %v3354 = vmul.f32 %v3206, %v3352
        %v3355 = vmul.f32 %v350, 2.935484
        %v3356 = vadd.f32 %v349, %v3355
        %3358 = vst [vmem:[#allocation1] ss:$2 sm:$0xff] %v3356
        %v3359 = vld.sshfl [vmem:[#allocation1] sm:$0xff pattern:$0x75316420]
        %v3360 = vld.sshfl [vmem:[#allocation1 + $0x8] sm:$0xff pattern:$0x75316420]
        %v3361 = vsel %vm399, %v3359, 0
        %v3363 = vsel %vm399, %v3360, 0
        %3365 = vmatpush.msra.mxu0 0.0
        %3366 = vmatpush.msra.mxu0 0.0
        %3367 = vmatpush.msra.mxu0 0.0
        %3368 = vmatpush.msra.mxu0 0.0
        %3369 = vmatpush.msra.mxu0 0.0
        %3370 = vmatpush.msra.mxu0 0.0
        %3371 = vmatpush.msra.mxu0 0.0
        %3372 = vmatpush.msra.mxu0 0.0
        %3373 = vmatpush.msra.mxu0 0.0
        %3374 = vmatpush.msra.mxu0 0.0
        %3375 = vmatpush.msra.mxu0 0.0
        %3376 = vmatpush.msra.mxu0 0.0
        %3377 = vmatpush.msra.mxu0 0.0
        %3378 = vmatpush.msra.mxu0 0.0
        %3379 = vmatpush.msra.mxu0 0.0
        %3380 = vmatpush.msra.mxu0 %v3361
        %3381 = vmatmul.f32.gmra.mxu0 %v388
        %v3382 = vpop.f32.mrf.mxu0
        %v3383 = vadd.f32 %v365, %v3382
        %3384 = vmatmul.f32.gmra.mxu0 %v391
        %v3385 = vpop.f32.mrf.mxu0
        %v3386 = vadd.f32 %v370, %v3385
        %3387 = vmatmul.f32.gmra.mxu0 %v394
        %v3388 = vpop.f32.mrf.mxu0
        %v3389 = vadd.f32 %v375, %v3388
        %3390 = vmatmul.f32.gmra.mxu0 %v397
        %v3391 = vpop.f32.mrf.mxu0
        %v3392 = vadd.f32 %v380, %v3391
        %3393 = vdwg.mxu0
        %3394 = vmatpush.msra.mxu0 0.0
        %3395 = vmatpush.msra.mxu0 0.0
        %3396 = vmatpush.msra.mxu0 0.0
        %3397 = vmatpush.msra.mxu0 0.0
        %3398 = vmatpush.msra.mxu0 0.0
        %3399 = vmatpush.msra.mxu0 0.0
        %3400 = vmatpush.msra.mxu0 0.0
        %3401 = vmatpush.msra.mxu0 0.0
        %3402 = vmatpush.msra.mxu0 0.0
        %3403 = vmatpush.msra.mxu0 0.0
        %3404 = vmatpush.msra.mxu0 0.0
        %3405 = vmatpush.msra.mxu0 0.0
        %3406 = vmatpush.msra.mxu0 0.0
        %3407 = vmatpush.msra.mxu0 0.0
        %3408 = vmatpush.msra.mxu0 0.0
        %3409 = vmatpush.msra.mxu0 %v3363
        %3410 = vmatmul.f32.gmra.mxu0 %v388
        %v3411 = vpop.f32.mrf.mxu0
        %v3412 = vadd.f32 %v365, %v3411
        %3413 = vmatmul.f32.gmra.mxu0 %v391
        %v3414 = vpop.f32.mrf.mxu0
        %v3415 = vadd.f32 %v370, %v3414
        %3416 = vmatmul.f32.gmra.mxu0 %v394
        %v3417 = vpop.f32.mrf.mxu0
        %v3418 = vadd.f32 %v375, %v3417
        %3419 = vmatmul.f32.gmra.mxu0 %v397
        %v3420 = vpop.f32.mrf.mxu0
        %v3421 = vadd.f32 %v380, %v3420
        %3422 = vdwg.mxu0
        %v3423 = vmax.f32 %v3383, 0.0
        %v3424 = vmax.f32 %v3412, 0.0
        %v3425 = vmax.f32 %v3386, 0.0
        %v3426 = vmax.f32 %v3415, 0.0
        %v3427 = vmax.f32 %v3389, 0.0
        %v3428 = vmax.f32 %v3418, 0.0
        %v3429 = vmax.f32 %v3392, 0.0
        %v3430 = vmax.f32 %v3421, 0.0
        %3431 = vmatpush.msra.mxu0 0.0
        %3432 = vmatpush.msra.mxu0 0.0
        %3433 = vmatpush.msra.mxu0 0.0
        %3434 = vmatpush.msra.mxu0 0.0
        %3435 = vmatpush.msra.mxu0 0.0
        %3436 = vmatpush.msra.mxu0 0.0
        %3437 = vmatpush.msra.mxu0 0.0
        %3438 = vmatpush.msra.mxu0 0.0
        %3439 = vmatpush.msra.mxu0 0.0
        %3440 = vmatpush.msra.mxu0 0.0
        %3441 = vmatpush.msra.mxu0 0.0
        %3442 = vmatpush.msra.mxu0 0.0
        %3443 = vmatpush.msra.mxu0 %v3429
        %3444 = vmatpush.msra.mxu0 %v3427
        %3445 = vmatpush.msra.mxu0 %v3425
        %3446 = vmatpush.msra.mxu0 %v3423
        %3447 = vmatmul.f32.gmra.mxu0 %v477
        %v3448 = vpop.f32.mrf.mxu0
        %v3449 = vadd.f32 %v473, %v3448
        %3450 = vdwg.mxu0
        %3451 = vmatpush.msra.mxu0 0.0
        %3452 = vmatpush.msra.mxu0 0.0
        %3453 = vmatpush.msra.mxu0 0.0
        %3454 = vmatpush.msra.mxu0 0.0
        %3455 = vmatpush.msra.mxu0 0.0
        %3456 = vmatpush.msra.mxu0 0.0
        %3457 = vmatpush.msra.mxu0 0.0
        %3458 = vmatpush.msra.mxu0 0.0
        %3459 = vmatpush.msra.mxu0 0.0
        %3460 = vmatpush.msra.mxu0 0.0
        %3461 = vmatpush.msra.mxu0 0.0
        %3462 = vmatpush.msra.mxu0 0.0
        %3463 = vmatpush.msra.mxu0 %v3430
        %3464 = vmatpush.msra.mxu0 %v3428
        %3465 = vmatpush.msra.mxu0 %v3426
        %3466 = vmatpush.msra.mxu0 %v3424
        %3467 = vmatmul.f32.gmra.mxu0 %v477
        %v3468 = vpop.f32.mrf.mxu0
        %v3469 = vadd.f32 %v473, %v3468
        %3470 = vdwg.mxu0
        %v3471 = vmax.f32 %v3449, 0.0
        %v3472 = vmax.f32 %v3469, 0.0
        %v3473 = vsub.f32 0.0, %v3471
        %v3474 = vsub.f32 0.0, %v3472
        %v3475 = vmul.f32 %v3473, 0.0967741
        %v3476 = vmul.f32 %v3474, 0.0967741
        %v3477 = vmul.f32 %v3475, 1.442695
        %v3478 = vpow.pop %v3477
        %v3479 = vmul.f32 %v3476, 1.442695
        %v3480 = vpow.pop %v3479
        %v3481 = vsub.f32 1.0, %v3478
        %v3482 = vsub.f32 1.0, %v3480
        %v3483 = vmul.f32 %v3481, %v3353
        %v3484 = vmul.f32 %v3482, %v3354
        %v3485 = vperm.slane %v3483, 0
        %v3486 = vperm.slane %v3484, 0
        %v3487 = vmul.f32 %v3485, %v3449
        %v3488 = vmul.f32 %v3486, %v3469
        %v3489 = vadd.f32 %v3341, %v3487
        %v3490 = vadd.f32 %v3342, %v3488
        %v3491 = vmul.f32 %v3483, 2.935484
        %v3492 = vmul.f32 %v3484, 2.935484
        %v3493 = vadd.f32 %v3345, %v3491
        %v3494 = vadd.f32 %v3346, %v3492
        %v3495 = vadd.f32 %v3347, %v3483
        %v3496 = vadd.f32 %v3348, %v3484
        %v3497 = vsub.f32 1.0, %v3481
        %v3498 = vsub.f32 1.0, %v3482
        %v3499 = vadd.f32 %v3497, 1e-10
        %v3500 = vadd.f32 %v3498, 1e-10
        %v3501 = vmul.f32 %v3353, %v3499
        %v3502 = vmul.f32 %v3354, %v3500
        %v3503 = vmul.f32 %v350, 3.032258
        %v3504 = vadd.f32 %v349, %v3503
        %3506 = vst [vmem:[#allocation1] ss:$2 sm:$0xff] %v3504
        %v3507 = vld.sshfl [vmem:[#allocation1] sm:$0xff pattern:$0x75316420]
        %v3508 = vld.sshfl [vmem:[#allocation1 + $0x8] sm:$0xff pattern:$0x75316420]
        %v3509 = vsel %vm399, %v3507, 0
        %v3511 = vsel %vm399, %v3508, 0
        %3513 = vmatpush.msra.mxu0 0.0
        %3514 = vmatpush.msra.mxu0 0.0
        %3515 = vmatpush.msra.mxu0 0.0
        %3516 = vmatpush.msra.mxu0 0.0
        %3517 = vmatpush.msra.mxu0 0.0
        %3518 = vmatpush.msra.mxu0 0.0
        %3519 = vmatpush.msra.mxu0 0.0
        %3520 = vmatpush.msra.mxu0 0.0
        %3521 = vmatpush.msra.mxu0 0.0
        %3522 = vmatpush.msra.mxu0 0.0
        %3523 = vmatpush.msra.mxu0 0.0
        %3524 = vmatpush.msra.mxu0 0.0
        %3525 = vmatpush.msra.mxu0 0.0
        %3526 = vmatpush.msra.mxu0 0.0
        %3527 = vmatpush.msra.mxu0 0.0
        %3528 = vmatpush.msra.mxu0 %v3509
        %3529 = vmatmul.f32.gmra.mxu0 %v388
        %v3530 = vpop.f32.mrf.mxu0
        %v3531 = vadd.f32 %v365, %v3530
        %3532 = vmatmul.f32.gmra.mxu0 %v391
        %v3533 = vpop.f32.mrf.mxu0
        %v3534 = vadd.f32 %v370, %v3533
        %3535 = vmatmul.f32.gmra.mxu0 %v394
        %v3536 = vpop.f32.mrf.mxu0
        %v3537 = vadd.f32 %v375, %v3536
        %3538 = vmatmul.f32.gmra.mxu0 %v397
        %v3539 = vpop.f32.mrf.mxu0
        %v3540 = vadd.f32 %v380, %v3539
        %3541 = vdwg.mxu0
        %3542 = vmatpush.msra.mxu0 0.0
        %3543 = vmatpush.msra.mxu0 0.0
        %3544 = vmatpush.msra.mxu0 0.0
        %3545 = vmatpush.msra.mxu0 0.0
        %3546 = vmatpush.msra.mxu0 0.0
        %3547 = vmatpush.msra.mxu0 0.0
        %3548 = vmatpush.msra.mxu0 0.0
        %3549 = vmatpush.msra.mxu0 0.0
        %3550 = vmatpush.msra.mxu0 0.0
        %3551 = vmatpush.msra.mxu0 0.0
        %3552 = vmatpush.msra.mxu0 0.0
        %3553 = vmatpush.msra.mxu0 0.0
        %3554 = vmatpush.msra.mxu0 0.0
        %3555 = vmatpush.msra.mxu0 0.0
        %3556 = vmatpush.msra.mxu0 0.0
        %3557 = vmatpush.msra.mxu0 %v3511
        %3558 = vmatmul.f32.gmra.mxu0 %v388
        %v3559 = vpop.f32.mrf.mxu0
        %v3560 = vadd.f32 %v365, %v3559
        %3561 = vmatmul.f32.gmra.mxu0 %v391
        %v3562 = vpop.f32.mrf.mxu0
        %v3563 = vadd.f32 %v370, %v3562
        %3564 = vmatmul.f32.gmra.mxu0 %v394
        %v3565 = vpop.f32.mrf.mxu0
        %v3566 = vadd.f32 %v375, %v3565
        %3567 = vmatmul.f32.gmra.mxu0 %v397
        %v3568 = vpop.f32.mrf.mxu0
        %v3569 = vadd.f32 %v380, %v3568
        %3570 = vdwg.mxu0
        %v3571 = vmax.f32 %v3531, 0.0
        %v3572 = vmax.f32 %v3560, 0.0
        %v3573 = vmax.f32 %v3534, 0.0
        %v3574 = vmax.f32 %v3563, 0.0
        %v3575 = vmax.f32 %v3537, 0.0
        %v3576 = vmax.f32 %v3566, 0.0
        %v3577 = vmax.f32 %v3540, 0.0
        %v3578 = vmax.f32 %v3569, 0.0
        %3579 = vmatpush.msra.mxu0 0.0
        %3580 = vmatpush.msra.mxu0 0.0
        %3581 = vmatpush.msra.mxu0 0.0
        %3582 = vmatpush.msra.mxu0 0.0
        %3583 = vmatpush.msra.mxu0 0.0
        %3584 = vmatpush.msra.mxu0 0.0
        %3585 = vmatpush.msra.mxu0 0.0
        %3586 = vmatpush.msra.mxu0 0.0
        %3587 = vmatpush.msra.mxu0 0.0
        %3588 = vmatpush.msra.mxu0 0.0
        %3589 = vmatpush.msra.mxu0 0.0
        %3590 = vmatpush.msra.mxu0 0.0
        %3591 = vmatpush.msra.mxu0 %v3577
        %3592 = vmatpush.msra.mxu0 %v3575
        %3593 = vmatpush.msra.mxu0 %v3573
        %3594 = vmatpush.msra.mxu0 %v3571
        %3595 = vmatmul.f32.gmra.mxu0 %v477
        %v3596 = vpop.f32.mrf.mxu0
        %v3597 = vadd.f32 %v473, %v3596
        %3598 = vdwg.mxu0
        %3599 = vmatpush.msra.mxu0 0.0
        %3600 = vmatpush.msra.mxu0 0.0
        %3601 = vmatpush.msra.mxu0 0.0
        %3602 = vmatpush.msra.mxu0 0.0
        %3603 = vmatpush.msra.mxu0 0.0
        %3604 = vmatpush.msra.mxu0 0.0
        %3605 = vmatpush.msra.mxu0 0.0
        %3606 = vmatpush.msra.mxu0 0.0
        %3607 = vmatpush.msra.mxu0 0.0
        %3608 = vmatpush.msra.mxu0 0.0
        %3609 = vmatpush.msra.mxu0 0.0
        %3610 = vmatpush.msra.mxu0 0.0
        %3611 = vmatpush.msra.mxu0 %v3578
        %3612 = vmatpush.msra.mxu0 %v3576
        %3613 = vmatpush.msra.mxu0 %v3574
        %3614 = vmatpush.msra.mxu0 %v3572
        %3615 = vmatmul.f32.gmra.mxu0 %v477
        %v3616 = vpop.f32.mrf.mxu0
        %v3617 = vadd.f32 %v473, %v3616
        %3618 = vdwg.mxu0
        %v3619 = vmax.f32 %v3597, 0.0
        %v3620 = vmax.f32 %v3617, 0.0
        %v3621 = vsub.f32 0.0, %v3619
        %v3622 = vsub.f32 0.0, %v3620
        %v3623 = vmul.f32 %v3621, 0.09677434
        %v3624 = vmul.f32 %v3622, 0.09677434
        %v3625 = vmul.f32 %v3623, 1.442695
        %v3626 = vpow.pop %v3625
        %v3627 = vmul.f32 %v3624, 1.442695
        %v3628 = vpow.pop %v3627
        %v3629 = vsub.f32 1.0, %v3626
        %v3630 = vsub.f32 1.0, %v3628
        %v3631 = vmul.f32 %v3629, %v3501
        %v3632 = vmul.f32 %v3630, %v3502
        %v3633 = vperm.slane %v3631, 0
        %v3634 = vperm.slane %v3632, 0
        %v3635 = vmul.f32 %v3633, %v3597
        %v3636 = vmul.f32 %v3634, %v3617
        %v3637 = vadd.f32 %v3489, %v3635
        %v3638 = vadd.f32 %v3490, %v3636
        %v3639 = vmul.f32 %v3631, 3.032258
        %v3640 = vmul.f32 %v3632, 3.032258
        %v3641 = vadd.f32 %v3493, %v3639
        %v3642 = vadd.f32 %v3494, %v3640
        %v3643 = vadd.f32 %v3495, %v3631
        %v3644 = vadd.f32 %v3496, %v3632
        %v3645 = vsub.f32 1.0, %v3629
        %v3646 = vsub.f32 1.0, %v3630
        %v3647 = vadd.f32 %v3645, 1e-10
        %v3648 = vadd.f32 %v3646, 1e-10
        %v3649 = vmul.f32 %v3501, %v3647
        %v3650 = vmul.f32 %v3502, %v3648
        %v3651 = vmul.f32 %v350, 3.1290324
        %v3652 = vadd.f32 %v349, %v3651
        %3654 = vst [vmem:[#allocation1] ss:$2 sm:$0xff] %v3652
        %v3655 = vld.sshfl [vmem:[#allocation1] sm:$0xff pattern:$0x75316420]
        %v3656 = vld.sshfl [vmem:[#allocation1 + $0x8] sm:$0xff pattern:$0x75316420]
        %v3657 = vsel %vm399, %v3655, 0
        %v3659 = vsel %vm399, %v3656, 0
        %3661 = vmatpush.msra.mxu0 0.0
        %3662 = vmatpush.msra.mxu0 0.0
        %3663 = vmatpush.msra.mxu0 0.0
        %3664 = vmatpush.msra.mxu0 0.0
        %3665 = vmatpush.msra.mxu0 0.0
        %3666 = vmatpush.msra.mxu0 0.0
        %3667 = vmatpush.msra.mxu0 0.0
        %3668 = vmatpush.msra.mxu0 0.0
        %3669 = vmatpush.msra.mxu0 0.0
        %3670 = vmatpush.msra.mxu0 0.0
        %3671 = vmatpush.msra.mxu0 0.0
        %3672 = vmatpush.msra.mxu0 0.0
        %3673 = vmatpush.msra.mxu0 0.0
        %3674 = vmatpush.msra.mxu0 0.0
        %3675 = vmatpush.msra.mxu0 0.0
        %3676 = vmatpush.msra.mxu0 %v3657
        %3677 = vmatmul.f32.gmra.mxu0 %v388
        %v3678 = vpop.f32.mrf.mxu0
        %v3679 = vadd.f32 %v365, %v3678
        %3680 = vmatmul.f32.gmra.mxu0 %v391
        %v3681 = vpop.f32.mrf.mxu0
        %v3682 = vadd.f32 %v370, %v3681
        %3683 = vmatmul.f32.gmra.mxu0 %v394
        %v3684 = vpop.f32.mrf.mxu0
        %v3685 = vadd.f32 %v375, %v3684
        %3686 = vmatmul.f32.gmra.mxu0 %v397
        %v3687 = vpop.f32.mrf.mxu0
        %v3688 = vadd.f32 %v380, %v3687
        %3689 = vdwg.mxu0
        %3690 = vmatpush.msra.mxu0 0.0
        %3691 = vmatpush.msra.mxu0 0.0
        %3692 = vmatpush.msra.mxu0 0.0
        %3693 = vmatpush.msra.mxu0 0.0
        %3694 = vmatpush.msra.mxu0 0.0
        %3695 = vmatpush.msra.mxu0 0.0
        %3696 = vmatpush.msra.mxu0 0.0
        %3697 = vmatpush.msra.mxu0 0.0
        %3698 = vmatpush.msra.mxu0 0.0
        %3699 = vmatpush.msra.mxu0 0.0
        %3700 = vmatpush.msra.mxu0 0.0
        %3701 = vmatpush.msra.mxu0 0.0
        %3702 = vmatpush.msra.mxu0 0.0
        %3703 = vmatpush.msra.mxu0 0.0
        %3704 = vmatpush.msra.mxu0 0.0
        %3705 = vmatpush.msra.mxu0 %v3659
        %3706 = vmatmul.f32.gmra.mxu0 %v388
        %v3707 = vpop.f32.mrf.mxu0
        %v3708 = vadd.f32 %v365, %v3707
        %3709 = vmatmul.f32.gmra.mxu0 %v391
        %v3710 = vpop.f32.mrf.mxu0
        %v3711 = vadd.f32 %v370, %v3710
        %3712 = vmatmul.f32.gmra.mxu0 %v394
        %v3713 = vpop.f32.mrf.mxu0
        %v3714 = vadd.f32 %v375, %v3713
        %3715 = vmatmul.f32.gmra.mxu0 %v397
        %v3716 = vpop.f32.mrf.mxu0
        %v3717 = vadd.f32 %v380, %v3716
        %3718 = vdwg.mxu0
        %v3719 = vmax.f32 %v3679, 0.0
        %v3720 = vmax.f32 %v3708, 0.0
        %v3721 = vmax.f32 %v3682, 0.0
        %v3722 = vmax.f32 %v3711, 0.0
        %v3723 = vmax.f32 %v3685, 0.0
        %v3724 = vmax.f32 %v3714, 0.0
        %v3725 = vmax.f32 %v3688, 0.0
        %v3726 = vmax.f32 %v3717, 0.0
        %3727 = vmatpush.msra.mxu0 0.0
        %3728 = vmatpush.msra.mxu0 0.0
        %3729 = vmatpush.msra.mxu0 0.0
        %3730 = vmatpush.msra.mxu0 0.0
        %3731 = vmatpush.msra.mxu0 0.0
        %3732 = vmatpush.msra.mxu0 0.0
        %3733 = vmatpush.msra.mxu0 0.0
        %3734 = vmatpush.msra.mxu0 0.0
        %3735 = vmatpush.msra.mxu0 0.0
        %3736 = vmatpush.msra.mxu0 0.0
        %3737 = vmatpush.msra.mxu0 0.0
        %3738 = vmatpush.msra.mxu0 0.0
        %3739 = vmatpush.msra.mxu0 %v3725
        %3740 = vmatpush.msra.mxu0 %v3723
        %3741 = vmatpush.msra.mxu0 %v3721
        %3742 = vmatpush.msra.mxu0 %v3719
        %3743 = vmatmul.f32.gmra.mxu0 %v477
        %v3744 = vpop.f32.mrf.mxu0
        %v3745 = vadd.f32 %v473, %v3744
        %3746 = vdwg.mxu0
        %3747 = vmatpush.msra.mxu0 0.0
        %3748 = vmatpush.msra.mxu0 0.0
        %3749 = vmatpush.msra.mxu0 0.0
        %3750 = vmatpush.msra.mxu0 0.0
        %3751 = vmatpush.msra.mxu0 0.0
        %3752 = vmatpush.msra.mxu0 0.0
        %3753 = vmatpush.msra.mxu0 0.0
        %3754 = vmatpush.msra.mxu0 0.0
        %3755 = vmatpush.msra.mxu0 0.0
        %3756 = vmatpush.msra.mxu0 0.0
        %3757 = vmatpush.msra.mxu0 0.0
        %3758 = vmatpush.msra.mxu0 0.0
        %3759 = vmatpush.msra.mxu0 %v3726
        %3760 = vmatpush.msra.mxu0 %v3724
        %3761 = vmatpush.msra.mxu0 %v3722
        %3762 = vmatpush.msra.mxu0 %v3720
        %3763 = vmatmul.f32.gmra.mxu0 %v477
        %v3764 = vpop.f32.mrf.mxu0
        %v3765 = vadd.f32 %v473, %v3764
        %3766 = vdwg.mxu0
        %v3767 = vmax.f32 %v3745, 0.0
        %v3768 = vmax.f32 %v3765, 0.0
        %v3769 = vsub.f32 0.0, %v3767
        %v3770 = vsub.f32 0.0, %v3768
        %v3771 = vmul.f32 %v3769, 0.0967741
        %v3772 = vmul.f32 %v3770, 0.0967741
        %v3773 = vmul.f32 %v3771, 1.442695
        %v3774 = vpow.pop %v3773
        %v3775 = vmul.f32 %v3772, 1.442695
        %v3776 = vpow.pop %v3775
        %v3777 = vsub.f32 1.0, %v3774
        %v3778 = vsub.f32 1.0, %v3776
        %v3779 = vmul.f32 %v3777, %v3649
        %v3780 = vmul.f32 %v3778, %v3650
        %v3781 = vperm.slane %v3779, 0
        %v3782 = vperm.slane %v3780, 0
        %v3783 = vmul.f32 %v3781, %v3745
        %v3784 = vmul.f32 %v3782, %v3765
        %v3785 = vadd.f32 %v3637, %v3783
        %v3786 = vadd.f32 %v3638, %v3784
        %v3787 = vmul.f32 %v3779, 3.1290324
        %v3788 = vmul.f32 %v3780, 3.1290324
        %v3789 = vadd.f32 %v3641, %v3787
        %v3790 = vadd.f32 %v3642, %v3788
        %v3791 = vadd.f32 %v3643, %v3779
        %v3792 = vadd.f32 %v3644, %v3780
        %v3793 = vsub.f32 1.0, %v3777
        %v3794 = vsub.f32 1.0, %v3778
        %v3795 = vadd.f32 %v3793, 1e-10
        %v3796 = vadd.f32 %v3794, 1e-10
        %v3797 = vmul.f32 %v3649, %v3795
        %v3798 = vmul.f32 %v3650, %v3796
        %v3799 = vmul.f32 %v350, 3.2258065
        %v3800 = vadd.f32 %v349, %v3799
        %3802 = vst [vmem:[#allocation1] ss:$2 sm:$0xff] %v3800
        %v3803 = vld.sshfl [vmem:[#allocation1] sm:$0xff pattern:$0x75316420]
        %v3804 = vld.sshfl [vmem:[#allocation1 + $0x8] sm:$0xff pattern:$0x75316420]
        %v3805 = vsel %vm399, %v3803, 0
        %v3807 = vsel %vm399, %v3804, 0
        %3809 = vmatpush.msra.mxu0 0.0
        %3810 = vmatpush.msra.mxu0 0.0
        %3811 = vmatpush.msra.mxu0 0.0
        %3812 = vmatpush.msra.mxu0 0.0
        %3813 = vmatpush.msra.mxu0 0.0
        %3814 = vmatpush.msra.mxu0 0.0
        %3815 = vmatpush.msra.mxu0 0.0
        %3816 = vmatpush.msra.mxu0 0.0
        %3817 = vmatpush.msra.mxu0 0.0
        %3818 = vmatpush.msra.mxu0 0.0
        %3819 = vmatpush.msra.mxu0 0.0
        %3820 = vmatpush.msra.mxu0 0.0
        %3821 = vmatpush.msra.mxu0 0.0
        %3822 = vmatpush.msra.mxu0 0.0
        %3823 = vmatpush.msra.mxu0 0.0
        %3824 = vmatpush.msra.mxu0 %v3805
        %3825 = vmatmul.f32.gmra.mxu0 %v388
        %v3826 = vpop.f32.mrf.mxu0
        %v3827 = vadd.f32 %v365, %v3826
        %3828 = vmatmul.f32.gmra.mxu0 %v391
        %v3829 = vpop.f32.mrf.mxu0
        %v3830 = vadd.f32 %v370, %v3829
        %3831 = vmatmul.f32.gmra.mxu0 %v394
        %v3832 = vpop.f32.mrf.mxu0
        %v3833 = vadd.f32 %v375, %v3832
        %3834 = vmatmul.f32.gmra.mxu0 %v397
        %v3835 = vpop.f32.mrf.mxu0
        %v3836 = vadd.f32 %v380, %v3835
        %3837 = vdwg.mxu0
        %3838 = vmatpush.msra.mxu0 0.0
        %3839 = vmatpush.msra.mxu0 0.0
        %3840 = vmatpush.msra.mxu0 0.0
        %3841 = vmatpush.msra.mxu0 0.0
        %3842 = vmatpush.msra.mxu0 0.0
        %3843 = vmatpush.msra.mxu0 0.0
        %3844 = vmatpush.msra.mxu0 0.0
        %3845 = vmatpush.msra.mxu0 0.0
        %3846 = vmatpush.msra.mxu0 0.0
        %3847 = vmatpush.msra.mxu0 0.0
        %3848 = vmatpush.msra.mxu0 0.0
        %3849 = vmatpush.msra.mxu0 0.0
        %3850 = vmatpush.msra.mxu0 0.0
        %3851 = vmatpush.msra.mxu0 0.0
        %3852 = vmatpush.msra.mxu0 0.0
        %3853 = vmatpush.msra.mxu0 %v3807
        %3854 = vmatmul.f32.gmra.mxu0 %v388
        %v3855 = vpop.f32.mrf.mxu0
        %v3856 = vadd.f32 %v365, %v3855
        %3857 = vmatmul.f32.gmra.mxu0 %v391
        %v3858 = vpop.f32.mrf.mxu0
        %v3859 = vadd.f32 %v370, %v3858
        %3860 = vmatmul.f32.gmra.mxu0 %v394
        %v3861 = vpop.f32.mrf.mxu0
        %v3862 = vadd.f32 %v375, %v3861
        %3863 = vmatmul.f32.gmra.mxu0 %v397
        %v3864 = vpop.f32.mrf.mxu0
        %v3865 = vadd.f32 %v380, %v3864
        %3866 = vdwg.mxu0
        %v3867 = vmax.f32 %v3827, 0.0
        %v3868 = vmax.f32 %v3856, 0.0
        %v3869 = vmax.f32 %v3830, 0.0
        %v3870 = vmax.f32 %v3859, 0.0
        %v3871 = vmax.f32 %v3833, 0.0
        %v3872 = vmax.f32 %v3862, 0.0
        %v3873 = vmax.f32 %v3836, 0.0
        %v3874 = vmax.f32 %v3865, 0.0
        %3875 = vmatpush.msra.mxu0 0.0
        %3876 = vmatpush.msra.mxu0 0.0
        %3877 = vmatpush.msra.mxu0 0.0
        %3878 = vmatpush.msra.mxu0 0.0
        %3879 = vmatpush.msra.mxu0 0.0
        %3880 = vmatpush.msra.mxu0 0.0
        %3881 = vmatpush.msra.mxu0 0.0
        %3882 = vmatpush.msra.mxu0 0.0
        %3883 = vmatpush.msra.mxu0 0.0
        %3884 = vmatpush.msra.mxu0 0.0
        %3885 = vmatpush.msra.mxu0 0.0
        %3886 = vmatpush.msra.mxu0 0.0
        %3887 = vmatpush.msra.mxu0 %v3873
        %3888 = vmatpush.msra.mxu0 %v3871
        %3889 = vmatpush.msra.mxu0 %v3869
        %3890 = vmatpush.msra.mxu0 %v3867
        %3891 = vmatmul.f32.gmra.mxu0 %v477
        %v3892 = vpop.f32.mrf.mxu0
        %v3893 = vadd.f32 %v473, %v3892
        %3894 = vdwg.mxu0
        %3895 = vmatpush.msra.mxu0 0.0
        %3896 = vmatpush.msra.mxu0 0.0
        %3897 = vmatpush.msra.mxu0 0.0
        %3898 = vmatpush.msra.mxu0 0.0
        %3899 = vmatpush.msra.mxu0 0.0
        %3900 = vmatpush.msra.mxu0 0.0
        %3901 = vmatpush.msra.mxu0 0.0
        %3902 = vmatpush.msra.mxu0 0.0
        %3903 = vmatpush.msra.mxu0 0.0
        %3904 = vmatpush.msra.mxu0 0.0
        %3905 = vmatpush.msra.mxu0 0.0
        %3906 = vmatpush.msra.mxu0 0.0
        %3907 = vmatpush.msra.mxu0 %v3874
        %3908 = vmatpush.msra.mxu0 %v3872
        %3909 = vmatpush.msra.mxu0 %v3870
        %3910 = vmatpush.msra.mxu0 %v3868
        %3911 = vmatmul.f32.gmra.mxu0 %v477
        %v3912 = vpop.f32.mrf.mxu0
        %v3913 = vadd.f32 %v473, %v3912
        %3914 = vdwg.mxu0
        %v3915 = vmax.f32 %v3893, 0.0
        %v3916 = vmax.f32 %v3913, 0.0
        %v3917 = vsub.f32 0.0, %v3915
        %v3918 = vsub.f32 0.0, %v3916
        %v3919 = vmul.f32 %v3917, 0.0967741
        %v3920 = vmul.f32 %v3918, 0.0967741
        %v3921 = vmul.f32 %v3919, 1.442695
        %v3922 = vpow.pop %v3921
        %v3923 = vmul.f32 %v3920, 1.442695
        %v3924 = vpow.pop %v3923
        %v3925 = vsub.f32 1.0, %v3922
        %v3926 = vsub.f32 1.0, %v3924
        %v3927 = vmul.f32 %v3925, %v3797
        %v3928 = vmul.f32 %v3926, %v3798
        %v3929 = vperm.slane %v3927, 0
        %v3930 = vperm.slane %v3928, 0
        %v3931 = vmul.f32 %v3929, %v3893
        %v3932 = vmul.f32 %v3930, %v3913
        %v3933 = vadd.f32 %v3785, %v3931
        %v3934 = vadd.f32 %v3786, %v3932
        %v3935 = vmul.f32 %v3927, 3.2258065
        %v3936 = vmul.f32 %v3928, 3.2258065
        %v3937 = vadd.f32 %v3789, %v3935
        %v3938 = vadd.f32 %v3790, %v3936
        %v3939 = vadd.f32 %v3791, %v3927
        %v3940 = vadd.f32 %v3792, %v3928
        %v3941 = vsub.f32 1.0, %v3925
        %v3942 = vsub.f32 1.0, %v3926
        %v3943 = vadd.f32 %v3941, 1e-10
        %v3944 = vadd.f32 %v3942, 1e-10
        %v3945 = vmul.f32 %v3797, %v3943
        %v3946 = vmul.f32 %v3798, %v3944
        %v3947 = vmul.f32 %v350, 3.3225806
        %v3948 = vadd.f32 %v349, %v3947
        %3950 = vst [vmem:[#allocation1] ss:$2 sm:$0xff] %v3948
        %v3951 = vld.sshfl [vmem:[#allocation1] sm:$0xff pattern:$0x75316420]
        %v3952 = vld.sshfl [vmem:[#allocation1 + $0x8] sm:$0xff pattern:$0x75316420]
        %v3953 = vsel %vm399, %v3951, 0
        %v3955 = vsel %vm399, %v3952, 0
        %3957 = vmatpush.msra.mxu0 0.0
        %3958 = vmatpush.msra.mxu0 0.0
        %3959 = vmatpush.msra.mxu0 0.0
        %3960 = vmatpush.msra.mxu0 0.0
        %3961 = vmatpush.msra.mxu0 0.0
        %3962 = vmatpush.msra.mxu0 0.0
        %3963 = vmatpush.msra.mxu0 0.0
        %3964 = vmatpush.msra.mxu0 0.0
        %3965 = vmatpush.msra.mxu0 0.0
        %3966 = vmatpush.msra.mxu0 0.0
        %3967 = vmatpush.msra.mxu0 0.0
        %3968 = vmatpush.msra.mxu0 0.0
        %3969 = vmatpush.msra.mxu0 0.0
        %3970 = vmatpush.msra.mxu0 0.0
        %3971 = vmatpush.msra.mxu0 0.0
        %3972 = vmatpush.msra.mxu0 %v3953
        %3973 = vmatmul.f32.gmra.mxu0 %v388
        %v3974 = vpop.f32.mrf.mxu0
        %v3975 = vadd.f32 %v365, %v3974
        %3976 = vmatmul.f32.gmra.mxu0 %v391
        %v3977 = vpop.f32.mrf.mxu0
        %v3978 = vadd.f32 %v370, %v3977
        %3979 = vmatmul.f32.gmra.mxu0 %v394
        %v3980 = vpop.f32.mrf.mxu0
        %v3981 = vadd.f32 %v375, %v3980
        %3982 = vmatmul.f32.gmra.mxu0 %v397
        %v3983 = vpop.f32.mrf.mxu0
        %v3984 = vadd.f32 %v380, %v3983
        %3985 = vdwg.mxu0
        %3986 = vmatpush.msra.mxu0 0.0
        %3987 = vmatpush.msra.mxu0 0.0
        %3988 = vmatpush.msra.mxu0 0.0
        %3989 = vmatpush.msra.mxu0 0.0
        %3990 = vmatpush.msra.mxu0 0.0
        %3991 = vmatpush.msra.mxu0 0.0
        %3992 = vmatpush.msra.mxu0 0.0
        %3993 = vmatpush.msra.mxu0 0.0
        %3994 = vmatpush.msra.mxu0 0.0
        %3995 = vmatpush.msra.mxu0 0.0
        %3996 = vmatpush.msra.mxu0 0.0
        %3997 = vmatpush.msra.mxu0 0.0
        %3998 = vmatpush.msra.mxu0 0.0
        %3999 = vmatpush.msra.mxu0 0.0
        %4000 = vmatpush.msra.mxu0 0.0
        %4001 = vmatpush.msra.mxu0 %v3955
        %4002 = vmatmul.f32.gmra.mxu0 %v388
        %v4003 = vpop.f32.mrf.mxu0
        %v4004 = vadd.f32 %v365, %v4003
        %4005 = vmatmul.f32.gmra.mxu0 %v391
        %v4006 = vpop.f32.mrf.mxu0
        %v4007 = vadd.f32 %v370, %v4006
        %4008 = vmatmul.f32.gmra.mxu0 %v394
        %v4009 = vpop.f32.mrf.mxu0
        %v4010 = vadd.f32 %v375, %v4009
        %4011 = vmatmul.f32.gmra.mxu0 %v397
        %v4012 = vpop.f32.mrf.mxu0
        %v4013 = vadd.f32 %v380, %v4012
        %4014 = vdwg.mxu0
        %v4015 = vmax.f32 %v3975, 0.0
        %v4016 = vmax.f32 %v4004, 0.0
        %v4017 = vmax.f32 %v3978, 0.0
        %v4018 = vmax.f32 %v4007, 0.0
        %v4019 = vmax.f32 %v3981, 0.0
        %v4020 = vmax.f32 %v4010, 0.0
        %v4021 = vmax.f32 %v3984, 0.0
        %v4022 = vmax.f32 %v4013, 0.0
        %4023 = vmatpush.msra.mxu0 0.0
        %4024 = vmatpush.msra.mxu0 0.0
        %4025 = vmatpush.msra.mxu0 0.0
        %4026 = vmatpush.msra.mxu0 0.0
        %4027 = vmatpush.msra.mxu0 0.0
        %4028 = vmatpush.msra.mxu0 0.0
        %4029 = vmatpush.msra.mxu0 0.0
        %4030 = vmatpush.msra.mxu0 0.0
        %4031 = vmatpush.msra.mxu0 0.0
        %4032 = vmatpush.msra.mxu0 0.0
        %4033 = vmatpush.msra.mxu0 0.0
        %4034 = vmatpush.msra.mxu0 0.0
        %4035 = vmatpush.msra.mxu0 %v4021
        %4036 = vmatpush.msra.mxu0 %v4019
        %4037 = vmatpush.msra.mxu0 %v4017
        %4038 = vmatpush.msra.mxu0 %v4015
        %4039 = vmatmul.f32.gmra.mxu0 %v477
        %v4040 = vpop.f32.mrf.mxu0
        %v4041 = vadd.f32 %v473, %v4040
        %4042 = vdwg.mxu0
        %4043 = vmatpush.msra.mxu0 0.0
        %4044 = vmatpush.msra.mxu0 0.0
        %4045 = vmatpush.msra.mxu0 0.0
        %4046 = vmatpush.msra.mxu0 0.0
        %4047 = vmatpush.msra.mxu0 0.0
        %4048 = vmatpush.msra.mxu0 0.0
        %4049 = vmatpush.msra.mxu0 0.0
        %4050 = vmatpush.msra.mxu0 0.0
        %4051 = vmatpush.msra.mxu0 0.0
        %4052 = vmatpush.msra.mxu0 0.0
        %4053 = vmatpush.msra.mxu0 0.0
        %4054 = vmatpush.msra.mxu0 0.0
        %4055 = vmatpush.msra.mxu0 %v4022
        %4056 = vmatpush.msra.mxu0 %v4020
        %4057 = vmatpush.msra.mxu0 %v4018
        %4058 = vmatpush.msra.mxu0 %v4016
        %4059 = vmatmul.f32.gmra.mxu0 %v477
        %v4060 = vpop.f32.mrf.mxu0
        %v4061 = vadd.f32 %v473, %v4060
        %4062 = vdwg.mxu0
        %v4063 = vmax.f32 %v4041, 0.0
        %v4064 = vmax.f32 %v4061, 0.0
        %v4065 = vsub.f32 0.0, %v4063
        %v4066 = vsub.f32 0.0, %v4064
        %v4067 = vmul.f32 %v4065, 0.09677434
        %v4068 = vmul.f32 %v4066, 0.09677434
        %v4069 = vmul.f32 %v4067, 1.442695
        %v4070 = vpow.pop %v4069
        %v4071 = vmul.f32 %v4068, 1.442695
        %v4072 = vpow.pop %v4071
        %v4073 = vsub.f32 1.0, %v4070
        %v4074 = vsub.f32 1.0, %v4072
        %v4075 = vmul.f32 %v4073, %v3945
        %v4076 = vmul.f32 %v4074, %v3946
        %v4077 = vperm.slane %v4075, 0
        %v4078 = vperm.slane %v4076, 0
        %v4079 = vmul.f32 %v4077, %v4041
        %v4080 = vmul.f32 %v4078, %v4061
        %v4081 = vadd.f32 %v3933, %v4079
        %v4082 = vadd.f32 %v3934, %v4080
        %v4083 = vmul.f32 %v4075, 3.3225806
        %v4084 = vmul.f32 %v4076, 3.3225806
        %v4085 = vadd.f32 %v3937, %v4083
        %v4086 = vadd.f32 %v3938, %v4084
        %v4087 = vadd.f32 %v3939, %v4075
        %v4088 = vadd.f32 %v3940, %v4076
        %v4089 = vsub.f32 1.0, %v4073
        %v4090 = vsub.f32 1.0, %v4074
        %v4091 = vadd.f32 %v4089, 1e-10
        %v4092 = vadd.f32 %v4090, 1e-10
        %v4093 = vmul.f32 %v3945, %v4091
        %v4094 = vmul.f32 %v3946, %v4092
        %v4095 = vmul.f32 %v350, 3.419355
        %v4096 = vadd.f32 %v349, %v4095
        %4098 = vst [vmem:[#allocation1] ss:$2 sm:$0xff] %v4096
        %v4099 = vld.sshfl [vmem:[#allocation1] sm:$0xff pattern:$0x75316420]
        %v4100 = vld.sshfl [vmem:[#allocation1 + $0x8] sm:$0xff pattern:$0x75316420]
        %v4101 = vsel %vm399, %v4099, 0
        %v4103 = vsel %vm399, %v4100, 0
        %4105 = vmatpush.msra.mxu0 0.0
        %4106 = vmatpush.msra.mxu0 0.0
        %4107 = vmatpush.msra.mxu0 0.0
        %4108 = vmatpush.msra.mxu0 0.0
        %4109 = vmatpush.msra.mxu0 0.0
        %4110 = vmatpush.msra.mxu0 0.0
        %4111 = vmatpush.msra.mxu0 0.0
        %4112 = vmatpush.msra.mxu0 0.0
        %4113 = vmatpush.msra.mxu0 0.0
        %4114 = vmatpush.msra.mxu0 0.0
        %4115 = vmatpush.msra.mxu0 0.0
        %4116 = vmatpush.msra.mxu0 0.0
        %4117 = vmatpush.msra.mxu0 0.0
        %4118 = vmatpush.msra.mxu0 0.0
        %4119 = vmatpush.msra.mxu0 0.0
        %4120 = vmatpush.msra.mxu0 %v4101
        %4121 = vmatmul.f32.gmra.mxu0 %v388
        %v4122 = vpop.f32.mrf.mxu0
        %v4123 = vadd.f32 %v365, %v4122
        %4124 = vmatmul.f32.gmra.mxu0 %v391
        %v4125 = vpop.f32.mrf.mxu0
        %v4126 = vadd.f32 %v370, %v4125
        %4127 = vmatmul.f32.gmra.mxu0 %v394
        %v4128 = vpop.f32.mrf.mxu0
        %v4129 = vadd.f32 %v375, %v4128
        %4130 = vmatmul.f32.gmra.mxu0 %v397
        %v4131 = vpop.f32.mrf.mxu0
        %v4132 = vadd.f32 %v380, %v4131
        %4133 = vdwg.mxu0
        %4134 = vmatpush.msra.mxu0 0.0
        %4135 = vmatpush.msra.mxu0 0.0
        %4136 = vmatpush.msra.mxu0 0.0
        %4137 = vmatpush.msra.mxu0 0.0
        %4138 = vmatpush.msra.mxu0 0.0
        %4139 = vmatpush.msra.mxu0 0.0
        %4140 = vmatpush.msra.mxu0 0.0
        %4141 = vmatpush.msra.mxu0 0.0
        %4142 = vmatpush.msra.mxu0 0.0
        %4143 = vmatpush.msra.mxu0 0.0
        %4144 = vmatpush.msra.mxu0 0.0
        %4145 = vmatpush.msra.mxu0 0.0
        %4146 = vmatpush.msra.mxu0 0.0
        %4147 = vmatpush.msra.mxu0 0.0
        %4148 = vmatpush.msra.mxu0 0.0
        %4149 = vmatpush.msra.mxu0 %v4103
        %4150 = vmatmul.f32.gmra.mxu0 %v388
        %v4151 = vpop.f32.mrf.mxu0
        %v4152 = vadd.f32 %v365, %v4151
        %4153 = vmatmul.f32.gmra.mxu0 %v391
        %v4154 = vpop.f32.mrf.mxu0
        %v4155 = vadd.f32 %v370, %v4154
        %4156 = vmatmul.f32.gmra.mxu0 %v394
        %v4157 = vpop.f32.mrf.mxu0
        %v4158 = vadd.f32 %v375, %v4157
        %4159 = vmatmul.f32.gmra.mxu0 %v397
        %v4160 = vpop.f32.mrf.mxu0
        %v4161 = vadd.f32 %v380, %v4160
        %4162 = vdwg.mxu0
        %v4163 = vmax.f32 %v4123, 0.0
        %v4164 = vmax.f32 %v4152, 0.0
        %v4165 = vmax.f32 %v4126, 0.0
        %v4166 = vmax.f32 %v4155, 0.0
        %v4167 = vmax.f32 %v4129, 0.0
        %v4168 = vmax.f32 %v4158, 0.0
        %v4169 = vmax.f32 %v4132, 0.0
        %v4170 = vmax.f32 %v4161, 0.0
        %4171 = vmatpush.msra.mxu0 0.0
        %4172 = vmatpush.msra.mxu0 0.0
        %4173 = vmatpush.msra.mxu0 0.0
        %4174 = vmatpush.msra.mxu0 0.0
        %4175 = vmatpush.msra.mxu0 0.0
        %4176 = vmatpush.msra.mxu0 0.0
        %4177 = vmatpush.msra.mxu0 0.0
        %4178 = vmatpush.msra.mxu0 0.0
        %4179 = vmatpush.msra.mxu0 0.0
        %4180 = vmatpush.msra.mxu0 0.0
        %4181 = vmatpush.msra.mxu0 0.0
        %4182 = vmatpush.msra.mxu0 0.0
        %4183 = vmatpush.msra.mxu0 %v4169
        %4184 = vmatpush.msra.mxu0 %v4167
        %4185 = vmatpush.msra.mxu0 %v4165
        %4186 = vmatpush.msra.mxu0 %v4163
        %4187 = vmatmul.f32.gmra.mxu0 %v477
        %v4188 = vpop.f32.mrf.mxu0
        %v4189 = vadd.f32 %v473, %v4188
        %4190 = vdwg.mxu0
        %4191 = vmatpush.msra.mxu0 0.0
        %4192 = vmatpush.msra.mxu0 0.0
        %4193 = vmatpush.msra.mxu0 0.0
        %4194 = vmatpush.msra.mxu0 0.0
        %4195 = vmatpush.msra.mxu0 0.0
        %4196 = vmatpush.msra.mxu0 0.0
        %4197 = vmatpush.msra.mxu0 0.0
        %4198 = vmatpush.msra.mxu0 0.0
        %4199 = vmatpush.msra.mxu0 0.0
        %4200 = vmatpush.msra.mxu0 0.0
        %4201 = vmatpush.msra.mxu0 0.0
        %4202 = vmatpush.msra.mxu0 0.0
        %4203 = vmatpush.msra.mxu0 %v4170
        %4204 = vmatpush.msra.mxu0 %v4168
        %4205 = vmatpush.msra.mxu0 %v4166
        %4206 = vmatpush.msra.mxu0 %v4164
        %4207 = vmatmul.f32.gmra.mxu0 %v477
        %v4208 = vpop.f32.mrf.mxu0
        %v4209 = vadd.f32 %v473, %v4208
        %4210 = vdwg.mxu0
        %v4211 = vmax.f32 %v4189, 0.0
        %v4212 = vmax.f32 %v4209, 0.0
        %v4213 = vsub.f32 0.0, %v4211
        %v4214 = vsub.f32 0.0, %v4212
        %v4215 = vmul.f32 %v4213, 0.0967741
        %v4216 = vmul.f32 %v4214, 0.0967741
        %v4217 = vmul.f32 %v4215, 1.442695
        %v4218 = vpow.pop %v4217
        %v4219 = vmul.f32 %v4216, 1.442695
        %v4220 = vpow.pop %v4219
        %v4221 = vsub.f32 1.0, %v4218
        %v4222 = vsub.f32 1.0, %v4220
        %v4223 = vmul.f32 %v4221, %v4093
        %v4224 = vmul.f32 %v4222, %v4094
        %v4225 = vperm.slane %v4223, 0
        %v4226 = vperm.slane %v4224, 0
        %v4227 = vmul.f32 %v4225, %v4189
        %v4228 = vmul.f32 %v4226, %v4209
        %v4229 = vadd.f32 %v4081, %v4227
        %v4230 = vadd.f32 %v4082, %v4228
        %v4231 = vmul.f32 %v4223, 3.419355
        %v4232 = vmul.f32 %v4224, 3.419355
        %v4233 = vadd.f32 %v4085, %v4231
        %v4234 = vadd.f32 %v4086, %v4232
        %v4235 = vadd.f32 %v4087, %v4223
        %v4236 = vadd.f32 %v4088, %v4224
        %v4237 = vsub.f32 1.0, %v4221
        %v4238 = vsub.f32 1.0, %v4222
        %v4239 = vadd.f32 %v4237, 1e-10
        %v4240 = vadd.f32 %v4238, 1e-10
        %v4241 = vmul.f32 %v4093, %v4239
        %v4242 = vmul.f32 %v4094, %v4240
        %v4243 = vmul.f32 %v350, 3.516129
        %v4244 = vadd.f32 %v349, %v4243
        %4246 = vst [vmem:[#allocation1] ss:$2 sm:$0xff] %v4244
        %v4247 = vld.sshfl [vmem:[#allocation1] sm:$0xff pattern:$0x75316420]
        %v4248 = vld.sshfl [vmem:[#allocation1 + $0x8] sm:$0xff pattern:$0x75316420]
        %v4249 = vsel %vm399, %v4247, 0
        %v4251 = vsel %vm399, %v4248, 0
        %4253 = vmatpush.msra.mxu0 0.0
        %4254 = vmatpush.msra.mxu0 0.0
        %4255 = vmatpush.msra.mxu0 0.0
        %4256 = vmatpush.msra.mxu0 0.0
        %4257 = vmatpush.msra.mxu0 0.0
        %4258 = vmatpush.msra.mxu0 0.0
        %4259 = vmatpush.msra.mxu0 0.0
        %4260 = vmatpush.msra.mxu0 0.0
        %4261 = vmatpush.msra.mxu0 0.0
        %4262 = vmatpush.msra.mxu0 0.0
        %4263 = vmatpush.msra.mxu0 0.0
        %4264 = vmatpush.msra.mxu0 0.0
        %4265 = vmatpush.msra.mxu0 0.0
        %4266 = vmatpush.msra.mxu0 0.0
        %4267 = vmatpush.msra.mxu0 0.0
        %4268 = vmatpush.msra.mxu0 %v4249
        %4269 = vmatmul.f32.gmra.mxu0 %v388
        %v4270 = vpop.f32.mrf.mxu0
        %v4271 = vadd.f32 %v365, %v4270
        %4272 = vmatmul.f32.gmra.mxu0 %v391
        %v4273 = vpop.f32.mrf.mxu0
        %v4274 = vadd.f32 %v370, %v4273
        %4275 = vmatmul.f32.gmra.mxu0 %v394
        %v4276 = vpop.f32.mrf.mxu0
        %v4277 = vadd.f32 %v375, %v4276
        %4278 = vmatmul.f32.gmra.mxu0 %v397
        %v4279 = vpop.f32.mrf.mxu0
        %v4280 = vadd.f32 %v380, %v4279
        %4281 = vdwg.mxu0
        %4282 = vmatpush.msra.mxu0 0.0
        %4283 = vmatpush.msra.mxu0 0.0
        %4284 = vmatpush.msra.mxu0 0.0
        %4285 = vmatpush.msra.mxu0 0.0
        %4286 = vmatpush.msra.mxu0 0.0
        %4287 = vmatpush.msra.mxu0 0.0
        %4288 = vmatpush.msra.mxu0 0.0
        %4289 = vmatpush.msra.mxu0 0.0
        %4290 = vmatpush.msra.mxu0 0.0
        %4291 = vmatpush.msra.mxu0 0.0
        %4292 = vmatpush.msra.mxu0 0.0
        %4293 = vmatpush.msra.mxu0 0.0
        %4294 = vmatpush.msra.mxu0 0.0
        %4295 = vmatpush.msra.mxu0 0.0
        %4296 = vmatpush.msra.mxu0 0.0
        %4297 = vmatpush.msra.mxu0 %v4251
        %4298 = vmatmul.f32.gmra.mxu0 %v388
        %v4299 = vpop.f32.mrf.mxu0
        %v4300 = vadd.f32 %v365, %v4299
        %4301 = vmatmul.f32.gmra.mxu0 %v391
        %v4302 = vpop.f32.mrf.mxu0
        %v4303 = vadd.f32 %v370, %v4302
        %4304 = vmatmul.f32.gmra.mxu0 %v394
        %v4305 = vpop.f32.mrf.mxu0
        %v4306 = vadd.f32 %v375, %v4305
        %4307 = vmatmul.f32.gmra.mxu0 %v397
        %v4308 = vpop.f32.mrf.mxu0
        %v4309 = vadd.f32 %v380, %v4308
        %4310 = vdwg.mxu0
        %v4311 = vmax.f32 %v4271, 0.0
        %v4312 = vmax.f32 %v4300, 0.0
        %v4313 = vmax.f32 %v4274, 0.0
        %v4314 = vmax.f32 %v4303, 0.0
        %v4315 = vmax.f32 %v4277, 0.0
        %v4316 = vmax.f32 %v4306, 0.0
        %v4317 = vmax.f32 %v4280, 0.0
        %v4318 = vmax.f32 %v4309, 0.0
        %4319 = vmatpush.msra.mxu0 0.0
        %4320 = vmatpush.msra.mxu0 0.0
        %4321 = vmatpush.msra.mxu0 0.0
        %4322 = vmatpush.msra.mxu0 0.0
        %4323 = vmatpush.msra.mxu0 0.0
        %4324 = vmatpush.msra.mxu0 0.0
        %4325 = vmatpush.msra.mxu0 0.0
        %4326 = vmatpush.msra.mxu0 0.0
        %4327 = vmatpush.msra.mxu0 0.0
        %4328 = vmatpush.msra.mxu0 0.0
        %4329 = vmatpush.msra.mxu0 0.0
        %4330 = vmatpush.msra.mxu0 0.0
        %4331 = vmatpush.msra.mxu0 %v4317
        %4332 = vmatpush.msra.mxu0 %v4315
        %4333 = vmatpush.msra.mxu0 %v4313
        %4334 = vmatpush.msra.mxu0 %v4311
        %4335 = vmatmul.f32.gmra.mxu0 %v477
        %v4336 = vpop.f32.mrf.mxu0
        %v4337 = vadd.f32 %v473, %v4336
        %4338 = vdwg.mxu0
        %4339 = vmatpush.msra.mxu0 0.0
        %4340 = vmatpush.msra.mxu0 0.0
        %4341 = vmatpush.msra.mxu0 0.0
        %4342 = vmatpush.msra.mxu0 0.0
        %4343 = vmatpush.msra.mxu0 0.0
        %4344 = vmatpush.msra.mxu0 0.0
        %4345 = vmatpush.msra.mxu0 0.0
        %4346 = vmatpush.msra.mxu0 0.0
        %4347 = vmatpush.msra.mxu0 0.0
        %4348 = vmatpush.msra.mxu0 0.0
        %4349 = vmatpush.msra.mxu0 0.0
        %4350 = vmatpush.msra.mxu0 0.0
        %4351 = vmatpush.msra.mxu0 %v4318
        %4352 = vmatpush.msra.mxu0 %v4316
        %4353 = vmatpush.msra.mxu0 %v4314
        %4354 = vmatpush.msra.mxu0 %v4312
        %4355 = vmatmul.f32.gmra.mxu0 %v477
        %v4356 = vpop.f32.mrf.mxu0
        %v4357 = vadd.f32 %v473, %v4356
        %4358 = vdwg.mxu0
        %v4359 = vmax.f32 %v4337, 0.0
        %v4360 = vmax.f32 %v4357, 0.0
        %v4361 = vsub.f32 0.0, %v4359
        %v4362 = vsub.f32 0.0, %v4360
        %v4363 = vmul.f32 %v4361, 0.0967741
        %v4364 = vmul.f32 %v4362, 0.0967741
        %v4365 = vmul.f32 %v4363, 1.442695
        %v4366 = vpow.pop %v4365
        %v4367 = vmul.f32 %v4364, 1.442695
        %v4368 = vpow.pop %v4367
        %v4369 = vsub.f32 1.0, %v4366
        %v4370 = vsub.f32 1.0, %v4368
        %v4371 = vmul.f32 %v4369, %v4241
        %v4372 = vmul.f32 %v4370, %v4242
        %v4373 = vperm.slane %v4371, 0
        %v4374 = vperm.slane %v4372, 0
        %v4375 = vmul.f32 %v4373, %v4337
        %v4376 = vmul.f32 %v4374, %v4357
        %v4377 = vadd.f32 %v4229, %v4375
        %v4378 = vadd.f32 %v4230, %v4376
        %v4379 = vmul.f32 %v4371, 3.516129
        %v4380 = vmul.f32 %v4372, 3.516129
        %v4381 = vadd.f32 %v4233, %v4379
        %v4382 = vadd.f32 %v4234, %v4380
        %v4383 = vadd.f32 %v4235, %v4371
        %v4384 = vadd.f32 %v4236, %v4372
        %v4385 = vsub.f32 1.0, %v4369
        %v4386 = vsub.f32 1.0, %v4370
        %v4387 = vadd.f32 %v4385, 1e-10
        %v4388 = vadd.f32 %v4386, 1e-10
        %v4389 = vmul.f32 %v4241, %v4387
        %v4390 = vmul.f32 %v4242, %v4388
        %v4391 = vmul.f32 %v350, 3.612903
        %v4392 = vadd.f32 %v349, %v4391
        %4394 = vst [vmem:[#allocation1] ss:$2 sm:$0xff] %v4392
        %v4395 = vld.sshfl [vmem:[#allocation1] sm:$0xff pattern:$0x75316420]
        %v4396 = vld.sshfl [vmem:[#allocation1 + $0x8] sm:$0xff pattern:$0x75316420]
        %v4397 = vsel %vm399, %v4395, 0
        %v4399 = vsel %vm399, %v4396, 0
        %4401 = vmatpush.msra.mxu0 0.0
        %4402 = vmatpush.msra.mxu0 0.0
        %4403 = vmatpush.msra.mxu0 0.0
        %4404 = vmatpush.msra.mxu0 0.0
        %4405 = vmatpush.msra.mxu0 0.0
        %4406 = vmatpush.msra.mxu0 0.0
        %4407 = vmatpush.msra.mxu0 0.0
        %4408 = vmatpush.msra.mxu0 0.0
        %4409 = vmatpush.msra.mxu0 0.0
        %4410 = vmatpush.msra.mxu0 0.0
        %4411 = vmatpush.msra.mxu0 0.0
        %4412 = vmatpush.msra.mxu0 0.0
        %4413 = vmatpush.msra.mxu0 0.0
        %4414 = vmatpush.msra.mxu0 0.0
        %4415 = vmatpush.msra.mxu0 0.0
        %4416 = vmatpush.msra.mxu0 %v4397
        %4417 = vmatmul.f32.gmra.mxu0 %v388
        %v4418 = vpop.f32.mrf.mxu0
        %v4419 = vadd.f32 %v365, %v4418
        %4420 = vmatmul.f32.gmra.mxu0 %v391
        %v4421 = vpop.f32.mrf.mxu0
        %v4422 = vadd.f32 %v370, %v4421
        %4423 = vmatmul.f32.gmra.mxu0 %v394
        %v4424 = vpop.f32.mrf.mxu0
        %v4425 = vadd.f32 %v375, %v4424
        %4426 = vmatmul.f32.gmra.mxu0 %v397
        %v4427 = vpop.f32.mrf.mxu0
        %v4428 = vadd.f32 %v380, %v4427
        %4429 = vdwg.mxu0
        %4430 = vmatpush.msra.mxu0 0.0
        %4431 = vmatpush.msra.mxu0 0.0
        %4432 = vmatpush.msra.mxu0 0.0
        %4433 = vmatpush.msra.mxu0 0.0
        %4434 = vmatpush.msra.mxu0 0.0
        %4435 = vmatpush.msra.mxu0 0.0
        %4436 = vmatpush.msra.mxu0 0.0
        %4437 = vmatpush.msra.mxu0 0.0
        %4438 = vmatpush.msra.mxu0 0.0
        %4439 = vmatpush.msra.mxu0 0.0
        %4440 = vmatpush.msra.mxu0 0.0
        %4441 = vmatpush.msra.mxu0 0.0
        %4442 = vmatpush.msra.mxu0 0.0
        %4443 = vmatpush.msra.mxu0 0.0
        %4444 = vmatpush.msra.mxu0 0.0
        %4445 = vmatpush.msra.mxu0 %v4399
        %4446 = vmatmul.f32.gmra.mxu0 %v388
        %v4447 = vpop.f32.mrf.mxu0
        %v4448 = vadd.f32 %v365, %v4447
        %4449 = vmatmul.f32.gmra.mxu0 %v391
        %v4450 = vpop.f32.mrf.mxu0
        %v4451 = vadd.f32 %v370, %v4450
        %4452 = vmatmul.f32.gmra.mxu0 %v394
        %v4453 = vpop.f32.mrf.mxu0
        %v4454 = vadd.f32 %v375, %v4453
        %4455 = vmatmul.f32.gmra.mxu0 %v397
        %v4456 = vpop.f32.mrf.mxu0
        %v4457 = vadd.f32 %v380, %v4456
        %4458 = vdwg.mxu0
        %v4459 = vmax.f32 %v4419, 0.0
        %v4460 = vmax.f32 %v4448, 0.0
        %v4461 = vmax.f32 %v4422, 0.0
        %v4462 = vmax.f32 %v4451, 0.0
        %v4463 = vmax.f32 %v4425, 0.0
        %v4464 = vmax.f32 %v4454, 0.0
        %v4465 = vmax.f32 %v4428, 0.0
        %v4466 = vmax.f32 %v4457, 0.0
        %4467 = vmatpush.msra.mxu0 0.0
        %4468 = vmatpush.msra.mxu0 0.0
        %4469 = vmatpush.msra.mxu0 0.0
        %4470 = vmatpush.msra.mxu0 0.0
        %4471 = vmatpush.msra.mxu0 0.0
        %4472 = vmatpush.msra.mxu0 0.0
        %4473 = vmatpush.msra.mxu0 0.0
        %4474 = vmatpush.msra.mxu0 0.0
        %4475 = vmatpush.msra.mxu0 0.0
        %4476 = vmatpush.msra.mxu0 0.0
        %4477 = vmatpush.msra.mxu0 0.0
        %4478 = vmatpush.msra.mxu0 0.0
        %4479 = vmatpush.msra.mxu0 %v4465
        %4480 = vmatpush.msra.mxu0 %v4463
        %4481 = vmatpush.msra.mxu0 %v4461
        %4482 = vmatpush.msra.mxu0 %v4459
        %4483 = vmatmul.f32.gmra.mxu0 %v477
        %v4484 = vpop.f32.mrf.mxu0
        %v4485 = vadd.f32 %v473, %v4484
        %4486 = vdwg.mxu0
        %4487 = vmatpush.msra.mxu0 0.0
        %4488 = vmatpush.msra.mxu0 0.0
        %4489 = vmatpush.msra.mxu0 0.0
        %4490 = vmatpush.msra.mxu0 0.0
        %4491 = vmatpush.msra.mxu0 0.0
        %4492 = vmatpush.msra.mxu0 0.0
        %4493 = vmatpush.msra.mxu0 0.0
        %4494 = vmatpush.msra.mxu0 0.0
        %4495 = vmatpush.msra.mxu0 0.0
        %4496 = vmatpush.msra.mxu0 0.0
        %4497 = vmatpush.msra.mxu0 0.0
        %4498 = vmatpush.msra.mxu0 0.0
        %4499 = vmatpush.msra.mxu0 %v4466
        %4500 = vmatpush.msra.mxu0 %v4464
        %4501 = vmatpush.msra.mxu0 %v4462
        %4502 = vmatpush.msra.mxu0 %v4460
        %4503 = vmatmul.f32.gmra.mxu0 %v477
        %v4504 = vpop.f32.mrf.mxu0
        %v4505 = vadd.f32 %v473, %v4504
        %4506 = vdwg.mxu0
        %v4507 = vmax.f32 %v4485, 0.0
        %v4508 = vmax.f32 %v4505, 0.0
        %v4509 = vsub.f32 0.0, %v4507
        %v4510 = vsub.f32 0.0, %v4508
        %v4511 = vmul.f32 %v4509, 0.09677434
        %v4512 = vmul.f32 %v4510, 0.09677434
        %v4513 = vmul.f32 %v4511, 1.442695
        %v4514 = vpow.pop %v4513
        %v4515 = vmul.f32 %v4512, 1.442695
        %v4516 = vpow.pop %v4515
        %v4517 = vsub.f32 1.0, %v4514
        %v4518 = vsub.f32 1.0, %v4516
        %v4519 = vmul.f32 %v4517, %v4389
        %v4520 = vmul.f32 %v4518, %v4390
        %v4521 = vperm.slane %v4519, 0
        %v4522 = vperm.slane %v4520, 0
        %v4523 = vmul.f32 %v4521, %v4485
        %v4524 = vmul.f32 %v4522, %v4505
        %v4525 = vadd.f32 %v4377, %v4523
        %v4526 = vadd.f32 %v4378, %v4524
        %v4527 = vmul.f32 %v4519, 3.612903
        %v4528 = vmul.f32 %v4520, 3.612903
        %v4529 = vadd.f32 %v4381, %v4527
        %v4530 = vadd.f32 %v4382, %v4528
        %v4531 = vadd.f32 %v4383, %v4519
        %v4532 = vadd.f32 %v4384, %v4520
        %v4533 = vsub.f32 1.0, %v4517
        %v4534 = vsub.f32 1.0, %v4518
        %v4535 = vadd.f32 %v4533, 1e-10
        %v4536 = vadd.f32 %v4534, 1e-10
        %v4537 = vmul.f32 %v4389, %v4535
        %v4538 = vmul.f32 %v4390, %v4536
        %v4539 = vmul.f32 %v350, 3.7096775
        %v4540 = vadd.f32 %v349, %v4539
        %4542 = vst [vmem:[#allocation1] ss:$2 sm:$0xff] %v4540
        %v4543 = vld.sshfl [vmem:[#allocation1] sm:$0xff pattern:$0x75316420]
        %v4544 = vld.sshfl [vmem:[#allocation1 + $0x8] sm:$0xff pattern:$0x75316420]
        %v4545 = vsel %vm399, %v4543, 0
        %v4547 = vsel %vm399, %v4544, 0
        %4549 = vmatpush.msra.mxu0 0.0
        %4550 = vmatpush.msra.mxu0 0.0
        %4551 = vmatpush.msra.mxu0 0.0
        %4552 = vmatpush.msra.mxu0 0.0
        %4553 = vmatpush.msra.mxu0 0.0
        %4554 = vmatpush.msra.mxu0 0.0
        %4555 = vmatpush.msra.mxu0 0.0
        %4556 = vmatpush.msra.mxu0 0.0
        %4557 = vmatpush.msra.mxu0 0.0
        %4558 = vmatpush.msra.mxu0 0.0
        %4559 = vmatpush.msra.mxu0 0.0
        %4560 = vmatpush.msra.mxu0 0.0
        %4561 = vmatpush.msra.mxu0 0.0
        %4562 = vmatpush.msra.mxu0 0.0
        %4563 = vmatpush.msra.mxu0 0.0
        %4564 = vmatpush.msra.mxu0 %v4545
        %4565 = vmatmul.f32.gmra.mxu0 %v388
        %v4566 = vpop.f32.mrf.mxu0
        %v4567 = vadd.f32 %v365, %v4566
        %4568 = vmatmul.f32.gmra.mxu0 %v391
        %v4569 = vpop.f32.mrf.mxu0
        %v4570 = vadd.f32 %v370, %v4569
        %4571 = vmatmul.f32.gmra.mxu0 %v394
        %v4572 = vpop.f32.mrf.mxu0
        %v4573 = vadd.f32 %v375, %v4572
        %4574 = vmatmul.f32.gmra.mxu0 %v397
        %v4575 = vpop.f32.mrf.mxu0
        %v4576 = vadd.f32 %v380, %v4575
        %4577 = vdwg.mxu0
        %4578 = vmatpush.msra.mxu0 0.0
        %4579 = vmatpush.msra.mxu0 0.0
        %4580 = vmatpush.msra.mxu0 0.0
        %4581 = vmatpush.msra.mxu0 0.0
        %4582 = vmatpush.msra.mxu0 0.0
        %4583 = vmatpush.msra.mxu0 0.0
        %4584 = vmatpush.msra.mxu0 0.0
        %4585 = vmatpush.msra.mxu0 0.0
        %4586 = vmatpush.msra.mxu0 0.0
        %4587 = vmatpush.msra.mxu0 0.0
        %4588 = vmatpush.msra.mxu0 0.0
        %4589 = vmatpush.msra.mxu0 0.0
        %4590 = vmatpush.msra.mxu0 0.0
        %4591 = vmatpush.msra.mxu0 0.0
        %4592 = vmatpush.msra.mxu0 0.0
        %4593 = vmatpush.msra.mxu0 %v4547
        %4594 = vmatmul.f32.gmra.mxu0 %v388
        %v4595 = vpop.f32.mrf.mxu0
        %v4596 = vadd.f32 %v365, %v4595
        %4597 = vmatmul.f32.gmra.mxu0 %v391
        %v4598 = vpop.f32.mrf.mxu0
        %v4599 = vadd.f32 %v370, %v4598
        %4600 = vmatmul.f32.gmra.mxu0 %v394
        %v4601 = vpop.f32.mrf.mxu0
        %v4602 = vadd.f32 %v375, %v4601
        %4603 = vmatmul.f32.gmra.mxu0 %v397
        %v4604 = vpop.f32.mrf.mxu0
        %v4605 = vadd.f32 %v380, %v4604
        %4606 = vdwg.mxu0
        %v4607 = vmax.f32 %v4567, 0.0
        %v4608 = vmax.f32 %v4596, 0.0
        %v4609 = vmax.f32 %v4570, 0.0
        %v4610 = vmax.f32 %v4599, 0.0
        %v4611 = vmax.f32 %v4573, 0.0
        %v4612 = vmax.f32 %v4602, 0.0
        %v4613 = vmax.f32 %v4576, 0.0
        %v4614 = vmax.f32 %v4605, 0.0
        %4615 = vmatpush.msra.mxu0 0.0
        %4616 = vmatpush.msra.mxu0 0.0
        %4617 = vmatpush.msra.mxu0 0.0
        %4618 = vmatpush.msra.mxu0 0.0
        %4619 = vmatpush.msra.mxu0 0.0
        %4620 = vmatpush.msra.mxu0 0.0
        %4621 = vmatpush.msra.mxu0 0.0
        %4622 = vmatpush.msra.mxu0 0.0
        %4623 = vmatpush.msra.mxu0 0.0
        %4624 = vmatpush.msra.mxu0 0.0
        %4625 = vmatpush.msra.mxu0 0.0
        %4626 = vmatpush.msra.mxu0 0.0
        %4627 = vmatpush.msra.mxu0 %v4613
        %4628 = vmatpush.msra.mxu0 %v4611
        %4629 = vmatpush.msra.mxu0 %v4609
        %4630 = vmatpush.msra.mxu0 %v4607
        %4631 = vmatmul.f32.gmra.mxu0 %v477
        %v4632 = vpop.f32.mrf.mxu0
        %v4633 = vadd.f32 %v473, %v4632
        %4634 = vdwg.mxu0
        %4635 = vmatpush.msra.mxu0 0.0
        %4636 = vmatpush.msra.mxu0 0.0
        %4637 = vmatpush.msra.mxu0 0.0
        %4638 = vmatpush.msra.mxu0 0.0
        %4639 = vmatpush.msra.mxu0 0.0
        %4640 = vmatpush.msra.mxu0 0.0
        %4641 = vmatpush.msra.mxu0 0.0
        %4642 = vmatpush.msra.mxu0 0.0
        %4643 = vmatpush.msra.mxu0 0.0
        %4644 = vmatpush.msra.mxu0 0.0
        %4645 = vmatpush.msra.mxu0 0.0
        %4646 = vmatpush.msra.mxu0 0.0
        %4647 = vmatpush.msra.mxu0 %v4614
        %4648 = vmatpush.msra.mxu0 %v4612
        %4649 = vmatpush.msra.mxu0 %v4610
        %4650 = vmatpush.msra.mxu0 %v4608
        %4651 = vmatmul.f32.gmra.mxu0 %v477
        %v4652 = vpop.f32.mrf.mxu0
        %v4653 = vadd.f32 %v473, %v4652
        %4654 = vdwg.mxu0
        %v4655 = vmax.f32 %v4633, 0.0
        %v4656 = vmax.f32 %v4653, 0.0
        %v4657 = vsub.f32 0.0, %v4655
        %v4658 = vsub.f32 0.0, %v4656
        %v4659 = vmul.f32 %v4657, 0.0967741
        %v4660 = vmul.f32 %v4658, 0.0967741
        %v4661 = vmul.f32 %v4659, 1.442695
        %v4662 = vpow.pop %v4661
        %v4663 = vmul.f32 %v4660, 1.442695
        %v4664 = vpow.pop %v4663
        %v4665 = vsub.f32 1.0, %v4662
        %v4666 = vsub.f32 1.0, %v4664
        %v4667 = vmul.f32 %v4665, %v4537
        %v4668 = vmul.f32 %v4666, %v4538
        %v4669 = vperm.slane %v4667, 0
        %v4670 = vperm.slane %v4668, 0
        %v4671 = vmul.f32 %v4669, %v4633
        %v4672 = vmul.f32 %v4670, %v4653
        %v4673 = vadd.f32 %v4525, %v4671
        %v4674 = vadd.f32 %v4526, %v4672
        %v4675 = vmul.f32 %v4667, 3.7096775
        %v4676 = vmul.f32 %v4668, 3.7096775
        %v4677 = vadd.f32 %v4529, %v4675
        %v4678 = vadd.f32 %v4530, %v4676
        %v4679 = vadd.f32 %v4531, %v4667
        %v4680 = vadd.f32 %v4532, %v4668
        %v4681 = vsub.f32 1.0, %v4665
        %v4682 = vsub.f32 1.0, %v4666
        %v4683 = vadd.f32 %v4681, 1e-10
        %v4684 = vadd.f32 %v4682, 1e-10
        %v4685 = vmul.f32 %v4537, %v4683
        %v4686 = vmul.f32 %v4538, %v4684
        %v4687 = vmul.f32 %v350, 3.8064516
        %v4688 = vadd.f32 %v349, %v4687
        %4690 = vst [vmem:[#allocation1] ss:$2 sm:$0xff] %v4688
        %v4691 = vld.sshfl [vmem:[#allocation1] sm:$0xff pattern:$0x75316420]
        %v4692 = vld.sshfl [vmem:[#allocation1 + $0x8] sm:$0xff pattern:$0x75316420]
        %v4693 = vsel %vm399, %v4691, 0
        %v4695 = vsel %vm399, %v4692, 0
        %4697 = vmatpush.msra.mxu0 0.0
        %4698 = vmatpush.msra.mxu0 0.0
        %4699 = vmatpush.msra.mxu0 0.0
        %4700 = vmatpush.msra.mxu0 0.0
        %4701 = vmatpush.msra.mxu0 0.0
        %4702 = vmatpush.msra.mxu0 0.0
        %4703 = vmatpush.msra.mxu0 0.0
        %4704 = vmatpush.msra.mxu0 0.0
        %4705 = vmatpush.msra.mxu0 0.0
        %4706 = vmatpush.msra.mxu0 0.0
        %4707 = vmatpush.msra.mxu0 0.0
        %4708 = vmatpush.msra.mxu0 0.0
        %4709 = vmatpush.msra.mxu0 0.0
        %4710 = vmatpush.msra.mxu0 0.0
        %4711 = vmatpush.msra.mxu0 0.0
        %4712 = vmatpush.msra.mxu0 %v4693
        %4713 = vmatmul.f32.gmra.mxu0 %v388
        %v4714 = vpop.f32.mrf.mxu0
        %v4715 = vadd.f32 %v365, %v4714
        %4716 = vmatmul.f32.gmra.mxu0 %v391
        %v4717 = vpop.f32.mrf.mxu0
        %v4718 = vadd.f32 %v370, %v4717
        %4719 = vmatmul.f32.gmra.mxu0 %v394
        %v4720 = vpop.f32.mrf.mxu0
        %v4721 = vadd.f32 %v375, %v4720
        %4722 = vmatmul.f32.gmra.mxu0 %v397
        %v4723 = vpop.f32.mrf.mxu0
        %v4724 = vadd.f32 %v380, %v4723
        %4725 = vdwg.mxu0
        %4726 = vmatpush.msra.mxu0 0.0
        %4727 = vmatpush.msra.mxu0 0.0
        %4728 = vmatpush.msra.mxu0 0.0
        %4729 = vmatpush.msra.mxu0 0.0
        %4730 = vmatpush.msra.mxu0 0.0
        %4731 = vmatpush.msra.mxu0 0.0
        %4732 = vmatpush.msra.mxu0 0.0
        %4733 = vmatpush.msra.mxu0 0.0
        %4734 = vmatpush.msra.mxu0 0.0
        %4735 = vmatpush.msra.mxu0 0.0
        %4736 = vmatpush.msra.mxu0 0.0
        %4737 = vmatpush.msra.mxu0 0.0
        %4738 = vmatpush.msra.mxu0 0.0
        %4739 = vmatpush.msra.mxu0 0.0
        %4740 = vmatpush.msra.mxu0 0.0
        %4741 = vmatpush.msra.mxu0 %v4695
        %4742 = vmatmul.f32.gmra.mxu0 %v388
        %v4743 = vpop.f32.mrf.mxu0
        %v4744 = vadd.f32 %v365, %v4743
        %4745 = vmatmul.f32.gmra.mxu0 %v391
        %v4746 = vpop.f32.mrf.mxu0
        %v4747 = vadd.f32 %v370, %v4746
        %4748 = vmatmul.f32.gmra.mxu0 %v394
        %v4749 = vpop.f32.mrf.mxu0
        %v4750 = vadd.f32 %v375, %v4749
        %4751 = vmatmul.f32.gmra.mxu0 %v397
        %v4752 = vpop.f32.mrf.mxu0
        %v4753 = vadd.f32 %v380, %v4752
        %4754 = vdwg.mxu0
        %v4755 = vmax.f32 %v4715, 0.0
        %v4756 = vmax.f32 %v4744, 0.0
        %v4757 = vmax.f32 %v4718, 0.0
        %v4758 = vmax.f32 %v4747, 0.0
        %v4759 = vmax.f32 %v4721, 0.0
        %v4760 = vmax.f32 %v4750, 0.0
        %v4761 = vmax.f32 %v4724, 0.0
        %v4762 = vmax.f32 %v4753, 0.0
        %4763 = vmatpush.msra.mxu0 0.0
        %4764 = vmatpush.msra.mxu0 0.0
        %4765 = vmatpush.msra.mxu0 0.0
        %4766 = vmatpush.msra.mxu0 0.0
        %4767 = vmatpush.msra.mxu0 0.0
        %4768 = vmatpush.msra.mxu0 0.0
        %4769 = vmatpush.msra.mxu0 0.0
        %4770 = vmatpush.msra.mxu0 0.0
        %4771 = vmatpush.msra.mxu0 0.0
        %4772 = vmatpush.msra.mxu0 0.0
        %4773 = vmatpush.msra.mxu0 0.0
        %4774 = vmatpush.msra.mxu0 0.0
        %4775 = vmatpush.msra.mxu0 %v4761
        %4776 = vmatpush.msra.mxu0 %v4759
        %4777 = vmatpush.msra.mxu0 %v4757
        %4778 = vmatpush.msra.mxu0 %v4755
        %4779 = vmatmul.f32.gmra.mxu0 %v477
        %v4780 = vpop.f32.mrf.mxu0
        %v4781 = vadd.f32 %v473, %v4780
        %4782 = vdwg.mxu0
        %4783 = vmatpush.msra.mxu0 0.0
        %4784 = vmatpush.msra.mxu0 0.0
        %4785 = vmatpush.msra.mxu0 0.0
        %4786 = vmatpush.msra.mxu0 0.0
        %4787 = vmatpush.msra.mxu0 0.0
        %4788 = vmatpush.msra.mxu0 0.0
        %4789 = vmatpush.msra.mxu0 0.0
        %4790 = vmatpush.msra.mxu0 0.0
        %4791 = vmatpush.msra.mxu0 0.0
        %4792 = vmatpush.msra.mxu0 0.0
        %4793 = vmatpush.msra.mxu0 0.0
        %4794 = vmatpush.msra.mxu0 0.0
        %4795 = vmatpush.msra.mxu0 %v4762
        %4796 = vmatpush.msra.mxu0 %v4760
        %4797 = vmatpush.msra.mxu0 %v4758
        %4798 = vmatpush.msra.mxu0 %v4756
        %4799 = vmatmul.f32.gmra.mxu0 %v477
        %v4800 = vpop.f32.mrf.mxu0
        %v4801 = vadd.f32 %v473, %v4800
        %4802 = vdwg.mxu0
        %v4803 = vmax.f32 %v4781, 0.0
        %v4804 = vmax.f32 %v4801, 0.0
        %v4805 = vsub.f32 0.0, %v4803
        %v4806 = vsub.f32 0.0, %v4804
        %v4807 = vmul.f32 %v4805, 0.09677434
        %v4808 = vmul.f32 %v4806, 0.09677434
        %v4809 = vmul.f32 %v4807, 1.442695
        %v4810 = vpow.pop %v4809
        %v4811 = vmul.f32 %v4808, 1.442695
        %v4812 = vpow.pop %v4811
        %v4813 = vsub.f32 1.0, %v4810
        %v4814 = vsub.f32 1.0, %v4812
        %v4815 = vmul.f32 %v4813, %v4685
        %v4816 = vmul.f32 %v4814, %v4686
        %v4817 = vperm.slane %v4815, 0
        %v4818 = vperm.slane %v4816, 0
        %v4819 = vmul.f32 %v4817, %v4781
        %v4820 = vmul.f32 %v4818, %v4801
        %v4821 = vadd.f32 %v4673, %v4819
        %v4822 = vadd.f32 %v4674, %v4820
        %v4823 = vmul.f32 %v4815, 3.8064516
        %v4824 = vmul.f32 %v4816, 3.8064516
        %v4825 = vadd.f32 %v4677, %v4823
        %v4826 = vadd.f32 %v4678, %v4824
        %v4827 = vadd.f32 %v4679, %v4815
        %v4828 = vadd.f32 %v4680, %v4816
        %v4829 = vsub.f32 1.0, %v4813
        %v4830 = vsub.f32 1.0, %v4814
        %v4831 = vadd.f32 %v4829, 1e-10
        %v4832 = vadd.f32 %v4830, 1e-10
        %v4833 = vmul.f32 %v4685, %v4831
        %v4834 = vmul.f32 %v4686, %v4832
        %v4835 = vmul.f32 %v350, 3.903226
        %v4836 = vadd.f32 %v349, %v4835
        %4838 = vst [vmem:[#allocation1] ss:$2 sm:$0xff] %v4836
        %v4839 = vld.sshfl [vmem:[#allocation1] sm:$0xff pattern:$0x75316420]
        %v4840 = vld.sshfl [vmem:[#allocation1 + $0x8] sm:$0xff pattern:$0x75316420]
        %v4841 = vsel %vm399, %v4839, 0
        %v4843 = vsel %vm399, %v4840, 0
        %4845 = vmatpush.msra.mxu0 0.0
        %4846 = vmatpush.msra.mxu0 0.0
        %4847 = vmatpush.msra.mxu0 0.0
        %4848 = vmatpush.msra.mxu0 0.0
        %4849 = vmatpush.msra.mxu0 0.0
        %4850 = vmatpush.msra.mxu0 0.0
        %4851 = vmatpush.msra.mxu0 0.0
        %4852 = vmatpush.msra.mxu0 0.0
        %4853 = vmatpush.msra.mxu0 0.0
        %4854 = vmatpush.msra.mxu0 0.0
        %4855 = vmatpush.msra.mxu0 0.0
        %4856 = vmatpush.msra.mxu0 0.0
        %4857 = vmatpush.msra.mxu0 0.0
        %4858 = vmatpush.msra.mxu0 0.0
        %4859 = vmatpush.msra.mxu0 0.0
        %4860 = vmatpush.msra.mxu0 %v4841
        %4861 = vmatmul.f32.gmra.mxu0 %v388
        %v4862 = vpop.f32.mrf.mxu0
        %v4863 = vadd.f32 %v365, %v4862
        %4864 = vmatmul.f32.gmra.mxu0 %v391
        %v4865 = vpop.f32.mrf.mxu0
        %v4866 = vadd.f32 %v370, %v4865
        %4867 = vmatmul.f32.gmra.mxu0 %v394
        %v4868 = vpop.f32.mrf.mxu0
        %v4869 = vadd.f32 %v375, %v4868
        %4870 = vmatmul.f32.gmra.mxu0 %v397
        %v4871 = vpop.f32.mrf.mxu0
        %v4872 = vadd.f32 %v380, %v4871
        %4873 = vdwg.mxu0
        %4874 = vmatpush.msra.mxu0 0.0
        %4875 = vmatpush.msra.mxu0 0.0
        %4876 = vmatpush.msra.mxu0 0.0
        %4877 = vmatpush.msra.mxu0 0.0
        %4878 = vmatpush.msra.mxu0 0.0
        %4879 = vmatpush.msra.mxu0 0.0
        %4880 = vmatpush.msra.mxu0 0.0
        %4881 = vmatpush.msra.mxu0 0.0
        %4882 = vmatpush.msra.mxu0 0.0
        %4883 = vmatpush.msra.mxu0 0.0
        %4884 = vmatpush.msra.mxu0 0.0
        %4885 = vmatpush.msra.mxu0 0.0
        %4886 = vmatpush.msra.mxu0 0.0
        %4887 = vmatpush.msra.mxu0 0.0
        %4888 = vmatpush.msra.mxu0 0.0
        %4889 = vmatpush.msra.mxu0 %v4843
        %4890 = vmatmul.f32.gmra.mxu0 %v388
        %v4891 = vpop.f32.mrf.mxu0
        %v4892 = vadd.f32 %v365, %v4891
        %4893 = vmatmul.f32.gmra.mxu0 %v391
        %v4894 = vpop.f32.mrf.mxu0
        %v4895 = vadd.f32 %v370, %v4894
        %4896 = vmatmul.f32.gmra.mxu0 %v394
        %v4897 = vpop.f32.mrf.mxu0
        %v4898 = vadd.f32 %v375, %v4897
        %4899 = vmatmul.f32.gmra.mxu0 %v397
        %v4900 = vpop.f32.mrf.mxu0
        %v4901 = vadd.f32 %v380, %v4900
        %4902 = vdwg.mxu0
        %v4903 = vmax.f32 %v4863, 0.0
        %v4904 = vmax.f32 %v4892, 0.0
        %v4905 = vmax.f32 %v4866, 0.0
        %v4906 = vmax.f32 %v4895, 0.0
        %v4907 = vmax.f32 %v4869, 0.0
        %v4908 = vmax.f32 %v4898, 0.0
        %v4909 = vmax.f32 %v4872, 0.0
        %v4910 = vmax.f32 %v4901, 0.0
        %4911 = vmatpush.msra.mxu0 0.0
        %4912 = vmatpush.msra.mxu0 0.0
        %4913 = vmatpush.msra.mxu0 0.0
        %4914 = vmatpush.msra.mxu0 0.0
        %4915 = vmatpush.msra.mxu0 0.0
        %4916 = vmatpush.msra.mxu0 0.0
        %4917 = vmatpush.msra.mxu0 0.0
        %4918 = vmatpush.msra.mxu0 0.0
        %4919 = vmatpush.msra.mxu0 0.0
        %4920 = vmatpush.msra.mxu0 0.0
        %4921 = vmatpush.msra.mxu0 0.0
        %4922 = vmatpush.msra.mxu0 0.0
        %4923 = vmatpush.msra.mxu0 %v4909
        %4924 = vmatpush.msra.mxu0 %v4907
        %4925 = vmatpush.msra.mxu0 %v4905
        %4926 = vmatpush.msra.mxu0 %v4903
        %4927 = vmatmul.f32.gmra.mxu0 %v477
        %v4928 = vpop.f32.mrf.mxu0
        %v4929 = vadd.f32 %v473, %v4928
        %4930 = vdwg.mxu0
        %4931 = vmatpush.msra.mxu0 0.0
        %4932 = vmatpush.msra.mxu0 0.0
        %4933 = vmatpush.msra.mxu0 0.0
        %4934 = vmatpush.msra.mxu0 0.0
        %4935 = vmatpush.msra.mxu0 0.0
        %4936 = vmatpush.msra.mxu0 0.0
        %4937 = vmatpush.msra.mxu0 0.0
        %4938 = vmatpush.msra.mxu0 0.0
        %4939 = vmatpush.msra.mxu0 0.0
        %4940 = vmatpush.msra.mxu0 0.0
        %4941 = vmatpush.msra.mxu0 0.0
        %4942 = vmatpush.msra.mxu0 0.0
        %4943 = vmatpush.msra.mxu0 %v4910
        %4944 = vmatpush.msra.mxu0 %v4908
        %4945 = vmatpush.msra.mxu0 %v4906
        %4946 = vmatpush.msra.mxu0 %v4904
        %4947 = vmatmul.f32.gmra.mxu0 %v477
        %v4948 = vpop.f32.mrf.mxu0
        %v4949 = vadd.f32 %v473, %v4948
        %4950 = vdwg.mxu0
        %v4951 = vmax.f32 %v4929, 0.0
        %v4952 = vmax.f32 %v4949, 0.0
        %v4953 = vsub.f32 0.0, %v4951
        %v4954 = vsub.f32 0.0, %v4952
        %v4955 = vmul.f32 %v4953, 0.0967741
        %v4956 = vmul.f32 %v4954, 0.0967741
        %v4957 = vmul.f32 %v4955, 1.442695
        %v4958 = vpow.pop %v4957
        %v4959 = vmul.f32 %v4956, 1.442695
        %v4960 = vpow.pop %v4959
        %v4961 = vsub.f32 1.0, %v4958
        %v4962 = vsub.f32 1.0, %v4960
        %v4963 = vmul.f32 %v4961, %v4833
        %v4964 = vmul.f32 %v4962, %v4834
        %v4965 = vperm.slane %v4963, 0
        %v4966 = vperm.slane %v4964, 0
        %v4967 = vmul.f32 %v4965, %v4929
        %v4968 = vmul.f32 %v4966, %v4949
        %v4969 = vadd.f32 %v4821, %v4967
        %v4970 = vadd.f32 %v4822, %v4968
        %v4971 = vmul.f32 %v4963, 3.903226
        %v4972 = vmul.f32 %v4964, 3.903226
        %v4973 = vadd.f32 %v4825, %v4971
        %v4974 = vadd.f32 %v4826, %v4972
        %v4975 = vadd.f32 %v4827, %v4963
        %v4976 = vadd.f32 %v4828, %v4964
        %v4977 = vsub.f32 1.0, %v4961
        %v4978 = vsub.f32 1.0, %v4962
        %v4979 = vadd.f32 %v4977, 1e-10
        %v4980 = vadd.f32 %v4978, 1e-10
        %v4981 = vmul.f32 %v4833, %v4979
        %v4982 = vmul.f32 %v4834, %v4980
        %v4983 = vmul.f32 %v350, 4.0
        %v4984 = vadd.f32 %v349, %v4983
        %4986 = vst [vmem:[#allocation1] ss:$2 sm:$0xff] %v4984
        %v4987 = vld.sshfl [vmem:[#allocation1] sm:$0xff pattern:$0x75316420]
        %v4988 = vld.sshfl [vmem:[#allocation1 + $0x8] sm:$0xff pattern:$0x75316420]
        %v4989 = vsel %vm399, %v4987, 0
        %v4991 = vsel %vm399, %v4988, 0
        %4993 = vmatpush.msra.mxu0 0.0
        %4994 = vmatpush.msra.mxu0 0.0
        %4995 = vmatpush.msra.mxu0 0.0
        %4996 = vmatpush.msra.mxu0 0.0
        %4997 = vmatpush.msra.mxu0 0.0
        %4998 = vmatpush.msra.mxu0 0.0
        %4999 = vmatpush.msra.mxu0 0.0
        %5000 = vmatpush.msra.mxu0 0.0
        %5001 = vmatpush.msra.mxu0 0.0
        %5002 = vmatpush.msra.mxu0 0.0
        %5003 = vmatpush.msra.mxu0 0.0
        %5004 = vmatpush.msra.mxu0 0.0
        %5005 = vmatpush.msra.mxu0 0.0
        %5006 = vmatpush.msra.mxu0 0.0
        %5007 = vmatpush.msra.mxu0 0.0
        %5008 = vmatpush.msra.mxu0 %v4989
        %5009 = vmatmul.f32.gmra.mxu0 %v388
        %v5010 = vpop.f32.mrf.mxu0
        %v5011 = vadd.f32 %v365, %v5010
        %5012 = vmatmul.f32.gmra.mxu0 %v391
        %v5013 = vpop.f32.mrf.mxu0
        %v5014 = vadd.f32 %v370, %v5013
        %5015 = vmatmul.f32.gmra.mxu0 %v394
        %v5016 = vpop.f32.mrf.mxu0
        %v5017 = vadd.f32 %v375, %v5016
        %5018 = vmatmul.f32.gmra.mxu0 %v397
        %v5019 = vpop.f32.mrf.mxu0
        %v5020 = vadd.f32 %v380, %v5019
        %5021 = vdwg.mxu0
        %5022 = vmatpush.msra.mxu0 0.0
        %5023 = vmatpush.msra.mxu0 0.0
        %5024 = vmatpush.msra.mxu0 0.0
        %5025 = vmatpush.msra.mxu0 0.0
        %5026 = vmatpush.msra.mxu0 0.0
        %5027 = vmatpush.msra.mxu0 0.0
        %5028 = vmatpush.msra.mxu0 0.0
        %5029 = vmatpush.msra.mxu0 0.0
        %5030 = vmatpush.msra.mxu0 0.0
        %5031 = vmatpush.msra.mxu0 0.0
        %5032 = vmatpush.msra.mxu0 0.0
        %5033 = vmatpush.msra.mxu0 0.0
        %5034 = vmatpush.msra.mxu0 0.0
        %5035 = vmatpush.msra.mxu0 0.0
        %5036 = vmatpush.msra.mxu0 0.0
        %5037 = vmatpush.msra.mxu0 %v4991
        %5038 = vmatmul.f32.gmra.mxu0 %v388
        %v5039 = vpop.f32.mrf.mxu0
        %v5040 = vadd.f32 %v365, %v5039
        %5041 = vmatmul.f32.gmra.mxu0 %v391
        %v5042 = vpop.f32.mrf.mxu0
        %v5043 = vadd.f32 %v370, %v5042
        %5044 = vmatmul.f32.gmra.mxu0 %v394
        %v5045 = vpop.f32.mrf.mxu0
        %v5046 = vadd.f32 %v375, %v5045
        %5047 = vmatmul.f32.gmra.mxu0 %v397
        %v5048 = vpop.f32.mrf.mxu0
        %v5049 = vadd.f32 %v380, %v5048
        %5050 = vdwg.mxu0
        %v5051 = vmax.f32 %v5011, 0.0
        %v5052 = vmax.f32 %v5040, 0.0
        %v5053 = vmax.f32 %v5014, 0.0
        %v5054 = vmax.f32 %v5043, 0.0
        %v5055 = vmax.f32 %v5017, 0.0
        %v5056 = vmax.f32 %v5046, 0.0
        %v5057 = vmax.f32 %v5020, 0.0
        %v5058 = vmax.f32 %v5049, 0.0
        %5059 = vmatpush.msra.mxu0 0.0
        %5060 = vmatpush.msra.mxu0 0.0
        %5061 = vmatpush.msra.mxu0 0.0
        %5062 = vmatpush.msra.mxu0 0.0
        %5063 = vmatpush.msra.mxu0 0.0
        %5064 = vmatpush.msra.mxu0 0.0
        %5065 = vmatpush.msra.mxu0 0.0
        %5066 = vmatpush.msra.mxu0 0.0
        %5067 = vmatpush.msra.mxu0 0.0
        %5068 = vmatpush.msra.mxu0 0.0
        %5069 = vmatpush.msra.mxu0 0.0
        %5070 = vmatpush.msra.mxu0 0.0
        %5071 = vmatpush.msra.mxu0 %v5057
        %5072 = vmatpush.msra.mxu0 %v5055
        %5073 = vmatpush.msra.mxu0 %v5053
        %5074 = vmatpush.msra.mxu0 %v5051
        %5075 = vmatmul.f32.gmra.mxu0 %v477
        %v5076 = vpop.f32.mrf.mxu0
        %v5077 = vadd.f32 %v473, %v5076
        %5078 = vdwg.mxu0
        %5079 = vmatpush.msra.mxu0 0.0
        %5080 = vmatpush.msra.mxu0 0.0
        %5081 = vmatpush.msra.mxu0 0.0
        %5082 = vmatpush.msra.mxu0 0.0
        %5083 = vmatpush.msra.mxu0 0.0
        %5084 = vmatpush.msra.mxu0 0.0
        %5085 = vmatpush.msra.mxu0 0.0
        %5086 = vmatpush.msra.mxu0 0.0
        %5087 = vmatpush.msra.mxu0 0.0
        %5088 = vmatpush.msra.mxu0 0.0
        %5089 = vmatpush.msra.mxu0 0.0
        %5090 = vmatpush.msra.mxu0 0.0
        %5091 = vmatpush.msra.mxu0 %v5058
        %5092 = vmatpush.msra.mxu0 %v5056
        %5093 = vmatpush.msra.mxu0 %v5054
        %5094 = vmatpush.msra.mxu0 %v5052
        %5095 = vmatmul.f32.gmra.mxu0 %v477
        %v5096 = vpop.f32.mrf.mxu0
        %v5097 = vadd.f32 %v473, %v5096
        %5098 = vdwg.mxu0
        %v5099 = vmax.f32 %v5077, 0.0
        %v5100 = vmax.f32 %v5097, 0.0
        %v5101 = vsub.f32 0.0, %v5099
        %v5102 = vsub.f32 0.0, %v5100
        %v5103 = vmul.f32 %v5101, 0.0967741
        %v5104 = vmul.f32 %v5102, 0.0967741
        %v5105 = vmul.f32 %v5103, 1.442695
        %v5106 = vpow.pop %v5105
        %v5107 = vmul.f32 %v5104, 1.442695
        %v5108 = vpow.pop %v5107
        %v5109 = vsub.f32 1.0, %v5106
        %v5110 = vsub.f32 1.0, %v5108
        %v5111 = vmul.f32 %v5109, %v4981
        %v5112 = vmul.f32 %v5110, %v4982
        %v5113 = vperm.slane %v5111, 0
        %v5114 = vperm.slane %v5112, 0
        %v5115 = vmul.f32 %v5113, %v5077
        %v5116 = vmul.f32 %v5114, %v5097
        %v5117 = vadd.f32 %v4969, %v5115
        %v5118 = vadd.f32 %v4970, %v5116
        %v5119 = vmul.f32 %v5111, 4.0
        %v5120 = vmul.f32 %v5112, 4.0
        %v5121 = vadd.f32 %v4973, %v5119
        %v5122 = vadd.f32 %v4974, %v5120
        %v5123 = vadd.f32 %v4975, %v5111
        %v5124 = vadd.f32 %v4976, %v5112
        %v5127 = vrot.slane %v5118, 4
        %vm5128 = vcmask 1043456
        %v5129 = vsel %vm5128, %v5117, %v5127
        %v5130 = vrot.slane %v5129, 5
        %v5131 = vrot.slane %v5130, 4
        %5133 = vst [vmem:[%s319] sm:$0x77] %v5131
        %v5136 = vrot.slane %v5122, 7
        %vm5137 = vcmask 1040384
        %v5138 = vsel %vm5137, %v5121, %v5136
        %v5140 = vlaneseq
        %vm5141 = vcmp.ge.s32.totalorder %v5140, 0
        %vm5142 = vcmp.lt.s32.totalorder %v5140, 256
        %vm5143 = vmand %vm5141, %vm5142
        %5144 = vst.msk [vmem:[%s326] sm:$0x3] %vm5143, %v5138
        %v5147 = vrot.slane %v5124, 7
        %v5148 = vsel %vm5137, %v5123, %v5147
        %5150 = vst.msk [vmem:[%s333] sm:$0x3] %vm5143, %v5148
        %s5151 = sand.u32 %s170, 1
        %s5152 = scalar_lea.sflag [#allocation3], %s5151
        %s5153 = sand.u32 %s170, 1
        %s5154 = smul.addr %s5153, 8
        %s5155 = scalar_lea.vmem [#allocation2], %s5154
        %s5156 = sand.u32 %s26, 1
        %s5157 = scalar_lea.sflag [#allocation5], %s5156
        %s5158 = sand.u32 %s196, 1
        %s5159 = smul.addr %s5158, 2
        %s5160 = scalar_lea.vmem [#allocation4], %s5159
        %s5161 = sand.u32 %s26, 1
        %s5162 = scalar_lea.sflag [#allocation5], %s5161
        %s5163 = sand.u32 %s222, 1
        %s5164 = smul.addr %s5163, 2
        %s5165 = scalar_lea.vmem [#allocation6], %s5164
        // Predicated region
        $region45: #{tpu_custom_call.1} parent=43 // pred_check
          %p5166 = pneg %p180
        $region46: #{tpu_custom_call.1} parent=43 // pred_check_branch
          %5168 = sbr.rel (%p5166) target = $region48
        $region47: #{tpu_custom_call.1} parent=43 // pred_region
          %s5169 = smul.u32 2, %s26
          %5171 = vsyncadd %s5152, 0
          %s5172 = smul.addr %s5169, 4
          %s5173 = scalar_lea.hbm %s6, %s5172
          %s5175 = sshll.u32 %s5155, 4
          %s5176 = int_to_ptr.vmem [resolvable:$true] %s5175
          %s5177 = sshll.u32 %s5173, 4
          %s5178 = int_to_ptr.hbm [resolvable:$true] %s5177
          %5180 = dma.vmem_to_hbm [thread:$0]  %s5176, 128, %s5178, %s5152
        $region48: #{tpu_custom_call.1} parent=43 // pred_fallthru
          _
        // Predicated region
        $region49: #{tpu_custom_call.1} parent=43 // pred_check
          %p5181 = pneg %p206
        $region50: #{tpu_custom_call.1} parent=43 // pred_check_branch
          %5183 = sbr.rel (%p5181) target = $region52
        $region51: #{tpu_custom_call.1} parent=43 // pred_region
          %s5184 = smul.u32 2, %s26
          %5186 = vsyncadd %s5157, 0
          %s5187 = scalar_lea.hbm %s7, %s5184
          %s5189 = sshll.u32 %s5160, 4
          %s5190 = int_to_ptr.vmem [resolvable:$true] %s5189
          %s5191 = sshll.u32 %s5187, 4
          %s5192 = int_to_ptr.hbm [resolvable:$true] %s5191
          %5194 = dma.vmem_to_hbm [thread:$0]  %s5190, 32, %s5192, %s5157
        $region52: #{tpu_custom_call.1} parent=43 // pred_fallthru
          _
        // Predicated region
        $region53: #{tpu_custom_call.1} parent=43 // pred_check
          %p5195 = pneg %p232
        $region54: #{tpu_custom_call.1} parent=43 // pred_check_branch
          %5197 = sbr.rel (%p5195) target = $region56
        $region55: #{tpu_custom_call.1} parent=43 // pred_region
          %s5198 = smul.u32 2, %s26
          %5200 = vsyncadd %s5162, 0
          %s5201 = scalar_lea.hbm %s8, %s5198
          %s5203 = sshll.u32 %s5165, 4
          %s5204 = int_to_ptr.vmem [resolvable:$true] %s5203
          %s5205 = sshll.u32 %s5201, 4
          %s5206 = int_to_ptr.hbm [resolvable:$true] %s5205
          %5208 = dma.vmem_to_hbm [thread:$0]  %s5204, 32, %s5206, %s5162
        $region56: #{tpu_custom_call.1} parent=43 // pred_fallthru
          _
      $region44: #{tpu_custom_call.1} parent=5 // pred_fallthru
        _
      %p5209 = scmp.le.s32.totalorder 2, %s21
      // Predicated region
      $region57: #{tpu_custom_call.1} parent=5 // pred_check
        %p5210 = pneg %p5209
      $region58: #{tpu_custom_call.1} parent=5 // pred_check_branch
        %5212 = sbr.rel (%p5210) target = $region60
      $region59: #{tpu_custom_call.1} parent=5 // pred_region
        %s5213 = ssub.s32 %s21, 2
        // Predicated region
        $region61: #{tpu_custom_call.1} parent=59 // pred_check
          %p5214 = pneg %p186
        $region62: #{tpu_custom_call.1} parent=59 // pred_check_branch
          %5216 = sbr.rel (%p5214) target = $region64
        $region63: #{tpu_custom_call.1} parent=59 // pred_region
          %s5217 = sand.u32 %s171, 1
          %s5218 = scalar_lea.sflag [#allocation3], %s5217
          %s5219 = sand.u32 %s171, 1
          %s5220 = smul.addr %s5219, 8
          %s5221 = scalar_lea.vmem [#allocation2], %s5220
          %5223 = dma.done %s5218, 128
        $region64: #{tpu_custom_call.1} parent=59 // pred_fallthru
          _
        // Predicated region
        $region65: #{tpu_custom_call.1} parent=59 // pred_check
          %p5224 = pneg %p212
        $region66: #{tpu_custom_call.1} parent=59 // pred_check_branch
          %5226 = sbr.rel (%p5224) target = $region68
        $region67: #{tpu_custom_call.1} parent=59 // pred_region
          %s5227 = sand.u32 %s27, 1
          %s5228 = scalar_lea.sflag [#allocation5], %s5227
          %s5229 = sand.u32 %s197, 1
          %s5230 = smul.addr %s5229, 2
          %s5231 = scalar_lea.vmem [#allocation4], %s5230
          %5233 = dma.done %s5228, 32
        $region68: #{tpu_custom_call.1} parent=59 // pred_fallthru
          _
        // Predicated region
        $region69: #{tpu_custom_call.1} parent=59 // pred_check
          %p5234 = pneg %p238
        $region70: #{tpu_custom_call.1} parent=59 // pred_check_branch
          %5236 = sbr.rel (%p5234) target = $region72
        $region71: #{tpu_custom_call.1} parent=59 // pred_region
          %s5237 = sand.u32 %s27, 1
          %s5238 = scalar_lea.sflag [#allocation5], %s5237
          %s5239 = sand.u32 %s223, 1
          %s5240 = smul.addr %s5239, 2
          %s5241 = scalar_lea.vmem [#allocation6], %s5240
          %5243 = dma.done %s5238, 32
        $region72: #{tpu_custom_call.1} parent=59 // pred_fallthru
          _
      $region60: #{tpu_custom_call.1} parent=5 // pred_fallthru
        _
    $region6: #{tpu_custom_call.1} parent=1 // loop_footer
      %s25 = sadd.s32 1, %s21
    $region7: #{tpu_custom_call.1} parent=1 // loop_footer_branch
      %20 = sbr.rel target = $region3
    $region8: #{tpu_custom_call.1} parent=1 // loop_exit
      _
    %5244 = vsyncpa [#allocation3], 1
    %s5245 = scalar_lea.sflag [#allocation3], 1
    %5246 = vsyncpa %s5245, 1
    %5247 = vsyncpa [#allocation5], 1
    %s5248 = scalar_lea.sflag [#allocation5], 1
    %5249 = vsyncpa %s5248, 1

</llo_original>
